<compile_context>
chip_gen: v6e
topology: v6e:2x2x1
jax: 0.10.0
libtpu: 0.0.40
codegen_flags: <defaults>
</compile_context>

<pallas_src>
from functools import partial

import jax
import jax.numpy as jnp
from jax.experimental import pallas as pl
from jax.experimental.pallas import tpu as pltpu

_VMEM_LIMIT = 32 * 1024 * 1024
_BN_EPS = 1e-5


# ----------------------------------------------------------------------------
# Row tiling / padding helpers
# ----------------------------------------------------------------------------

def _round_up(x, m):
    return (x + m - 1) // m * m


def _plan_rows(n):
    """Pick a row tile (multiple of 8, <= 512) and the padded point count."""
    tm = min(512, _round_up(n, 8))
    return tm, _round_up(n, tm)


def _pad_points(xp, n_pad):
    """Pad the points axis by replicating point 0 (safe under the max reduction)."""
    B, N, C = xp.shape
    if n_pad == N:
        return xp
    pad = jnp.broadcast_to(xp[:, :1, :], (B, n_pad - N, C))
    return jnp.concatenate([xp, pad], axis=1)


# ----------------------------------------------------------------------------
# Kernel 1: fused point-wise MLP (3 layers) + max over the points axis
# ----------------------------------------------------------------------------

def _point_mlp_max_kernel(x_ref, w1_ref, b1_ref, w2_ref, b2_ref, w3_ref, b3_ref,
                          *out_refs, emit_pf, relu3):
    if emit_pf:
        pf_ref, glob_ref = out_refs
    else:
        (glob_ref,) = out_refs
    i = pl.program_id(1)

    x = x_ref[0]                                                      # (tm, 3) bf16
    h = jnp.dot(x, w1_ref[0], preferred_element_type=jnp.float32) + b1_ref[...]
    h = jnp.maximum(h, 0.0)                                           # (tm, 64) f32
    if emit_pf:
        pf_ref[0] = h.astype(pf_ref.dtype)
    h = h.astype(jnp.bfloat16)
    h = jnp.dot(h, w2_ref[...], preferred_element_type=jnp.float32) + b2_ref[...]
    h = jnp.maximum(h, 0.0).astype(jnp.bfloat16)                      # (tm, 128)
    h = jnp.dot(h, w3_ref[...], preferred_element_type=jnp.float32) + b3_ref[...]
    if relu3:
        h = jnp.maximum(h, 0.0)                                       # (tm, 1024) f32

    @pl.when(i == 0)
    def _():
        glob_ref[0] = jnp.full((1, h.shape[-1]), -jnp.inf, jnp.float32)

    glob_ref[0] = jnp.maximum(glob_ref[0], jnp.max(h, axis=0, keepdims=True))


def point_mlp_max(xb, w1, b1, w2, b2, w3, b3, *, tm, emit_pf, relu3):
    """xb: (B, n_pad, cin) bf16; w1: (B, cin, c1) bf16 (per-batch); returns max feature (B, c3)
    and, if emit_pf, the first-layer point features (B, n_pad, c1) bf16."""
    B, n_pad, cin = xb.shape
    n_tiles = n_pad // tm
    c1, c2, c3 = w1.shape[-1], w2.shape[-1], w3.shape[-1]

    out_shape = [jax.ShapeDtypeStruct((B, 1, c3), jnp.float32)]
    out_specs = [pl.BlockSpec((1, 1, c3), lambda b, i: (b, 0, 0))]
    if emit_pf:
        out_shape = [jax.ShapeDtypeStruct((B, n_pad, c1), jnp.bfloat16)] + out_shape
        out_specs = [pl.BlockSpec((1, tm, c1), lambda b, i: (b, i, 0))] + out_specs

    outs = pl.pallas_call(
        partial(_point_mlp_max_kernel, emit_pf=emit_pf, relu3=relu3),
        out_shape=tuple(out_shape),
        grid=(B, n_tiles),
        in_specs=[
            pl.BlockSpec((1, tm, cin), lambda b, i: (b, i, 0)),
            pl.BlockSpec((1, cin, c1), lambda b, i: (b, 0, 0)),
            pl.BlockSpec((1, c1), lambda b, i: (0, 0)),
            pl.BlockSpec((c1, c2), lambda b, i: (0, 0)),
            pl.BlockSpec((1, c2), lambda b, i: (0, 0)),
            pl.BlockSpec((c2, c3), lambda b, i: (0, 0)),
            pl.BlockSpec((1, c3), lambda b, i: (0, 0)),
        ],
        out_specs=tuple(out_specs),
        compiler_params=pltpu.CompilerParams(
            dimension_semantics=("parallel", "arbitrary"),
            vmem_limit_bytes=_VMEM_LIMIT,
        ),
    )(xb, w1, b1, w2, b2, w3, b3)

    if emit_pf:
        pf, glob = outs
        return pf, glob.reshape(B, c3)
    glob = outs[0] if isinstance(outs, (tuple, list)) else outs
    return glob.reshape(B, c3)


# ----------------------------------------------------------------------------
# Kernel 2: fused STN FC stack (1024 -> 512 -> 256 -> 9) on B rows
# ----------------------------------------------------------------------------

def _stn_fc_kernel(g_ref, w1_ref, b1_ref, w2_ref, b2_ref, w3_ref, b3_ref, o_ref):
    h = jnp.dot(g_ref[...], w1_ref[...], preferred_element_type=jnp.float32) + b1_ref[...]
    h = jnp.maximum(h, 0.0)
    h = jnp.dot(h, w2_ref[...], preferred_element_type=jnp.float32) + b2_ref[...]
    h = jnp.maximum(h, 0.0)
    o_ref[...] = jnp.dot(h, w3_ref[...], preferred_element_type=jnp.float32) + b3_ref[...]


def stn_fc(g, w1, b1, w2, b2, w3, b3):
    B = g.shape[0]
    return pl.pallas_call(
        _stn_fc_kernel,
        out_shape=jax.ShapeDtypeStruct((B, w3.shape[1]), jnp.float32),
        grid=(1,),
        in_specs=[
            pl.BlockSpec(g.shape, lambda i: (0, 0)),
            pl.BlockSpec(w1.shape, lambda i: (0, 0)),
            pl.BlockSpec(b1.shape, lambda i: (0, 0)),
            pl.BlockSpec(w2.shape, lambda i: (0, 0)),
            pl.BlockSpec(b2.shape, lambda i: (0, 0)),
            pl.BlockSpec(w3.shape, lambda i: (0, 0)),
            pl.BlockSpec(b3.shape, lambda i: (0, 0)),
        ],
        out_specs=pl.BlockSpec((B, w3.shape[1]), lambda i: (0, 0)),
        compiler_params=pltpu.CompilerParams(
            dimension_semantics=("arbitrary",),
            vmem_limit_bytes=_VMEM_LIMIT,
        ),
    )(g, w1, b1, w2, b2, w3, b3)


# ----------------------------------------------------------------------------
# Kernel 3: fused dense head (64 -> 512 -> 256 -> 128 -> k) + log_softmax
#           (the 1088-wide concat is replaced by the per-batch bias g1)
# ----------------------------------------------------------------------------

def _head_kernel(pf_ref, g1_ref, w1_ref, b1_ref, w2_ref, b2_ref, w3_ref, b3_ref,
                 w4_ref, b4_ref, o_ref):
    pf = pf_ref[0]                                                    # (tm, 64) bf16
    h = jnp.dot(pf, w1_ref[...], preferred_element_type=jnp.float32)
    h = h + b1_ref[...] + g1_ref[0]                                   # global feature as bias
    h = jnp.maximum(h, 0.0).astype(jnp.bfloat16)                      # (tm, 512)
    h = jnp.dot(h, w2_ref[...], preferred_element_type=jnp.float32) + b2_ref[...]
    h = jnp.maximum(h, 0.0).astype(jnp.bfloat16)                      # (tm, 256)
    h = jnp.dot(h, w3_ref[...], preferred_element_type=jnp.float32) + b3_ref[...]
    h = jnp.maximum(h, 0.0).astype(jnp.bfloat16)                      # (tm, 128)
    logits = jnp.dot(h, w4_ref[...], preferred_element_type=jnp.float32) + b4_ref[...]
    m = jnp.max(logits, axis=-1, keepdims=True)
    lse = m + jnp.log(jnp.sum(jnp.exp(logits - m), axis=-1, keepdims=True))
    o_ref[0] = logits - lse


def head_chain(pf, g1, w1, b1, w2, b2, w3, b3, w4, b4, *, tm):
    B, n_pad, c_pf = pf.shape
    n_tiles = n_pad // tm
    c1, c2, c3, k = w1.shape[1], w2.shape[1], w3.shape[1], w4.shape[1]
    return pl.pallas_call(
        _head_kernel,
        out_shape=jax.ShapeDtypeStruct((B, n_pad, k), jnp.float32),
        grid=(B, n_tiles),
        in_specs=[
            pl.BlockSpec((1, tm, c_pf), lambda b, i: (b, i, 0)),
            pl.BlockSpec((1, 1, c1), lambda b, i: (b, 0, 0)),
            pl.BlockSpec((c_pf, c1), lambda b, i: (0, 0)),
            pl.BlockSpec((1, c1), lambda b, i: (0, 0)),
            pl.BlockSpec((c1, c2), lambda b, i: (0, 0)),
            pl.BlockSpec((1, c2), lambda b, i: (0, 0)),
            pl.BlockSpec((c2, c3), lambda b, i: (0, 0)),
            pl.BlockSpec((1, c3), lambda b, i: (0, 0)),
            pl.BlockSpec((c3, k), lambda b, i: (0, 0)),
            pl.BlockSpec((1, k), lambda b, i: (0, 0)),
        ],
        out_specs=pl.BlockSpec((1, tm, k), lambda b, i: (b, i, 0)),
        compiler_params=pltpu.CompilerParams(
            dimension_semantics=("parallel", "parallel"),
            vmem_limit_bytes=_VMEM_LIMIT,
        ),
    )(pf, g1, w1, b1, w2, b2, w3, b3, w4, b4)


# ----------------------------------------------------------------------------
# Parameter construction (deterministic, synthetic; BN folded in eval mode)
# ----------------------------------------------------------------------------

def _lin_init(key, cin, cout, scale=0.05):
    kw, kb = jax.random.split(key)
    w = jax.random.normal(kw, (cin, cout), jnp.float32) * scale
    b = jax.random.normal(kb, (1, cout), jnp.float32) * scale
    return w, b


def _bn_init(key, c):
    kg, kb = jax.random.split(key)
    gamma = 1.0 + 0.1 * jax.random.normal(kg, (c,), jnp.float32)
    beta = 0.1 * jax.random.normal(kb, (c,), jnp.float32)
    mean = jnp.zeros((c,), jnp.float32)
    var = jnp.ones((c,), jnp.float32)
    return gamma, beta, mean, var


def _fold_bn(w, b, bn):
    gamma, beta, mean, var = bn
    scale = gamma / jnp.sqrt(var + _BN_EPS)
    return w * scale[None, :], (b - mean[None, :]) * scale[None, :] + beta[None, :]


def init_params(key, k=2):
    keys = jax.random.split(key, 32)
    ki = iter(keys)
    p = {}

    def conv_bn(cin, cout):
        w, b = _lin_init(next(ki), cin, cout)
        return _fold_bn(w, b, _bn_init(next(ki), cout))

    # --- STN3d ---
    p["stn_c1"] = conv_bn(3, 64)
    p["stn_c2"] = conv_bn(64, 128)
    p["stn_c3"] = conv_bn(128, 1024)
    p["stn_fc1"] = conv_bn(1024, 512)
    p["stn_fc2"] = conv_bn(512, 256)
    w, b = _lin_init(next(ki), 256, 9)
    iden = jnp.array([1, 0, 0, 0, 1, 0, 0, 0, 1], jnp.float32).reshape(1, 9)
    p["stn_fc3"] = (w, b + iden)          # identity folded into the fc3 bias

    # --- PointNetfeat ---
    p["feat_c1"] = conv_bn(3, 64)
    p["feat_c2"] = conv_bn(64, 128)
    p["feat_c3"] = conv_bn(128, 1024)

    # --- Dense segmentation head ---
    p["head_c1"] = conv_bn(1088, 512)
    p["head_c2"] = conv_bn(512, 256)
    p["head_c3"] = conv_bn(256, 128)
    p["head_c4"] = _lin_init(next(ki), 128, k)
    return p


# ----------------------------------------------------------------------------
# Forward pass
# ----------------------------------------------------------------------------

def pointnet_densecls_forward(x, p):
    """x: (B, 3, N) float32 (PyTorch NCW). Returns (log_probs (B,N,k), trans (B,3,3), None)."""
    B, _, N = x.shape
    xp = jnp.transpose(x, (0, 2, 1))                      # (B, N, 3)
    tm, n_pad = _plan_rows(N)
    xb = _pad_points(xp, n_pad).astype(jnp.bfloat16)      # (B, n_pad, 3)

    bf16 = jnp.bfloat16

    # ---- STN3d: fused conv1->conv2->conv3(+ReLU) + max over points ----
    w1, b1 = p["stn_c1"]; w2, b2 = p["stn_c2"]; w3, b3 = p["stn_c3"]
    w1b = jnp.broadcast_to(w1.astype(bf16)[None], (B,) + w1.shape)
    g = point_mlp_max(xb, w1b, b1, w2.astype(bf16), b2, w3.astype(bf16), b3,
                      tm=tm, emit_pf=False, relu3=True)            # (B, 1024) f32
    # fused fc1->fc2->fc3 (identity already folded into fc3 bias)
    t = stn_fc(g, p["stn_fc1"][0], p["stn_fc1"][1],
               p["stn_fc2"][0], p["stn_fc2"][1],
               p["stn_fc3"][0], p["stn_fc3"][1])                   # (B, 9)
    trans = t.reshape(B, 3, 3)

    # ---- PointNetfeat: 3x3 transform folded into conv1's weight (no bmm kernel) ----
    wf1, bf1 = p["feat_c1"]; wf2, bf2 = p["feat_c2"]; wf3, bf3 = p["feat_c3"]
    w1p = jnp.einsum("bij,jk->bik", trans, wf1).astype(bf16)       # (B, 3, 64)
    pointfeat, glob = point_mlp_max(xb, w1p, bf1, wf2.astype(bf16), bf2,
                                    wf3.astype(bf16), bf3,
                                    tm=tm, emit_pf=True, relu3=False)
    # pointfeat: (B, n_pad, 64) bf16, glob: (B, 1024) f32

    # ---- Dense head: concat([glob, pointfeat]) never materialized ----
    wh1, bh1 = p["head_c1"]; wh2, bh2 = p["head_c2"]
    wh3, bh3 = p["head_c3"]; wh4, bh4 = p["head_c4"]
    g1 = (glob @ wh1[:1024, :]).reshape(B, 1, wh1.shape[1])        # (B, 1, 512) f32
    logp = head_chain(pointfeat, g1,
                      wh1[1024:, :].astype(bf16), bh1,
                      wh2.astype(bf16), bh2,
                      wh3.astype(bf16), bh3,
                      wh4.astype(bf16), bh4, tm=tm)                # (B, n_pad, k)
    return logp[:, :N, :], trans, None


if __name__ == "__main__":
    key = jax.random.PRNGKey(0)
    kx, kp = jax.random.split(key)

    B, N, k = 2, 64, 2
    x = jax.random.normal(kx, (B, 3, N), jnp.float32)     # PyTorch NCW input
    params = init_params(kp, k=k)

    fwd = jax.jit(pointnet_densecls_forward)
    out, trans, trans_feat = fwd(x, params)
    out = jax.block_until_ready(out)
    trans = jax.block_until_ready(trans)

    assert out.shape == (B, N, k)
    assert trans.shape == (B, 3, 3)
    assert trans_feat is None
    # log-softmax rows should (exp-)sum to 1
    assert bool(jnp.allclose(jnp.sum(jnp.exp(out), axis=-1), 1.0, atol=1e-4))
    print("KERNEL_OK")
</pallas_src>

<mosaic_0001>
module attributes {stable_mosaic.version = 11 : i64} {
  func.func @_point_mlp_max_kernel(%arg0: i32, %arg1: i32, %arg2: memref<1x64x3xbf16, #tpu.memory_space<vmem>>, %arg3: memref<1x3x64xbf16, #tpu.memory_space<vmem>>, %arg4: memref<1x64xf32, #tpu.memory_space<vmem>>, %arg5: memref<64x128xbf16, #tpu.memory_space<vmem>>, %arg6: memref<1x128xf32, #tpu.memory_space<vmem>>, %arg7: memref<128x1024xbf16, #tpu.memory_space<vmem>>, %arg8: memref<1x1024xf32, #tpu.memory_space<vmem>>, %arg9: memref<1x1x1024xf32, #tpu.memory_space<vmem>>) attributes {dimension_semantics = [#tpu.dimension_semantics<parallel>, #tpu.dimension_semantics<arbitrary>], iteration_bounds = array<i64: 2, 1>, scalar_prefetch = 0 : i64, scratch_operands = 0 : i64, tpu.core_type = #tpu.core_type<tc>, window_params = [{transform_indices = @transform_0, window_bounds = array<i64: 1, 64, 3>}, {transform_indices = @transform_1, window_bounds = array<i64: 1, 3, 64>}, {pipeline_mode = #tpu.pipeline_mode<synchronous>, transform_indices = @transform_2, window_bounds = array<i64: 1, 64>}, {pipeline_mode = #tpu.pipeline_mode<synchronous>, transform_indices = @transform_3, window_bounds = array<i64: 64, 128>}, {pipeline_mode = #tpu.pipeline_mode<synchronous>, transform_indices = @transform_4, window_bounds = array<i64: 1, 128>}, {pipeline_mode = #tpu.pipeline_mode<synchronous>, transform_indices = @transform_5, window_bounds = array<i64: 128, 1024>}, {pipeline_mode = #tpu.pipeline_mode<synchronous>, transform_indices = @transform_6, window_bounds = array<i64: 1, 1024>}, {transform_indices = @transform_7, window_bounds = array<i64: 1, 1, 1024>}]} {
    %c0 = arith.constant 0 : index
    %c0_0 = arith.constant 0 : index
    %c0_1 = arith.constant 0 : index
    %0 = vector.load %arg2[%c0, %c0_0, %c0_1] : memref<1x64x3xbf16, #tpu.memory_space<vmem>>, vector<1x64x3xbf16>
    %1 = vector.shape_cast %0 : vector<1x64x3xbf16> to vector<64x3xbf16>
    %c0_2 = arith.constant 0 : index
    %c0_3 = arith.constant 0 : index
    %c0_4 = arith.constant 0 : index
    %2 = vector.load %arg3[%c0_2, %c0_3, %c0_4] : memref<1x3x64xbf16, #tpu.memory_space<vmem>>, vector<1x3x64xbf16>
    %3 = vector.shape_cast %2 : vector<1x3x64xbf16> to vector<3x64xbf16>
    %cst = arith.constant dense<0.000000e+00> : vector<64x64xf32>
    %4 = tpu.matmul %1, %3, %cst {dimension_numbers = #tpu.dot_dimension_numbers<[1], [0], [0], [1], [0, 0, 1, 1], [], []>} : vector<64x3xbf16>, vector<3x64xbf16>, vector<64x64xf32> -> vector<64x64xf32>
    %c0_5 = arith.constant 0 : index
    %c0_6 = arith.constant 0 : index
    %5 = vector.load %arg4[%c0_5, %c0_6] : memref<1x64xf32, #tpu.memory_space<vmem>>, vector<1x64xf32>
    %6 = vector.broadcast %5 : vector<1x64xf32> to vector<64x64xf32>
    %7 = arith.addf %4, %6 : vector<64x64xf32>
    %cst_7 = arith.constant 0.000000e+00 : f32
    %8 = vector.broadcast %cst_7 : f32 to vector<64x64xf32>
    %9 = arith.maximumf %7, %8 : vector<64x64xf32>
    %10 = arith.truncf %9 : vector<64x64xf32> to vector<64x64xbf16>
    %c0_8 = arith.constant 0 : index
    %c0_9 = arith.constant 0 : index
    %11 = vector.load %arg5[%c0_8, %c0_9] : memref<64x128xbf16, #tpu.memory_space<vmem>>, vector<64x128xbf16>
    %cst_10 = arith.constant dense<0.000000e+00> : vector<64x128xf32>
    %12 = tpu.matmul %10, %11, %cst_10 {dimension_numbers = #tpu.dot_dimension_numbers<[1], [0], [0], [1], [0, 0, 1, 1], [], []>} : vector<64x64xbf16>, vector<64x128xbf16>, vector<64x128xf32> -> vector<64x128xf32>
    %c0_11 = arith.constant 0 : index
    %c0_12 = arith.constant 0 : index
    %13 = vector.load %arg6[%c0_11, %c0_12] : memref<1x128xf32, #tpu.memory_space<vmem>>, vector<1x128xf32>
    %14 = vector.broadcast %13 : vector<1x128xf32> to vector<64x128xf32>
    %15 = arith.addf %12, %14 : vector<64x128xf32>
    %cst_13 = arith.constant 0.000000e+00 : f32
    %16 = vector.broadcast %cst_13 : f32 to vector<64x128xf32>
    %17 = arith.maximumf %15, %16 : vector<64x128xf32>
    %18 = arith.truncf %17 : vector<64x128xf32> to vector<64x128xbf16>
    %c0_14 = arith.constant 0 : index
    %c0_15 = arith.constant 0 : index
    %19 = vector.load %arg7[%c0_14, %c0_15] : memref<128x1024xbf16, #tpu.memory_space<vmem>>, vector<128x1024xbf16>
    %cst_16 = arith.constant dense<0.000000e+00> : vector<64x1024xf32>
    %20 = tpu.matmul %18, %19, %cst_16 {dimension_numbers = #tpu.dot_dimension_numbers<[1], [0], [0], [1], [0, 0, 1, 1], [], []>} : vector<64x128xbf16>, vector<128x1024xbf16>, vector<64x1024xf32> -> vector<64x1024xf32>
    %c0_17 = arith.constant 0 : index
    %c0_18 = arith.constant 0 : index
    %21 = vector.load %arg8[%c0_17, %c0_18] : memref<1x1024xf32, #tpu.memory_space<vmem>>, vector<1x1024xf32>
    %22 = vector.broadcast %21 : vector<1x1024xf32> to vector<64x1024xf32>
    %23 = arith.addf %20, %22 : vector<64x1024xf32>
    %cst_19 = arith.constant 0.000000e+00 : f32
    %24 = vector.broadcast %cst_19 : f32 to vector<64x1024xf32>
    %25 = arith.maximumf %23, %24 : vector<64x1024xf32>
    %c0_i32 = arith.constant 0 : i32
    %26 = arith.cmpi eq, %arg1, %c0_i32 : i32
    %27 = arith.extui %26 : i1 to i32
    %c0_i32_20 = arith.constant 0 : i32
    %28 = arith.cmpi ne, %27, %c0_i32_20 : i32
    scf.if %28 {
      %cst_28 = arith.constant 0xFF800000 : f32
      %37 = vector.broadcast %cst_28 : f32 to vector<1x1024xf32>
      %c0_29 = arith.constant 0 : index
      %c0_30 = arith.constant 0 : index
      %c0_31 = arith.constant 0 : index
      %38 = vector.load %arg9[%c0_29, %c0_30, %c0_31] : memref<1x1x1024xf32, #tpu.memory_space<vmem>>, vector<1x1x1024xf32>
      %39 = vector.shape_cast %38 : vector<1x1x1024xf32> to vector<1x1024xf32>
      %40 = vector.shape_cast %37 : vector<1x1024xf32> to vector<1x1x1024xf32>
      tpu.vector_store %arg9[%c0_29, %c0_30, %c0_31], %40 {strides = array<i32>} : memref<1x1x1024xf32, #tpu.memory_space<vmem>>, vector<1x1x1024xf32>,
    } else {
    }
    %c0_21 = arith.constant 0 : index
    %c0_22 = arith.constant 0 : index
    %c0_23 = arith.constant 0 : index
    %29 = vector.load %arg9[%c0_21, %c0_22, %c0_23] : memref<1x1x1024xf32, #tpu.memory_space<vmem>>, vector<1x1x1024xf32>
    %30 = vector.shape_cast %29 : vector<1x1x1024xf32> to vector<1x1024xf32>
    %cst_24 = arith.constant dense<0xFF800000> : vector<1024xf32>
    %31 = vector.multi_reduction <maximumf>, %25, %cst_24 [0] : vector<64x1024xf32> to vector<1024xf32>
    %32 = vector.shape_cast %31 : vector<1024xf32> to vector<1x1024xf32>
    %33 = arith.maximumf %30, %32 : vector<1x1024xf32>
    %c0_25 = arith.constant 0 : index
    %c0_26 = arith.constant 0 : index
    %c0_27 = arith.constant 0 : index
    %34 = vector.load %arg9[%c0_25, %c0_26, %c0_27] : memref<1x1x1024xf32, #tpu.memory_space<vmem>>, vector<1x1x1024xf32>
    %35 = vector.shape_cast %34 : vector<1x1x1024xf32> to vector<1x1024xf32>
    %36 = vector.shape_cast %33 : vector<1x1024xf32> to vector<1x1x1024xf32>
    tpu.vector_store %arg9[%c0_25, %c0_26, %c0_27], %36 {strides = array<i32>} : memref<1x1x1024xf32, #tpu.memory_space<vmem>>, vector<1x1x1024xf32>,
    return
  }
  func.func @transform_0(%arg0: i32, %arg1: i32) -> (i32, i32, i32) {
    %c0_i32 = arith.constant 0 : i32
    %c0_i32_0 = arith.constant 0 : i32
    return %arg0, %arg1, %c0_i32 : i32, i32, i32
  }
  func.func @transform_1(%arg0: i32, %arg1: i32) -> (i32, i32, i32) {
    %c0_i32 = arith.constant 0 : i32
    %c0_i32_0 = arith.constant 0 : i32
    %c0_i32_1 = arith.constant 0 : i32
    return %arg0, %c0_i32, %c0_i32_0 : i32, i32, i32
  }
  func.func @transform_2(%arg0: i32, %arg1: i32) -> (i32, i32) {
    %c0_i32 = arith.constant 0 : i32
    %c0_i32_0 = arith.constant 0 : i32
    %c0_i32_1 = arith.constant 0 : i32
    return %c0_i32, %c0_i32_0 : i32, i32
  }
  func.func @transform_3(%arg0: i32, %arg1: i32) -> (i32, i32) {
    %c0_i32 = arith.constant 0 : i32
    %c0_i32_0 = arith.constant 0 : i32
    %c0_i32_1 = arith.constant 0 : i32
    return %c0_i32, %c0_i32_0 : i32, i32
  }
  func.func @transform_4(%arg0: i32, %arg1: i32) -> (i32, i32) {
    %c0_i32 = arith.constant 0 : i32
    %c0_i32_0 = arith.constant 0 : i32
    %c0_i32_1 = arith.constant 0 : i32
    return %c0_i32, %c0_i32_0 : i32, i32
  }
  func.func @transform_5(%arg0: i32, %arg1: i32) -> (i32, i32) {
    %c0_i32 = arith.constant 0 : i32
    %c0_i32_0 = arith.constant 0 : i32
    %c0_i32_1 = arith.constant 0 : i32
    return %c0_i32, %c0_i32_0 : i32, i32
  }
  func.func @transform_6(%arg0: i32, %arg1: i32) -> (i32, i32) {
    %c0_i32 = arith.constant 0 : i32
    %c0_i32_0 = arith.constant 0 : i32
    %c0_i32_1 = arith.constant 0 : i32
    return %c0_i32, %c0_i32_0 : i32, i32
  }
  func.func @transform_7(%arg0: i32, %arg1: i32) -> (i32, i32, i32) {
    %c0_i32 = arith.constant 0 : i32
    %c0_i32_0 = arith.constant 0 : i32
    %c0_i32_1 = arith.constant 0 : i32
    return %arg0, %c0_i32, %c0_i32_0 : i32, i32, i32
  }
}

module attributes {stable_mosaic.version = 11 : i64} {
  func.func @_stn_fc_kernel(%arg0: i32, %arg1: memref<2x1024xf32, #tpu.memory_space<vmem>>, %arg2: memref<1024x512xf32, #tpu.memory_space<vmem>>, %arg3: memref<1x512xf32, #tpu.memory_space<vmem>>, %arg4: memref<512x256xf32, #tpu.memory_space<vmem>>, %arg5: memref<1x256xf32, #tpu.memory_space<vmem>>, %arg6: memref<256x9xf32, #tpu.memory_space<vmem>>, %arg7: memref<1x9xf32, #tpu.memory_space<vmem>>, %arg8: memref<2x9xf32, #tpu.memory_space<vmem>>) attributes {dimension_semantics = [#tpu.dimension_semantics<arbitrary>], iteration_bounds = array<i64: 1>, scalar_prefetch = 0 : i64, scratch_operands = 0 : i64, tpu.core_type = #tpu.core_type<tc>, window_params = [{pipeline_mode = #tpu.pipeline_mode<synchronous>, transform_indices = @transform_0, window_bounds = array<i64: 2, 1024>}, {pipeline_mode = #tpu.pipeline_mode<synchronous>, transform_indices = @transform_1, window_bounds = array<i64: 1024, 512>}, {pipeline_mode = #tpu.pipeline_mode<synchronous>, transform_indices = @transform_2, window_bounds = array<i64: 1, 512>}, {pipeline_mode = #tpu.pipeline_mode<synchronous>, transform_indices = @transform_3, window_bounds = array<i64: 512, 256>}, {pipeline_mode = #tpu.pipeline_mode<synchronous>, transform_indices = @transform_4, window_bounds = array<i64: 1, 256>}, {pipeline_mode = #tpu.pipeline_mode<synchronous>, transform_indices = @transform_5, window_bounds = array<i64: 256, 9>}, {pipeline_mode = #tpu.pipeline_mode<synchronous>, transform_indices = @transform_6, window_bounds = array<i64: 1, 9>}, {pipeline_mode = #tpu.pipeline_mode<synchronous>, transform_indices = @transform_7, window_bounds = array<i64: 2, 9>}]} {
    %c0 = arith.constant 0 : index
    %c0_0 = arith.constant 0 : index
    %0 = vector.load %arg1[%c0, %c0_0] : memref<2x1024xf32, #tpu.memory_space<vmem>>, vector<2x1024xf32>
    %c0_1 = arith.constant 0 : index
    %c0_2 = arith.constant 0 : index
    %1 = vector.load %arg2[%c0_1, %c0_2] : memref<1024x512xf32, #tpu.memory_space<vmem>>, vector<1024x512xf32>
    %cst = arith.constant dense<0.000000e+00> : vector<2x512xf32>
    %2 = tpu.matmul %0, %1, %cst {dimension_numbers = #tpu.dot_dimension_numbers<[1], [0], [0], [1], [0, 0, 1, 1], [], []>} : vector<2x1024xf32>, vector<1024x512xf32>, vector<2x512xf32> -> vector<2x512xf32>
    %c0_3 = arith.constant 0 : index
    %c0_4 = arith.constant 0 : index
    %3 = vector.load %arg3[%c0_3, %c0_4] : memref<1x512xf32, #tpu.memory_space<vmem>>, vector<1x512xf32>
    %4 = vector.broadcast %3 : vector<1x512xf32> to vector<2x512xf32>
    %5 = arith.addf %2, %4 : vector<2x512xf32>
    %cst_5 = arith.constant 0.000000e+00 : f32
    %6 = vector.broadcast %cst_5 : f32 to vector<2x512xf32>
    %7 = arith.maximumf %5, %6 : vector<2x512xf32>
    %c0_6 = arith.constant 0 : index
    %c0_7 = arith.constant 0 : index
    %8 = vector.load %arg4[%c0_6, %c0_7] : memref<512x256xf32, #tpu.memory_space<vmem>>, vector<512x256xf32>
    %cst_8 = arith.constant dense<0.000000e+00> : vector<2x256xf32>
    %9 = tpu.matmul %7, %8, %cst_8 {dimension_numbers = #tpu.dot_dimension_numbers<[1], [0], [0], [1], [0, 0, 1, 1], [], []>} : vector<2x512xf32>, vector<512x256xf32>, vector<2x256xf32> -> vector<2x256xf32>
    %c0_9 = arith.constant 0 : index
    %c0_10 = arith.constant 0 : index
    %10 = vector.load %arg5[%c0_9, %c0_10] : memref<1x256xf32, #tpu.memory_space<vmem>>, vector<1x256xf32>
    %11 = vector.broadcast %10 : vector<1x256xf32> to vector<2x256xf32>
    %12 = arith.addf %9, %11 : vector<2x256xf32>
    %cst_11 = arith.constant 0.000000e+00 : f32
    %13 = vector.broadcast %cst_11 : f32 to vector<2x256xf32>
    %14 = arith.maximumf %12, %13 : vector<2x256xf32>
    %c0_12 = arith.constant 0 : index
    %c0_13 = arith.constant 0 : index
    %15 = vector.load %arg6[%c0_12, %c0_13] : memref<256x9xf32, #tpu.memory_space<vmem>>, vector<256x9xf32>
    %cst_14 = arith.constant dense<0.000000e+00> : vector<2x9xf32>
    %16 = tpu.matmul %14, %15, %cst_14 {dimension_numbers = #tpu.dot_dimension_numbers<[1], [0], [0], [1], [0, 0, 1, 1], [], []>} : vector<2x256xf32>, vector<256x9xf32>, vector<2x9xf32> -> vector<2x9xf32>
    %c0_15 = arith.constant 0 : index
    %c0_16 = arith.constant 0 : index
    %17 = vector.load %arg7[%c0_15, %c0_16] : memref<1x9xf32, #tpu.memory_space<vmem>>, vector<1x9xf32>
    %18 = vector.broadcast %17 : vector<1x9xf32> to vector<2x9xf32>
    %19 = arith.addf %16, %18 : vector<2x9xf32>
    %c0_17 = arith.constant 0 : index
    %c0_18 = arith.constant 0 : index
    %20 = vector.load %arg8[%c0_17, %c0_18] : memref<2x9xf32, #tpu.memory_space<vmem>>, vector<2x9xf32>
    tpu.vector_store %arg8[%c0_17, %c0_18], %19 {strides = array<i32>} : memref<2x9xf32, #tpu.memory_space<vmem>>, vector<2x9xf32>,
    return
  }
  func.func @transform_0(%arg0: i32) -> (i32, i32) {
    %c0_i32 = arith.constant 0 : i32
    %c0_i32_0 = arith.constant 0 : i32
    %c0_i32_1 = arith.constant 0 : i32
    return %c0_i32, %c0_i32_0 : i32, i32
  }
  func.func @transform_1(%arg0: i32) -> (i32, i32) {
    %c0_i32 = arith.constant 0 : i32
    %c0_i32_0 = arith.constant 0 : i32
    %c0_i32_1 = arith.constant 0 : i32
    return %c0_i32, %c0_i32_0 : i32, i32
  }
  func.func @transform_2(%arg0: i32) -> (i32, i32) {
    %c0_i32 = arith.constant 0 : i32
    %c0_i32_0 = arith.constant 0 : i32
    %c0_i32_1 = arith.constant 0 : i32
    return %c0_i32, %c0_i32_0 : i32, i32
  }
  func.func @transform_3(%arg0: i32) -> (i32, i32) {
    %c0_i32 = arith.constant 0 : i32
    %c0_i32_0 = arith.constant 0 : i32
    %c0_i32_1 = arith.constant 0 : i32
    return %c0_i32, %c0_i32_0 : i32, i32
  }
  func.func @transform_4(%arg0: i32) -> (i32, i32) {
    %c0_i32 = arith.constant 0 : i32
    %c0_i32_0 = arith.constant 0 : i32
    %c0_i32_1 = arith.constant 0 : i32
    return %c0_i32, %c0_i32_0 : i32, i32
  }
  func.func @transform_5(%arg0: i32) -> (i32, i32) {
    %c0_i32 = arith.constant 0 : i32
    %c0_i32_0 = arith.constant 0 : i32
    %c0_i32_1 = arith.constant 0 : i32
    return %c0_i32, %c0_i32_0 : i32, i32
  }
  func.func @transform_6(%arg0: i32) -> (i32, i32) {
    %c0_i32 = arith.constant 0 : i32
    %c0_i32_0 = arith.constant 0 : i32
    %c0_i32_1 = arith.constant 0 : i32
    return %c0_i32, %c0_i32_0 : i32, i32
  }
  func.func @transform_7(%arg0: i32) -> (i32, i32) {
    %c0_i32 = arith.constant 0 : i32
    %c0_i32_0 = arith.constant 0 : i32
    %c0_i32_1 = arith.constant 0 : i32
    return %c0_i32, %c0_i32_0 : i32, i32
  }
}

module attributes {stable_mosaic.version = 11 : i64} {
  func.func @_point_mlp_max_kernel(%arg0: i32, %arg1: i32, %arg2: memref<1x64x3xbf16, #tpu.memory_space<vmem>>, %arg3: memref<1x3x64xbf16, #tpu.memory_space<vmem>>, %arg4: memref<1x64xf32, #tpu.memory_space<vmem>>, %arg5: memref<64x128xbf16, #tpu.memory_space<vmem>>, %arg6: memref<1x128xf32, #tpu.memory_space<vmem>>, %arg7: memref<128x1024xbf16, #tpu.memory_space<vmem>>, %arg8: memref<1x1024xf32, #tpu.memory_space<vmem>>, %arg9: memref<1x64x64xbf16, #tpu.memory_space<vmem>>, %arg10: memref<1x1x1024xf32, #tpu.memory_space<vmem>>) attributes {dimension_semantics = [#tpu.dimension_semantics<parallel>, #tpu.dimension_semantics<arbitrary>], iteration_bounds = array<i64: 2, 1>, scalar_prefetch = 0 : i64, scratch_operands = 0 : i64, tpu.core_type = #tpu.core_type<tc>, window_params = [{transform_indices = @transform_0, window_bounds = array<i64: 1, 64, 3>}, {transform_indices = @transform_1, window_bounds = array<i64: 1, 3, 64>}, {pipeline_mode = #tpu.pipeline_mode<synchronous>, transform_indices = @transform_2, window_bounds = array<i64: 1, 64>}, {pipeline_mode = #tpu.pipeline_mode<synchronous>, transform_indices = @transform_3, window_bounds = array<i64: 64, 128>}, {pipeline_mode = #tpu.pipeline_mode<synchronous>, transform_indices = @transform_4, window_bounds = array<i64: 1, 128>}, {pipeline_mode = #tpu.pipeline_mode<synchronous>, transform_indices = @transform_5, window_bounds = array<i64: 128, 1024>}, {pipeline_mode = #tpu.pipeline_mode<synchronous>, transform_indices = @transform_6, window_bounds = array<i64: 1, 1024>}, {transform_indices = @transform_7, window_bounds = array<i64: 1, 64, 64>}, {transform_indices = @transform_8, window_bounds = array<i64: 1, 1, 1024>}]} {
    %c0 = arith.constant 0 : index
    %c0_0 = arith.constant 0 : index
    %c0_1 = arith.constant 0 : index
    %0 = vector.load %arg2[%c0, %c0_0, %c0_1] : memref<1x64x3xbf16, #tpu.memory_space<vmem>>, vector<1x64x3xbf16>
    %1 = vector.shape_cast %0 : vector<1x64x3xbf16> to vector<64x3xbf16>
    %c0_2 = arith.constant 0 : index
    %c0_3 = arith.constant 0 : index
    %c0_4 = arith.constant 0 : index
    %2 = vector.load %arg3[%c0_2, %c0_3, %c0_4] : memref<1x3x64xbf16, #tpu.memory_space<vmem>>, vector<1x3x64xbf16>
    %3 = vector.shape_cast %2 : vector<1x3x64xbf16> to vector<3x64xbf16>
    %cst = arith.constant dense<0.000000e+00> : vector<64x64xf32>
    %4 = tpu.matmul %1, %3, %cst {dimension_numbers = #tpu.dot_dimension_numbers<[1], [0], [0], [1], [0, 0, 1, 1], [], []>} : vector<64x3xbf16>, vector<3x64xbf16>, vector<64x64xf32> -> vector<64x64xf32>
    %c0_5 = arith.constant 0 : index
    %c0_6 = arith.constant 0 : index
    %5 = vector.load %arg4[%c0_5, %c0_6] : memref<1x64xf32, #tpu.memory_space<vmem>>, vector<1x64xf32>
    %6 = vector.broadcast %5 : vector<1x64xf32> to vector<64x64xf32>
    %7 = arith.addf %4, %6 : vector<64x64xf32>
    %cst_7 = arith.constant 0.000000e+00 : f32
    %8 = vector.broadcast %cst_7 : f32 to vector<64x64xf32>
    %9 = arith.maximumf %7, %8 : vector<64x64xf32>
    %10 = arith.truncf %9 : vector<64x64xf32> to vector<64x64xbf16>
    %c0_8 = arith.constant 0 : index
    %c0_9 = arith.constant 0 : index
    %c0_10 = arith.constant 0 : index
    %11 = vector.load %arg9[%c0_8, %c0_9, %c0_10] : memref<1x64x64xbf16, #tpu.memory_space<vmem>>, vector<1x64x64xbf16>
    %12 = vector.shape_cast %11 : vector<1x64x64xbf16> to vector<64x64xbf16>
    %13 = vector.shape_cast %10 : vector<64x64xbf16> to vector<1x64x64xbf16>
    tpu.vector_store %arg9[%c0_8, %c0_9, %c0_10], %13 {strides = array<i32>} : memref<1x64x64xbf16, #tpu.memory_space<vmem>>, vector<1x64x64xbf16>,
    %14 = arith.truncf %9 : vector<64x64xf32> to vector<64x64xbf16>
    %c0_11 = arith.constant 0 : index
    %c0_12 = arith.constant 0 : index
    %15 = vector.load %arg5[%c0_11, %c0_12] : memref<64x128xbf16, #tpu.memory_space<vmem>>, vector<64x128xbf16>
    %cst_13 = arith.constant dense<0.000000e+00> : vector<64x128xf32>
    %16 = tpu.matmul %14, %15, %cst_13 {dimension_numbers = #tpu.dot_dimension_numbers<[1], [0], [0], [1], [0, 0, 1, 1], [], []>} : vector<64x64xbf16>, vector<64x128xbf16>, vector<64x128xf32> -> vector<64x128xf32>
    %c0_14 = arith.constant 0 : index
    %c0_15 = arith.constant 0 : index
    %17 = vector.load %arg6[%c0_14, %c0_15] : memref<1x128xf32, #tpu.memory_space<vmem>>, vector<1x128xf32>
    %18 = vector.broadcast %17 : vector<1x128xf32> to vector<64x128xf32>
    %19 = arith.addf %16, %18 : vector<64x128xf32>
    %cst_16 = arith.constant 0.000000e+00 : f32
    %20 = vector.broadcast %cst_16 : f32 to vector<64x128xf32>
    %21 = arith.maximumf %19, %20 : vector<64x128xf32>
    %22 = arith.truncf %21 : vector<64x128xf32> to vector<64x128xbf16>
    %c0_17 = arith.constant 0 : index
    %c0_18 = arith.constant 0 : index
    %23 = vector.load %arg7[%c0_17, %c0_18] : memref<128x1024xbf16, #tpu.memory_space<vmem>>, vector<128x1024xbf16>
    %cst_19 = arith.constant dense<0.000000e+00> : vector<64x1024xf32>
    %24 = tpu.matmul %22, %23, %cst_19 {dimension_numbers = #tpu.dot_dimension_numbers<[1], [0], [0], [1], [0, 0, 1, 1], [], []>} : vector<64x128xbf16>, vector<128x1024xbf16>, vector<64x1024xf32> -> vector<64x1024xf32>
    %c0_20 = arith.constant 0 : index
    %c0_21 = arith.constant 0 : index
    %25 = vector.load %arg8[%c0_20, %c0_21] : memref<1x1024xf32, #tpu.memory_space<vmem>>, vector<1x1024xf32>
    %26 = vector.broadcast %25 : vector<1x1024xf32> to vector<64x1024xf32>
    %27 = arith.addf %24, %26 : vector<64x1024xf32>
    %c0_i32 = arith.constant 0 : i32
    %28 = arith.cmpi eq, %arg1, %c0_i32 : i32
    %29 = arith.extui %28 : i1 to i32
    %c0_i32_22 = arith.constant 0 : i32
    %30 = arith.cmpi ne, %29, %c0_i32_22 : i32
    scf.if %30 {
      %cst_30 = arith.constant 0xFF800000 : f32
      %39 = vector.broadcast %cst_30 : f32 to vector<1x1024xf32>
      %c0_31 = arith.constant 0 : index
      %c0_32 = arith.constant 0 : index
      %c0_33 = arith.constant 0 : index
      %40 = vector.load %arg10[%c0_31, %c0_32, %c0_33] : memref<1x1x1024xf32, #tpu.memory_space<vmem>>, vector<1x1x1024xf32>
      %41 = vector.shape_cast %40 : vector<1x1x1024xf32> to vector<1x1024xf32>
      %42 = vector.shape_cast %39 : vector<1x1024xf32> to vector<1x1x1024xf32>
      tpu.vector_store %arg10[%c0_31, %c0_32, %c0_33], %42 {strides = array<i32>} : memref<1x1x1024xf32, #tpu.memory_space<vmem>>, vector<1x1x1024xf32>,
    } else {
    }
    %c0_23 = arith.constant 0 : index
    %c0_24 = arith.constant 0 : index
    %c0_25 = arith.constant 0 : index
    %31 = vector.load %arg10[%c0_23, %c0_24, %c0_25] : memref<1x1x1024xf32, #tpu.memory_space<vmem>>, vector<1x1x1024xf32>
    %32 = vector.shape_cast %31 : vector<1x1x1024xf32> to vector<1x1024xf32>
    %cst_26 = arith.constant dense<0xFF800000> : vector<1024xf32>
    %33 = vector.multi_reduction <maximumf>, %27, %cst_26 [0] : vector<64x1024xf32> to vector<1024xf32>
    %34 = vector.shape_cast %33 : vector<1024xf32> to vector<1x1024xf32>
    %35 = arith.maximumf %32, %34 : vector<1x1024xf32>
    %c0_27 = arith.constant 0 : index
    %c0_28 = arith.constant 0 : index
    %c0_29 = arith.constant 0 : index
    %36 = vector.load %arg10[%c0_27, %c0_28, %c0_29] : memref<1x1x1024xf32, #tpu.memory_space<vmem>>, vector<1x1x1024xf32>
    %37 = vector.shape_cast %36 : vector<1x1x1024xf32> to vector<1x1024xf32>
    %38 = vector.shape_cast %35 : vector<1x1024xf32> to vector<1x1x1024xf32>
    tpu.vector_store %arg10[%c0_27, %c0_28, %c0_29], %38 {strides = array<i32>} : memref<1x1x1024xf32, #tpu.memory_space<vmem>>, vector<1x1x1024xf32>,
    return
  }
  func.func @transform_0(%arg0: i32, %arg1: i32) -> (i32, i32, i32) {
    %c0_i32 = arith.constant 0 : i32
    %c0_i32_0 = arith.constant 0 : i32
    return %arg0, %arg1, %c0_i32 : i32, i32, i32
  }
  func.func @transform_1(%arg0: i32, %arg1: i32) -> (i32, i32, i32) {
    %c0_i32 = arith.constant 0 : i32
    %c0_i32_0 = arith.constant 0 : i32
    %c0_i32_1 = arith.constant 0 : i32
    return %arg0, %c0_i32, %c0_i32_0 : i32, i32, i32
  }
  func.func @transform_2(%arg0: i32, %arg1: i32) -> (i32, i32) {
    %c0_i32 = arith.constant 0 : i32
    %c0_i32_0 = arith.constant 0 : i32
    %c0_i32_1 = arith.constant 0 : i32
    return %c0_i32, %c0_i32_0 : i32, i32
  }
  func.func @transform_3(%arg0: i32, %arg1: i32) -> (i32, i32) {
    %c0_i32 = arith.constant 0 : i32
    %c0_i32_0 = arith.constant 0 : i32
    %c0_i32_1 = arith.constant 0 : i32
    return %c0_i32, %c0_i32_0 : i32, i32
  }
  func.func @transform_4(%arg0: i32, %arg1: i32) -> (i32, i32) {
    %c0_i32 = arith.constant 0 : i32
    %c0_i32_0 = arith.constant 0 : i32
    %c0_i32_1 = arith.constant 0 : i32
    return %c0_i32, %c0_i32_0 : i32, i32
  }
  func.func @transform_5(%arg0: i32, %arg1: i32) -> (i32, i32) {
    %c0_i32 = arith.constant 0 : i32
    %c0_i32_0 = arith.constant 0 : i32
    %c0_i32_1 = arith.constant 0 : i32
    return %c0_i32, %c0_i32_0 : i32, i32
  }
  func.func @transform_6(%arg0: i32, %arg1: i32) -> (i32, i32) {
    %c0_i32 = arith.constant 0 : i32
    %c0_i32_0 = arith.constant 0 : i32
    %c0_i32_1 = arith.constant 0 : i32
    return %c0_i32, %c0_i32_0 : i32, i32
  }
  func.func @transform_7(%arg0: i32, %arg1: i32) -> (i32, i32, i32) {
    %c0_i32 = arith.constant 0 : i32
    %c0_i32_0 = arith.constant 0 : i32
    return %arg0, %arg1, %c0_i32 : i32, i32, i32
  }
  func.func @transform_8(%arg0: i32, %arg1: i32) -> (i32, i32, i32) {
    %c0_i32 = arith.constant 0 : i32
    %c0_i32_0 = arith.constant 0 : i32
    %c0_i32_1 = arith.constant 0 : i32
    return %arg0, %c0_i32, %c0_i32_0 : i32, i32, i32
  }
}

module attributes {stable_mosaic.version = 11 : i64} {
  func.func @_head_kernel(%arg0: i32, %arg1: i32, %arg2: memref<1x64x64xbf16, #tpu.memory_space<vmem>>, %arg3: memref<1x1x512xf32, #tpu.memory_space<vmem>>, %arg4: memref<64x512xbf16, #tpu.memory_space<vmem>>, %arg5: memref<1x512xf32, #tpu.memory_space<vmem>>, %arg6: memref<512x256xbf16, #tpu.memory_space<vmem>>, %arg7: memref<1x256xf32, #tpu.memory_space<vmem>>, %arg8: memref<256x128xbf16, #tpu.memory_space<vmem>>, %arg9: memref<1x128xf32, #tpu.memory_space<vmem>>, %arg10: memref<128x2xbf16, #tpu.memory_space<vmem>>, %arg11: memref<1x2xf32, #tpu.memory_space<vmem>>, %arg12: memref<1x64x2xf32, #tpu.memory_space<vmem>>) attributes {dimension_semantics = [#tpu.dimension_semantics<parallel>, #tpu.dimension_semantics<parallel>], iteration_bounds = array<i64: 2, 1>, scalar_prefetch = 0 : i64, scratch_operands = 0 : i64, tpu.core_type = #tpu.core_type<tc>, window_params = [{transform_indices = @transform_0, window_bounds = array<i64: 1, 64, 64>}, {transform_indices = @transform_1, window_bounds = array<i64: 1, 1, 512>}, {pipeline_mode = #tpu.pipeline_mode<synchronous>, transform_indices = @transform_2, window_bounds = array<i64: 64, 512>}, {pipeline_mode = #tpu.pipeline_mode<synchronous>, transform_indices = @transform_3, window_bounds = array<i64: 1, 512>}, {pipeline_mode = #tpu.pipeline_mode<synchronous>, transform_indices = @transform_4, window_bounds = array<i64: 512, 256>}, {pipeline_mode = #tpu.pipeline_mode<synchronous>, transform_indices = @transform_5, window_bounds = array<i64: 1, 256>}, {pipeline_mode = #tpu.pipeline_mode<synchronous>, transform_indices = @transform_6, window_bounds = array<i64: 256, 128>}, {pipeline_mode = #tpu.pipeline_mode<synchronous>, transform_indices = @transform_7, window_bounds = array<i64: 1, 128>}, {pipeline_mode = #tpu.pipeline_mode<synchronous>, transform_indices = @transform_8, window_bounds = array<i64: 128, 2>}, {pipeline_mode = #tpu.pipeline_mode<synchronous>, transform_indices = @transform_9, window_bounds = array<i64: 1, 2>}, {transform_indices = @transform_10, window_bounds = array<i64: 1, 64, 2>}]} {
    %c0 = arith.constant 0 : index
    %c0_0 = arith.constant 0 : index
    %c0_1 = arith.constant 0 : index
    %0 = vector.load %arg2[%c0, %c0_0, %c0_1] : memref<1x64x64xbf16, #tpu.memory_space<vmem>>, vector<1x64x64xbf16>
    %1 = vector.shape_cast %0 : vector<1x64x64xbf16> to vector<64x64xbf16>
    %c0_2 = arith.constant 0 : index
    %c0_3 = arith.constant 0 : index
    %2 = vector.load %arg4[%c0_2, %c0_3] : memref<64x512xbf16, #tpu.memory_space<vmem>>, vector<64x512xbf16>
    %cst = arith.constant dense<0.000000e+00> : vector<64x512xf32>
    %3 = tpu.matmul %1, %2, %cst {dimension_numbers = #tpu.dot_dimension_numbers<[1], [0], [0], [1], [0, 0, 1, 1], [], []>} : vector<64x64xbf16>, vector<64x512xbf16>, vector<64x512xf32> -> vector<64x512xf32>
    %c0_4 = arith.constant 0 : index
    %c0_5 = arith.constant 0 : index
    %4 = vector.load %arg5[%c0_4, %c0_5] : memref<1x512xf32, #tpu.memory_space<vmem>>, vector<1x512xf32>
    %5 = vector.broadcast %4 : vector<1x512xf32> to vector<64x512xf32>
    %6 = arith.addf %3, %5 : vector<64x512xf32>
    %c0_6 = arith.constant 0 : index
    %c0_7 = arith.constant 0 : index
    %c0_8 = arith.constant 0 : index
    %7 = vector.load %arg3[%c0_6, %c0_7, %c0_8] : memref<1x1x512xf32, #tpu.memory_space<vmem>>, vector<1x1x512xf32>
    %8 = vector.shape_cast %7 : vector<1x1x512xf32> to vector<1x512xf32>
    %9 = vector.broadcast %8 : vector<1x512xf32> to vector<64x512xf32>
    %10 = arith.addf %6, %9 : vector<64x512xf32>
    %cst_9 = arith.constant 0.000000e+00 : f32
    %11 = vector.broadcast %cst_9 : f32 to vector<64x512xf32>
    %12 = arith.maximumf %10, %11 : vector<64x512xf32>
    %13 = arith.truncf %12 : vector<64x512xf32> to vector<64x512xbf16>
    %c0_10 = arith.constant 0 : index
    %c0_11 = arith.constant 0 : index
    %14 = vector.load %arg6[%c0_10, %c0_11] : memref<512x256xbf16, #tpu.memory_space<vmem>>, vector<512x256xbf16>
    %cst_12 = arith.constant dense<0.000000e+00> : vector<64x256xf32>
    %15 = tpu.matmul %13, %14, %cst_12 {dimension_numbers = #tpu.dot_dimension_numbers<[1], [0], [0], [1], [0, 0, 1, 1], [], []>} : vector<64x512xbf16>, vector<512x256xbf16>, vector<64x256xf32> -> vector<64x256xf32>
    %c0_13 = arith.constant 0 : index
    %c0_14 = arith.constant 0 : index
    %16 = vector.load %arg7[%c0_13, %c0_14] : memref<1x256xf32, #tpu.memory_space<vmem>>, vector<1x256xf32>
    %17 = vector.broadcast %16 : vector<1x256xf32> to vector<64x256xf32>
    %18 = arith.addf %15, %17 : vector<64x256xf32>
    %cst_15 = arith.constant 0.000000e+00 : f32
    %19 = vector.broadcast %cst_15 : f32 to vector<64x256xf32>
    %20 = arith.maximumf %18, %19 : vector<64x256xf32>
    %21 = arith.truncf %20 : vector<64x256xf32> to vector<64x256xbf16>
    %c0_16 = arith.constant 0 : index
    %c0_17 = arith.constant 0 : index
    %22 = vector.load %arg8[%c0_16, %c0_17] : memref<256x128xbf16, #tpu.memory_space<vmem>>, vector<256x128xbf16>
    %cst_18 = arith.constant dense<0.000000e+00> : vector<64x128xf32>
    %23 = tpu.matmul %21, %22, %cst_18 {dimension_numbers = #tpu.dot_dimension_numbers<[1], [0], [0], [1], [0, 0, 1, 1], [], []>} : vector<64x256xbf16>, vector<256x128xbf16>, vector<64x128xf32> -> vector<64x128xf32>
    %c0_19 = arith.constant 0 : index
    %c0_20 = arith.constant 0 : index
    %24 = vector.load %arg9[%c0_19, %c0_20] : memref<1x128xf32, #tpu.memory_space<vmem>>, vector<1x128xf32>
    %25 = vector.broadcast %24 : vector<1x128xf32> to vector<64x128xf32>
    %26 = arith.addf %23, %25 : vector<64x128xf32>
    %cst_21 = arith.constant 0.000000e+00 : f32
    %27 = vector.broadcast %cst_21 : f32 to vector<64x128xf32>
    %28 = arith.maximumf %26, %27 : vector<64x128xf32>
    %29 = arith.truncf %28 : vector<64x128xf32> to vector<64x128xbf16>
    %c0_22 = arith.constant 0 : index
    %c0_23 = arith.constant 0 : index
    %30 = vector.load %arg10[%c0_22, %c0_23] : memref<128x2xbf16, #tpu.memory_space<vmem>>, vector<128x2xbf16>
    %cst_24 = arith.constant dense<0.000000e+00> : vector<64x2xf32>
    %31 = tpu.matmul %29, %30, %cst_24 {dimension_numbers = #tpu.dot_dimension_numbers<[1], [0], [0], [1], [0, 0, 1, 1], [], []>} : vector<64x128xbf16>, vector<128x2xbf16>, vector<64x2xf32> -> vector<64x2xf32>
    %c0_25 = arith.constant 0 : index
    %c0_26 = arith.constant 0 : index
    %32 = vector.load %arg11[%c0_25, %c0_26] : memref<1x2xf32, #tpu.memory_space<vmem>>, vector<1x2xf32>
    %33 = vector.broadcast %32 : vector<1x2xf32> to vector<64x2xf32>
    %34 = arith.addf %31, %33 : vector<64x2xf32>
    %cst_27 = arith.constant dense<0xFF800000> : vector<64xf32>
    %35 = vector.multi_reduction <maximumf>, %34, %cst_27 [1] : vector<64x2xf32> to vector<64xf32>
    %36 = vector.shape_cast %35 : vector<64xf32> to vector<64x1xf32>
    %37 = vector.broadcast %36 : vector<64x1xf32> to vector<64x2xf32>
    %38 = arith.subf %34, %37 : vector<64x2xf32>
    %39 = math.exp %38 : vector<64x2xf32>
    %cst_28 = arith.constant dense<0.000000e+00> : vector<64xf32>
    %40 = vector.multi_reduction <add>, %39, %cst_28 [1] : vector<64x2xf32> to vector<64xf32>
    %41 = vector.shape_cast %40 : vector<64xf32> to vector<64x1xf32>
    %42 = math.log %41 : vector<64x1xf32>
    %43 = arith.addf %36, %42 : vector<64x1xf32>
    %44 = vector.broadcast %43 : vector<64x1xf32> to vector<64x2xf32>
    %45 = arith.subf %34, %44 : vector<64x2xf32>
    %c0_29 = arith.constant 0 : index
    %c0_30 = arith.constant 0 : index
    %c0_31 = arith.constant 0 : index
    %46 = vector.load %arg12[%c0_29, %c0_30, %c0_31] : memref<1x64x2xf32, #tpu.memory_space<vmem>>, vector<1x64x2xf32>
    %47 = vector.shape_cast %46 : vector<1x64x2xf32> to vector<64x2xf32>
    %48 = vector.shape_cast %45 : vector<64x2xf32> to vector<1x64x2xf32>
    tpu.vector_store %arg12[%c0_29, %c0_30, %c0_31], %48 {strides = array<i32>} : memref<1x64x2xf32, #tpu.memory_space<vmem>>, vector<1x64x2xf32>,
    return
  }
  func.func @transform_0(%arg0: i32, %arg1: i32) -> (i32, i32, i32) {
    %c0_i32 = arith.constant 0 : i32
    %c0_i32_0 = arith.constant 0 : i32
    return %arg0, %arg1, %c0_i32 : i32, i32, i32
  }
  func.func @transform_1(%arg0: i32, %arg1: i32) -> (i32, i32, i32) {
    %c0_i32 = arith.constant 0 : i32
    %c0_i32_0 = arith.constant 0 : i32
    %c0_i32_1 = arith.constant 0 : i32
    return %arg0, %c0_i32, %c0_i32_0 : i32, i32, i32
  }
  func.func @transform_2(%arg0: i32, %arg1: i32) -> (i32, i32) {
    %c0_i32 = arith.constant 0 : i32
    %c0_i32_0 = arith.constant 0 : i32
    %c0_i32_1 = arith.constant 0 : i32
    return %c0_i32, %c0_i32_0 : i32, i32
  }
  func.func @transform_3(%arg0: i32, %arg1: i32) -> (i32, i32) {
    %c0_i32 = arith.constant 0 : i32
    %c0_i32_0 = arith.constant 0 : i32
    %c0_i32_1 = arith.constant 0 : i32
    return %c0_i32, %c0_i32_0 : i32, i32
  }
  func.func @transform_4(%arg0: i32, %arg1: i32) -> (i32, i32) {
    %c0_i32 = arith.constant 0 : i32
    %c0_i32_0 = arith.constant 0 : i32
    %c0_i32_1 = arith.constant 0 : i32
    return %c0_i32, %c0_i32_0 : i32, i32
  }
  func.func @transform_5(%arg0: i32, %arg1: i32) -> (i32, i32) {
    %c0_i32 = arith.constant 0 : i32
    %c0_i32_0 = arith.constant 0 : i32
    %c0_i32_1 = arith.constant 0 : i32
    return %c0_i32, %c0_i32_0 : i32, i32
  }
  func.func @transform_6(%arg0: i32, %arg1: i32) -> (i32, i32) {
    %c0_i32 = arith.constant 0 : i32
    %c0_i32_0 = arith.constant 0 : i32
    %c0_i32_1 = arith.constant 0 : i32
    return %c0_i32, %c0_i32_0 : i32, i32
  }
  func.func @transform_7(%arg0: i32, %arg1: i32) -> (i32, i32) {
    %c0_i32 = arith.constant 0 : i32
    %c0_i32_0 = arith.constant 0 : i32
    %c0_i32_1 = arith.constant 0 : i32
    return %c0_i32, %c0_i32_0 : i32, i32
  }
  func.func @transform_8(%arg0: i32, %arg1: i32) -> (i32, i32) {
    %c0_i32 = arith.constant 0 : i32
    %c0_i32_0 = arith.constant 0 : i32
    %c0_i32_1 = arith.constant 0 : i32
    return %c0_i32, %c0_i32_0 : i32, i32
  }
  func.func @transform_9(%arg0: i32, %arg1: i32) -> (i32, i32) {
    %c0_i32 = arith.constant 0 : i32
    %c0_i32_0 = arith.constant 0 : i32
    %c0_i32_1 = arith.constant 0 : i32
    return %c0_i32, %c0_i32_0 : i32, i32
  }
  func.func @transform_10(%arg0: i32, %arg1: i32) -> (i32, i32, i32) {
    %c0_i32 = arith.constant 0 : i32
    %c0_i32_0 = arith.constant 0 : i32
    return %arg0, %arg1, %c0_i32 : i32, i32, i32
  }
}

</mosaic_0001>

<llo_original>
// kernel: pointnet_densecls_forward.4
$region0: #{pointnet_densecls_forward.4}
  #allocation0 [shape = 'u32[]', space=smem, size = 0x4, offset = 0x4, fixed_abs, tag = 'smem constant byte address 0x4 - core index']
  #allocation1 [shape = 'u32[144,128]{1,0:T(1,128)}', space=vmem, size = 0x12000, scoped, tag = 'internal scratch']
  %s0 = inlined_call_operand.vmem [shape: bf16[2,64,3], index: 0, kind: input, shape index: {}]
  %s1 = inlined_call_operand.vmem [shape: bf16[2,3,64], index: 1, kind: input, shape index: {}]
  %s2 = inlined_call_operand.hbm [shape: f32[1,64], index: 2, kind: input, shape index: {}]
  %s3 = inlined_call_operand.vmem [shape: bf16[64,128], index: 3, kind: input, shape index: {}]
  %s4 = inlined_call_operand.hbm [shape: f32[1,128], index: 4, kind: input, shape index: {}]
  %s5 = inlined_call_operand.vmem [shape: bf16[128,1024], index: 5, kind: input, shape index: {}]
  %s6 = inlined_call_operand.hbm [shape: f32[1,1024], index: 6, kind: input, shape index: {}]
  %s7 = inlined_call_operand.vmem [shape: f32[2,1,1024], index: 7, kind: output, shape index: {}]
  %s8 = sld [smem:[#allocation0]]
  $region77: #{pointnet_densecls_forward.4} parent=0
    _
  %s10 = ssub.s32 1, %s8
  %s11 = scalar_select 0, %s10, %s8
  $region1: #{pointnet_densecls_forward.4} parent=0
    #allocation2 [shape = 'u8[512]{0}', space=vmem, size = 0x400, scoped, tag = 'input window, operand 2, single buffered']
    #allocation3 [shape = 's32[2]{0}', space=sflag, size = 0x8, scoped, tag = 'scoped memory for pointnet_densecls_forward.4']
    #allocation4 [shape = 'u8[512]{0}', space=vmem, size = 0x400, scoped, tag = 'input window, operand 4, single buffered']
    #allocation5 [shape = 's32[1]{0}', space=sflag, size = 0x4, scoped, tag = 'scoped memory for pointnet_densecls_forward.4']
    #allocation6 [shape = 'u8[4096]{0}', space=vmem, size = 0x1000, scoped, tag = 'input window, operand 6, single buffered']
    %12 = vsyncpa [#allocation3], 0
    %13 = vsyncpa [#allocation5], 0
    loop: start=0, step=1, limit=4
    $region2: #{pointnet_densecls_forward.4} parent=1 // loop_pre_header
      _
    $region3: #{pointnet_densecls_forward.4} parent=1 // loop_header
      %s15 = sphi 0, %s19
      %p16 = scmp.ge.s32.totalorder %s15, 4
      %s22 = sphi 0, %s34
      %s23 = sphi 0, %s30
      %s24 = sphi 0, %s22
      %s25 = sphi 0, %s23
      %s26 = sphi 0, %s24
      %s27 = sphi 0, %s25
      %s39 = sphi 0, %s41
      %s42 = sphi 0, %s39
      %s43 = sphi 0, %s42
      %s59 = sphi 0, %s43
      %s65 = sphi 0, %s67
      %s68 = sphi 0, %s65
      %s69 = sphi 0, %s68
      %s85 = sphi 0, %s69
      %s89 = sphi 0, %s89
      %s91 = sphi 0, %s89
      %s92 = sphi 0, %s91
      %s106 = sphi 0, %s92
      %s110 = sphi 0, %s110
      %s112 = sphi 0, %s110
      %s113 = sphi 0, %s112
      %s127 = sphi 0, %s113
      %s131 = sphi 0, %s131
      %s133 = sphi 0, %s131
      %s134 = sphi 0, %s133
      %s148 = sphi 0, %s134
      %s152 = sphi 0, %s152
      %s154 = sphi 0, %s152
      %s155 = sphi 0, %s154
      %s169 = sphi 0, %s155
      %s173 = sphi 0, %s173
      %s175 = sphi 0, %s173
      %s176 = sphi 0, %s175
      %s190 = sphi 0, %s176
      %s196 = sphi 0, %s198
      %s199 = sphi 0, %s196
      %s200 = sphi 0, %s199
      %s216 = sphi 0, %s200
    $region4: #{pointnet_densecls_forward.4} parent=1 // loop_header_branch
      %18 = sbr.rel (%p16) target = $region8
    $region5: #{pointnet_densecls_forward.4} parent=1 // loop_body
      %s20 = ssub.s32 %s15, 1
      %s21 = ssub.s32 %s15, 2
      %s28 = sadd.s32 1, %s23
      %p29 = scmp.ge.s32.totalorder %s28, 1
      %s30 = scalar_select %p29, 0, %s28
      %s31 = sadd.s32 1, %s22
      %s32 = scalar_select %p29, %s31, %s22
      %p33 = scmp.ge.s32.totalorder %s32, 2
      %s34 = scalar_select %p33, 0, %s32
      %s35 = ssub.s32 %s22, %s34
      %s36 = ssub.s32 %s23, %s30
      %s37 = sor.u32 %s35, %s36
      %p38 = scmp.eq.s32.totalorder %s37, 0
      %s40 = sadd.s32 %s39, 1
      %s41 = scalar_select %p38, %s39, %s40
      %p44 = pneg %p38
      %p45 = scmp.eq.s32.totalorder %s15, 1
      %p46 = por %p44, %p45
      %p47 = scmp.ne.s32.totalorder %s39, %s42
      %p48 = scmp.eq.s32.totalorder %s15, 0
      %p49 = por %p47, %p48
      %p50 = scmp.ne.s32.totalorder %s39, %s42
      %p51 = scmp.eq.s32.totalorder %s20, 1
      %p52 = por %p50, %p51
      %p53 = scmp.ne.s32.totalorder %s42, %s43
      %p54 = scmp.eq.s32.totalorder %s20, 0
      %p55 = por %p53, %p54
      %p56 = scmp.ne.s32.totalorder %s42, %s43
      %p57 = scmp.eq.s32.totalorder %s21, 1
      %p58 = por %p56, %p57
      %p60 = scmp.ne.s32.totalorder %s43, %s59
      %p61 = scmp.eq.s32.totalorder %s21, 0
      %p62 = por %p60, %p61
      %s63 = ssub.s32 %s22, %s34
      %p64 = scmp.eq.s32.totalorder %s63, 0
      %s66 = sadd.s32 %s65, 1
      %s67 = scalar_select %p64, %s65, %s66
      %p70 = pneg %p64
      %p71 = scmp.eq.s32.totalorder %s15, 1
      %p72 = por %p70, %p71
      %p73 = scmp.ne.s32.totalorder %s65, %s68
      %p74 = scmp.eq.s32.totalorder %s15, 0
      %p75 = por %p73, %p74
      %p76 = scmp.ne.s32.totalorder %s65, %s68
      %p77 = scmp.eq.s32.totalorder %s20, 1
      %p78 = por %p76, %p77
      %p79 = scmp.ne.s32.totalorder %s68, %s69
      %p80 = scmp.eq.s32.totalorder %s20, 0
      %p81 = por %p79, %p80
      %p82 = scmp.ne.s32.totalorder %s68, %s69
      %p83 = scmp.eq.s32.totalorder %s21, 1
      %p84 = por %p82, %p83
      %p86 = scmp.ne.s32.totalorder %s69, %s85
      %p87 = scmp.eq.s32.totalorder %s21, 0
      %p88 = por %p86, %p87
      %s90 = sadd.s32 %s89, 1
      %p93 = scmp.eq.s32.totalorder %s15, 1
      %p94 = scmp.ne.s32.totalorder %s89, %s91
      %p95 = scmp.eq.s32.totalorder %s15, 0
      %p96 = por %p94, %p95
      %p97 = scmp.ne.s32.totalorder %s89, %s91
      %p98 = scmp.eq.s32.totalorder %s20, 1
      %p99 = por %p97, %p98
      %p100 = scmp.ne.s32.totalorder %s91, %s92
      %p101 = scmp.eq.s32.totalorder %s20, 0
      %p102 = por %p100, %p101
      %p103 = scmp.ne.s32.totalorder %s91, %s92
      %p104 = scmp.eq.s32.totalorder %s21, 1
      %p105 = por %p103, %p104
      %p107 = scmp.ne.s32.totalorder %s92, %s106
      %p108 = scmp.eq.s32.totalorder %s21, 0
      %p109 = por %p107, %p108
      %s111 = sadd.s32 %s110, 1
      %p114 = scmp.eq.s32.totalorder %s15, 1
      %p115 = scmp.ne.s32.totalorder %s110, %s112
      %p116 = scmp.eq.s32.totalorder %s15, 0
      %p117 = por %p115, %p116
      %p118 = scmp.ne.s32.totalorder %s110, %s112
      %p119 = scmp.eq.s32.totalorder %s20, 1
      %p120 = por %p118, %p119
      %p121 = scmp.ne.s32.totalorder %s112, %s113
      %p122 = scmp.eq.s32.totalorder %s20, 0
      %p123 = por %p121, %p122
      %p124 = scmp.ne.s32.totalorder %s112, %s113
      %p125 = scmp.eq.s32.totalorder %s21, 1
      %p126 = por %p124, %p125
      %p128 = scmp.ne.s32.totalorder %s113, %s127
      %p129 = scmp.eq.s32.totalorder %s21, 0
      %p130 = por %p128, %p129
      %s132 = sadd.s32 %s131, 1
      %p135 = scmp.eq.s32.totalorder %s15, 1
      %p136 = scmp.ne.s32.totalorder %s131, %s133
      %p137 = scmp.eq.s32.totalorder %s15, 0
      %p138 = por %p136, %p137
      %p139 = scmp.ne.s32.totalorder %s131, %s133
      %p140 = scmp.eq.s32.totalorder %s20, 1
      %p141 = por %p139, %p140
      %p142 = scmp.ne.s32.totalorder %s133, %s134
      %p143 = scmp.eq.s32.totalorder %s20, 0
      %p144 = por %p142, %p143
      %p145 = scmp.ne.s32.totalorder %s133, %s134
      %p146 = scmp.eq.s32.totalorder %s21, 1
      %p147 = por %p145, %p146
      %p149 = scmp.ne.s32.totalorder %s134, %s148
      %p150 = scmp.eq.s32.totalorder %s21, 0
      %p151 = por %p149, %p150
      %s153 = sadd.s32 %s152, 1
      %p156 = scmp.eq.s32.totalorder %s15, 1
      %p157 = scmp.ne.s32.totalorder %s152, %s154
      %p158 = scmp.eq.s32.totalorder %s15, 0
      %p159 = por %p157, %p158
      %p160 = scmp.ne.s32.totalorder %s152, %s154
      %p161 = scmp.eq.s32.totalorder %s20, 1
      %p162 = por %p160, %p161
      %p163 = scmp.ne.s32.totalorder %s154, %s155
      %p164 = scmp.eq.s32.totalorder %s20, 0
      %p165 = por %p163, %p164
      %p166 = scmp.ne.s32.totalorder %s154, %s155
      %p167 = scmp.eq.s32.totalorder %s21, 1
      %p168 = por %p166, %p167
      %p170 = scmp.ne.s32.totalorder %s155, %s169
      %p171 = scmp.eq.s32.totalorder %s21, 0
      %p172 = por %p170, %p171
      %s174 = sadd.s32 %s173, 1
      %p177 = scmp.eq.s32.totalorder %s15, 1
      %p178 = scmp.ne.s32.totalorder %s173, %s175
      %p179 = scmp.eq.s32.totalorder %s15, 0
      %p180 = por %p178, %p179
      %p181 = scmp.ne.s32.totalorder %s173, %s175
      %p182 = scmp.eq.s32.totalorder %s20, 1
      %p183 = por %p181, %p182
      %p184 = scmp.ne.s32.totalorder %s175, %s176
      %p185 = scmp.eq.s32.totalorder %s20, 0
      %p186 = por %p184, %p185
      %p187 = scmp.ne.s32.totalorder %s175, %s176
      %p188 = scmp.eq.s32.totalorder %s21, 1
      %p189 = por %p187, %p188
      %p191 = scmp.ne.s32.totalorder %s176, %s190
      %p192 = scmp.eq.s32.totalorder %s21, 0
      %p193 = por %p191, %p192
      %s194 = ssub.s32 %s22, %s34
      %p195 = scmp.eq.s32.totalorder %s194, 0
      %s197 = sadd.s32 %s196, 1
      %s198 = scalar_select %p195, %s196, %s197
      %p201 = pneg %p195
      %p202 = scmp.eq.s32.totalorder %s15, 1
      %p203 = por %p201, %p202
      %p204 = scmp.ne.s32.totalorder %s196, %s199
      %p205 = scmp.eq.s32.totalorder %s15, 0
      %p206 = por %p204, %p205
      %p207 = scmp.ne.s32.totalorder %s196, %s199
      %p208 = scmp.eq.s32.totalorder %s20, 1
      %p209 = por %p207, %p208
      %p210 = scmp.ne.s32.totalorder %s199, %s200
      %p211 = scmp.eq.s32.totalorder %s20, 0
      %p212 = por %p210, %p211
      %p213 = scmp.ne.s32.totalorder %s199, %s200
      %p214 = scmp.eq.s32.totalorder %s21, 1
      %p215 = por %p213, %p214
      %p217 = scmp.ne.s32.totalorder %s200, %s216
      %p218 = scmp.eq.s32.totalorder %s21, 0
      %p219 = por %p217, %p218
      %p220 = scmp.le.s32.totalorder 1, %s15
      %p221 = scmp.lt.s32.totalorder %s15, 3
      %p222 = pnand %p220, %p221
      %p223 = pneg %p222
      // Predicated region
      $region9: #{pointnet_densecls_forward.4} parent=5 // pred_check
        _
      $region10: #{pointnet_densecls_forward.4} parent=5 // pred_check_branch
        %225 = sbr.rel (%p222) target = $region12
      $region11: #{pointnet_densecls_forward.4} parent=5 // pred_region
        %s226 = ssub.s32 %s15, 1
        // Predicated region
        $region13: #{pointnet_densecls_forward.4} parent=11 // pred_check
          %p227 = pneg %p102
        $region14: #{pointnet_densecls_forward.4} parent=11 // pred_check_branch
          %229 = sbr.rel (%p227) target = $region16
        $region15: #{pointnet_densecls_forward.4} parent=11 // pred_region
          %s231 = ssub.s32 16, 16
          %232 = vsyncadd [#allocation3], %s231
          %s234 = sshll.u32 [#allocation2], 4
          %s235 = int_to_ptr.vmem [resolvable:$true] %s234
          %237 = dma.hbm_to_vmem [thread:$0]  %s2, 16, %s235, [#allocation3]
        $region16: #{pointnet_densecls_forward.4} parent=11 // pred_fallthru
          _
        // Predicated region
        $region17: #{pointnet_densecls_forward.4} parent=11 // pred_check
          %p238 = pneg %p123
        $region18: #{pointnet_densecls_forward.4} parent=11 // pred_check_branch
          %240 = sbr.rel (%p238) target = $region20
        $region19: #{pointnet_densecls_forward.4} parent=11 // pred_region
          _
        $region20: #{pointnet_densecls_forward.4} parent=11 // pred_fallthru
          _
        // Predicated region
        $region21: #{pointnet_densecls_forward.4} parent=11 // pred_check
          %p241 = pneg %p144
        $region22: #{pointnet_densecls_forward.4} parent=11 // pred_check_branch
          %243 = sbr.rel (%p241) target = $region24
        $region23: #{pointnet_densecls_forward.4} parent=11 // pred_region
          %s245 = ssub.s32 16, 16
          %246 = vsyncadd [#allocation5], %s245
          %s248 = sshll.u32 [#allocation4], 4
          %s249 = int_to_ptr.vmem [resolvable:$true] %s248
          %251 = dma.hbm_to_vmem [thread:$0]  %s4, 16, %s249, [#allocation5]
        $region24: #{pointnet_densecls_forward.4} parent=11 // pred_fallthru
          _
        // Predicated region
        $region25: #{pointnet_densecls_forward.4} parent=11 // pred_check
          %p252 = pneg %p165
        $region26: #{pointnet_densecls_forward.4} parent=11 // pred_check_branch
          %254 = sbr.rel (%p252) target = $region28
        $region27: #{pointnet_densecls_forward.4} parent=11 // pred_region
          _
        $region28: #{pointnet_densecls_forward.4} parent=11 // pred_fallthru
          _
        // Predicated region
        $region29: #{pointnet_densecls_forward.4} parent=11 // pred_check
          %p255 = pneg %p186
        $region30: #{pointnet_densecls_forward.4} parent=11 // pred_check_branch
          %257 = sbr.rel (%p255) target = $region32
        $region31: #{pointnet_densecls_forward.4} parent=11 // pred_region
          %s259 = ssub.s32 128, 128
          %260 = vsyncadd [#allocation5], %s259
          %s262 = sshll.u32 [#allocation6], 4
          %s263 = int_to_ptr.vmem [resolvable:$true] %s262
          %265 = dma.hbm_to_vmem [thread:$0]  %s6, 128, %s263, [#allocation5]
        $region32: #{pointnet_densecls_forward.4} parent=11 // pred_fallthru
          _
      $region12: #{pointnet_densecls_forward.4} parent=5 // pred_fallthru
        _
      %p266 = scmp.lt.s32.totalorder %s15, 2
      // Predicated region
      $region33: #{pointnet_densecls_forward.4} parent=5 // pred_check
        %p267 = pneg %p266
      $region34: #{pointnet_densecls_forward.4} parent=5 // pred_check_branch
        %269 = sbr.rel (%p267) target = $region36
      $region35: #{pointnet_densecls_forward.4} parent=5 // pred_region
        // Predicated region
        $region37: #{pointnet_densecls_forward.4} parent=35 // pred_check
          %p270 = pneg %p49
        $region38: #{pointnet_densecls_forward.4} parent=35 // pred_check_branch
          %272 = sbr.rel (%p270) target = $region40
        $region39: #{pointnet_densecls_forward.4} parent=35 // pred_region
          %s273 = smul.u32 8, %s23
          %p274 = scmp.lt.s32.totalorder %s22, 1
          %s275 = scalar_select %p274, %s22, 1
          %p276 = scmp.lt.s32.totalorder %s273, 7
          %s277 = scalar_select %p276, %s273, 7
          %s278 = smul.addr %s275, 8
          %s279 = sadd.s32 %s277, %s278
          %s280 = smul.addr %s279, 4
          %s281 = scalar_lea.vmem %s0, %s280
          %s282 = smul.u32 8, %s23
        $region40: #{pointnet_densecls_forward.4} parent=35 // pred_fallthru
          _
        // Predicated region
        $region41: #{pointnet_densecls_forward.4} parent=35 // pred_check
          %p283 = pneg %p75
        $region42: #{pointnet_densecls_forward.4} parent=35 // pred_check_branch
          %285 = sbr.rel (%p283) target = $region44
        $region43: #{pointnet_densecls_forward.4} parent=35 // pred_region
          %p286 = scmp.lt.s32.totalorder %s22, 1
          %s287 = scalar_select %p286, %s22, 1
          %s288 = smul.addr %s287, 2
          %s289 = scalar_lea.vmem %s1, %s288
        $region44: #{pointnet_densecls_forward.4} parent=35 // pred_fallthru
          _
      $region36: #{pointnet_densecls_forward.4} parent=5 // pred_fallthru
        _
      %p290 = scmp.le.s32.totalorder 1, %s15
      %p291 = scmp.lt.s32.totalorder %s15, 3
      %p292 = pnand %p290, %p291
      %p293 = pneg %p292
      // Predicated region
      $region45: #{pointnet_densecls_forward.4} parent=5 // pred_check
        _
      $region46: #{pointnet_densecls_forward.4} parent=5 // pred_check_branch
        %295 = sbr.rel (%p292) target = $region48
      $region47: #{pointnet_densecls_forward.4} parent=5 // pred_region
        %s296 = ssub.s32 %s15, 1
        // Predicated region
        $region49: #{pointnet_densecls_forward.4} parent=47 // pred_check
          %p297 = pneg %p102
        $region50: #{pointnet_densecls_forward.4} parent=47 // pred_check_branch
          %299 = sbr.rel (%p297) target = $region52
        $region51: #{pointnet_densecls_forward.4} parent=47 // pred_region
          %300 = dma.done [#allocation3], 16
        $region52: #{pointnet_densecls_forward.4} parent=47 // pred_fallthru
          _
        // Predicated region
        $region53: #{pointnet_densecls_forward.4} parent=47 // pred_check
          %p301 = pneg %p144
        $region54: #{pointnet_densecls_forward.4} parent=47 // pred_check_branch
          %303 = sbr.rel (%p301) target = $region56
        $region55: #{pointnet_densecls_forward.4} parent=47 // pred_region
          %304 = dma.done [#allocation5], 16
        $region56: #{pointnet_densecls_forward.4} parent=47 // pred_fallthru
          _
        // Predicated region
        $region57: #{pointnet_densecls_forward.4} parent=47 // pred_check
          %p305 = pneg %p186
        $region58: #{pointnet_densecls_forward.4} parent=47 // pred_check_branch
          %307 = sbr.rel (%p305) target = $region60
        $region59: #{pointnet_densecls_forward.4} parent=47 // pred_region
          %308 = dma.done [#allocation5], 128
        $region60: #{pointnet_densecls_forward.4} parent=47 // pred_fallthru
          _
        %s309 = smul.u32 8, %s25
        %p310 = scmp.lt.s32.totalorder %s24, 1
        %s311 = scalar_select %p310, %s24, 1
        %p312 = scmp.lt.s32.totalorder %s309, 7
        %s313 = scalar_select %p312, %s309, 7
        %s314 = smul.addr %s311, 8
        %s315 = sadd.s32 %s313, %s314
        %s316 = smul.addr %s315, 4
        %s317 = scalar_lea.vmem %s0, %s316
        %p318 = pneg %p55
        %p319 = pneg %p52
        %p320 = scmp.lt.s32.totalorder %s24, 1
        %s321 = scalar_select %p320, %s24, 1
        %s322 = smul.addr %s321, 2
        %s323 = scalar_lea.vmem %s1, %s322
        %p324 = pneg %p81
        %p325 = pneg %p78
        %p326 = pneg %p102
        %p327 = pneg %p99
        %p328 = pneg %p123
        %p329 = pneg %p120
        %p330 = pneg %p144
        %p331 = pneg %p141
        %p332 = pneg %p165
        %p333 = pneg %p162
        %p334 = pneg %p186
        %p335 = pneg %p183
        %p336 = pneg %p212
        %p337 = pneg %p209
        %p338 = scmp.lt.s32.totalorder %s24, 1
        %s339 = scalar_select %p338, %s24, 1
        %s340 = smul.addr %s339, 8
        %s341 = scalar_lea.vmem %s7, %s340
        %s342 = smul.u32 8, %s25
        %p343 = scmp.lt.s32.totalorder %s24, 1
        %s344 = scalar_select %p343, %s24, 1
        %p345 = scmp.lt.s32.totalorder %s342, 7
        %s346 = scalar_select %p345, %s342, 7
        %s347 = smul.addr %s344, 8
        %s348 = sadd.s32 %s346, %s347
        %s349 = smul.addr %s348, 4
        %s350 = scalar_lea.vmem %s0, %s349
        %s351 = smul.u32 8, %s25
        %p352 = scmp.lt.s32.totalorder %s24, 1
        %s353 = scalar_select %p352, %s24, 1
        %s354 = smul.addr %s353, 2
        %s355 = scalar_lea.vmem %s1, %s354
        %p356 = scmp.lt.s32.totalorder %s24, 1
        %s357 = scalar_select %p356, %s24, 1
        %s358 = smul.addr %s357, 8
        %s359 = scalar_lea.vmem %s7, %s358
        %v361 = vld [vmem:[%s350] sm:$0xf]
        %v362 = vld [vmem:[%s350 + $0x4] sm:$0xf]
        %v363 = vld [vmem:[%s350 + $0x8] sm:$0xf]
        %v364 = vld [vmem:[%s350 + $0xc] sm:$0xf]
        %v365 = vld [vmem:[%s350 + $0x10] sm:$0xf]
        %v366 = vld [vmem:[%s350 + $0x14] sm:$0xf]
        %v367 = vld [vmem:[%s350 + $0x18] sm:$0xf]
        %v368 = vld [vmem:[%s350 + $0x1c] sm:$0xf]
        %v369 = vld [vmem:[%s355] sm:$0x3]
        %v370 = vld [vmem:[#allocation2] sm:$0x1]
        %v372 = vlaneseq
        %v373 = vshrl.u32 %v372, 7
        %v374 = vsub.s32 0, %v373
        %v375 = vrot.slane %v370, %v374
        %v385 = vunpack.c.l.b16 %v361
        %v386 = vunpack.c.l.b16 %v362
        %v387 = vunpack.c.l.b16 %v363
        %v388 = vunpack.c.l.b16 %v364
        %v389 = vunpack.c.l.b16 %v365
        %v390 = vunpack.c.l.b16 %v366
        %v391 = vunpack.c.l.b16 %v367
        %v392 = vunpack.c.l.b16 %v368
        %v393 = vpack.c.b16 %v386, %v385
        %v394 = vpack.c.b16 %v388, %v387
        %v395 = vpack.c.b16 %v390, %v389
        %v396 = vpack.c.b16 %v392, %v391
        %vm397 = vcmask 23552
        %v399 = vsel %vm397, %v393, 0
        %v402 = vsel %vm397, %v394, 0
        %v405 = vsel %vm397, %v395, 0
        %v408 = vsel %vm397, %v396, 0
        %vm410 = vcmask 1040384
        %vm411 = vcmask 1041408
        %v412 = vsel %vm410, 4294967295, 65535
        %v413 = vsel %vm411, %v412, 0
        %v415 = vand.u32 %v369, %v413
        %417 = vmatprep.subr.bf16.mxu0 0
        %418 = vmatpush1.bf16.msra.mxu0 0
        %419 = vmatprep.subr.bf16.mxu0 0
        %420 = vmatpush1.bf16.msra.mxu0 0
        %421 = vmatprep.subr.bf16.mxu0 0
        %422 = vmatpush1.bf16.msra.mxu0 0
        %423 = vmatprep.subr.bf16.mxu0 0
        %424 = vmatpush1.bf16.msra.mxu0 0
        %425 = vmatprep.subr.bf16.mxu0 0
        %426 = vmatpush1.bf16.msra.mxu0 0
        %427 = vmatprep.subr.bf16.mxu0 0
        %428 = vmatpush1.bf16.msra.mxu0 0
        %429 = vmatprep.subr.bf16.mxu0 0
        %430 = vmatpush1.bf16.msra.mxu0 0
        %431 = vmatprep.subr.bf16.mxu0 0
        %432 = vmatpush1.bf16.msra.mxu0 %v415
        %433 = vmatprep.subr.bf16.mxu0 0
        %434 = vmatpush2.bf16.msra.mxu0 0
        %435 = vmatprep.subr.bf16.mxu0 0
        %436 = vmatpush2.bf16.msra.mxu0 0
        %437 = vmatprep.subr.bf16.mxu0 0
        %438 = vmatpush2.bf16.msra.mxu0 0
        %439 = vmatprep.subr.bf16.mxu0 0
        %440 = vmatpush2.bf16.msra.mxu0 0
        %441 = vmatprep.subr.bf16.mxu0 0
        %442 = vmatpush2.bf16.msra.mxu0 0
        %443 = vmatprep.subr.bf16.mxu0 0
        %444 = vmatpush2.bf16.msra.mxu0 0
        %445 = vmatprep.subr.bf16.mxu0 0
        %446 = vmatpush2.bf16.msra.mxu0 0
        %447 = vmatprep.subr.bf16.mxu0 0
        %448 = vmatpush2.bf16.msra.mxu0 0
        %449 = vmatprep.mubr.bf16.mxu0 0
        %450 = vmatmul.mubr.bf16.gmra.mxu0 %v399
        %v451 = vpop.f32.mrf.mxu0
        %v452 = vadd.f32 %v375, %v451
        %v453 = vpop.f32.mrf.mxu0
        %v454 = vpop.f32.mrf.mxu0
        %v455 = vadd.f32 %v375, %v454
        %v456 = vpop.f32.mrf.mxu0
        %457 = vmatprep.mubr.bf16.mxu0 0
        %458 = vmatmul.mubr.bf16.gmra.mxu0 %v402
        %v459 = vpop.f32.mrf.mxu0
        %v460 = vadd.f32 %v375, %v459
        %v461 = vpop.f32.mrf.mxu0
        %v462 = vpop.f32.mrf.mxu0
        %v463 = vadd.f32 %v375, %v462
        %v464 = vpop.f32.mrf.mxu0
        %465 = vmatprep.mubr.bf16.mxu0 0
        %466 = vmatmul.mubr.bf16.gmra.mxu0 %v405
        %v467 = vpop.f32.mrf.mxu0
        %v468 = vadd.f32 %v375, %v467
        %v469 = vpop.f32.mrf.mxu0
        %v470 = vpop.f32.mrf.mxu0
        %v471 = vadd.f32 %v375, %v470
        %v472 = vpop.f32.mrf.mxu0
        %473 = vmatprep.mubr.bf16.mxu0 0
        %474 = vmatmul.mubr.bf16.gmra.mxu0 %v408
        %v475 = vpop.f32.mrf.mxu0
        %v476 = vadd.f32 %v375, %v475
        %v477 = vpop.f32.mrf.mxu0
        %v478 = vpop.f32.mrf.mxu0
        %v479 = vadd.f32 %v375, %v478
        %v480 = vpop.f32.mrf.mxu0
        %481 = vdwg.mxu0
        %v482 = vmax.f32 %v452, 0.0
        %v483 = vmax.f32 %v455, 0.0
        %v484 = vmax.f32 %v460, 0.0
        %v485 = vmax.f32 %v463, 0.0
        %v486 = vmax.f32 %v468, 0.0
        %v487 = vmax.f32 %v471, 0.0
        %v488 = vmax.f32 %v476, 0.0
        %v489 = vmax.f32 %v479, 0.0
        %v490 = vpack.c.bf16 %v483, %v482
        %v491 = vpack.c.bf16 %v485, %v484
        %v492 = vpack.c.bf16 %v487, %v486
        %v493 = vpack.c.bf16 %v489, %v488
        %v494 = vld [vmem:[%s3] sm:$0xf]
        %v495 = vld [vmem:[%s3 + $0x4] sm:$0xf]
        %v496 = vld [vmem:[%s3 + $0x8] sm:$0xf]
        %v497 = vld [vmem:[%s3 + $0xc] sm:$0xf]
        %v498 = vld [vmem:[%s3 + $0x10] sm:$0xf]
        %v499 = vld [vmem:[%s3 + $0x14] sm:$0xf]
        %v500 = vld [vmem:[%s3 + $0x18] sm:$0xf]
        %v501 = vld [vmem:[%s3 + $0x1c] sm:$0xf]
        %v502 = vld [vmem:[#allocation4] sm:$0x1]
        %v504 = vlaneseq
        %v505 = vshrl.u32 %v504, 7
        %v506 = vsub.s32 0, %v505
        %v507 = vrot.slane %v502, %v506
        %v517 = vunpack.c.l.b16 %v494
        %v518 = vunpack.c.l.b16 %v495
        %v519 = vunpack.c.l.b16 %v496
        %v520 = vunpack.c.l.b16 %v497
        %v521 = vunpack.c.l.b16 %v498
        %v522 = vunpack.c.l.b16 %v499
        %v523 = vunpack.c.l.b16 %v500
        %v524 = vunpack.c.l.b16 %v501
        %v525 = vpack.c.b16 %v518, %v517
        %v526 = vpack.c.b16 %v520, %v519
        %v527 = vpack.c.b16 %v522, %v521
        %v528 = vpack.c.b16 %v524, %v523
        %vm533 = vcmask 523264
        %v535 = vsel %vm533, %v490, 0
        %v538 = vsel %vm533, %v491, 0
        %v541 = vsel %vm533, %v492, 0
        %v544 = vsel %vm533, %v493, 0
        %546 = vmatprep.subr.bf16.mxu0 0
        %547 = vmatpush1.bf16.msra.mxu0 0
        %548 = vmatprep.subr.bf16.mxu0 0
        %549 = vmatpush1.bf16.msra.mxu0 0
        %550 = vmatprep.subr.bf16.mxu0 0
        %551 = vmatpush1.bf16.msra.mxu0 0
        %552 = vmatprep.subr.bf16.mxu0 0
        %553 = vmatpush1.bf16.msra.mxu0 0
        %554 = vmatprep.subr.bf16.mxu0 0
        %555 = vmatpush1.bf16.msra.mxu0 %v528
        %556 = vmatprep.subr.bf16.mxu0 0
        %557 = vmatpush1.bf16.msra.mxu0 %v527
        %558 = vmatprep.subr.bf16.mxu0 0
        %559 = vmatpush1.bf16.msra.mxu0 %v526
        %560 = vmatprep.subr.bf16.mxu0 0
        %561 = vmatpush1.bf16.msra.mxu0 %v525
        %562 = vmatprep.subr.bf16.mxu0 0
        %563 = vmatpush2.bf16.msra.mxu0 0
        %564 = vmatprep.subr.bf16.mxu0 0
        %565 = vmatpush2.bf16.msra.mxu0 0
        %566 = vmatprep.subr.bf16.mxu0 0
        %567 = vmatpush2.bf16.msra.mxu0 0
        %568 = vmatprep.subr.bf16.mxu0 0
        %569 = vmatpush2.bf16.msra.mxu0 0
        %570 = vmatprep.subr.bf16.mxu0 0
        %571 = vmatpush2.bf16.msra.mxu0 0
        %572 = vmatprep.subr.bf16.mxu0 0
        %573 = vmatpush2.bf16.msra.mxu0 0
        %574 = vmatprep.subr.bf16.mxu0 0
        %575 = vmatpush2.bf16.msra.mxu0 0
        %576 = vmatprep.subr.bf16.mxu0 0
        %577 = vmatpush2.bf16.msra.mxu0 0
        %578 = vmatprep.mubr.bf16.mxu0 0
        %579 = vmatmul.mubr.bf16.gmra.mxu0 %v535
        %v580 = vpop.f32.mrf.mxu0
        %v581 = vadd.f32 %v507, %v580
        %v582 = vpop.f32.mrf.mxu0
        %v583 = vpop.f32.mrf.mxu0
        %v584 = vadd.f32 %v507, %v583
        %v585 = vpop.f32.mrf.mxu0
        %586 = vmatprep.mubr.bf16.mxu0 0
        %587 = vmatmul.mubr.bf16.gmra.mxu0 %v538
        %v588 = vpop.f32.mrf.mxu0
        %v589 = vadd.f32 %v507, %v588
        %v590 = vpop.f32.mrf.mxu0
        %v591 = vpop.f32.mrf.mxu0
        %v592 = vadd.f32 %v507, %v591
        %v593 = vpop.f32.mrf.mxu0
        %594 = vmatprep.mubr.bf16.mxu0 0
        %595 = vmatmul.mubr.bf16.gmra.mxu0 %v541
        %v596 = vpop.f32.mrf.mxu0
        %v597 = vadd.f32 %v507, %v596
        %v598 = vpop.f32.mrf.mxu0
        %v599 = vpop.f32.mrf.mxu0
        %v600 = vadd.f32 %v507, %v599
        %v601 = vpop.f32.mrf.mxu0
        %602 = vmatprep.mubr.bf16.mxu0 0
        %603 = vmatmul.mubr.bf16.gmra.mxu0 %v544
        %v604 = vpop.f32.mrf.mxu0
        %v605 = vadd.f32 %v507, %v604
        %v606 = vpop.f32.mrf.mxu0
        %v607 = vpop.f32.mrf.mxu0
        %v608 = vadd.f32 %v507, %v607
        %v609 = vpop.f32.mrf.mxu0
        %610 = vdwg.mxu0
        %v611 = vmax.f32 %v581, 0.0
        %v612 = vmax.f32 %v584, 0.0
        %v613 = vmax.f32 %v589, 0.0
        %v614 = vmax.f32 %v592, 0.0
        %v615 = vmax.f32 %v597, 0.0
        %v616 = vmax.f32 %v600, 0.0
        %v617 = vmax.f32 %v605, 0.0
        %v618 = vmax.f32 %v608, 0.0
        %v619 = vpack.c.bf16 %v612, %v611
        %v620 = vpack.c.bf16 %v614, %v613
        %v621 = vpack.c.bf16 %v616, %v615
        %v622 = vpack.c.bf16 %v618, %v617
        %v623 = vld [vmem:[%s5] sm:$0xff]
        %v624 = vld [vmem:[%s5 + $0x8] sm:$0xff]
        %v625 = vld [vmem:[%s5 + $0x10] sm:$0xff]
        %v626 = vld [vmem:[%s5 + $0x18] sm:$0xff]
        %v627 = vld [vmem:[%s5 + $0x20] sm:$0xff]
        %v628 = vld [vmem:[%s5 + $0x28] sm:$0xff]
        %v629 = vld [vmem:[%s5 + $0x30] sm:$0xff]
        %v630 = vld [vmem:[%s5 + $0x38] sm:$0xff]
        %v631 = vld [vmem:[%s5 + $0x40] sm:$0xff]
        %v632 = vld [vmem:[%s5 + $0x48] sm:$0xff]
        %v633 = vld [vmem:[%s5 + $0x50] sm:$0xff]
        %v634 = vld [vmem:[%s5 + $0x58] sm:$0xff]
        %v635 = vld [vmem:[%s5 + $0x60] sm:$0xff]
        %v636 = vld [vmem:[%s5 + $0x68] sm:$0xff]
        %v637 = vld [vmem:[%s5 + $0x70] sm:$0xff]
        %v638 = vld [vmem:[%s5 + $0x78] sm:$0xff]
        %v639 = vld [vmem:[%s5 + $0x80] sm:$0xff]
        %v640 = vld [vmem:[%s5 + $0x88] sm:$0xff]
        %v641 = vld [vmem:[%s5 + $0x90] sm:$0xff]
        %v642 = vld [vmem:[%s5 + $0x98] sm:$0xff]
        %v643 = vld [vmem:[%s5 + $0xa0] sm:$0xff]
        %v644 = vld [vmem:[%s5 + $0xa8] sm:$0xff]
        %v645 = vld [vmem:[%s5 + $0xb0] sm:$0xff]
        %v646 = vld [vmem:[%s5 + $0xb8] sm:$0xff]
        %v647 = vld [vmem:[%s5 + $0xc0] sm:$0xff]
        %v648 = vld [vmem:[%s5 + $0xc8] sm:$0xff]
        %v649 = vld [vmem:[%s5 + $0xd0] sm:$0xff]
        %v650 = vld [vmem:[%s5 + $0xd8] sm:$0xff]
        %v651 = vld [vmem:[%s5 + $0xe0] sm:$0xff]
        %v652 = vld [vmem:[%s5 + $0xe8] sm:$0xff]
        %v653 = vld [vmem:[%s5 + $0xf0] sm:$0xff]
        %v654 = vld [vmem:[%s5 + $0xf8] sm:$0xff]
        %v655 = vld [vmem:[%s5 + $0x100] sm:$0xff]
        %v656 = vld [vmem:[%s5 + $0x108] sm:$0xff]
        %v657 = vld [vmem:[%s5 + $0x110] sm:$0xff]
        %v658 = vld [vmem:[%s5 + $0x118] sm:$0xff]
        %v659 = vld [vmem:[%s5 + $0x120] sm:$0xff]
        %v660 = vld [vmem:[%s5 + $0x128] sm:$0xff]
        %v661 = vld [vmem:[%s5 + $0x130] sm:$0xff]
        %v662 = vld [vmem:[%s5 + $0x138] sm:$0xff]
        %v663 = vld [vmem:[%s5 + $0x140] sm:$0xff]
        %v664 = vld [vmem:[%s5 + $0x148] sm:$0xff]
        %v665 = vld [vmem:[%s5 + $0x150] sm:$0xff]
        %v666 = vld [vmem:[%s5 + $0x158] sm:$0xff]
        %v667 = vld [vmem:[%s5 + $0x160] sm:$0xff]
        %v668 = vld [vmem:[%s5 + $0x168] sm:$0xff]
        %v669 = vld [vmem:[%s5 + $0x170] sm:$0xff]
        %v670 = vld [vmem:[%s5 + $0x178] sm:$0xff]
        %v671 = vld [vmem:[%s5 + $0x180] sm:$0xff]
        %v672 = vld [vmem:[%s5 + $0x188] sm:$0xff]
        %v673 = vld [vmem:[%s5 + $0x190] sm:$0xff]
        %v674 = vld [vmem:[%s5 + $0x198] sm:$0xff]
        %v675 = vld [vmem:[%s5 + $0x1a0] sm:$0xff]
        %v676 = vld [vmem:[%s5 + $0x1a8] sm:$0xff]
        %v677 = vld [vmem:[%s5 + $0x1b0] sm:$0xff]
        %v678 = vld [vmem:[%s5 + $0x1b8] sm:$0xff]
        %v679 = vld [vmem:[%s5 + $0x1c0] sm:$0xff]
        %v680 = vld [vmem:[%s5 + $0x1c8] sm:$0xff]
        %v681 = vld [vmem:[%s5 + $0x1d0] sm:$0xff]
        %v682 = vld [vmem:[%s5 + $0x1d8] sm:$0xff]
        %v683 = vld [vmem:[%s5 + $0x1e0] sm:$0xff]
        %v684 = vld [vmem:[%s5 + $0x1e8] sm:$0xff]
        %v685 = vld [vmem:[%s5 + $0x1f0] sm:$0xff]
        %v686 = vld [vmem:[%s5 + $0x1f8] sm:$0xff]
        %v687 = vld [vmem:[#allocation6] sm:$0xff]
        %v689 = vlaneseq
        %v690 = vshrl.u32 %v689, 7
        %v691 = vsub.s32 0, %v690
        %v692 = vrot.slane %v687, %v691
        %v693 = vlaneseq
        %v694 = vshrl.u32 %v693, 7
        %v695 = vsub.s32 1, %v694
        %v696 = vrot.slane %v687, %v695
        %v697 = vlaneseq
        %v698 = vshrl.u32 %v697, 7
        %v699 = vsub.s32 2, %v698
        %v700 = vrot.slane %v687, %v699
        %v701 = vlaneseq
        %v702 = vshrl.u32 %v701, 7
        %v703 = vsub.s32 3, %v702
        %v704 = vrot.slane %v687, %v703
        %v705 = vlaneseq
        %v706 = vshrl.u32 %v705, 7
        %v707 = vsub.s32 4, %v706
        %v708 = vrot.slane %v687, %v707
        %v709 = vlaneseq
        %v710 = vshrl.u32 %v709, 7
        %v711 = vsub.s32 5, %v710
        %v712 = vrot.slane %v687, %v711
        %v713 = vlaneseq
        %v714 = vshrl.u32 %v713, 7
        %v715 = vsub.s32 6, %v714
        %v716 = vrot.slane %v687, %v715
        %v717 = vlaneseq
        %v718 = vshrl.u32 %v717, 7
        %v719 = vsub.s32 7, %v718
        %v720 = vrot.slane %v687, %v719
        %v793 = vunpack.c.l.b16 %v623
        %v794 = vunpack.c.h.b16 %v623
        %v795 = vunpack.c.l.b16 %v624
        %v796 = vunpack.c.h.b16 %v624
        %v797 = vunpack.c.l.b16 %v625
        %v798 = vunpack.c.h.b16 %v625
        %v799 = vunpack.c.l.b16 %v626
        %v800 = vunpack.c.h.b16 %v626
        %v801 = vunpack.c.l.b16 %v627
        %v802 = vunpack.c.h.b16 %v627
        %v803 = vunpack.c.l.b16 %v628
        %v804 = vunpack.c.h.b16 %v628
        %v805 = vunpack.c.l.b16 %v629
        %v806 = vunpack.c.h.b16 %v629
        %v807 = vunpack.c.l.b16 %v630
        %v808 = vunpack.c.h.b16 %v630
        %v809 = vunpack.c.l.b16 %v631
        %v810 = vunpack.c.h.b16 %v631
        %v811 = vunpack.c.l.b16 %v632
        %v812 = vunpack.c.h.b16 %v632
        %v813 = vunpack.c.l.b16 %v633
        %v814 = vunpack.c.h.b16 %v633
        %v815 = vunpack.c.l.b16 %v634
        %v816 = vunpack.c.h.b16 %v634
        %v817 = vunpack.c.l.b16 %v635
        %v818 = vunpack.c.h.b16 %v635
        %v819 = vunpack.c.l.b16 %v636
        %v820 = vunpack.c.h.b16 %v636
        %v821 = vunpack.c.l.b16 %v637
        %v822 = vunpack.c.h.b16 %v637
        %v823 = vunpack.c.l.b16 %v638
        %v824 = vunpack.c.h.b16 %v638
        %v825 = vunpack.c.l.b16 %v639
        %v826 = vunpack.c.h.b16 %v639
        %v827 = vunpack.c.l.b16 %v640
        %v828 = vunpack.c.h.b16 %v640
        %v829 = vunpack.c.l.b16 %v641
        %v830 = vunpack.c.h.b16 %v641
        %v831 = vunpack.c.l.b16 %v642
        %v832 = vunpack.c.h.b16 %v642
        %v833 = vunpack.c.l.b16 %v643
        %v834 = vunpack.c.h.b16 %v643
        %v835 = vunpack.c.l.b16 %v644
        %v836 = vunpack.c.h.b16 %v644
        %v837 = vunpack.c.l.b16 %v645
        %v838 = vunpack.c.h.b16 %v645
        %v839 = vunpack.c.l.b16 %v646
        %v840 = vunpack.c.h.b16 %v646
        %v841 = vunpack.c.l.b16 %v647
        %v842 = vunpack.c.h.b16 %v647
        %v843 = vunpack.c.l.b16 %v648
        %v844 = vunpack.c.h.b16 %v648
        %v845 = vunpack.c.l.b16 %v649
        %v846 = vunpack.c.h.b16 %v649
        %v847 = vunpack.c.l.b16 %v650
        %v848 = vunpack.c.h.b16 %v650
        %v849 = vunpack.c.l.b16 %v651
        %v850 = vunpack.c.h.b16 %v651
        %v851 = vunpack.c.l.b16 %v652
        %v852 = vunpack.c.h.b16 %v652
        %v853 = vunpack.c.l.b16 %v653
        %v854 = vunpack.c.h.b16 %v653
        %v855 = vunpack.c.l.b16 %v654
        %v856 = vunpack.c.h.b16 %v654
        %v857 = vunpack.c.l.b16 %v655
        %v858 = vunpack.c.h.b16 %v655
        %v859 = vunpack.c.l.b16 %v656
        %v860 = vunpack.c.h.b16 %v656
        %v861 = vunpack.c.l.b16 %v657
        %v862 = vunpack.c.h.b16 %v657
        %v863 = vunpack.c.l.b16 %v658
        %v864 = vunpack.c.h.b16 %v658
        %v865 = vunpack.c.l.b16 %v659
        %v866 = vunpack.c.h.b16 %v659
        %v867 = vunpack.c.l.b16 %v660
        %v868 = vunpack.c.h.b16 %v660
        %v869 = vunpack.c.l.b16 %v661
        %v870 = vunpack.c.h.b16 %v661
        %v871 = vunpack.c.l.b16 %v662
        %v872 = vunpack.c.h.b16 %v662
        %v873 = vunpack.c.l.b16 %v663
        %v874 = vunpack.c.h.b16 %v663
        %v875 = vunpack.c.l.b16 %v664
        %v876 = vunpack.c.h.b16 %v664
        %v877 = vunpack.c.l.b16 %v665
        %v878 = vunpack.c.h.b16 %v665
        %v879 = vunpack.c.l.b16 %v666
        %v880 = vunpack.c.h.b16 %v666
        %v881 = vunpack.c.l.b16 %v667
        %v882 = vunpack.c.h.b16 %v667
        %v883 = vunpack.c.l.b16 %v668
        %v884 = vunpack.c.h.b16 %v668
        %v885 = vunpack.c.l.b16 %v669
        %v886 = vunpack.c.h.b16 %v669
        %v887 = vunpack.c.l.b16 %v670
        %v888 = vunpack.c.h.b16 %v670
        %v889 = vunpack.c.l.b16 %v671
        %v890 = vunpack.c.h.b16 %v671
        %v891 = vunpack.c.l.b16 %v672
        %v892 = vunpack.c.h.b16 %v672
        %v893 = vunpack.c.l.b16 %v673
        %v894 = vunpack.c.h.b16 %v673
        %v895 = vunpack.c.l.b16 %v674
        %v896 = vunpack.c.h.b16 %v674
        %v897 = vunpack.c.l.b16 %v675
        %v898 = vunpack.c.h.b16 %v675
        %v899 = vunpack.c.l.b16 %v676
        %v900 = vunpack.c.h.b16 %v676
        %v901 = vunpack.c.l.b16 %v677
        %v902 = vunpack.c.h.b16 %v677
        %v903 = vunpack.c.l.b16 %v678
        %v904 = vunpack.c.h.b16 %v678
        %v905 = vunpack.c.l.b16 %v679
        %v906 = vunpack.c.h.b16 %v679
        %v907 = vunpack.c.l.b16 %v680
        %v908 = vunpack.c.h.b16 %v680
        %v909 = vunpack.c.l.b16 %v681
        %v910 = vunpack.c.h.b16 %v681
        %v911 = vunpack.c.l.b16 %v682
        %v912 = vunpack.c.h.b16 %v682
        %v913 = vunpack.c.l.b16 %v683
        %v914 = vunpack.c.h.b16 %v683
        %v915 = vunpack.c.l.b16 %v684
        %v916 = vunpack.c.h.b16 %v684
        %v917 = vunpack.c.l.b16 %v685
        %v918 = vunpack.c.h.b16 %v685
        %v919 = vunpack.c.l.b16 %v686
        %v920 = vunpack.c.h.b16 %v686
        %v921 = vpack.c.b16 %v801, %v793
        %v922 = vpack.c.b16 %v802, %v794
        %v923 = vpack.c.b16 %v803, %v795
        %v924 = vpack.c.b16 %v804, %v796
        %v925 = vpack.c.b16 %v805, %v797
        %v926 = vpack.c.b16 %v806, %v798
        %v927 = vpack.c.b16 %v807, %v799
        %v928 = vpack.c.b16 %v808, %v800
        %v929 = vpack.c.b16 %v817, %v809
        %v930 = vpack.c.b16 %v818, %v810
        %v931 = vpack.c.b16 %v819, %v811
        %v932 = vpack.c.b16 %v820, %v812
        %v933 = vpack.c.b16 %v821, %v813
        %v934 = vpack.c.b16 %v822, %v814
        %v935 = vpack.c.b16 %v823, %v815
        %v936 = vpack.c.b16 %v824, %v816
        %v937 = vpack.c.b16 %v833, %v825
        %v938 = vpack.c.b16 %v834, %v826
        %v939 = vpack.c.b16 %v835, %v827
        %v940 = vpack.c.b16 %v836, %v828
        %v941 = vpack.c.b16 %v837, %v829
        %v942 = vpack.c.b16 %v838, %v830
        %v943 = vpack.c.b16 %v839, %v831
        %v944 = vpack.c.b16 %v840, %v832
        %v945 = vpack.c.b16 %v849, %v841
        %v946 = vpack.c.b16 %v850, %v842
        %v947 = vpack.c.b16 %v851, %v843
        %v948 = vpack.c.b16 %v852, %v844
        %v949 = vpack.c.b16 %v853, %v845
        %v950 = vpack.c.b16 %v854, %v846
        %v951 = vpack.c.b16 %v855, %v847
        %v952 = vpack.c.b16 %v856, %v848
        %v953 = vpack.c.b16 %v865, %v857
        %v954 = vpack.c.b16 %v866, %v858
        %v955 = vpack.c.b16 %v867, %v859
        %v956 = vpack.c.b16 %v868, %v860
        %v957 = vpack.c.b16 %v869, %v861
        %v958 = vpack.c.b16 %v870, %v862
        %v959 = vpack.c.b16 %v871, %v863
        %v960 = vpack.c.b16 %v872, %v864
        %v961 = vpack.c.b16 %v881, %v873
        %v962 = vpack.c.b16 %v882, %v874
        %v963 = vpack.c.b16 %v883, %v875
        %v964 = vpack.c.b16 %v884, %v876
        %v965 = vpack.c.b16 %v885, %v877
        %v966 = vpack.c.b16 %v886, %v878
        %v967 = vpack.c.b16 %v887, %v879
        %v968 = vpack.c.b16 %v888, %v880
        %v969 = vpack.c.b16 %v897, %v889
        %v970 = vpack.c.b16 %v898, %v890
        %v971 = vpack.c.b16 %v899, %v891
        %v972 = vpack.c.b16 %v900, %v892
        %v973 = vpack.c.b16 %v901, %v893
        %v974 = vpack.c.b16 %v902, %v894
        %v975 = vpack.c.b16 %v903, %v895
        %v976 = vpack.c.b16 %v904, %v896
        %v977 = vpack.c.b16 %v913, %v905
        %v978 = vpack.c.b16 %v914, %v906
        %v979 = vpack.c.b16 %v915, %v907
        %v980 = vpack.c.b16 %v916, %v908
        %v981 = vpack.c.b16 %v917, %v909
        %v982 = vpack.c.b16 %v918, %v910
        %v983 = vpack.c.b16 %v919, %v911
        %v984 = vpack.c.b16 %v920, %v912
        %1049 = vmatprep.subr.bf16.mxu0 %v978
        %1050 = vmatpush1.bf16.msra.mxu0 %v977
        %1051 = vmatprep.subr.bf16.mxu0 %v970
        %1052 = vmatpush1.bf16.msra.mxu0 %v969
        %1053 = vmatprep.subr.bf16.mxu0 %v962
        %1054 = vmatpush1.bf16.msra.mxu0 %v961
        %1055 = vmatprep.subr.bf16.mxu0 %v954
        %1056 = vmatpush1.bf16.msra.mxu0 %v953
        %1057 = vmatprep.subr.bf16.mxu0 %v946
        %1058 = vmatpush1.bf16.msra.mxu0 %v945
        %1059 = vmatprep.subr.bf16.mxu0 %v938
        %1060 = vmatpush1.bf16.msra.mxu0 %v937
        %1061 = vmatprep.subr.bf16.mxu0 %v930
        %1062 = vmatpush1.bf16.msra.mxu0 %v929
        %1063 = vmatprep.subr.bf16.mxu0 %v922
        %1064 = vmatpush1.bf16.msra.mxu0 %v921
        %1065 = vmatprep.subr.bf16.mxu0 0
        %1066 = vmatpush2.bf16.msra.mxu0 0
        %1067 = vmatprep.subr.bf16.mxu0 0
        %1068 = vmatpush2.bf16.msra.mxu0 0
        %1069 = vmatprep.subr.bf16.mxu0 0
        %1070 = vmatpush2.bf16.msra.mxu0 0
        %1071 = vmatprep.subr.bf16.mxu0 0
        %1072 = vmatpush2.bf16.msra.mxu0 0
        %1073 = vmatprep.subr.bf16.mxu0 0
        %1074 = vmatpush2.bf16.msra.mxu0 0
        %1075 = vmatprep.subr.bf16.mxu0 0
        %1076 = vmatpush2.bf16.msra.mxu0 0
        %1077 = vmatprep.subr.bf16.mxu0 0
        %1078 = vmatpush2.bf16.msra.mxu0 0
        %1079 = vmatprep.subr.bf16.mxu0 0
        %1080 = vmatpush2.bf16.msra.mxu0 0
        %1081 = vmatprep.mubr.bf16.mxu0 0
        %1082 = vmatmul.mubr.bf16.gmra.mxu0 %v619
        %v1083 = vpop.f32.mrf.mxu0
        %v1084 = vadd.f32 %v692, %v1083
        %v1085 = vpop.f32.mrf.mxu0
        %v1086 = vadd.f32 %v696, %v1085
        %v1087 = vpop.f32.mrf.mxu0
        %v1088 = vadd.f32 %v692, %v1087
        %v1089 = vpop.f32.mrf.mxu0
        %v1090 = vadd.f32 %v696, %v1089
        %1091 = vmatprep.mubr.bf16.mxu0 0
        %1092 = vmatmul.mubr.bf16.gmra.mxu0 %v620
        %v1093 = vpop.f32.mrf.mxu0
        %v1094 = vadd.f32 %v692, %v1093
        %v1095 = vpop.f32.mrf.mxu0
        %v1096 = vadd.f32 %v696, %v1095
        %v1097 = vpop.f32.mrf.mxu0
        %v1098 = vadd.f32 %v692, %v1097
        %v1099 = vpop.f32.mrf.mxu0
        %v1100 = vadd.f32 %v696, %v1099
        %1101 = vmatprep.mubr.bf16.mxu0 0
        %1102 = vmatmul.mubr.bf16.gmra.mxu0 %v621
        %v1103 = vpop.f32.mrf.mxu0
        %v1104 = vadd.f32 %v692, %v1103
        %v1105 = vpop.f32.mrf.mxu0
        %v1106 = vadd.f32 %v696, %v1105
        %v1107 = vpop.f32.mrf.mxu0
        %v1108 = vadd.f32 %v692, %v1107
        %v1109 = vpop.f32.mrf.mxu0
        %v1110 = vadd.f32 %v696, %v1109
        %1111 = vmatprep.mubr.bf16.mxu0 0
        %1112 = vmatmul.mubr.bf16.gmra.mxu0 %v622
        %v1113 = vpop.f32.mrf.mxu0
        %v1114 = vadd.f32 %v692, %v1113
        %v1115 = vpop.f32.mrf.mxu0
        %v1116 = vadd.f32 %v696, %v1115
        %v1117 = vpop.f32.mrf.mxu0
        %v1118 = vadd.f32 %v692, %v1117
        %v1119 = vpop.f32.mrf.mxu0
        %v1120 = vadd.f32 %v696, %v1119
        %1121 = vdwg.mxu0
        %1122 = vmatprep.subr.bf16.mxu0 %v980
        %1123 = vmatpush1.bf16.msra.mxu0 %v979
        %1124 = vmatprep.subr.bf16.mxu0 %v972
        %1125 = vmatpush1.bf16.msra.mxu0 %v971
        %1126 = vmatprep.subr.bf16.mxu0 %v964
        %1127 = vmatpush1.bf16.msra.mxu0 %v963
        %1128 = vmatprep.subr.bf16.mxu0 %v956
        %1129 = vmatpush1.bf16.msra.mxu0 %v955
        %1130 = vmatprep.subr.bf16.mxu0 %v948
        %1131 = vmatpush1.bf16.msra.mxu0 %v947
        %1132 = vmatprep.subr.bf16.mxu0 %v940
        %1133 = vmatpush1.bf16.msra.mxu0 %v939
        %1134 = vmatprep.subr.bf16.mxu0 %v932
        %1135 = vmatpush1.bf16.msra.mxu0 %v931
        %1136 = vmatprep.subr.bf16.mxu0 %v924
        %1137 = vmatpush1.bf16.msra.mxu0 %v923
        %1138 = vmatprep.subr.bf16.mxu0 0
        %1139 = vmatpush2.bf16.msra.mxu0 0
        %1140 = vmatprep.subr.bf16.mxu0 0
        %1141 = vmatpush2.bf16.msra.mxu0 0
        %1142 = vmatprep.subr.bf16.mxu0 0
        %1143 = vmatpush2.bf16.msra.mxu0 0
        %1144 = vmatprep.subr.bf16.mxu0 0
        %1145 = vmatpush2.bf16.msra.mxu0 0
        %1146 = vmatprep.subr.bf16.mxu0 0
        %1147 = vmatpush2.bf16.msra.mxu0 0
        %1148 = vmatprep.subr.bf16.mxu0 0
        %1149 = vmatpush2.bf16.msra.mxu0 0
        %1150 = vmatprep.subr.bf16.mxu0 0
        %1151 = vmatpush2.bf16.msra.mxu0 0
        %1152 = vmatprep.subr.bf16.mxu0 0
        %1153 = vmatpush2.bf16.msra.mxu0 0
        %1154 = vmatprep.mubr.bf16.mxu0 0
        %1155 = vmatmul.mubr.bf16.gmra.mxu0 %v619
        %v1156 = vpop.f32.mrf.mxu0
        %v1157 = vadd.f32 %v700, %v1156
        %v1158 = vpop.f32.mrf.mxu0
        %v1159 = vadd.f32 %v704, %v1158
        %v1160 = vpop.f32.mrf.mxu0
        %v1161 = vadd.f32 %v700, %v1160
        %v1162 = vpop.f32.mrf.mxu0
        %v1163 = vadd.f32 %v704, %v1162
        %1164 = vmatprep.mubr.bf16.mxu0 0
        %1165 = vmatmul.mubr.bf16.gmra.mxu0 %v620
        %v1166 = vpop.f32.mrf.mxu0
        %v1167 = vadd.f32 %v700, %v1166
        %v1168 = vpop.f32.mrf.mxu0
        %v1169 = vadd.f32 %v704, %v1168
        %v1170 = vpop.f32.mrf.mxu0
        %v1171 = vadd.f32 %v700, %v1170
        %v1172 = vpop.f32.mrf.mxu0
        %v1173 = vadd.f32 %v704, %v1172
        %1174 = vmatprep.mubr.bf16.mxu0 0
        %1175 = vmatmul.mubr.bf16.gmra.mxu0 %v621
        %v1176 = vpop.f32.mrf.mxu0
        %v1177 = vadd.f32 %v700, %v1176
        %v1178 = vpop.f32.mrf.mxu0
        %v1179 = vadd.f32 %v704, %v1178
        %v1180 = vpop.f32.mrf.mxu0
        %v1181 = vadd.f32 %v700, %v1180
        %v1182 = vpop.f32.mrf.mxu0
        %v1183 = vadd.f32 %v704, %v1182
        %1184 = vmatprep.mubr.bf16.mxu0 0
        %1185 = vmatmul.mubr.bf16.gmra.mxu0 %v622
        %v1186 = vpop.f32.mrf.mxu0
        %v1187 = vadd.f32 %v700, %v1186
        %v1188 = vpop.f32.mrf.mxu0
        %v1189 = vadd.f32 %v704, %v1188
        %v1190 = vpop.f32.mrf.mxu0
        %v1191 = vadd.f32 %v700, %v1190
        %v1192 = vpop.f32.mrf.mxu0
        %v1193 = vadd.f32 %v704, %v1192
        %1194 = vdwg.mxu0
        %1195 = vmatprep.subr.bf16.mxu0 %v982
        %1196 = vmatpush1.bf16.msra.mxu0 %v981
        %1197 = vmatprep.subr.bf16.mxu0 %v974
        %1198 = vmatpush1.bf16.msra.mxu0 %v973
        %1199 = vmatprep.subr.bf16.mxu0 %v966
        %1200 = vmatpush1.bf16.msra.mxu0 %v965
        %1201 = vmatprep.subr.bf16.mxu0 %v958
        %1202 = vmatpush1.bf16.msra.mxu0 %v957
        %1203 = vmatprep.subr.bf16.mxu0 %v950
        %1204 = vmatpush1.bf16.msra.mxu0 %v949
        %1205 = vmatprep.subr.bf16.mxu0 %v942
        %1206 = vmatpush1.bf16.msra.mxu0 %v941
        %1207 = vmatprep.subr.bf16.mxu0 %v934
        %1208 = vmatpush1.bf16.msra.mxu0 %v933
        %1209 = vmatprep.subr.bf16.mxu0 %v926
        %1210 = vmatpush1.bf16.msra.mxu0 %v925
        %1211 = vmatprep.subr.bf16.mxu0 0
        %1212 = vmatpush2.bf16.msra.mxu0 0
        %1213 = vmatprep.subr.bf16.mxu0 0
        %1214 = vmatpush2.bf16.msra.mxu0 0
        %1215 = vmatprep.subr.bf16.mxu0 0
        %1216 = vmatpush2.bf16.msra.mxu0 0
        %1217 = vmatprep.subr.bf16.mxu0 0
        %1218 = vmatpush2.bf16.msra.mxu0 0
        %1219 = vmatprep.subr.bf16.mxu0 0
        %1220 = vmatpush2.bf16.msra.mxu0 0
        %1221 = vmatprep.subr.bf16.mxu0 0
        %1222 = vmatpush2.bf16.msra.mxu0 0
        %1223 = vmatprep.subr.bf16.mxu0 0
        %1224 = vmatpush2.bf16.msra.mxu0 0
        %1225 = vmatprep.subr.bf16.mxu0 0
        %1226 = vmatpush2.bf16.msra.mxu0 0
        %1227 = vmatprep.mubr.bf16.mxu0 0
        %1228 = vmatmul.mubr.bf16.gmra.mxu0 %v619
        %v1229 = vpop.f32.mrf.mxu0
        %v1230 = vadd.f32 %v708, %v1229
        %v1231 = vpop.f32.mrf.mxu0
        %v1232 = vadd.f32 %v712, %v1231
        %v1233 = vpop.f32.mrf.mxu0
        %v1234 = vadd.f32 %v708, %v1233
        %v1235 = vpop.f32.mrf.mxu0
        %v1236 = vadd.f32 %v712, %v1235
        %1237 = vmatprep.mubr.bf16.mxu0 0
        %1238 = vmatmul.mubr.bf16.gmra.mxu0 %v620
        %v1239 = vpop.f32.mrf.mxu0
        %v1240 = vadd.f32 %v708, %v1239
        %v1241 = vpop.f32.mrf.mxu0
        %v1242 = vadd.f32 %v712, %v1241
        %v1243 = vpop.f32.mrf.mxu0
        %v1244 = vadd.f32 %v708, %v1243
        %v1245 = vpop.f32.mrf.mxu0
        %v1246 = vadd.f32 %v712, %v1245
        %1247 = vmatprep.mubr.bf16.mxu0 0
        %1248 = vmatmul.mubr.bf16.gmra.mxu0 %v621
        %v1249 = vpop.f32.mrf.mxu0
        %v1250 = vadd.f32 %v708, %v1249
        %v1251 = vpop.f32.mrf.mxu0
        %v1252 = vadd.f32 %v712, %v1251
        %v1253 = vpop.f32.mrf.mxu0
        %v1254 = vadd.f32 %v708, %v1253
        %v1255 = vpop.f32.mrf.mxu0
        %v1256 = vadd.f32 %v712, %v1255
        %1257 = vmatprep.mubr.bf16.mxu0 0
        %1258 = vmatmul.mubr.bf16.gmra.mxu0 %v622
        %v1259 = vpop.f32.mrf.mxu0
        %v1260 = vadd.f32 %v708, %v1259
        %v1261 = vpop.f32.mrf.mxu0
        %v1262 = vadd.f32 %v712, %v1261
        %v1263 = vpop.f32.mrf.mxu0
        %v1264 = vadd.f32 %v708, %v1263
        %v1265 = vpop.f32.mrf.mxu0
        %v1266 = vadd.f32 %v712, %v1265
        %1267 = vdwg.mxu0
        %1268 = vmatprep.subr.bf16.mxu0 %v984
        %1269 = vmatpush1.bf16.msra.mxu0 %v983
        %1270 = vmatprep.subr.bf16.mxu0 %v976
        %1271 = vmatpush1.bf16.msra.mxu0 %v975
        %1272 = vmatprep.subr.bf16.mxu0 %v968
        %1273 = vmatpush1.bf16.msra.mxu0 %v967
        %1274 = vmatprep.subr.bf16.mxu0 %v960
        %1275 = vmatpush1.bf16.msra.mxu0 %v959
        %1276 = vmatprep.subr.bf16.mxu0 %v952
        %1277 = vmatpush1.bf16.msra.mxu0 %v951
        %1278 = vmatprep.subr.bf16.mxu0 %v944
        %1279 = vmatpush1.bf16.msra.mxu0 %v943
        %1280 = vmatprep.subr.bf16.mxu0 %v936
        %1281 = vmatpush1.bf16.msra.mxu0 %v935
        %1282 = vmatprep.subr.bf16.mxu0 %v928
        %1283 = vmatpush1.bf16.msra.mxu0 %v927
        %1284 = vmatprep.subr.bf16.mxu0 0
        %1285 = vmatpush2.bf16.msra.mxu0 0
        %1286 = vmatprep.subr.bf16.mxu0 0
        %1287 = vmatpush2.bf16.msra.mxu0 0
        %1288 = vmatprep.subr.bf16.mxu0 0
        %1289 = vmatpush2.bf16.msra.mxu0 0
        %1290 = vmatprep.subr.bf16.mxu0 0
        %1291 = vmatpush2.bf16.msra.mxu0 0
        %1292 = vmatprep.subr.bf16.mxu0 0
        %1293 = vmatpush2.bf16.msra.mxu0 0
        %1294 = vmatprep.subr.bf16.mxu0 0
        %1295 = vmatpush2.bf16.msra.mxu0 0
        %1296 = vmatprep.subr.bf16.mxu0 0
        %1297 = vmatpush2.bf16.msra.mxu0 0
        %1298 = vmatprep.subr.bf16.mxu0 0
        %1299 = vmatpush2.bf16.msra.mxu0 0
        %1300 = vmatprep.mubr.bf16.mxu0 0
        %1301 = vmatmul.mubr.bf16.gmra.mxu0 %v619
        %v1302 = vpop.f32.mrf.mxu0
        %v1303 = vadd.f32 %v716, %v1302
        %v1304 = vpop.f32.mrf.mxu0
        %v1305 = vadd.f32 %v720, %v1304
        %v1306 = vpop.f32.mrf.mxu0
        %v1307 = vadd.f32 %v716, %v1306
        %v1308 = vpop.f32.mrf.mxu0
        %v1309 = vadd.f32 %v720, %v1308
        %1310 = vmatprep.mubr.bf16.mxu0 0
        %1311 = vmatmul.mubr.bf16.gmra.mxu0 %v620
        %v1312 = vpop.f32.mrf.mxu0
        %v1313 = vadd.f32 %v716, %v1312
        %v1314 = vpop.f32.mrf.mxu0
        %v1315 = vadd.f32 %v720, %v1314
        %v1316 = vpop.f32.mrf.mxu0
        %v1317 = vadd.f32 %v716, %v1316
        %v1318 = vpop.f32.mrf.mxu0
        %v1319 = vadd.f32 %v720, %v1318
        %1320 = vmatprep.mubr.bf16.mxu0 0
        %1321 = vmatmul.mubr.bf16.gmra.mxu0 %v621
        %v1322 = vpop.f32.mrf.mxu0
        %v1323 = vadd.f32 %v716, %v1322
        %v1324 = vpop.f32.mrf.mxu0
        %v1325 = vadd.f32 %v720, %v1324
        %v1326 = vpop.f32.mrf.mxu0
        %v1327 = vadd.f32 %v716, %v1326
        %v1328 = vpop.f32.mrf.mxu0
        %v1329 = vadd.f32 %v720, %v1328
        %1330 = vmatprep.mubr.bf16.mxu0 0
        %1331 = vmatmul.mubr.bf16.gmra.mxu0 %v622
        %v1332 = vpop.f32.mrf.mxu0
        %v1333 = vadd.f32 %v716, %v1332
        %v1334 = vpop.f32.mrf.mxu0
        %v1335 = vadd.f32 %v720, %v1334
        %v1336 = vpop.f32.mrf.mxu0
        %v1337 = vadd.f32 %v716, %v1336
        %v1338 = vpop.f32.mrf.mxu0
        %v1339 = vadd.f32 %v720, %v1338
        %1340 = vdwg.mxu0
        %v1341 = vmax.f32 %v1084, 0.0
        %v1342 = vmax.f32 %v1086, 0.0
        %v1343 = vmax.f32 %v1157, 0.0
        %v1344 = vmax.f32 %v1159, 0.0
        %v1345 = vmax.f32 %v1230, 0.0
        %v1346 = vmax.f32 %v1232, 0.0
        %v1347 = vmax.f32 %v1303, 0.0
        %v1348 = vmax.f32 %v1305, 0.0
        %v1349 = vmax.f32 %v1088, 0.0
        %v1350 = vmax.f32 %v1090, 0.0
        %v1351 = vmax.f32 %v1161, 0.0
        %v1352 = vmax.f32 %v1163, 0.0
        %v1353 = vmax.f32 %v1234, 0.0
        %v1354 = vmax.f32 %v1236, 0.0
        %v1355 = vmax.f32 %v1307, 0.0
        %v1356 = vmax.f32 %v1309, 0.0
        %v1357 = vmax.f32 %v1094, 0.0
        %v1358 = vmax.f32 %v1096, 0.0
        %v1359 = vmax.f32 %v1167, 0.0
        %v1360 = vmax.f32 %v1169, 0.0
        %v1361 = vmax.f32 %v1240, 0.0
        %v1362 = vmax.f32 %v1242, 0.0
        %v1363 = vmax.f32 %v1313, 0.0
        %v1364 = vmax.f32 %v1315, 0.0
        %v1365 = vmax.f32 %v1098, 0.0
        %v1366 = vmax.f32 %v1100, 0.0
        %v1367 = vmax.f32 %v1171, 0.0
        %v1368 = vmax.f32 %v1173, 0.0
        %v1369 = vmax.f32 %v1244, 0.0
        %v1370 = vmax.f32 %v1246, 0.0
        %v1371 = vmax.f32 %v1317, 0.0
        %v1372 = vmax.f32 %v1319, 0.0
        %v1373 = vmax.f32 %v1104, 0.0
        %v1374 = vmax.f32 %v1106, 0.0
        %v1375 = vmax.f32 %v1177, 0.0
        %v1376 = vmax.f32 %v1179, 0.0
        %v1377 = vmax.f32 %v1250, 0.0
        %v1378 = vmax.f32 %v1252, 0.0
        %v1379 = vmax.f32 %v1323, 0.0
        %v1380 = vmax.f32 %v1325, 0.0
        %v1381 = vmax.f32 %v1108, 0.0
        %v1382 = vmax.f32 %v1110, 0.0
        %v1383 = vmax.f32 %v1181, 0.0
        %v1384 = vmax.f32 %v1183, 0.0
        %v1385 = vmax.f32 %v1254, 0.0
        %v1386 = vmax.f32 %v1256, 0.0
        %v1387 = vmax.f32 %v1327, 0.0
        %v1388 = vmax.f32 %v1329, 0.0
        %v1389 = vmax.f32 %v1114, 0.0
        %v1390 = vmax.f32 %v1116, 0.0
        %v1391 = vmax.f32 %v1187, 0.0
        %v1392 = vmax.f32 %v1189, 0.0
        %v1393 = vmax.f32 %v1260, 0.0
        %v1394 = vmax.f32 %v1262, 0.0
        %v1395 = vmax.f32 %v1333, 0.0
        %v1396 = vmax.f32 %v1335, 0.0
        %v1397 = vmax.f32 %v1118, 0.0
        %v1398 = vmax.f32 %v1120, 0.0
        %v1399 = vmax.f32 %v1191, 0.0
        %v1400 = vmax.f32 %v1193, 0.0
        %v1401 = vmax.f32 %v1264, 0.0
        %v1402 = vmax.f32 %v1266, 0.0
        %v1403 = vmax.f32 %v1337, 0.0
        %v1404 = vmax.f32 %v1339, 0.0
        %p1405 = scmp.eq.s32.totalorder %s25, 0
        // Predicated region
        $region61: #{pointnet_densecls_forward.4} parent=47 // pred_check
          %p1406 = pneg %p1405
        $region62: #{pointnet_densecls_forward.4} parent=47 // pred_check_branch
          %1408 = sbr.rel (%p1406) target = $region64
        $region63: #{pointnet_densecls_forward.4} parent=47 // pred_region
          %1409 = vst [vmem:[%s359] sm:$0xff] -inf
        $region64: #{pointnet_densecls_forward.4} parent=47 // pred_fallthru
          _
        %v1410 = vld [vmem:[%s359] sm:$0xff]
        %v1411 = vmax.f32 %v1341, %v1349
        %v1412 = vmax.f32 %v1411, %v1357
        %v1413 = vmax.f32 %v1412, %v1365
        %v1414 = vmax.f32 %v1413, %v1373
        %v1415 = vmax.f32 %v1414, %v1381
        %v1416 = vmax.f32 %v1415, %v1389
        %v1417 = vmax.f32 %v1416, %v1397
        %v1418 = vrot.slane %v1417, 4
        %v1419 = vmax.f32 %v1417, %v1418
        %v1420 = vrot.slane %v1419, 2
        %v1421 = vmax.f32 %v1419, %v1420
        %v1422 = vrot.slane %v1421, 1
        %v1423 = vmax.f32 %v1421, %v1422
        %v1424 = vmax.f32 %v1342, %v1350
        %v1425 = vmax.f32 %v1424, %v1358
        %v1426 = vmax.f32 %v1425, %v1366
        %v1427 = vmax.f32 %v1426, %v1374
        %v1428 = vmax.f32 %v1427, %v1382
        %v1429 = vmax.f32 %v1428, %v1390
        %v1430 = vmax.f32 %v1429, %v1398
        %v1431 = vrot.slane %v1430, 4
        %v1432 = vmax.f32 %v1430, %v1431
        %v1433 = vrot.slane %v1432, 2
        %v1434 = vmax.f32 %v1432, %v1433
        %v1435 = vrot.slane %v1434, 1
        %v1436 = vmax.f32 %v1434, %v1435
        %v1437 = vmax.f32 %v1343, %v1351
        %v1438 = vmax.f32 %v1437, %v1359
        %v1439 = vmax.f32 %v1438, %v1367
        %v1440 = vmax.f32 %v1439, %v1375
        %v1441 = vmax.f32 %v1440, %v1383
        %v1442 = vmax.f32 %v1441, %v1391
        %v1443 = vmax.f32 %v1442, %v1399
        %v1444 = vrot.slane %v1443, 4
        %v1445 = vmax.f32 %v1443, %v1444
        %v1446 = vrot.slane %v1445, 2
        %v1447 = vmax.f32 %v1445, %v1446
        %v1448 = vrot.slane %v1447, 1
        %v1449 = vmax.f32 %v1447, %v1448
        %v1450 = vmax.f32 %v1344, %v1352
        %v1451 = vmax.f32 %v1450, %v1360
        %v1452 = vmax.f32 %v1451, %v1368
        %v1453 = vmax.f32 %v1452, %v1376
        %v1454 = vmax.f32 %v1453, %v1384
        %v1455 = vmax.f32 %v1454, %v1392
        %v1456 = vmax.f32 %v1455, %v1400
        %v1457 = vrot.slane %v1456, 4
        %v1458 = vmax.f32 %v1456, %v1457
        %v1459 = vrot.slane %v1458, 2
        %v1460 = vmax.f32 %v1458, %v1459
        %v1461 = vrot.slane %v1460, 1
        %v1462 = vmax.f32 %v1460, %v1461
        %v1463 = vmax.f32 %v1345, %v1353
        %v1464 = vmax.f32 %v1463, %v1361
        %v1465 = vmax.f32 %v1464, %v1369
        %v1466 = vmax.f32 %v1465, %v1377
        %v1467 = vmax.f32 %v1466, %v1385
        %v1468 = vmax.f32 %v1467, %v1393
        %v1469 = vmax.f32 %v1468, %v1401
        %v1470 = vrot.slane %v1469, 4
        %v1471 = vmax.f32 %v1469, %v1470
        %v1472 = vrot.slane %v1471, 2
        %v1473 = vmax.f32 %v1471, %v1472
        %v1474 = vrot.slane %v1473, 1
        %v1475 = vmax.f32 %v1473, %v1474
        %v1476 = vmax.f32 %v1346, %v1354
        %v1477 = vmax.f32 %v1476, %v1362
        %v1478 = vmax.f32 %v1477, %v1370
        %v1479 = vmax.f32 %v1478, %v1378
        %v1480 = vmax.f32 %v1479, %v1386
        %v1481 = vmax.f32 %v1480, %v1394
        %v1482 = vmax.f32 %v1481, %v1402
        %v1483 = vrot.slane %v1482, 4
        %v1484 = vmax.f32 %v1482, %v1483
        %v1485 = vrot.slane %v1484, 2
        %v1486 = vmax.f32 %v1484, %v1485
        %v1487 = vrot.slane %v1486, 1
        %v1488 = vmax.f32 %v1486, %v1487
        %v1489 = vmax.f32 %v1347, %v1355
        %v1490 = vmax.f32 %v1489, %v1363
        %v1491 = vmax.f32 %v1490, %v1371
        %v1492 = vmax.f32 %v1491, %v1379
        %v1493 = vmax.f32 %v1492, %v1387
        %v1494 = vmax.f32 %v1493, %v1395
        %v1495 = vmax.f32 %v1494, %v1403
        %v1496 = vrot.slane %v1495, 4
        %v1497 = vmax.f32 %v1495, %v1496
        %v1498 = vrot.slane %v1497, 2
        %v1499 = vmax.f32 %v1497, %v1498
        %v1500 = vrot.slane %v1499, 1
        %v1501 = vmax.f32 %v1499, %v1500
        %v1502 = vmax.f32 %v1348, %v1356
        %v1503 = vmax.f32 %v1502, %v1364
        %v1504 = vmax.f32 %v1503, %v1372
        %v1505 = vmax.f32 %v1504, %v1380
        %v1506 = vmax.f32 %v1505, %v1388
        %v1507 = vmax.f32 %v1506, %v1396
        %v1508 = vmax.f32 %v1507, %v1404
        %v1509 = vrot.slane %v1508, 4
        %v1510 = vmax.f32 %v1508, %v1509
        %v1511 = vrot.slane %v1510, 2
        %v1512 = vmax.f32 %v1510, %v1511
        %v1513 = vrot.slane %v1512, 1
        %v1514 = vmax.f32 %v1512, %v1513
        %v1523 = vcombine.low %v1423, %v1436
        %v1524 = vcombine.low %v1449, %v1462
        %v1525 = vcombine.low %v1475, %v1488
        %v1526 = vcombine.low %v1501, %v1514
        %v1528 = vunpack.c.l.s4 1966171168
        %v1529 = vunpack.c.0.s8 %v1528
        %v1530 = vlaneseq
        %v1531 = vshrl.u32 %v1530, 7
        %v1532 = vsub.s32 %v1529, %v1531
        %v1533 = vrot.slane %v1523, %v1532
        %v1535 = vunpack.c.l.s4 1966171168
        %v1536 = vunpack.c.0.s8 %v1535
        %v1537 = vlaneseq
        %v1538 = vshrl.u32 %v1537, 7
        %v1539 = vsub.s32 %v1536, %v1538
        %v1540 = vrot.slane %v1524, %v1539
        %v1542 = vunpack.c.l.s4 1966171168
        %v1543 = vunpack.c.0.s8 %v1542
        %v1544 = vlaneseq
        %v1545 = vshrl.u32 %v1544, 7
        %v1546 = vsub.s32 %v1543, %v1545
        %v1547 = vrot.slane %v1525, %v1546
        %v1549 = vunpack.c.l.s4 1966171168
        %v1550 = vunpack.c.0.s8 %v1549
        %v1551 = vlaneseq
        %v1552 = vshrl.u32 %v1551, 7
        %v1553 = vsub.s32 %v1550, %v1552
        %v1554 = vrot.slane %v1526, %v1553
        %v1555 = vcombine.low %v1533, %v1540
        %v1556 = vcombine.low %v1547, %v1554
        %v1558 = vunpack.c.l.s4 1966171168
        %v1559 = vunpack.c.0.s8 %v1558
        %v1560 = vlaneseq
        %v1561 = vshrl.u32 %v1560, 7
        %v1562 = vsub.s32 %v1559, %v1561
        %v1563 = vrot.slane %v1555, %v1562
        %v1565 = vunpack.c.l.s4 1966171168
        %v1566 = vunpack.c.0.s8 %v1565
        %v1567 = vlaneseq
        %v1568 = vshrl.u32 %v1567, 7
        %v1569 = vsub.s32 %v1566, %v1568
        %v1570 = vrot.slane %v1556, %v1569
        %v1571 = vcombine.low %v1563, %v1570
        %v1573 = vmax.f32 %v1410, %v1571
        %1574 = vst [vmem:[%s359] sm:$0xff] %v1573
        %p1575 = scmp.lt.s32.totalorder %s24, 1
        %s1576 = scalar_select %p1575, %s24, 1
        %s1577 = smul.addr %s1576, 8
        %s1578 = scalar_lea.vmem %s7, %s1577
        // Predicated region
        $region65: #{pointnet_densecls_forward.4} parent=47 // pred_check
          %p1579 = pneg %p209
        $region66: #{pointnet_densecls_forward.4} parent=47 // pred_check_branch
          %1581 = sbr.rel (%p1579) target = $region68
        $region67: #{pointnet_densecls_forward.4} parent=47 // pred_region
          _
        $region68: #{pointnet_densecls_forward.4} parent=47 // pred_fallthru
          _
      $region48: #{pointnet_densecls_forward.4} parent=5 // pred_fallthru
        _
      %p1582 = scmp.le.s32.totalorder 2, %s15
      // Predicated region
      $region69: #{pointnet_densecls_forward.4} parent=5 // pred_check
        %p1583 = pneg %p1582
      $region70: #{pointnet_densecls_forward.4} parent=5 // pred_check_branch
        %1585 = sbr.rel (%p1583) target = $region72
      $region71: #{pointnet_densecls_forward.4} parent=5 // pred_region
        %s1586 = ssub.s32 %s15, 2
        // Predicated region
        $region73: #{pointnet_densecls_forward.4} parent=71 // pred_check
          %p1587 = pneg %p215
        $region74: #{pointnet_densecls_forward.4} parent=71 // pred_check_branch
          %1589 = sbr.rel (%p1587) target = $region76
        $region75: #{pointnet_densecls_forward.4} parent=71 // pred_region
          %p1590 = scmp.lt.s32.totalorder %s26, 1
          %s1591 = scalar_select %p1590, %s26, 1
          %s1592 = smul.addr %s1591, 8
          %s1593 = scalar_lea.vmem %s7, %s1592
        $region76: #{pointnet_densecls_forward.4} parent=71 // pred_fallthru
          _
      $region72: #{pointnet_densecls_forward.4} parent=5 // pred_fallthru
        _
    $region6: #{pointnet_densecls_forward.4} parent=1 // loop_footer
      %s19 = sadd.s32 1, %s15
    $region7: #{pointnet_densecls_forward.4} parent=1 // loop_footer_branch
      %14 = sbr.rel target = $region3
    $region8: #{pointnet_densecls_forward.4} parent=1 // loop_exit
      _
    %1594 = vsyncpa [#allocation3], 1
    %s1595 = scalar_lea.sflag [#allocation3], 1
    %1596 = vsyncpa %s1595, 1
    %1597 = vsyncpa [#allocation5], 1

// kernel: pointnet_densecls_forward.6
$region0: #{pointnet_densecls_forward.6}
  #allocation0 [shape = 'u32[]', space=smem, size = 0x4, offset = 0x4, fixed_abs, tag = 'smem constant byte address 0x4 - core index']
  #allocation1 [shape = 'u32[144,128]{1,0:T(1,128)}', space=vmem, size = 0x12000, scoped, tag = 'internal scratch']
  %s0 = inlined_call_operand.vmem [shape: bf16[2,64,3], index: 0, kind: input, shape index: {}]
  %s1 = inlined_call_operand.vmem [shape: bf16[2,3,64], index: 1, kind: input, shape index: {}]
  %s2 = inlined_call_operand.vmem [shape: f32[1,64], index: 2, kind: input, shape index: {}]
  %s3 = inlined_call_operand.vmem [shape: bf16[64,128], index: 3, kind: input, shape index: {}]
  %s4 = inlined_call_operand.vmem [shape: f32[1,128], index: 4, kind: input, shape index: {}]
  %s5 = inlined_call_operand.vmem [shape: bf16[128,1024], index: 5, kind: input, shape index: {}]
  %s6 = inlined_call_operand.vmem [shape: f32[1,1024], index: 6, kind: input, shape index: {}]
  %s7 = inlined_call_operand.vmem [shape: bf16[2,64,64], index: 7, kind: output, shape index: {0}]
  %s8 = inlined_call_operand.vmem [shape: f32[2,1,1024], index: 8, kind: output, shape index: {1}]
  %9 = xla_tuple %s7, %s8
  %s10 = sld [smem:[#allocation0]]
  $region73: #{pointnet_densecls_forward.6} parent=0
    _
  %s12 = ssub.s32 1, %s10
  %s13 = scalar_select 0, %s12, %s10
  loop: start=0, step=1, limit=4
  $region2: #{pointnet_densecls_forward.6} parent=0 // loop_pre_header
    _
  $region3: #{pointnet_densecls_forward.6} parent=0 // loop_header
    %s15 = sphi 0, %s19
    %p16 = scmp.ge.s32.totalorder %s15, 4
    %s22 = sphi 0, %s34
    %s23 = sphi 0, %s30
    %s24 = sphi 0, %s22
    %s25 = sphi 0, %s23
    %s26 = sphi 0, %s24
    %s27 = sphi 0, %s25
    %s39 = sphi 0, %s41
    %s42 = sphi 0, %s39
    %s43 = sphi 0, %s42
    %s59 = sphi 0, %s43
    %s65 = sphi 0, %s67
    %s68 = sphi 0, %s65
    %s69 = sphi 0, %s68
    %s85 = sphi 0, %s69
    %s89 = sphi 0, %s89
    %s91 = sphi 0, %s89
    %s92 = sphi 0, %s91
    %s106 = sphi 0, %s92
    %s110 = sphi 0, %s110
    %s112 = sphi 0, %s110
    %s113 = sphi 0, %s112
    %s127 = sphi 0, %s113
    %s131 = sphi 0, %s131
    %s133 = sphi 0, %s131
    %s134 = sphi 0, %s133
    %s148 = sphi 0, %s134
    %s152 = sphi 0, %s152
    %s154 = sphi 0, %s152
    %s155 = sphi 0, %s154
    %s169 = sphi 0, %s155
    %s173 = sphi 0, %s173
    %s175 = sphi 0, %s173
    %s176 = sphi 0, %s175
    %s190 = sphi 0, %s176
    %s198 = sphi 0, %s200
    %s201 = sphi 0, %s198
    %s202 = sphi 0, %s201
    %s218 = sphi 0, %s202
    %s224 = sphi 0, %s226
    %s227 = sphi 0, %s224
    %s228 = sphi 0, %s227
    %s244 = sphi 0, %s228
  $region4: #{pointnet_densecls_forward.6} parent=0 // loop_header_branch
    %18 = sbr.rel (%p16) target = $region8
  $region5: #{pointnet_densecls_forward.6} parent=0 // loop_body
    %s20 = ssub.s32 %s15, 1
    %s21 = ssub.s32 %s15, 2
    %s28 = sadd.s32 1, %s23
    %p29 = scmp.ge.s32.totalorder %s28, 1
    %s30 = scalar_select %p29, 0, %s28
    %s31 = sadd.s32 1, %s22
    %s32 = scalar_select %p29, %s31, %s22
    %p33 = scmp.ge.s32.totalorder %s32, 2
    %s34 = scalar_select %p33, 0, %s32
    %s35 = ssub.s32 %s22, %s34
    %s36 = ssub.s32 %s23, %s30
    %s37 = sor.u32 %s35, %s36
    %p38 = scmp.eq.s32.totalorder %s37, 0
    %s40 = sadd.s32 %s39, 1
    %s41 = scalar_select %p38, %s39, %s40
    %p44 = pneg %p38
    %p45 = scmp.eq.s32.totalorder %s15, 1
    %p46 = por %p44, %p45
    %p47 = scmp.ne.s32.totalorder %s39, %s42
    %p48 = scmp.eq.s32.totalorder %s15, 0
    %p49 = por %p47, %p48
    %p50 = scmp.ne.s32.totalorder %s39, %s42
    %p51 = scmp.eq.s32.totalorder %s20, 1
    %p52 = por %p50, %p51
    %p53 = scmp.ne.s32.totalorder %s42, %s43
    %p54 = scmp.eq.s32.totalorder %s20, 0
    %p55 = por %p53, %p54
    %p56 = scmp.ne.s32.totalorder %s42, %s43
    %p57 = scmp.eq.s32.totalorder %s21, 1
    %p58 = por %p56, %p57
    %p60 = scmp.ne.s32.totalorder %s43, %s59
    %p61 = scmp.eq.s32.totalorder %s21, 0
    %p62 = por %p60, %p61
    %s63 = ssub.s32 %s22, %s34
    %p64 = scmp.eq.s32.totalorder %s63, 0
    %s66 = sadd.s32 %s65, 1
    %s67 = scalar_select %p64, %s65, %s66
    %p70 = pneg %p64
    %p71 = scmp.eq.s32.totalorder %s15, 1
    %p72 = por %p70, %p71
    %p73 = scmp.ne.s32.totalorder %s65, %s68
    %p74 = scmp.eq.s32.totalorder %s15, 0
    %p75 = por %p73, %p74
    %p76 = scmp.ne.s32.totalorder %s65, %s68
    %p77 = scmp.eq.s32.totalorder %s20, 1
    %p78 = por %p76, %p77
    %p79 = scmp.ne.s32.totalorder %s68, %s69
    %p80 = scmp.eq.s32.totalorder %s20, 0
    %p81 = por %p79, %p80
    %p82 = scmp.ne.s32.totalorder %s68, %s69
    %p83 = scmp.eq.s32.totalorder %s21, 1
    %p84 = por %p82, %p83
    %p86 = scmp.ne.s32.totalorder %s69, %s85
    %p87 = scmp.eq.s32.totalorder %s21, 0
    %p88 = por %p86, %p87
    %s90 = sadd.s32 %s89, 1
    %p93 = scmp.eq.s32.totalorder %s15, 1
    %p94 = scmp.ne.s32.totalorder %s89, %s91
    %p95 = scmp.eq.s32.totalorder %s15, 0
    %p96 = por %p94, %p95
    %p97 = scmp.ne.s32.totalorder %s89, %s91
    %p98 = scmp.eq.s32.totalorder %s20, 1
    %p99 = por %p97, %p98
    %p100 = scmp.ne.s32.totalorder %s91, %s92
    %p101 = scmp.eq.s32.totalorder %s20, 0
    %p102 = por %p100, %p101
    %p103 = scmp.ne.s32.totalorder %s91, %s92
    %p104 = scmp.eq.s32.totalorder %s21, 1
    %p105 = por %p103, %p104
    %p107 = scmp.ne.s32.totalorder %s92, %s106
    %p108 = scmp.eq.s32.totalorder %s21, 0
    %p109 = por %p107, %p108
    %s111 = sadd.s32 %s110, 1
    %p114 = scmp.eq.s32.totalorder %s15, 1
    %p115 = scmp.ne.s32.totalorder %s110, %s112
    %p116 = scmp.eq.s32.totalorder %s15, 0
    %p117 = por %p115, %p116
    %p118 = scmp.ne.s32.totalorder %s110, %s112
    %p119 = scmp.eq.s32.totalorder %s20, 1
    %p120 = por %p118, %p119
    %p121 = scmp.ne.s32.totalorder %s112, %s113
    %p122 = scmp.eq.s32.totalorder %s20, 0
    %p123 = por %p121, %p122
    %p124 = scmp.ne.s32.totalorder %s112, %s113
    %p125 = scmp.eq.s32.totalorder %s21, 1
    %p126 = por %p124, %p125
    %p128 = scmp.ne.s32.totalorder %s113, %s127
    %p129 = scmp.eq.s32.totalorder %s21, 0
    %p130 = por %p128, %p129
    %s132 = sadd.s32 %s131, 1
    %p135 = scmp.eq.s32.totalorder %s15, 1
    %p136 = scmp.ne.s32.totalorder %s131, %s133
    %p137 = scmp.eq.s32.totalorder %s15, 0
    %p138 = por %p136, %p137
    %p139 = scmp.ne.s32.totalorder %s131, %s133
    %p140 = scmp.eq.s32.totalorder %s20, 1
    %p141 = por %p139, %p140
    %p142 = scmp.ne.s32.totalorder %s133, %s134
    %p143 = scmp.eq.s32.totalorder %s20, 0
    %p144 = por %p142, %p143
    %p145 = scmp.ne.s32.totalorder %s133, %s134
    %p146 = scmp.eq.s32.totalorder %s21, 1
    %p147 = por %p145, %p146
    %p149 = scmp.ne.s32.totalorder %s134, %s148
    %p150 = scmp.eq.s32.totalorder %s21, 0
    %p151 = por %p149, %p150
    %s153 = sadd.s32 %s152, 1
    %p156 = scmp.eq.s32.totalorder %s15, 1
    %p157 = scmp.ne.s32.totalorder %s152, %s154
    %p158 = scmp.eq.s32.totalorder %s15, 0
    %p159 = por %p157, %p158
    %p160 = scmp.ne.s32.totalorder %s152, %s154
    %p161 = scmp.eq.s32.totalorder %s20, 1
    %p162 = por %p160, %p161
    %p163 = scmp.ne.s32.totalorder %s154, %s155
    %p164 = scmp.eq.s32.totalorder %s20, 0
    %p165 = por %p163, %p164
    %p166 = scmp.ne.s32.totalorder %s154, %s155
    %p167 = scmp.eq.s32.totalorder %s21, 1
    %p168 = por %p166, %p167
    %p170 = scmp.ne.s32.totalorder %s155, %s169
    %p171 = scmp.eq.s32.totalorder %s21, 0
    %p172 = por %p170, %p171
    %s174 = sadd.s32 %s173, 1
    %p177 = scmp.eq.s32.totalorder %s15, 1
    %p178 = scmp.ne.s32.totalorder %s173, %s175
    %p179 = scmp.eq.s32.totalorder %s15, 0
    %p180 = por %p178, %p179
    %p181 = scmp.ne.s32.totalorder %s173, %s175
    %p182 = scmp.eq.s32.totalorder %s20, 1
    %p183 = por %p181, %p182
    %p184 = scmp.ne.s32.totalorder %s175, %s176
    %p185 = scmp.eq.s32.totalorder %s20, 0
    %p186 = por %p184, %p185
    %p187 = scmp.ne.s32.totalorder %s175, %s176
    %p188 = scmp.eq.s32.totalorder %s21, 1
    %p189 = por %p187, %p188
    %p191 = scmp.ne.s32.totalorder %s176, %s190
    %p192 = scmp.eq.s32.totalorder %s21, 0
    %p193 = por %p191, %p192
    %s194 = ssub.s32 %s22, %s34
    %s195 = ssub.s32 %s23, %s30
    %s196 = sor.u32 %s194, %s195
    %p197 = scmp.eq.s32.totalorder %s196, 0
    %s199 = sadd.s32 %s198, 1
    %s200 = scalar_select %p197, %s198, %s199
    %p203 = pneg %p197
    %p204 = scmp.eq.s32.totalorder %s15, 1
    %p205 = por %p203, %p204
    %p206 = scmp.ne.s32.totalorder %s198, %s201
    %p207 = scmp.eq.s32.totalorder %s15, 0
    %p208 = por %p206, %p207
    %p209 = scmp.ne.s32.totalorder %s198, %s201
    %p210 = scmp.eq.s32.totalorder %s20, 1
    %p211 = por %p209, %p210
    %p212 = scmp.ne.s32.totalorder %s201, %s202
    %p213 = scmp.eq.s32.totalorder %s20, 0
    %p214 = por %p212, %p213
    %p215 = scmp.ne.s32.totalorder %s201, %s202
    %p216 = scmp.eq.s32.totalorder %s21, 1
    %p217 = por %p215, %p216
    %p219 = scmp.ne.s32.totalorder %s202, %s218
    %p220 = scmp.eq.s32.totalorder %s21, 0
    %p221 = por %p219, %p220
    %s222 = ssub.s32 %s22, %s34
    %p223 = scmp.eq.s32.totalorder %s222, 0
    %s225 = sadd.s32 %s224, 1
    %s226 = scalar_select %p223, %s224, %s225
    %p229 = pneg %p223
    %p230 = scmp.eq.s32.totalorder %s15, 1
    %p231 = por %p229, %p230
    %p232 = scmp.ne.s32.totalorder %s224, %s227
    %p233 = scmp.eq.s32.totalorder %s15, 0
    %p234 = por %p232, %p233
    %p235 = scmp.ne.s32.totalorder %s224, %s227
    %p236 = scmp.eq.s32.totalorder %s20, 1
    %p237 = por %p235, %p236
    %p238 = scmp.ne.s32.totalorder %s227, %s228
    %p239 = scmp.eq.s32.totalorder %s20, 0
    %p240 = por %p238, %p239
    %p241 = scmp.ne.s32.totalorder %s227, %s228
    %p242 = scmp.eq.s32.totalorder %s21, 1
    %p243 = por %p241, %p242
    %p245 = scmp.ne.s32.totalorder %s228, %s244
    %p246 = scmp.eq.s32.totalorder %s21, 0
    %p247 = por %p245, %p246
    %p248 = scmp.le.s32.totalorder 1, %s15
    %p249 = scmp.lt.s32.totalorder %s15, 3
    %p250 = pnand %p248, %p249
    %p251 = pneg %p250
    // Predicated region
    $region9: #{pointnet_densecls_forward.6} parent=5 // pred_check
      _
    $region10: #{pointnet_densecls_forward.6} parent=5 // pred_check_branch
      %253 = sbr.rel (%p250) target = $region12
    $region11: #{pointnet_densecls_forward.6} parent=5 // pred_region
      %s254 = ssub.s32 %s15, 1
      // Predicated region
      $region13: #{pointnet_densecls_forward.6} parent=11 // pred_check
        %p255 = pneg %p102
      $region14: #{pointnet_densecls_forward.6} parent=11 // pred_check_branch
        %257 = sbr.rel (%p255) target = $region16
      $region15: #{pointnet_densecls_forward.6} parent=11 // pred_region
        _
      $region16: #{pointnet_densecls_forward.6} parent=11 // pred_fallthru
        _
      // Predicated region
      $region17: #{pointnet_densecls_forward.6} parent=11 // pred_check
        %p258 = pneg %p123
      $region18: #{pointnet_densecls_forward.6} parent=11 // pred_check_branch
        %260 = sbr.rel (%p258) target = $region20
      $region19: #{pointnet_densecls_forward.6} parent=11 // pred_region
        _
      $region20: #{pointnet_densecls_forward.6} parent=11 // pred_fallthru
        _
      // Predicated region
      $region21: #{pointnet_densecls_forward.6} parent=11 // pred_check
        %p261 = pneg %p144
      $region22: #{pointnet_densecls_forward.6} parent=11 // pred_check_branch
        %263 = sbr.rel (%p261) target = $region24
      $region23: #{pointnet_densecls_forward.6} parent=11 // pred_region
        _
      $region24: #{pointnet_densecls_forward.6} parent=11 // pred_fallthru
        _
      // Predicated region
      $region25: #{pointnet_densecls_forward.6} parent=11 // pred_check
        %p264 = pneg %p165
      $region26: #{pointnet_densecls_forward.6} parent=11 // pred_check_branch
        %266 = sbr.rel (%p264) target = $region28
      $region27: #{pointnet_densecls_forward.6} parent=11 // pred_region
        _
      $region28: #{pointnet_densecls_forward.6} parent=11 // pred_fallthru
        _
      // Predicated region
      $region29: #{pointnet_densecls_forward.6} parent=11 // pred_check
        %p267 = pneg %p186
      $region30: #{pointnet_densecls_forward.6} parent=11 // pred_check_branch
        %269 = sbr.rel (%p267) target = $region32
      $region31: #{pointnet_densecls_forward.6} parent=11 // pred_region
        _
      $region32: #{pointnet_densecls_forward.6} parent=11 // pred_fallthru
        _
    $region12: #{pointnet_densecls_forward.6} parent=5 // pred_fallthru
      _
    %p270 = scmp.lt.s32.totalorder %s15, 2
    // Predicated region
    $region33: #{pointnet_densecls_forward.6} parent=5 // pred_check
      %p271 = pneg %p270
    $region34: #{pointnet_densecls_forward.6} parent=5 // pred_check_branch
      %273 = sbr.rel (%p271) target = $region36
    $region35: #{pointnet_densecls_forward.6} parent=5 // pred_region
      // Predicated region
      $region37: #{pointnet_densecls_forward.6} parent=35 // pred_check
        %p274 = pneg %p49
      $region38: #{pointnet_densecls_forward.6} parent=35 // pred_check_branch
        %276 = sbr.rel (%p274) target = $region40
      $region39: #{pointnet_densecls_forward.6} parent=35 // pred_region
        %s277 = smul.u32 8, %s23
        %p278 = scmp.lt.s32.totalorder %s22, 1
        %s279 = scalar_select %p278, %s22, 1
        %p280 = scmp.lt.s32.totalorder %s277, 7
        %s281 = scalar_select %p280, %s277, 7
        %s282 = smul.addr %s279, 8
        %s283 = sadd.s32 %s281, %s282
        %s284 = smul.addr %s283, 4
        %s285 = scalar_lea.vmem %s0, %s284
        %s286 = smul.u32 8, %s23
      $region40: #{pointnet_densecls_forward.6} parent=35 // pred_fallthru
        _
      // Predicated region
      $region41: #{pointnet_densecls_forward.6} parent=35 // pred_check
        %p287 = pneg %p75
      $region42: #{pointnet_densecls_forward.6} parent=35 // pred_check_branch
        %289 = sbr.rel (%p287) target = $region44
      $region43: #{pointnet_densecls_forward.6} parent=35 // pred_region
        %p290 = scmp.lt.s32.totalorder %s22, 1
        %s291 = scalar_select %p290, %s22, 1
        %s292 = smul.addr %s291, 2
        %s293 = scalar_lea.vmem %s1, %s292
      $region44: #{pointnet_densecls_forward.6} parent=35 // pred_fallthru
        _
    $region36: #{pointnet_densecls_forward.6} parent=5 // pred_fallthru
      _
    %p294 = scmp.le.s32.totalorder 1, %s15
    %p295 = scmp.lt.s32.totalorder %s15, 3
    %p296 = pnand %p294, %p295
    %p297 = pneg %p296
    // Predicated region
    $region45: #{pointnet_densecls_forward.6} parent=5 // pred_check
      _
    $region46: #{pointnet_densecls_forward.6} parent=5 // pred_check_branch
      %299 = sbr.rel (%p296) target = $region48
    $region47: #{pointnet_densecls_forward.6} parent=5 // pred_region
      %s300 = ssub.s32 %s15, 1
      %s301 = smul.u32 8, %s25
      %p302 = scmp.lt.s32.totalorder %s24, 1
      %s303 = scalar_select %p302, %s24, 1
      %p304 = scmp.lt.s32.totalorder %s301, 7
      %s305 = scalar_select %p304, %s301, 7
      %s306 = smul.addr %s303, 8
      %s307 = sadd.s32 %s305, %s306
      %s308 = smul.addr %s307, 4
      %s309 = scalar_lea.vmem %s0, %s308
      %p310 = pneg %p55
      %p311 = pneg %p52
      %p312 = scmp.lt.s32.totalorder %s24, 1
      %s313 = scalar_select %p312, %s24, 1
      %s314 = smul.addr %s313, 2
      %s315 = scalar_lea.vmem %s1, %s314
      %p316 = pneg %p81
      %p317 = pneg %p78
      %p318 = pneg %p102
      %p319 = pneg %p99
      %p320 = pneg %p123
      %p321 = pneg %p120
      %p322 = pneg %p144
      %p323 = pneg %p141
      %p324 = pneg %p165
      %p325 = pneg %p162
      %p326 = pneg %p186
      %p327 = pneg %p183
      %p328 = pneg %p214
      %p329 = pneg %p211
      %s330 = smul.u32 8, %s25
      %p331 = scmp.lt.s32.totalorder %s24, 1
      %s332 = scalar_select %p331, %s24, 1
      %p333 = scmp.lt.s32.totalorder %s330, 7
      %s334 = scalar_select %p333, %s330, 7
      %s335 = smul.addr %s332, 8
      %s336 = sadd.s32 %s334, %s335
      %s337 = smul.addr %s336, 4
      %s338 = scalar_lea.vmem %s7, %s337
      %p339 = pneg %p240
      %p340 = pneg %p237
      %p341 = scmp.lt.s32.totalorder %s24, 1
      %s342 = scalar_select %p341, %s24, 1
      %s343 = smul.addr %s342, 8
      %s344 = scalar_lea.vmem %s8, %s343
      %s345 = smul.u32 8, %s25
      %p346 = scmp.lt.s32.totalorder %s24, 1
      %s347 = scalar_select %p346, %s24, 1
      %p348 = scmp.lt.s32.totalorder %s345, 7
      %s349 = scalar_select %p348, %s345, 7
      %s350 = smul.addr %s347, 8
      %s351 = sadd.s32 %s349, %s350
      %s352 = smul.addr %s351, 4
      %s353 = scalar_lea.vmem %s0, %s352
      %s354 = smul.u32 8, %s25
      %p355 = scmp.lt.s32.totalorder %s24, 1
      %s356 = scalar_select %p355, %s24, 1
      %s357 = smul.addr %s356, 2
      %s358 = scalar_lea.vmem %s1, %s357
      %s359 = smul.u32 8, %s25
      %p360 = scmp.lt.s32.totalorder %s24, 1
      %s361 = scalar_select %p360, %s24, 1
      %p362 = scmp.lt.s32.totalorder %s359, 7
      %s363 = scalar_select %p362, %s359, 7
      %s364 = smul.addr %s361, 8
      %s365 = sadd.s32 %s363, %s364
      %s366 = smul.addr %s365, 4
      %s367 = scalar_lea.vmem %s7, %s366
      %s368 = smul.u32 8, %s25
      %p369 = scmp.lt.s32.totalorder %s24, 1
      %s370 = scalar_select %p369, %s24, 1
      %s371 = smul.addr %s370, 8
      %s372 = scalar_lea.vmem %s8, %s371
      %v374 = vld [vmem:[%s353] sm:$0xf]
      %v375 = vld [vmem:[%s353 + $0x4] sm:$0xf]
      %v376 = vld [vmem:[%s353 + $0x8] sm:$0xf]
      %v377 = vld [vmem:[%s353 + $0xc] sm:$0xf]
      %v378 = vld [vmem:[%s353 + $0x10] sm:$0xf]
      %v379 = vld [vmem:[%s353 + $0x14] sm:$0xf]
      %v380 = vld [vmem:[%s353 + $0x18] sm:$0xf]
      %v381 = vld [vmem:[%s353 + $0x1c] sm:$0xf]
      %v382 = vld [vmem:[%s358] sm:$0x3]
      %v383 = vld [vmem:[%s2] sm:$0x1]
      %v385 = vlaneseq
      %v386 = vshrl.u32 %v385, 7
      %v387 = vsub.s32 0, %v386
      %v388 = vrot.slane %v383, %v387
      %v398 = vunpack.c.l.b16 %v374
      %v399 = vunpack.c.l.b16 %v375
      %v400 = vunpack.c.l.b16 %v376
      %v401 = vunpack.c.l.b16 %v377
      %v402 = vunpack.c.l.b16 %v378
      %v403 = vunpack.c.l.b16 %v379
      %v404 = vunpack.c.l.b16 %v380
      %v405 = vunpack.c.l.b16 %v381
      %v406 = vpack.c.b16 %v399, %v398
      %v407 = vpack.c.b16 %v401, %v400
      %v408 = vpack.c.b16 %v403, %v402
      %v409 = vpack.c.b16 %v405, %v404
      %vm410 = vcmask 23552
      %v412 = vsel %vm410, %v406, 0
      %v415 = vsel %vm410, %v407, 0
      %v418 = vsel %vm410, %v408, 0
      %v421 = vsel %vm410, %v409, 0
      %vm423 = vcmask 1040384
      %vm424 = vcmask 1041408
      %v425 = vsel %vm423, 4294967295, 65535
      %v426 = vsel %vm424, %v425, 0
      %v428 = vand.u32 %v382, %v426
      %430 = vmatprep.subr.bf16.mxu0 0
      %431 = vmatpush1.bf16.msra.mxu0 0
      %432 = vmatprep.subr.bf16.mxu0 0
      %433 = vmatpush1.bf16.msra.mxu0 0
      %434 = vmatprep.subr.bf16.mxu0 0
      %435 = vmatpush1.bf16.msra.mxu0 0
      %436 = vmatprep.subr.bf16.mxu0 0
      %437 = vmatpush1.bf16.msra.mxu0 0
      %438 = vmatprep.subr.bf16.mxu0 0
      %439 = vmatpush1.bf16.msra.mxu0 0
      %440 = vmatprep.subr.bf16.mxu0 0
      %441 = vmatpush1.bf16.msra.mxu0 0
      %442 = vmatprep.subr.bf16.mxu0 0
      %443 = vmatpush1.bf16.msra.mxu0 0
      %444 = vmatprep.subr.bf16.mxu0 0
      %445 = vmatpush1.bf16.msra.mxu0 %v428
      %446 = vmatprep.subr.bf16.mxu0 0
      %447 = vmatpush2.bf16.msra.mxu0 0
      %448 = vmatprep.subr.bf16.mxu0 0
      %449 = vmatpush2.bf16.msra.mxu0 0
      %450 = vmatprep.subr.bf16.mxu0 0
      %451 = vmatpush2.bf16.msra.mxu0 0
      %452 = vmatprep.subr.bf16.mxu0 0
      %453 = vmatpush2.bf16.msra.mxu0 0
      %454 = vmatprep.subr.bf16.mxu0 0
      %455 = vmatpush2.bf16.msra.mxu0 0
      %456 = vmatprep.subr.bf16.mxu0 0
      %457 = vmatpush2.bf16.msra.mxu0 0
      %458 = vmatprep.subr.bf16.mxu0 0
      %459 = vmatpush2.bf16.msra.mxu0 0
      %460 = vmatprep.subr.bf16.mxu0 0
      %461 = vmatpush2.bf16.msra.mxu0 0
      %462 = vmatprep.mubr.bf16.mxu0 0
      %463 = vmatmul.mubr.bf16.gmra.mxu0 %v412
      %v464 = vpop.f32.mrf.mxu0
      %v465 = vadd.f32 %v388, %v464
      %v466 = vpop.f32.mrf.mxu0
      %v467 = vpop.f32.mrf.mxu0
      %v468 = vadd.f32 %v388, %v467
      %v469 = vpop.f32.mrf.mxu0
      %470 = vmatprep.mubr.bf16.mxu0 0
      %471 = vmatmul.mubr.bf16.gmra.mxu0 %v415
      %v472 = vpop.f32.mrf.mxu0
      %v473 = vadd.f32 %v388, %v472
      %v474 = vpop.f32.mrf.mxu0
      %v475 = vpop.f32.mrf.mxu0
      %v476 = vadd.f32 %v388, %v475
      %v477 = vpop.f32.mrf.mxu0
      %478 = vmatprep.mubr.bf16.mxu0 0
      %479 = vmatmul.mubr.bf16.gmra.mxu0 %v418
      %v480 = vpop.f32.mrf.mxu0
      %v481 = vadd.f32 %v388, %v480
      %v482 = vpop.f32.mrf.mxu0
      %v483 = vpop.f32.mrf.mxu0
      %v484 = vadd.f32 %v388, %v483
      %v485 = vpop.f32.mrf.mxu0
      %486 = vmatprep.mubr.bf16.mxu0 0
      %487 = vmatmul.mubr.bf16.gmra.mxu0 %v421
      %v488 = vpop.f32.mrf.mxu0
      %v489 = vadd.f32 %v388, %v488
      %v490 = vpop.f32.mrf.mxu0
      %v491 = vpop.f32.mrf.mxu0
      %v492 = vadd.f32 %v388, %v491
      %v493 = vpop.f32.mrf.mxu0
      %494 = vdwg.mxu0
      %v495 = vmax.f32 %v465, 0.0
      %v496 = vmax.f32 %v468, 0.0
      %v497 = vmax.f32 %v473, 0.0
      %v498 = vmax.f32 %v476, 0.0
      %v499 = vmax.f32 %v481, 0.0
      %v500 = vmax.f32 %v484, 0.0
      %v501 = vmax.f32 %v489, 0.0
      %v502 = vmax.f32 %v492, 0.0
      %v503 = vpack.c.bf16 %v496, %v495
      %v504 = vpack.c.bf16 %v498, %v497
      %v505 = vpack.c.bf16 %v500, %v499
      %v506 = vpack.c.bf16 %v502, %v501
      %v511 = vunpack.c.l.b16 %v503
      %v512 = vunpack.c.h.b16 %v503
      %v513 = vunpack.c.l.b16 %v504
      %v514 = vunpack.c.h.b16 %v504
      %v515 = vunpack.c.l.b16 %v505
      %v516 = vunpack.c.h.b16 %v505
      %v517 = vunpack.c.l.b16 %v506
      %v518 = vunpack.c.h.b16 %v506
      %v519 = vpack.c.b16 %v511, %v511
      %v520 = vpack.c.b16 %v512, %v512
      %v521 = vpack.c.b16 %v513, %v513
      %v522 = vpack.c.b16 %v514, %v514
      %v523 = vpack.c.b16 %v515, %v515
      %v524 = vpack.c.b16 %v516, %v516
      %v525 = vpack.c.b16 %v517, %v517
      %v526 = vpack.c.b16 %v518, %v518
      %vm535 = vcmask 519168
      %536 = vst.msk [vmem:[%s367] sm:$0xf] %vm535, %v519
      %537 = vst.msk [vmem:[%s367 + $0x4] sm:$0xf] %vm535, %v520
      %538 = vst.msk [vmem:[%s367 + $0x8] sm:$0xf] %vm535, %v521
      %539 = vst.msk [vmem:[%s367 + $0xc] sm:$0xf] %vm535, %v522
      %540 = vst.msk [vmem:[%s367 + $0x10] sm:$0xf] %vm535, %v523
      %541 = vst.msk [vmem:[%s367 + $0x14] sm:$0xf] %vm535, %v524
      %542 = vst.msk [vmem:[%s367 + $0x18] sm:$0xf] %vm535, %v525
      %543 = vst.msk [vmem:[%s367 + $0x1c] sm:$0xf] %vm535, %v526
      %v544 = vld [vmem:[%s3] sm:$0xf]
      %v545 = vld [vmem:[%s3 + $0x4] sm:$0xf]
      %v546 = vld [vmem:[%s3 + $0x8] sm:$0xf]
      %v547 = vld [vmem:[%s3 + $0xc] sm:$0xf]
      %v548 = vld [vmem:[%s3 + $0x10] sm:$0xf]
      %v549 = vld [vmem:[%s3 + $0x14] sm:$0xf]
      %v550 = vld [vmem:[%s3 + $0x18] sm:$0xf]
      %v551 = vld [vmem:[%s3 + $0x1c] sm:$0xf]
      %v552 = vld [vmem:[%s4] sm:$0x1]
      %v554 = vlaneseq
      %v555 = vshrl.u32 %v554, 7
      %v556 = vsub.s32 0, %v555
      %v557 = vrot.slane %v552, %v556
      %v567 = vunpack.c.l.b16 %v544
      %v568 = vunpack.c.l.b16 %v545
      %v569 = vunpack.c.l.b16 %v546
      %v570 = vunpack.c.l.b16 %v547
      %v571 = vunpack.c.l.b16 %v548
      %v572 = vunpack.c.l.b16 %v549
      %v573 = vunpack.c.l.b16 %v550
      %v574 = vunpack.c.l.b16 %v551
      %v575 = vpack.c.b16 %v568, %v567
      %v576 = vpack.c.b16 %v570, %v569
      %v577 = vpack.c.b16 %v572, %v571
      %v578 = vpack.c.b16 %v574, %v573
      %vm583 = vcmask 523264
      %v585 = vsel %vm583, %v503, 0
      %v588 = vsel %vm583, %v504, 0
      %v591 = vsel %vm583, %v505, 0
      %v594 = vsel %vm583, %v506, 0
      %596 = vmatprep.subr.bf16.mxu0 0
      %597 = vmatpush1.bf16.msra.mxu0 0
      %598 = vmatprep.subr.bf16.mxu0 0
      %599 = vmatpush1.bf16.msra.mxu0 0
      %600 = vmatprep.subr.bf16.mxu0 0
      %601 = vmatpush1.bf16.msra.mxu0 0
      %602 = vmatprep.subr.bf16.mxu0 0
      %603 = vmatpush1.bf16.msra.mxu0 0
      %604 = vmatprep.subr.bf16.mxu0 0
      %605 = vmatpush1.bf16.msra.mxu0 %v578
      %606 = vmatprep.subr.bf16.mxu0 0
      %607 = vmatpush1.bf16.msra.mxu0 %v577
      %608 = vmatprep.subr.bf16.mxu0 0
      %609 = vmatpush1.bf16.msra.mxu0 %v576
      %610 = vmatprep.subr.bf16.mxu0 0
      %611 = vmatpush1.bf16.msra.mxu0 %v575
      %612 = vmatprep.subr.bf16.mxu0 0
      %613 = vmatpush2.bf16.msra.mxu0 0
      %614 = vmatprep.subr.bf16.mxu0 0
      %615 = vmatpush2.bf16.msra.mxu0 0
      %616 = vmatprep.subr.bf16.mxu0 0
      %617 = vmatpush2.bf16.msra.mxu0 0
      %618 = vmatprep.subr.bf16.mxu0 0
      %619 = vmatpush2.bf16.msra.mxu0 0
      %620 = vmatprep.subr.bf16.mxu0 0
      %621 = vmatpush2.bf16.msra.mxu0 0
      %622 = vmatprep.subr.bf16.mxu0 0
      %623 = vmatpush2.bf16.msra.mxu0 0
      %624 = vmatprep.subr.bf16.mxu0 0
      %625 = vmatpush2.bf16.msra.mxu0 0
      %626 = vmatprep.subr.bf16.mxu0 0
      %627 = vmatpush2.bf16.msra.mxu0 0
      %628 = vmatprep.mubr.bf16.mxu0 0
      %629 = vmatmul.mubr.bf16.gmra.mxu0 %v585
      %v630 = vpop.f32.mrf.mxu0
      %v631 = vadd.f32 %v557, %v630
      %v632 = vpop.f32.mrf.mxu0
      %v633 = vpop.f32.mrf.mxu0
      %v634 = vadd.f32 %v557, %v633
      %v635 = vpop.f32.mrf.mxu0
      %636 = vmatprep.mubr.bf16.mxu0 0
      %637 = vmatmul.mubr.bf16.gmra.mxu0 %v588
      %v638 = vpop.f32.mrf.mxu0
      %v639 = vadd.f32 %v557, %v638
      %v640 = vpop.f32.mrf.mxu0
      %v641 = vpop.f32.mrf.mxu0
      %v642 = vadd.f32 %v557, %v641
      %v643 = vpop.f32.mrf.mxu0
      %644 = vmatprep.mubr.bf16.mxu0 0
      %645 = vmatmul.mubr.bf16.gmra.mxu0 %v591
      %v646 = vpop.f32.mrf.mxu0
      %v647 = vadd.f32 %v557, %v646
      %v648 = vpop.f32.mrf.mxu0
      %v649 = vpop.f32.mrf.mxu0
      %v650 = vadd.f32 %v557, %v649
      %v651 = vpop.f32.mrf.mxu0
      %652 = vmatprep.mubr.bf16.mxu0 0
      %653 = vmatmul.mubr.bf16.gmra.mxu0 %v594
      %v654 = vpop.f32.mrf.mxu0
      %v655 = vadd.f32 %v557, %v654
      %v656 = vpop.f32.mrf.mxu0
      %v657 = vpop.f32.mrf.mxu0
      %v658 = vadd.f32 %v557, %v657
      %v659 = vpop.f32.mrf.mxu0
      %660 = vdwg.mxu0
      %v661 = vmax.f32 %v631, 0.0
      %v662 = vmax.f32 %v634, 0.0
      %v663 = vmax.f32 %v639, 0.0
      %v664 = vmax.f32 %v642, 0.0
      %v665 = vmax.f32 %v647, 0.0
      %v666 = vmax.f32 %v650, 0.0
      %v667 = vmax.f32 %v655, 0.0
      %v668 = vmax.f32 %v658, 0.0
      %v669 = vpack.c.bf16 %v662, %v661
      %v670 = vpack.c.bf16 %v664, %v663
      %v671 = vpack.c.bf16 %v666, %v665
      %v672 = vpack.c.bf16 %v668, %v667
      %v673 = vld [vmem:[%s5] sm:$0xff]
      %v674 = vld [vmem:[%s5 + $0x8] sm:$0xff]
      %v675 = vld [vmem:[%s5 + $0x10] sm:$0xff]
      %v676 = vld [vmem:[%s5 + $0x18] sm:$0xff]
      %v677 = vld [vmem:[%s5 + $0x20] sm:$0xff]
      %v678 = vld [vmem:[%s5 + $0x28] sm:$0xff]
      %v679 = vld [vmem:[%s5 + $0x30] sm:$0xff]
      %v680 = vld [vmem:[%s5 + $0x38] sm:$0xff]
      %v681 = vld [vmem:[%s5 + $0x40] sm:$0xff]
      %v682 = vld [vmem:[%s5 + $0x48] sm:$0xff]
      %v683 = vld [vmem:[%s5 + $0x50] sm:$0xff]
      %v684 = vld [vmem:[%s5 + $0x58] sm:$0xff]
      %v685 = vld [vmem:[%s5 + $0x60] sm:$0xff]
      %v686 = vld [vmem:[%s5 + $0x68] sm:$0xff]
      %v687 = vld [vmem:[%s5 + $0x70] sm:$0xff]
      %v688 = vld [vmem:[%s5 + $0x78] sm:$0xff]
      %v689 = vld [vmem:[%s5 + $0x80] sm:$0xff]
      %v690 = vld [vmem:[%s5 + $0x88] sm:$0xff]
      %v691 = vld [vmem:[%s5 + $0x90] sm:$0xff]
      %v692 = vld [vmem:[%s5 + $0x98] sm:$0xff]
      %v693 = vld [vmem:[%s5 + $0xa0] sm:$0xff]
      %v694 = vld [vmem:[%s5 + $0xa8] sm:$0xff]
      %v695 = vld [vmem:[%s5 + $0xb0] sm:$0xff]
      %v696 = vld [vmem:[%s5 + $0xb8] sm:$0xff]
      %v697 = vld [vmem:[%s5 + $0xc0] sm:$0xff]
      %v698 = vld [vmem:[%s5 + $0xc8] sm:$0xff]
      %v699 = vld [vmem:[%s5 + $0xd0] sm:$0xff]
      %v700 = vld [vmem:[%s5 + $0xd8] sm:$0xff]
      %v701 = vld [vmem:[%s5 + $0xe0] sm:$0xff]
      %v702 = vld [vmem:[%s5 + $0xe8] sm:$0xff]
      %v703 = vld [vmem:[%s5 + $0xf0] sm:$0xff]
      %v704 = vld [vmem:[%s5 + $0xf8] sm:$0xff]
      %v705 = vld [vmem:[%s5 + $0x100] sm:$0xff]
      %v706 = vld [vmem:[%s5 + $0x108] sm:$0xff]
      %v707 = vld [vmem:[%s5 + $0x110] sm:$0xff]
      %v708 = vld [vmem:[%s5 + $0x118] sm:$0xff]
      %v709 = vld [vmem:[%s5 + $0x120] sm:$0xff]
      %v710 = vld [vmem:[%s5 + $0x128] sm:$0xff]
      %v711 = vld [vmem:[%s5 + $0x130] sm:$0xff]
      %v712 = vld [vmem:[%s5 + $0x138] sm:$0xff]
      %v713 = vld [vmem:[%s5 + $0x140] sm:$0xff]
      %v714 = vld [vmem:[%s5 + $0x148] sm:$0xff]
      %v715 = vld [vmem:[%s5 + $0x150] sm:$0xff]
      %v716 = vld [vmem:[%s5 + $0x158] sm:$0xff]
      %v717 = vld [vmem:[%s5 + $0x160] sm:$0xff]
      %v718 = vld [vmem:[%s5 + $0x168] sm:$0xff]
      %v719 = vld [vmem:[%s5 + $0x170] sm:$0xff]
      %v720 = vld [vmem:[%s5 + $0x178] sm:$0xff]
      %v721 = vld [vmem:[%s5 + $0x180] sm:$0xff]
      %v722 = vld [vmem:[%s5 + $0x188] sm:$0xff]
      %v723 = vld [vmem:[%s5 + $0x190] sm:$0xff]
      %v724 = vld [vmem:[%s5 + $0x198] sm:$0xff]
      %v725 = vld [vmem:[%s5 + $0x1a0] sm:$0xff]
      %v726 = vld [vmem:[%s5 + $0x1a8] sm:$0xff]
      %v727 = vld [vmem:[%s5 + $0x1b0] sm:$0xff]
      %v728 = vld [vmem:[%s5 + $0x1b8] sm:$0xff]
      %v729 = vld [vmem:[%s5 + $0x1c0] sm:$0xff]
      %v730 = vld [vmem:[%s5 + $0x1c8] sm:$0xff]
      %v731 = vld [vmem:[%s5 + $0x1d0] sm:$0xff]
      %v732 = vld [vmem:[%s5 + $0x1d8] sm:$0xff]
      %v733 = vld [vmem:[%s5 + $0x1e0] sm:$0xff]
      %v734 = vld [vmem:[%s5 + $0x1e8] sm:$0xff]
      %v735 = vld [vmem:[%s5 + $0x1f0] sm:$0xff]
      %v736 = vld [vmem:[%s5 + $0x1f8] sm:$0xff]
      %v737 = vld [vmem:[%s6] sm:$0xff]
      %v739 = vlaneseq
      %v740 = vshrl.u32 %v739, 7
      %v741 = vsub.s32 0, %v740
      %v742 = vrot.slane %v737, %v741
      %v743 = vlaneseq
      %v744 = vshrl.u32 %v743, 7
      %v745 = vsub.s32 1, %v744
      %v746 = vrot.slane %v737, %v745
      %v747 = vlaneseq
      %v748 = vshrl.u32 %v747, 7
      %v749 = vsub.s32 2, %v748
      %v750 = vrot.slane %v737, %v749
      %v751 = vlaneseq
      %v752 = vshrl.u32 %v751, 7
      %v753 = vsub.s32 3, %v752
      %v754 = vrot.slane %v737, %v753
      %v755 = vlaneseq
      %v756 = vshrl.u32 %v755, 7
      %v757 = vsub.s32 4, %v756
      %v758 = vrot.slane %v737, %v757
      %v759 = vlaneseq
      %v760 = vshrl.u32 %v759, 7
      %v761 = vsub.s32 5, %v760
      %v762 = vrot.slane %v737, %v761
      %v763 = vlaneseq
      %v764 = vshrl.u32 %v763, 7
      %v765 = vsub.s32 6, %v764
      %v766 = vrot.slane %v737, %v765
      %v767 = vlaneseq
      %v768 = vshrl.u32 %v767, 7
      %v769 = vsub.s32 7, %v768
      %v770 = vrot.slane %v737, %v769
      %v843 = vunpack.c.l.b16 %v673
      %v844 = vunpack.c.h.b16 %v673
      %v845 = vunpack.c.l.b16 %v674
      %v846 = vunpack.c.h.b16 %v674
      %v847 = vunpack.c.l.b16 %v675
      %v848 = vunpack.c.h.b16 %v675
      %v849 = vunpack.c.l.b16 %v676
      %v850 = vunpack.c.h.b16 %v676
      %v851 = vunpack.c.l.b16 %v677
      %v852 = vunpack.c.h.b16 %v677
      %v853 = vunpack.c.l.b16 %v678
      %v854 = vunpack.c.h.b16 %v678
      %v855 = vunpack.c.l.b16 %v679
      %v856 = vunpack.c.h.b16 %v679
      %v857 = vunpack.c.l.b16 %v680
      %v858 = vunpack.c.h.b16 %v680
      %v859 = vunpack.c.l.b16 %v681
      %v860 = vunpack.c.h.b16 %v681
      %v861 = vunpack.c.l.b16 %v682
      %v862 = vunpack.c.h.b16 %v682
      %v863 = vunpack.c.l.b16 %v683
      %v864 = vunpack.c.h.b16 %v683
      %v865 = vunpack.c.l.b16 %v684
      %v866 = vunpack.c.h.b16 %v684
      %v867 = vunpack.c.l.b16 %v685
      %v868 = vunpack.c.h.b16 %v685
      %v869 = vunpack.c.l.b16 %v686
      %v870 = vunpack.c.h.b16 %v686
      %v871 = vunpack.c.l.b16 %v687
      %v872 = vunpack.c.h.b16 %v687
      %v873 = vunpack.c.l.b16 %v688
      %v874 = vunpack.c.h.b16 %v688
      %v875 = vunpack.c.l.b16 %v689
      %v876 = vunpack.c.h.b16 %v689
      %v877 = vunpack.c.l.b16 %v690
      %v878 = vunpack.c.h.b16 %v690
      %v879 = vunpack.c.l.b16 %v691
      %v880 = vunpack.c.h.b16 %v691
      %v881 = vunpack.c.l.b16 %v692
      %v882 = vunpack.c.h.b16 %v692
      %v883 = vunpack.c.l.b16 %v693
      %v884 = vunpack.c.h.b16 %v693
      %v885 = vunpack.c.l.b16 %v694
      %v886 = vunpack.c.h.b16 %v694
      %v887 = vunpack.c.l.b16 %v695
      %v888 = vunpack.c.h.b16 %v695
      %v889 = vunpack.c.l.b16 %v696
      %v890 = vunpack.c.h.b16 %v696
      %v891 = vunpack.c.l.b16 %v697
      %v892 = vunpack.c.h.b16 %v697
      %v893 = vunpack.c.l.b16 %v698
      %v894 = vunpack.c.h.b16 %v698
      %v895 = vunpack.c.l.b16 %v699
      %v896 = vunpack.c.h.b16 %v699
      %v897 = vunpack.c.l.b16 %v700
      %v898 = vunpack.c.h.b16 %v700
      %v899 = vunpack.c.l.b16 %v701
      %v900 = vunpack.c.h.b16 %v701
      %v901 = vunpack.c.l.b16 %v702
      %v902 = vunpack.c.h.b16 %v702
      %v903 = vunpack.c.l.b16 %v703
      %v904 = vunpack.c.h.b16 %v703
      %v905 = vunpack.c.l.b16 %v704
      %v906 = vunpack.c.h.b16 %v704
      %v907 = vunpack.c.l.b16 %v705
      %v908 = vunpack.c.h.b16 %v705
      %v909 = vunpack.c.l.b16 %v706
      %v910 = vunpack.c.h.b16 %v706
      %v911 = vunpack.c.l.b16 %v707
      %v912 = vunpack.c.h.b16 %v707
      %v913 = vunpack.c.l.b16 %v708
      %v914 = vunpack.c.h.b16 %v708
      %v915 = vunpack.c.l.b16 %v709
      %v916 = vunpack.c.h.b16 %v709
      %v917 = vunpack.c.l.b16 %v710
      %v918 = vunpack.c.h.b16 %v710
      %v919 = vunpack.c.l.b16 %v711
      %v920 = vunpack.c.h.b16 %v711
      %v921 = vunpack.c.l.b16 %v712
      %v922 = vunpack.c.h.b16 %v712
      %v923 = vunpack.c.l.b16 %v713
      %v924 = vunpack.c.h.b16 %v713
      %v925 = vunpack.c.l.b16 %v714
      %v926 = vunpack.c.h.b16 %v714
      %v927 = vunpack.c.l.b16 %v715
      %v928 = vunpack.c.h.b16 %v715
      %v929 = vunpack.c.l.b16 %v716
      %v930 = vunpack.c.h.b16 %v716
      %v931 = vunpack.c.l.b16 %v717
      %v932 = vunpack.c.h.b16 %v717
      %v933 = vunpack.c.l.b16 %v718
      %v934 = vunpack.c.h.b16 %v718
      %v935 = vunpack.c.l.b16 %v719
      %v936 = vunpack.c.h.b16 %v719
      %v937 = vunpack.c.l.b16 %v720
      %v938 = vunpack.c.h.b16 %v720
      %v939 = vunpack.c.l.b16 %v721
      %v940 = vunpack.c.h.b16 %v721
      %v941 = vunpack.c.l.b16 %v722
      %v942 = vunpack.c.h.b16 %v722
      %v943 = vunpack.c.l.b16 %v723
      %v944 = vunpack.c.h.b16 %v723
      %v945 = vunpack.c.l.b16 %v724
      %v946 = vunpack.c.h.b16 %v724
      %v947 = vunpack.c.l.b16 %v725
      %v948 = vunpack.c.h.b16 %v725
      %v949 = vunpack.c.l.b16 %v726
      %v950 = vunpack.c.h.b16 %v726
      %v951 = vunpack.c.l.b16 %v727
      %v952 = vunpack.c.h.b16 %v727
      %v953 = vunpack.c.l.b16 %v728
      %v954 = vunpack.c.h.b16 %v728
      %v955 = vunpack.c.l.b16 %v729
      %v956 = vunpack.c.h.b16 %v729
      %v957 = vunpack.c.l.b16 %v730
      %v958 = vunpack.c.h.b16 %v730
      %v959 = vunpack.c.l.b16 %v731
      %v960 = vunpack.c.h.b16 %v731
      %v961 = vunpack.c.l.b16 %v732
      %v962 = vunpack.c.h.b16 %v732
      %v963 = vunpack.c.l.b16 %v733
      %v964 = vunpack.c.h.b16 %v733
      %v965 = vunpack.c.l.b16 %v734
      %v966 = vunpack.c.h.b16 %v734
      %v967 = vunpack.c.l.b16 %v735
      %v968 = vunpack.c.h.b16 %v735
      %v969 = vunpack.c.l.b16 %v736
      %v970 = vunpack.c.h.b16 %v736
      %v971 = vpack.c.b16 %v851, %v843
      %v972 = vpack.c.b16 %v852, %v844
      %v973 = vpack.c.b16 %v853, %v845
      %v974 = vpack.c.b16 %v854, %v846
      %v975 = vpack.c.b16 %v855, %v847
      %v976 = vpack.c.b16 %v856, %v848
      %v977 = vpack.c.b16 %v857, %v849
      %v978 = vpack.c.b16 %v858, %v850
      %v979 = vpack.c.b16 %v867, %v859
      %v980 = vpack.c.b16 %v868, %v860
      %v981 = vpack.c.b16 %v869, %v861
      %v982 = vpack.c.b16 %v870, %v862
      %v983 = vpack.c.b16 %v871, %v863
      %v984 = vpack.c.b16 %v872, %v864
      %v985 = vpack.c.b16 %v873, %v865
      %v986 = vpack.c.b16 %v874, %v866
      %v987 = vpack.c.b16 %v883, %v875
      %v988 = vpack.c.b16 %v884, %v876
      %v989 = vpack.c.b16 %v885, %v877
      %v990 = vpack.c.b16 %v886, %v878
      %v991 = vpack.c.b16 %v887, %v879
      %v992 = vpack.c.b16 %v888, %v880
      %v993 = vpack.c.b16 %v889, %v881
      %v994 = vpack.c.b16 %v890, %v882
      %v995 = vpack.c.b16 %v899, %v891
      %v996 = vpack.c.b16 %v900, %v892
      %v997 = vpack.c.b16 %v901, %v893
      %v998 = vpack.c.b16 %v902, %v894
      %v999 = vpack.c.b16 %v903, %v895
      %v1000 = vpack.c.b16 %v904, %v896
      %v1001 = vpack.c.b16 %v905, %v897
      %v1002 = vpack.c.b16 %v906, %v898
      %v1003 = vpack.c.b16 %v915, %v907
      %v1004 = vpack.c.b16 %v916, %v908
      %v1005 = vpack.c.b16 %v917, %v909
      %v1006 = vpack.c.b16 %v918, %v910
      %v1007 = vpack.c.b16 %v919, %v911
      %v1008 = vpack.c.b16 %v920, %v912
      %v1009 = vpack.c.b16 %v921, %v913
      %v1010 = vpack.c.b16 %v922, %v914
      %v1011 = vpack.c.b16 %v931, %v923
      %v1012 = vpack.c.b16 %v932, %v924
      %v1013 = vpack.c.b16 %v933, %v925
      %v1014 = vpack.c.b16 %v934, %v926
      %v1015 = vpack.c.b16 %v935, %v927
      %v1016 = vpack.c.b16 %v936, %v928
      %v1017 = vpack.c.b16 %v937, %v929
      %v1018 = vpack.c.b16 %v938, %v930
      %v1019 = vpack.c.b16 %v947, %v939
      %v1020 = vpack.c.b16 %v948, %v940
      %v1021 = vpack.c.b16 %v949, %v941
      %v1022 = vpack.c.b16 %v950, %v942
      %v1023 = vpack.c.b16 %v951, %v943
      %v1024 = vpack.c.b16 %v952, %v944
      %v1025 = vpack.c.b16 %v953, %v945
      %v1026 = vpack.c.b16 %v954, %v946
      %v1027 = vpack.c.b16 %v963, %v955
      %v1028 = vpack.c.b16 %v964, %v956
      %v1029 = vpack.c.b16 %v965, %v957
      %v1030 = vpack.c.b16 %v966, %v958
      %v1031 = vpack.c.b16 %v967, %v959
      %v1032 = vpack.c.b16 %v968, %v960
      %v1033 = vpack.c.b16 %v969, %v961
      %v1034 = vpack.c.b16 %v970, %v962
      %1099 = vmatprep.subr.bf16.mxu0 %v1028
      %1100 = vmatpush1.bf16.msra.mxu0 %v1027
      %1101 = vmatprep.subr.bf16.mxu0 %v1020
      %1102 = vmatpush1.bf16.msra.mxu0 %v1019
      %1103 = vmatprep.subr.bf16.mxu0 %v1012
      %1104 = vmatpush1.bf16.msra.mxu0 %v1011
      %1105 = vmatprep.subr.bf16.mxu0 %v1004
      %1106 = vmatpush1.bf16.msra.mxu0 %v1003
      %1107 = vmatprep.subr.bf16.mxu0 %v996
      %1108 = vmatpush1.bf16.msra.mxu0 %v995
      %1109 = vmatprep.subr.bf16.mxu0 %v988
      %1110 = vmatpush1.bf16.msra.mxu0 %v987
      %1111 = vmatprep.subr.bf16.mxu0 %v980
      %1112 = vmatpush1.bf16.msra.mxu0 %v979
      %1113 = vmatprep.subr.bf16.mxu0 %v972
      %1114 = vmatpush1.bf16.msra.mxu0 %v971
      %1115 = vmatprep.subr.bf16.mxu0 0
      %1116 = vmatpush2.bf16.msra.mxu0 0
      %1117 = vmatprep.subr.bf16.mxu0 0
      %1118 = vmatpush2.bf16.msra.mxu0 0
      %1119 = vmatprep.subr.bf16.mxu0 0
      %1120 = vmatpush2.bf16.msra.mxu0 0
      %1121 = vmatprep.subr.bf16.mxu0 0
      %1122 = vmatpush2.bf16.msra.mxu0 0
      %1123 = vmatprep.subr.bf16.mxu0 0
      %1124 = vmatpush2.bf16.msra.mxu0 0
      %1125 = vmatprep.subr.bf16.mxu0 0
      %1126 = vmatpush2.bf16.msra.mxu0 0
      %1127 = vmatprep.subr.bf16.mxu0 0
      %1128 = vmatpush2.bf16.msra.mxu0 0
      %1129 = vmatprep.subr.bf16.mxu0 0
      %1130 = vmatpush2.bf16.msra.mxu0 0
      %1131 = vmatprep.mubr.bf16.mxu0 0
      %1132 = vmatmul.mubr.bf16.gmra.mxu0 %v669
      %v1133 = vpop.f32.mrf.mxu0
      %v1134 = vadd.f32 %v742, %v1133
      %v1135 = vpop.f32.mrf.mxu0
      %v1136 = vadd.f32 %v746, %v1135
      %v1137 = vpop.f32.mrf.mxu0
      %v1138 = vadd.f32 %v742, %v1137
      %v1139 = vpop.f32.mrf.mxu0
      %v1140 = vadd.f32 %v746, %v1139
      %1141 = vmatprep.mubr.bf16.mxu0 0
      %1142 = vmatmul.mubr.bf16.gmra.mxu0 %v670
      %v1143 = vpop.f32.mrf.mxu0
      %v1144 = vadd.f32 %v742, %v1143
      %v1145 = vpop.f32.mrf.mxu0
      %v1146 = vadd.f32 %v746, %v1145
      %v1147 = vpop.f32.mrf.mxu0
      %v1148 = vadd.f32 %v742, %v1147
      %v1149 = vpop.f32.mrf.mxu0
      %v1150 = vadd.f32 %v746, %v1149
      %1151 = vmatprep.mubr.bf16.mxu0 0
      %1152 = vmatmul.mubr.bf16.gmra.mxu0 %v671
      %v1153 = vpop.f32.mrf.mxu0
      %v1154 = vadd.f32 %v742, %v1153
      %v1155 = vpop.f32.mrf.mxu0
      %v1156 = vadd.f32 %v746, %v1155
      %v1157 = vpop.f32.mrf.mxu0
      %v1158 = vadd.f32 %v742, %v1157
      %v1159 = vpop.f32.mrf.mxu0
      %v1160 = vadd.f32 %v746, %v1159
      %1161 = vmatprep.mubr.bf16.mxu0 0
      %1162 = vmatmul.mubr.bf16.gmra.mxu0 %v672
      %v1163 = vpop.f32.mrf.mxu0
      %v1164 = vadd.f32 %v742, %v1163
      %v1165 = vpop.f32.mrf.mxu0
      %v1166 = vadd.f32 %v746, %v1165
      %v1167 = vpop.f32.mrf.mxu0
      %v1168 = vadd.f32 %v742, %v1167
      %v1169 = vpop.f32.mrf.mxu0
      %v1170 = vadd.f32 %v746, %v1169
      %1171 = vdwg.mxu0
      %1172 = vmatprep.subr.bf16.mxu0 %v1030
      %1173 = vmatpush1.bf16.msra.mxu0 %v1029
      %1174 = vmatprep.subr.bf16.mxu0 %v1022
      %1175 = vmatpush1.bf16.msra.mxu0 %v1021
      %1176 = vmatprep.subr.bf16.mxu0 %v1014
      %1177 = vmatpush1.bf16.msra.mxu0 %v1013
      %1178 = vmatprep.subr.bf16.mxu0 %v1006
      %1179 = vmatpush1.bf16.msra.mxu0 %v1005
      %1180 = vmatprep.subr.bf16.mxu0 %v998
      %1181 = vmatpush1.bf16.msra.mxu0 %v997
      %1182 = vmatprep.subr.bf16.mxu0 %v990
      %1183 = vmatpush1.bf16.msra.mxu0 %v989
      %1184 = vmatprep.subr.bf16.mxu0 %v982
      %1185 = vmatpush1.bf16.msra.mxu0 %v981
      %1186 = vmatprep.subr.bf16.mxu0 %v974
      %1187 = vmatpush1.bf16.msra.mxu0 %v973
      %1188 = vmatprep.subr.bf16.mxu0 0
      %1189 = vmatpush2.bf16.msra.mxu0 0
      %1190 = vmatprep.subr.bf16.mxu0 0
      %1191 = vmatpush2.bf16.msra.mxu0 0
      %1192 = vmatprep.subr.bf16.mxu0 0
      %1193 = vmatpush2.bf16.msra.mxu0 0
      %1194 = vmatprep.subr.bf16.mxu0 0
      %1195 = vmatpush2.bf16.msra.mxu0 0
      %1196 = vmatprep.subr.bf16.mxu0 0
      %1197 = vmatpush2.bf16.msra.mxu0 0
      %1198 = vmatprep.subr.bf16.mxu0 0
      %1199 = vmatpush2.bf16.msra.mxu0 0
      %1200 = vmatprep.subr.bf16.mxu0 0
      %1201 = vmatpush2.bf16.msra.mxu0 0
      %1202 = vmatprep.subr.bf16.mxu0 0
      %1203 = vmatpush2.bf16.msra.mxu0 0
      %1204 = vmatprep.mubr.bf16.mxu0 0
      %1205 = vmatmul.mubr.bf16.gmra.mxu0 %v669
      %v1206 = vpop.f32.mrf.mxu0
      %v1207 = vadd.f32 %v750, %v1206
      %v1208 = vpop.f32.mrf.mxu0
      %v1209 = vadd.f32 %v754, %v1208
      %v1210 = vpop.f32.mrf.mxu0
      %v1211 = vadd.f32 %v750, %v1210
      %v1212 = vpop.f32.mrf.mxu0
      %v1213 = vadd.f32 %v754, %v1212
      %1214 = vmatprep.mubr.bf16.mxu0 0
      %1215 = vmatmul.mubr.bf16.gmra.mxu0 %v670
      %v1216 = vpop.f32.mrf.mxu0
      %v1217 = vadd.f32 %v750, %v1216
      %v1218 = vpop.f32.mrf.mxu0
      %v1219 = vadd.f32 %v754, %v1218
      %v1220 = vpop.f32.mrf.mxu0
      %v1221 = vadd.f32 %v750, %v1220
      %v1222 = vpop.f32.mrf.mxu0
      %v1223 = vadd.f32 %v754, %v1222
      %1224 = vmatprep.mubr.bf16.mxu0 0
      %1225 = vmatmul.mubr.bf16.gmra.mxu0 %v671
      %v1226 = vpop.f32.mrf.mxu0
      %v1227 = vadd.f32 %v750, %v1226
      %v1228 = vpop.f32.mrf.mxu0
      %v1229 = vadd.f32 %v754, %v1228
      %v1230 = vpop.f32.mrf.mxu0
      %v1231 = vadd.f32 %v750, %v1230
      %v1232 = vpop.f32.mrf.mxu0
      %v1233 = vadd.f32 %v754, %v1232
      %1234 = vmatprep.mubr.bf16.mxu0 0
      %1235 = vmatmul.mubr.bf16.gmra.mxu0 %v672
      %v1236 = vpop.f32.mrf.mxu0
      %v1237 = vadd.f32 %v750, %v1236
      %v1238 = vpop.f32.mrf.mxu0
      %v1239 = vadd.f32 %v754, %v1238
      %v1240 = vpop.f32.mrf.mxu0
      %v1241 = vadd.f32 %v750, %v1240
      %v1242 = vpop.f32.mrf.mxu0
      %v1243 = vadd.f32 %v754, %v1242
      %1244 = vdwg.mxu0
      %1245 = vmatprep.subr.bf16.mxu0 %v1032
      %1246 = vmatpush1.bf16.msra.mxu0 %v1031
      %1247 = vmatprep.subr.bf16.mxu0 %v1024
      %1248 = vmatpush1.bf16.msra.mxu0 %v1023
      %1249 = vmatprep.subr.bf16.mxu0 %v1016
      %1250 = vmatpush1.bf16.msra.mxu0 %v1015
      %1251 = vmatprep.subr.bf16.mxu0 %v1008
      %1252 = vmatpush1.bf16.msra.mxu0 %v1007
      %1253 = vmatprep.subr.bf16.mxu0 %v1000
      %1254 = vmatpush1.bf16.msra.mxu0 %v999
      %1255 = vmatprep.subr.bf16.mxu0 %v992
      %1256 = vmatpush1.bf16.msra.mxu0 %v991
      %1257 = vmatprep.subr.bf16.mxu0 %v984
      %1258 = vmatpush1.bf16.msra.mxu0 %v983
      %1259 = vmatprep.subr.bf16.mxu0 %v976
      %1260 = vmatpush1.bf16.msra.mxu0 %v975
      %1261 = vmatprep.subr.bf16.mxu0 0
      %1262 = vmatpush2.bf16.msra.mxu0 0
      %1263 = vmatprep.subr.bf16.mxu0 0
      %1264 = vmatpush2.bf16.msra.mxu0 0
      %1265 = vmatprep.subr.bf16.mxu0 0
      %1266 = vmatpush2.bf16.msra.mxu0 0
      %1267 = vmatprep.subr.bf16.mxu0 0
      %1268 = vmatpush2.bf16.msra.mxu0 0
      %1269 = vmatprep.subr.bf16.mxu0 0
      %1270 = vmatpush2.bf16.msra.mxu0 0
      %1271 = vmatprep.subr.bf16.mxu0 0
      %1272 = vmatpush2.bf16.msra.mxu0 0
      %1273 = vmatprep.subr.bf16.mxu0 0
      %1274 = vmatpush2.bf16.msra.mxu0 0
      %1275 = vmatprep.subr.bf16.mxu0 0
      %1276 = vmatpush2.bf16.msra.mxu0 0
      %1277 = vmatprep.mubr.bf16.mxu0 0
      %1278 = vmatmul.mubr.bf16.gmra.mxu0 %v669
      %v1279 = vpop.f32.mrf.mxu0
      %v1280 = vadd.f32 %v758, %v1279
      %v1281 = vpop.f32.mrf.mxu0
      %v1282 = vadd.f32 %v762, %v1281
      %v1283 = vpop.f32.mrf.mxu0
      %v1284 = vadd.f32 %v758, %v1283
      %v1285 = vpop.f32.mrf.mxu0
      %v1286 = vadd.f32 %v762, %v1285
      %1287 = vmatprep.mubr.bf16.mxu0 0
      %1288 = vmatmul.mubr.bf16.gmra.mxu0 %v670
      %v1289 = vpop.f32.mrf.mxu0
      %v1290 = vadd.f32 %v758, %v1289
      %v1291 = vpop.f32.mrf.mxu0
      %v1292 = vadd.f32 %v762, %v1291
      %v1293 = vpop.f32.mrf.mxu0
      %v1294 = vadd.f32 %v758, %v1293
      %v1295 = vpop.f32.mrf.mxu0
      %v1296 = vadd.f32 %v762, %v1295
      %1297 = vmatprep.mubr.bf16.mxu0 0
      %1298 = vmatmul.mubr.bf16.gmra.mxu0 %v671
      %v1299 = vpop.f32.mrf.mxu0
      %v1300 = vadd.f32 %v758, %v1299
      %v1301 = vpop.f32.mrf.mxu0
      %v1302 = vadd.f32 %v762, %v1301
      %v1303 = vpop.f32.mrf.mxu0
      %v1304 = vadd.f32 %v758, %v1303
      %v1305 = vpop.f32.mrf.mxu0
      %v1306 = vadd.f32 %v762, %v1305
      %1307 = vmatprep.mubr.bf16.mxu0 0
      %1308 = vmatmul.mubr.bf16.gmra.mxu0 %v672
      %v1309 = vpop.f32.mrf.mxu0
      %v1310 = vadd.f32 %v758, %v1309
      %v1311 = vpop.f32.mrf.mxu0
      %v1312 = vadd.f32 %v762, %v1311
      %v1313 = vpop.f32.mrf.mxu0
      %v1314 = vadd.f32 %v758, %v1313
      %v1315 = vpop.f32.mrf.mxu0
      %v1316 = vadd.f32 %v762, %v1315
      %1317 = vdwg.mxu0
      %1318 = vmatprep.subr.bf16.mxu0 %v1034
      %1319 = vmatpush1.bf16.msra.mxu0 %v1033
      %1320 = vmatprep.subr.bf16.mxu0 %v1026
      %1321 = vmatpush1.bf16.msra.mxu0 %v1025
      %1322 = vmatprep.subr.bf16.mxu0 %v1018
      %1323 = vmatpush1.bf16.msra.mxu0 %v1017
      %1324 = vmatprep.subr.bf16.mxu0 %v1010
      %1325 = vmatpush1.bf16.msra.mxu0 %v1009
      %1326 = vmatprep.subr.bf16.mxu0 %v1002
      %1327 = vmatpush1.bf16.msra.mxu0 %v1001
      %1328 = vmatprep.subr.bf16.mxu0 %v994
      %1329 = vmatpush1.bf16.msra.mxu0 %v993
      %1330 = vmatprep.subr.bf16.mxu0 %v986
      %1331 = vmatpush1.bf16.msra.mxu0 %v985
      %1332 = vmatprep.subr.bf16.mxu0 %v978
      %1333 = vmatpush1.bf16.msra.mxu0 %v977
      %1334 = vmatprep.subr.bf16.mxu0 0
      %1335 = vmatpush2.bf16.msra.mxu0 0
      %1336 = vmatprep.subr.bf16.mxu0 0
      %1337 = vmatpush2.bf16.msra.mxu0 0
      %1338 = vmatprep.subr.bf16.mxu0 0
      %1339 = vmatpush2.bf16.msra.mxu0 0
      %1340 = vmatprep.subr.bf16.mxu0 0
      %1341 = vmatpush2.bf16.msra.mxu0 0
      %1342 = vmatprep.subr.bf16.mxu0 0
      %1343 = vmatpush2.bf16.msra.mxu0 0
      %1344 = vmatprep.subr.bf16.mxu0 0
      %1345 = vmatpush2.bf16.msra.mxu0 0
      %1346 = vmatprep.subr.bf16.mxu0 0
      %1347 = vmatpush2.bf16.msra.mxu0 0
      %1348 = vmatprep.subr.bf16.mxu0 0
      %1349 = vmatpush2.bf16.msra.mxu0 0
      %1350 = vmatprep.mubr.bf16.mxu0 0
      %1351 = vmatmul.mubr.bf16.gmra.mxu0 %v669
      %v1352 = vpop.f32.mrf.mxu0
      %v1353 = vadd.f32 %v766, %v1352
      %v1354 = vpop.f32.mrf.mxu0
      %v1355 = vadd.f32 %v770, %v1354
      %v1356 = vpop.f32.mrf.mxu0
      %v1357 = vadd.f32 %v766, %v1356
      %v1358 = vpop.f32.mrf.mxu0
      %v1359 = vadd.f32 %v770, %v1358
      %1360 = vmatprep.mubr.bf16.mxu0 0
      %1361 = vmatmul.mubr.bf16.gmra.mxu0 %v670
      %v1362 = vpop.f32.mrf.mxu0
      %v1363 = vadd.f32 %v766, %v1362
      %v1364 = vpop.f32.mrf.mxu0
      %v1365 = vadd.f32 %v770, %v1364
      %v1366 = vpop.f32.mrf.mxu0
      %v1367 = vadd.f32 %v766, %v1366
      %v1368 = vpop.f32.mrf.mxu0
      %v1369 = vadd.f32 %v770, %v1368
      %1370 = vmatprep.mubr.bf16.mxu0 0
      %1371 = vmatmul.mubr.bf16.gmra.mxu0 %v671
      %v1372 = vpop.f32.mrf.mxu0
      %v1373 = vadd.f32 %v766, %v1372
      %v1374 = vpop.f32.mrf.mxu0
      %v1375 = vadd.f32 %v770, %v1374
      %v1376 = vpop.f32.mrf.mxu0
      %v1377 = vadd.f32 %v766, %v1376
      %v1378 = vpop.f32.mrf.mxu0
      %v1379 = vadd.f32 %v770, %v1378
      %1380 = vmatprep.mubr.bf16.mxu0 0
      %1381 = vmatmul.mubr.bf16.gmra.mxu0 %v672
      %v1382 = vpop.f32.mrf.mxu0
      %v1383 = vadd.f32 %v766, %v1382
      %v1384 = vpop.f32.mrf.mxu0
      %v1385 = vadd.f32 %v770, %v1384
      %v1386 = vpop.f32.mrf.mxu0
      %v1387 = vadd.f32 %v766, %v1386
      %v1388 = vpop.f32.mrf.mxu0
      %v1389 = vadd.f32 %v770, %v1388
      %1390 = vdwg.mxu0
      %p1391 = scmp.eq.s32.totalorder %s25, 0
      // Predicated region
      $region49: #{pointnet_densecls_forward.6} parent=47 // pred_check
        %p1392 = pneg %p1391
      $region50: #{pointnet_densecls_forward.6} parent=47 // pred_check_branch
        %1394 = sbr.rel (%p1392) target = $region52
      $region51: #{pointnet_densecls_forward.6} parent=47 // pred_region
        %1395 = vst [vmem:[%s372] sm:$0xff] -inf
      $region52: #{pointnet_densecls_forward.6} parent=47 // pred_fallthru
        _
      %v1396 = vld [vmem:[%s372] sm:$0xff]
      %v1397 = vmax.f32 %v1134, %v1138
      %v1398 = vmax.f32 %v1397, %v1144
      %v1399 = vmax.f32 %v1398, %v1148
      %v1400 = vmax.f32 %v1399, %v1154
      %v1401 = vmax.f32 %v1400, %v1158
      %v1402 = vmax.f32 %v1401, %v1164
      %v1403 = vmax.f32 %v1402, %v1168
      %v1404 = vrot.slane %v1403, 4
      %v1405 = vmax.f32 %v1403, %v1404
      %v1406 = vrot.slane %v1405, 2
      %v1407 = vmax.f32 %v1405, %v1406
      %v1408 = vrot.slane %v1407, 1
      %v1409 = vmax.f32 %v1407, %v1408
      %v1410 = vmax.f32 %v1136, %v1140
      %v1411 = vmax.f32 %v1410, %v1146
      %v1412 = vmax.f32 %v1411, %v1150
      %v1413 = vmax.f32 %v1412, %v1156
      %v1414 = vmax.f32 %v1413, %v1160
      %v1415 = vmax.f32 %v1414, %v1166
      %v1416 = vmax.f32 %v1415, %v1170
      %v1417 = vrot.slane %v1416, 4
      %v1418 = vmax.f32 %v1416, %v1417
      %v1419 = vrot.slane %v1418, 2
      %v1420 = vmax.f32 %v1418, %v1419
      %v1421 = vrot.slane %v1420, 1
      %v1422 = vmax.f32 %v1420, %v1421
      %v1423 = vmax.f32 %v1207, %v1211
      %v1424 = vmax.f32 %v1423, %v1217
      %v1425 = vmax.f32 %v1424, %v1221
      %v1426 = vmax.f32 %v1425, %v1227
      %v1427 = vmax.f32 %v1426, %v1231
      %v1428 = vmax.f32 %v1427, %v1237
      %v1429 = vmax.f32 %v1428, %v1241
      %v1430 = vrot.slane %v1429, 4
      %v1431 = vmax.f32 %v1429, %v1430
      %v1432 = vrot.slane %v1431, 2
      %v1433 = vmax.f32 %v1431, %v1432
      %v1434 = vrot.slane %v1433, 1
      %v1435 = vmax.f32 %v1433, %v1434
      %v1436 = vmax.f32 %v1209, %v1213
      %v1437 = vmax.f32 %v1436, %v1219
      %v1438 = vmax.f32 %v1437, %v1223
      %v1439 = vmax.f32 %v1438, %v1229
      %v1440 = vmax.f32 %v1439, %v1233
      %v1441 = vmax.f32 %v1440, %v1239
      %v1442 = vmax.f32 %v1441, %v1243
      %v1443 = vrot.slane %v1442, 4
      %v1444 = vmax.f32 %v1442, %v1443
      %v1445 = vrot.slane %v1444, 2
      %v1446 = vmax.f32 %v1444, %v1445
      %v1447 = vrot.slane %v1446, 1
      %v1448 = vmax.f32 %v1446, %v1447
      %v1449 = vmax.f32 %v1280, %v1284
      %v1450 = vmax.f32 %v1449, %v1290
      %v1451 = vmax.f32 %v1450, %v1294
      %v1452 = vmax.f32 %v1451, %v1300
      %v1453 = vmax.f32 %v1452, %v1304
      %v1454 = vmax.f32 %v1453, %v1310
      %v1455 = vmax.f32 %v1454, %v1314
      %v1456 = vrot.slane %v1455, 4
      %v1457 = vmax.f32 %v1455, %v1456
      %v1458 = vrot.slane %v1457, 2
      %v1459 = vmax.f32 %v1457, %v1458
      %v1460 = vrot.slane %v1459, 1
      %v1461 = vmax.f32 %v1459, %v1460
      %v1462 = vmax.f32 %v1282, %v1286
      %v1463 = vmax.f32 %v1462, %v1292
      %v1464 = vmax.f32 %v1463, %v1296
      %v1465 = vmax.f32 %v1464, %v1302
      %v1466 = vmax.f32 %v1465, %v1306
      %v1467 = vmax.f32 %v1466, %v1312
      %v1468 = vmax.f32 %v1467, %v1316
      %v1469 = vrot.slane %v1468, 4
      %v1470 = vmax.f32 %v1468, %v1469
      %v1471 = vrot.slane %v1470, 2
      %v1472 = vmax.f32 %v1470, %v1471
      %v1473 = vrot.slane %v1472, 1
      %v1474 = vmax.f32 %v1472, %v1473
      %v1475 = vmax.f32 %v1353, %v1357
      %v1476 = vmax.f32 %v1475, %v1363
      %v1477 = vmax.f32 %v1476, %v1367
      %v1478 = vmax.f32 %v1477, %v1373
      %v1479 = vmax.f32 %v1478, %v1377
      %v1480 = vmax.f32 %v1479, %v1383
      %v1481 = vmax.f32 %v1480, %v1387
      %v1482 = vrot.slane %v1481, 4
      %v1483 = vmax.f32 %v1481, %v1482
      %v1484 = vrot.slane %v1483, 2
      %v1485 = vmax.f32 %v1483, %v1484
      %v1486 = vrot.slane %v1485, 1
      %v1487 = vmax.f32 %v1485, %v1486
      %v1488 = vmax.f32 %v1355, %v1359
      %v1489 = vmax.f32 %v1488, %v1365
      %v1490 = vmax.f32 %v1489, %v1369
      %v1491 = vmax.f32 %v1490, %v1375
      %v1492 = vmax.f32 %v1491, %v1379
      %v1493 = vmax.f32 %v1492, %v1385
      %v1494 = vmax.f32 %v1493, %v1389
      %v1495 = vrot.slane %v1494, 4
      %v1496 = vmax.f32 %v1494, %v1495
      %v1497 = vrot.slane %v1496, 2
      %v1498 = vmax.f32 %v1496, %v1497
      %v1499 = vrot.slane %v1498, 1
      %v1500 = vmax.f32 %v1498, %v1499
      %v1509 = vcombine.low %v1409, %v1422
      %v1510 = vcombine.low %v1435, %v1448
      %v1511 = vcombine.low %v1461, %v1474
      %v1512 = vcombine.low %v1487, %v1500
      %v1514 = vunpack.c.l.s4 1966171168
      %v1515 = vunpack.c.0.s8 %v1514
      %v1516 = vlaneseq
      %v1517 = vshrl.u32 %v1516, 7
      %v1518 = vsub.s32 %v1515, %v1517
      %v1519 = vrot.slane %v1509, %v1518
      %v1521 = vunpack.c.l.s4 1966171168
      %v1522 = vunpack.c.0.s8 %v1521
      %v1523 = vlaneseq
      %v1524 = vshrl.u32 %v1523, 7
      %v1525 = vsub.s32 %v1522, %v1524
      %v1526 = vrot.slane %v1510, %v1525
      %v1528 = vunpack.c.l.s4 1966171168
      %v1529 = vunpack.c.0.s8 %v1528
      %v1530 = vlaneseq
      %v1531 = vshrl.u32 %v1530, 7
      %v1532 = vsub.s32 %v1529, %v1531
      %v1533 = vrot.slane %v1511, %v1532
      %v1535 = vunpack.c.l.s4 1966171168
      %v1536 = vunpack.c.0.s8 %v1535
      %v1537 = vlaneseq
      %v1538 = vshrl.u32 %v1537, 7
      %v1539 = vsub.s32 %v1536, %v1538
      %v1540 = vrot.slane %v1512, %v1539
      %v1541 = vcombine.low %v1519, %v1526
      %v1542 = vcombine.low %v1533, %v1540
      %v1544 = vunpack.c.l.s4 1966171168
      %v1545 = vunpack.c.0.s8 %v1544
      %v1546 = vlaneseq
      %v1547 = vshrl.u32 %v1546, 7
      %v1548 = vsub.s32 %v1545, %v1547
      %v1549 = vrot.slane %v1541, %v1548
      %v1551 = vunpack.c.l.s4 1966171168
      %v1552 = vunpack.c.0.s8 %v1551
      %v1553 = vlaneseq
      %v1554 = vshrl.u32 %v1553, 7
      %v1555 = vsub.s32 %v1552, %v1554
      %v1556 = vrot.slane %v1542, %v1555
      %v1557 = vcombine.low %v1549, %v1556
      %v1559 = vmax.f32 %v1396, %v1557
      %1560 = vst [vmem:[%s372] sm:$0xff] %v1559
      %s1561 = smul.u32 8, %s25
      %p1562 = scmp.lt.s32.totalorder %s24, 1
      %s1563 = scalar_select %p1562, %s24, 1
      %p1564 = scmp.lt.s32.totalorder %s1561, 7
      %s1565 = scalar_select %p1564, %s1561, 7
      %s1566 = smul.addr %s1563, 8
      %s1567 = sadd.s32 %s1565, %s1566
      %s1568 = smul.addr %s1567, 4
      %s1569 = scalar_lea.vmem %s7, %s1568
      %p1570 = scmp.lt.s32.totalorder %s24, 1
      %s1571 = scalar_select %p1570, %s24, 1
      %s1572 = smul.addr %s1571, 8
      %s1573 = scalar_lea.vmem %s8, %s1572
      // Predicated region
      $region53: #{pointnet_densecls_forward.6} parent=47 // pred_check
        %p1574 = pneg %p211
      $region54: #{pointnet_densecls_forward.6} parent=47 // pred_check_branch
        %1576 = sbr.rel (%p1574) target = $region56
      $region55: #{pointnet_densecls_forward.6} parent=47 // pred_region
        %s1577 = smul.u32 8, %s25
      $region56: #{pointnet_densecls_forward.6} parent=47 // pred_fallthru
        _
      // Predicated region
      $region57: #{pointnet_densecls_forward.6} parent=47 // pred_check
        %p1578 = pneg %p237
      $region58: #{pointnet_densecls_forward.6} parent=47 // pred_check_branch
        %1580 = sbr.rel (%p1578) target = $region60
      $region59: #{pointnet_densecls_forward.6} parent=47 // pred_region
        _
      $region60: #{pointnet_densecls_forward.6} parent=47 // pred_fallthru
        _
    $region48: #{pointnet_densecls_forward.6} parent=5 // pred_fallthru
      _
    %p1581 = scmp.le.s32.totalorder 2, %s15
    // Predicated region
    $region61: #{pointnet_densecls_forward.6} parent=5 // pred_check
      %p1582 = pneg %p1581
    $region62: #{pointnet_densecls_forward.6} parent=5 // pred_check_branch
      %1584 = sbr.rel (%p1582) target = $region64
    $region63: #{pointnet_densecls_forward.6} parent=5 // pred_region
      %s1585 = ssub.s32 %s15, 2
      // Predicated region
      $region65: #{pointnet_densecls_forward.6} parent=63 // pred_check
        %p1586 = pneg %p217
      $region66: #{pointnet_densecls_forward.6} parent=63 // pred_check_branch
        %1588 = sbr.rel (%p1586) target = $region68
      $region67: #{pointnet_densecls_forward.6} parent=63 // pred_region
        %s1589 = smul.u32 8, %s27
        %p1590 = scmp.lt.s32.totalorder %s26, 1
        %s1591 = scalar_select %p1590, %s26, 1
        %p1592 = scmp.lt.s32.totalorder %s1589, 7
        %s1593 = scalar_select %p1592, %s1589, 7
        %s1594 = smul.addr %s1591, 8
        %s1595 = sadd.s32 %s1593, %s1594
        %s1596 = smul.addr %s1595, 4
        %s1597 = scalar_lea.vmem %s7, %s1596
      $region68: #{pointnet_densecls_forward.6} parent=63 // pred_fallthru
        _
      // Predicated region
      $region69: #{pointnet_densecls_forward.6} parent=63 // pred_check
        %p1598 = pneg %p243
      $region70: #{pointnet_densecls_forward.6} parent=63 // pred_check_branch
        %1600 = sbr.rel (%p1598) target = $region72
      $region71: #{pointnet_densecls_forward.6} parent=63 // pred_region
        %p1601 = scmp.lt.s32.totalorder %s26, 1
        %s1602 = scalar_select %p1601, %s26, 1
        %s1603 = smul.addr %s1602, 8
        %s1604 = scalar_lea.vmem %s8, %s1603
      $region72: #{pointnet_densecls_forward.6} parent=63 // pred_fallthru
        _
    $region64: #{pointnet_densecls_forward.6} parent=5 // pred_fallthru
      _
  $region6: #{pointnet_densecls_forward.6} parent=0 // loop_footer
    %s19 = sadd.s32 1, %s15
  $region7: #{pointnet_densecls_forward.6} parent=0 // loop_footer_branch
    %14 = sbr.rel target = $region3
  $region8: #{pointnet_densecls_forward.6} parent=0 // loop_exit
    _

// kernel: pointnet_densecls_forward.5
$region0: #{pointnet_densecls_forward.5}
  #allocation0 [shape = 'u32[]', space=smem, size = 0x4, offset = 0x4, fixed_abs, tag = 'smem constant byte address 0x4 - core index']
  #allocation1 [shape = 'u32[144,128]{1,0:T(1,128)}', space=vmem, size = 0x12000, scoped, tag = 'internal scratch']
  %s0 = inlined_call_operand.vmem [shape: f32[2,1024], index: 0, kind: input, shape index: {}]
  %s1 = inlined_call_operand.hbm [shape: f32[1024,512], index: 1, kind: input, shape index: {}]
  %s2 = inlined_call_operand.hbm [shape: f32[1,512], index: 2, kind: input, shape index: {}]
  %s3 = inlined_call_operand.hbm [shape: f32[512,256], index: 3, kind: input, shape index: {}]
  %s4 = inlined_call_operand.hbm [shape: f32[1,256], index: 4, kind: input, shape index: {}]
  %s5 = inlined_call_operand.vmem [shape: f32[256,9], index: 5, kind: input, shape index: {}]
  %s6 = inlined_call_operand.hbm [shape: f32[1,9], index: 6, kind: input, shape index: {}]
  %s7 = inlined_call_operand.vmem [shape: f32[2,9], index: 7, kind: output, shape index: {}]
  %s8 = sld [smem:[#allocation0]]
  $region58: #{pointnet_densecls_forward.5} parent=0
    _
  %s10 = ssub.s32 1, %s8
  %s11 = scalar_select 0, %s10, %s8
  $region1: #{pointnet_densecls_forward.5} parent=0
    #allocation2 [shape = 'u8[2097152]{0}', space=vmem, size = 0x200000, scoped, tag = 'input window, operand 1, single buffered']
    #allocation3 [shape = 's32[1]{0}', space=sflag, size = 0x4, scoped, tag = 'scoped memory for pointnet_densecls_forward.5']
    #allocation4 [shape = 'u8[2048]{0}', space=vmem, size = 0x800, scoped, tag = 'input window, operand 2, single buffered']
    #allocation5 [shape = 's32[1]{0}', space=sflag, size = 0x4, scoped, tag = 'scoped memory for pointnet_densecls_forward.5']
    #allocation6 [shape = 'u8[524288]{0}', space=vmem, size = 0x80000, scoped, tag = 'input window, operand 3, single buffered']
    #allocation7 [shape = 'u8[1024]{0}', space=vmem, size = 0x400, scoped, tag = 'input window, operand 4, single buffered']
    #allocation8 [shape = 's32[1]{0}', space=sflag, size = 0x4, scoped, tag = 'scoped memory for pointnet_densecls_forward.5']
    #allocation9 [shape = 'u8[512]{0}', space=vmem, size = 0x400, scoped, tag = 'input window, operand 6, single buffered']
    %12 = vsyncpa [#allocation3], 0
    %13 = vsyncpa [#allocation5], 0
    %14 = vsyncpa [#allocation8], 0
    // Predicated region
    $region2: #{pointnet_densecls_forward.5} parent=1 // pred_check
      _
    $region3: #{pointnet_densecls_forward.5} parent=1 // pred_check_branch
      %16 = sbr.rel (0) target = $region5
    $region4: #{pointnet_densecls_forward.5} parent=1 // pred_region
      _
    $region5: #{pointnet_densecls_forward.5} parent=1 // pred_fallthru
      _
    // Predicated region
    $region6: #{pointnet_densecls_forward.5} parent=1 // pred_check
      _
    $region7: #{pointnet_densecls_forward.5} parent=1 // pred_check_branch
      %18 = sbr.rel (0) target = $region9
    $region8: #{pointnet_densecls_forward.5} parent=1 // pred_region
      %s20 = ssub.s32 65536, 65536
      %21 = vsyncadd [#allocation3], %s20
      %s22 = sshll.u32 [#allocation2], 4
      %s23 = int_to_ptr.vmem [resolvable:$true] %s22
      %28 = dma.hbm_to_vmem [thread:$0]  %s1, 65536, %s23, [#allocation3], 512, 512, 32
    $region9: #{pointnet_densecls_forward.5} parent=1 // pred_fallthru
      _
    // Predicated region
    $region10: #{pointnet_densecls_forward.5} parent=1 // pred_check
      _
    $region11: #{pointnet_densecls_forward.5} parent=1 // pred_check_branch
      %30 = sbr.rel (0) target = $region13
    $region12: #{pointnet_densecls_forward.5} parent=1 // pred_region
      %s32 = ssub.s32 64, 64
      %33 = vsyncadd [#allocation5], %s32
      %s35 = sshll.u32 [#allocation4], 4
      %s36 = int_to_ptr.vmem [resolvable:$true] %s35
      %38 = dma.hbm_to_vmem [thread:$0]  %s2, 64, %s36, [#allocation5]
    $region13: #{pointnet_densecls_forward.5} parent=1 // pred_fallthru
      _
    // Predicated region
    $region14: #{pointnet_densecls_forward.5} parent=1 // pred_check
      _
    $region15: #{pointnet_densecls_forward.5} parent=1 // pred_check_branch
      %40 = sbr.rel (0) target = $region17
    $region16: #{pointnet_densecls_forward.5} parent=1 // pred_region
      %s42 = ssub.s32 16384, 16384
      %43 = vsyncadd [#allocation5], %s42
      %s44 = sshll.u32 [#allocation6], 4
      %s45 = int_to_ptr.vmem [resolvable:$true] %s44
      %50 = dma.hbm_to_vmem [thread:$0]  %s3, 16384, %s45, [#allocation5], 256, 256, 16
    $region17: #{pointnet_densecls_forward.5} parent=1 // pred_fallthru
      _
    // Predicated region
    $region18: #{pointnet_densecls_forward.5} parent=1 // pred_check
      _
    $region19: #{pointnet_densecls_forward.5} parent=1 // pred_check_branch
      %52 = sbr.rel (0) target = $region21
    $region20: #{pointnet_densecls_forward.5} parent=1 // pred_region
      %s54 = ssub.s32 32, 32
      %55 = vsyncadd [#allocation8], %s54
      %s57 = sshll.u32 [#allocation7], 4
      %s58 = int_to_ptr.vmem [resolvable:$true] %s57
      %60 = dma.hbm_to_vmem [thread:$0]  %s4, 32, %s58, [#allocation8]
    $region21: #{pointnet_densecls_forward.5} parent=1 // pred_fallthru
      _
    // Predicated region
    $region22: #{pointnet_densecls_forward.5} parent=1 // pred_check
      _
    $region23: #{pointnet_densecls_forward.5} parent=1 // pred_check_branch
      %62 = sbr.rel (0) target = $region25
    $region24: #{pointnet_densecls_forward.5} parent=1 // pred_region
      _
    $region25: #{pointnet_densecls_forward.5} parent=1 // pred_fallthru
      _
    // Predicated region
    $region26: #{pointnet_densecls_forward.5} parent=1 // pred_check
      _
    $region27: #{pointnet_densecls_forward.5} parent=1 // pred_check_branch
      %64 = sbr.rel (0) target = $region29
    $region28: #{pointnet_densecls_forward.5} parent=1 // pred_region
      %s66 = ssub.s32 16, 16
      %67 = vsyncadd [#allocation8], %s66
      %s69 = sshll.u32 [#allocation9], 4
      %s70 = int_to_ptr.vmem [resolvable:$true] %s69
      %72 = dma.hbm_to_vmem [thread:$0]  %s6, 16, %s70, [#allocation8]
    $region29: #{pointnet_densecls_forward.5} parent=1 // pred_fallthru
      _
    // Predicated region
    $region30: #{pointnet_densecls_forward.5} parent=1 // pred_check
      _
    $region31: #{pointnet_densecls_forward.5} parent=1 // pred_check_branch
      %74 = sbr.rel (0) target = $region33
    $region32: #{pointnet_densecls_forward.5} parent=1 // pred_region
      %75 = dma.done [#allocation3], 65536
    $region33: #{pointnet_densecls_forward.5} parent=1 // pred_fallthru
      _
    // Predicated region
    $region34: #{pointnet_densecls_forward.5} parent=1 // pred_check
      _
    $region35: #{pointnet_densecls_forward.5} parent=1 // pred_check_branch
      %77 = sbr.rel (0) target = $region37
    $region36: #{pointnet_densecls_forward.5} parent=1 // pred_region
      %78 = dma.done [#allocation5], 64
    $region37: #{pointnet_densecls_forward.5} parent=1 // pred_fallthru
      _
    // Predicated region
    $region38: #{pointnet_densecls_forward.5} parent=1 // pred_check
      _
    $region39: #{pointnet_densecls_forward.5} parent=1 // pred_check_branch
      %80 = sbr.rel (0) target = $region41
    $region40: #{pointnet_densecls_forward.5} parent=1 // pred_region
      %81 = dma.done [#allocation5], 16384
    $region41: #{pointnet_densecls_forward.5} parent=1 // pred_fallthru
      _
    // Predicated region
    $region42: #{pointnet_densecls_forward.5} parent=1 // pred_check
      _
    $region43: #{pointnet_densecls_forward.5} parent=1 // pred_check_branch
      %83 = sbr.rel (0) target = $region45
    $region44: #{pointnet_densecls_forward.5} parent=1 // pred_region
      %84 = dma.done [#allocation8], 32
    $region45: #{pointnet_densecls_forward.5} parent=1 // pred_fallthru
      _
    // Predicated region
    $region46: #{pointnet_densecls_forward.5} parent=1 // pred_check
      _
    $region47: #{pointnet_densecls_forward.5} parent=1 // pred_check_branch
      %86 = sbr.rel (0) target = $region49
    $region48: #{pointnet_densecls_forward.5} parent=1 // pred_region
      %87 = dma.done [#allocation8], 16
    $region49: #{pointnet_densecls_forward.5} parent=1 // pred_fallthru
      _
    %v88 = vld [vmem:[%s0] sm:$0xff]
    %v89 = vld [vmem:[%s0 + $0x8] sm:$0xff]
    %v90 = vld [vmem:[#allocation2] sm:$0xff]
    %v91 = vld [vmem:[#allocation2 + $0x8] sm:$0xff]
    %v92 = vld [vmem:[#allocation2 + $0x10] sm:$0xff]
    %v93 = vld [vmem:[#allocation2 + $0x18] sm:$0xff]
    %v94 = vld [vmem:[#allocation2 + $0x20] sm:$0xff]
    %v95 = vld [vmem:[#allocation2 + $0x28] sm:$0xff]
    %v96 = vld [vmem:[#allocation2 + $0x30] sm:$0xff]
    %v97 = vld [vmem:[#allocation2 + $0x38] sm:$0xff]
    %v98 = vld [vmem:[#allocation2 + $0x40] sm:$0xff]
    %v99 = vld [vmem:[#allocation2 + $0x48] sm:$0xff]
    %v100 = vld [vmem:[#allocation2 + $0x50] sm:$0xff]
    %v101 = vld [vmem:[#allocation2 + $0x58] sm:$0xff]
    %v102 = vld [vmem:[#allocation2 + $0x60] sm:$0xff]
    %v103 = vld [vmem:[#allocation2 + $0x68] sm:$0xff]
    %v104 = vld [vmem:[#allocation2 + $0x70] sm:$0xff]
    %v105 = vld [vmem:[#allocation2 + $0x78] sm:$0xff]
    %v106 = vld [vmem:[#allocation2 + $0x80] sm:$0xff]
    %v107 = vld [vmem:[#allocation2 + $0x88] sm:$0xff]
    %v108 = vld [vmem:[#allocation2 + $0x90] sm:$0xff]
    %v109 = vld [vmem:[#allocation2 + $0x98] sm:$0xff]
    %v110 = vld [vmem:[#allocation2 + $0xa0] sm:$0xff]
    %v111 = vld [vmem:[#allocation2 + $0xa8] sm:$0xff]
    %v112 = vld [vmem:[#allocation2 + $0xb0] sm:$0xff]
    %v113 = vld [vmem:[#allocation2 + $0xb8] sm:$0xff]
    %v114 = vld [vmem:[#allocation2 + $0xc0] sm:$0xff]
    %v115 = vld [vmem:[#allocation2 + $0xc8] sm:$0xff]
    %v116 = vld [vmem:[#allocation2 + $0xd0] sm:$0xff]
    %v117 = vld [vmem:[#allocation2 + $0xd8] sm:$0xff]
    %v118 = vld [vmem:[#allocation2 + $0xe0] sm:$0xff]
    %v119 = vld [vmem:[#allocation2 + $0xe8] sm:$0xff]
    %v120 = vld [vmem:[#allocation2 + $0xf0] sm:$0xff]
    %v121 = vld [vmem:[#allocation2 + $0xf8] sm:$0xff]
    %v122 = vld [vmem:[#allocation2 + $0x100] sm:$0xff]
    %v123 = vld [vmem:[#allocation2 + $0x108] sm:$0xff]
    %v124 = vld [vmem:[#allocation2 + $0x110] sm:$0xff]
    %v125 = vld [vmem:[#allocation2 + $0x118] sm:$0xff]
    %v126 = vld [vmem:[#allocation2 + $0x120] sm:$0xff]
    %v127 = vld [vmem:[#allocation2 + $0x128] sm:$0xff]
    %v128 = vld [vmem:[#allocation2 + $0x130] sm:$0xff]
    %v129 = vld [vmem:[#allocation2 + $0x138] sm:$0xff]
    %v130 = vld [vmem:[#allocation2 + $0x140] sm:$0xff]
    %v131 = vld [vmem:[#allocation2 + $0x148] sm:$0xff]
    %v132 = vld [vmem:[#allocation2 + $0x150] sm:$0xff]
    %v133 = vld [vmem:[#allocation2 + $0x158] sm:$0xff]
    %v134 = vld [vmem:[#allocation2 + $0x160] sm:$0xff]
    %v135 = vld [vmem:[#allocation2 + $0x168] sm:$0xff]
    %v136 = vld [vmem:[#allocation2 + $0x170] sm:$0xff]
    %v137 = vld [vmem:[#allocation2 + $0x178] sm:$0xff]
    %v138 = vld [vmem:[#allocation2 + $0x180] sm:$0xff]
    %v139 = vld [vmem:[#allocation2 + $0x188] sm:$0xff]
    %v140 = vld [vmem:[#allocation2 + $0x190] sm:$0xff]
    %v141 = vld [vmem:[#allocation2 + $0x198] sm:$0xff]
    %v142 = vld [vmem:[#allocation2 + $0x1a0] sm:$0xff]
    %v143 = vld [vmem:[#allocation2 + $0x1a8] sm:$0xff]
    %v144 = vld [vmem:[#allocation2 + $0x1b0] sm:$0xff]
    %v145 = vld [vmem:[#allocation2 + $0x1b8] sm:$0xff]
    %v146 = vld [vmem:[#allocation2 + $0x1c0] sm:$0xff]
    %v147 = vld [vmem:[#allocation2 + $0x1c8] sm:$0xff]
    %v148 = vld [vmem:[#allocation2 + $0x1d0] sm:$0xff]
    %v149 = vld [vmem:[#allocation2 + $0x1d8] sm:$0xff]
    %v150 = vld [vmem:[#allocation2 + $0x1e0] sm:$0xff]
    %v151 = vld [vmem:[#allocation2 + $0x1e8] sm:$0xff]
    %v152 = vld [vmem:[#allocation2 + $0x1f0] sm:$0xff]
    %v153 = vld [vmem:[#allocation2 + $0x1f8] sm:$0xff]
    %v154 = vld [vmem:[#allocation2 + $0x200] sm:$0xff]
    %v155 = vld [vmem:[#allocation2 + $0x208] sm:$0xff]
    %v156 = vld [vmem:[#allocation2 + $0x210] sm:$0xff]
    %v157 = vld [vmem:[#allocation2 + $0x218] sm:$0xff]
    %v158 = vld [vmem:[#allocation2 + $0x220] sm:$0xff]
    %v159 = vld [vmem:[#allocation2 + $0x228] sm:$0xff]
    %v160 = vld [vmem:[#allocation2 + $0x230] sm:$0xff]
    %v161 = vld [vmem:[#allocation2 + $0x238] sm:$0xff]
    %v162 = vld [vmem:[#allocation2 + $0x240] sm:$0xff]
    %v163 = vld [vmem:[#allocation2 + $0x248] sm:$0xff]
    %v164 = vld [vmem:[#allocation2 + $0x250] sm:$0xff]
    %v165 = vld [vmem:[#allocation2 + $0x258] sm:$0xff]
    %v166 = vld [vmem:[#allocation2 + $0x260] sm:$0xff]
    %v167 = vld [vmem:[#allocation2 + $0x268] sm:$0xff]
    %v168 = vld [vmem:[#allocation2 + $0x270] sm:$0xff]
    %v169 = vld [vmem:[#allocation2 + $0x278] sm:$0xff]
    %v170 = vld [vmem:[#allocation2 + $0x280] sm:$0xff]
    %v171 = vld [vmem:[#allocation2 + $0x288] sm:$0xff]
    %v172 = vld [vmem:[#allocation2 + $0x290] sm:$0xff]
    %v173 = vld [vmem:[#allocation2 + $0x298] sm:$0xff]
    %v174 = vld [vmem:[#allocation2 + $0x2a0] sm:$0xff]
    %v175 = vld [vmem:[#allocation2 + $0x2a8] sm:$0xff]
    %v176 = vld [vmem:[#allocation2 + $0x2b0] sm:$0xff]
    %v177 = vld [vmem:[#allocation2 + $0x2b8] sm:$0xff]
    %v178 = vld [vmem:[#allocation2 + $0x2c0] sm:$0xff]
    %v179 = vld [vmem:[#allocation2 + $0x2c8] sm:$0xff]
    %v180 = vld [vmem:[#allocation2 + $0x2d0] sm:$0xff]
    %v181 = vld [vmem:[#allocation2 + $0x2d8] sm:$0xff]
    %v182 = vld [vmem:[#allocation2 + $0x2e0] sm:$0xff]
    %v183 = vld [vmem:[#allocation2 + $0x2e8] sm:$0xff]
    %v184 = vld [vmem:[#allocation2 + $0x2f0] sm:$0xff]
    %v185 = vld [vmem:[#allocation2 + $0x2f8] sm:$0xff]
    %v186 = vld [vmem:[#allocation2 + $0x300] sm:$0xff]
    %v187 = vld [vmem:[#allocation2 + $0x308] sm:$0xff]
    %v188 = vld [vmem:[#allocation2 + $0x310] sm:$0xff]
    %v189 = vld [vmem:[#allocation2 + $0x318] sm:$0xff]
    %v190 = vld [vmem:[#allocation2 + $0x320] sm:$0xff]
    %v191 = vld [vmem:[#allocation2 + $0x328] sm:$0xff]
    %v192 = vld [vmem:[#allocation2 + $0x330] sm:$0xff]
    %v193 = vld [vmem:[#allocation2 + $0x338] sm:$0xff]
    %v194 = vld [vmem:[#allocation2 + $0x340] sm:$0xff]
    %v195 = vld [vmem:[#allocation2 + $0x348] sm:$0xff]
    %v196 = vld [vmem:[#allocation2 + $0x350] sm:$0xff]
    %v197 = vld [vmem:[#allocation2 + $0x358] sm:$0xff]
    %v198 = vld [vmem:[#allocation2 + $0x360] sm:$0xff]
    %v199 = vld [vmem:[#allocation2 + $0x368] sm:$0xff]
    %v200 = vld [vmem:[#allocation2 + $0x370] sm:$0xff]
    %v201 = vld [vmem:[#allocation2 + $0x378] sm:$0xff]
    %v202 = vld [vmem:[#allocation2 + $0x380] sm:$0xff]
    %v203 = vld [vmem:[#allocation2 + $0x388] sm:$0xff]
    %v204 = vld [vmem:[#allocation2 + $0x390] sm:$0xff]
    %v205 = vld [vmem:[#allocation2 + $0x398] sm:$0xff]
    %v206 = vld [vmem:[#allocation2 + $0x3a0] sm:$0xff]
    %v207 = vld [vmem:[#allocation2 + $0x3a8] sm:$0xff]
    %v208 = vld [vmem:[#allocation2 + $0x3b0] sm:$0xff]
    %v209 = vld [vmem:[#allocation2 + $0x3b8] sm:$0xff]
    %v210 = vld [vmem:[#allocation2 + $0x3c0] sm:$0xff]
    %v211 = vld [vmem:[#allocation2 + $0x3c8] sm:$0xff]
    %v212 = vld [vmem:[#allocation2 + $0x3d0] sm:$0xff]
    %v213 = vld [vmem:[#allocation2 + $0x3d8] sm:$0xff]
    %v214 = vld [vmem:[#allocation2 + $0x3e0] sm:$0xff]
    %v215 = vld [vmem:[#allocation2 + $0x3e8] sm:$0xff]
    %v216 = vld [vmem:[#allocation2 + $0x3f0] sm:$0xff]
    %v217 = vld [vmem:[#allocation2 + $0x3f8] sm:$0xff]
    %v218 = vld [vmem:[#allocation2 + $0x400] sm:$0xff]
    %v219 = vld [vmem:[#allocation2 + $0x408] sm:$0xff]
    %v220 = vld [vmem:[#allocation2 + $0x410] sm:$0xff]
    %v221 = vld [vmem:[#allocation2 + $0x418] sm:$0xff]
    %v222 = vld [vmem:[#allocation2 + $0x420] sm:$0xff]
    %v223 = vld [vmem:[#allocation2 + $0x428] sm:$0xff]
    %v224 = vld [vmem:[#allocation2 + $0x430] sm:$0xff]
    %v225 = vld [vmem:[#allocation2 + $0x438] sm:$0xff]
    %v226 = vld [vmem:[#allocation2 + $0x440] sm:$0xff]
    %v227 = vld [vmem:[#allocation2 + $0x448] sm:$0xff]
    %v228 = vld [vmem:[#allocation2 + $0x450] sm:$0xff]
    %v229 = vld [vmem:[#allocation2 + $0x458] sm:$0xff]
    %v230 = vld [vmem:[#allocation2 + $0x460] sm:$0xff]
    %v231 = vld [vmem:[#allocation2 + $0x468] sm:$0xff]
    %v232 = vld [vmem:[#allocation2 + $0x470] sm:$0xff]
    %v233 = vld [vmem:[#allocation2 + $0x478] sm:$0xff]
    %v234 = vld [vmem:[#allocation2 + $0x480] sm:$0xff]
    %v235 = vld [vmem:[#allocation2 + $0x488] sm:$0xff]
    %v236 = vld [vmem:[#allocation2 + $0x490] sm:$0xff]
    %v237 = vld [vmem:[#allocation2 + $0x498] sm:$0xff]
    %v238 = vld [vmem:[#allocation2 + $0x4a0] sm:$0xff]
    %v239 = vld [vmem:[#allocation2 + $0x4a8] sm:$0xff]
    %v240 = vld [vmem:[#allocation2 + $0x4b0] sm:$0xff]
    %v241 = vld [vmem:[#allocation2 + $0x4b8] sm:$0xff]
    %v242 = vld [vmem:[#allocation2 + $0x4c0] sm:$0xff]
    %v243 = vld [vmem:[#allocation2 + $0x4c8] sm:$0xff]
    %v244 = vld [vmem:[#allocation2 + $0x4d0] sm:$0xff]
    %v245 = vld [vmem:[#allocation2 + $0x4d8] sm:$0xff]
    %v246 = vld [vmem:[#allocation2 + $0x4e0] sm:$0xff]
    %v247 = vld [vmem:[#allocation2 + $0x4e8] sm:$0xff]
    %v248 = vld [vmem:[#allocation2 + $0x4f0] sm:$0xff]
    %v249 = vld [vmem:[#allocation2 + $0x4f8] sm:$0xff]
    %v250 = vld [vmem:[#allocation2 + $0x500] sm:$0xff]
    %v251 = vld [vmem:[#allocation2 + $0x508] sm:$0xff]
    %v252 = vld [vmem:[#allocation2 + $0x510] sm:$0xff]
    %v253 = vld [vmem:[#allocation2 + $0x518] sm:$0xff]
    %v254 = vld [vmem:[#allocation2 + $0x520] sm:$0xff]
    %v255 = vld [vmem:[#allocation2 + $0x528] sm:$0xff]
    %v256 = vld [vmem:[#allocation2 + $0x530] sm:$0xff]
    %v257 = vld [vmem:[#allocation2 + $0x538] sm:$0xff]
    %v258 = vld [vmem:[#allocation2 + $0x540] sm:$0xff]
    %v259 = vld [vmem:[#allocation2 + $0x548] sm:$0xff]
    %v260 = vld [vmem:[#allocation2 + $0x550] sm:$0xff]
    %v261 = vld [vmem:[#allocation2 + $0x558] sm:$0xff]
    %v262 = vld [vmem:[#allocation2 + $0x560] sm:$0xff]
    %v263 = vld [vmem:[#allocation2 + $0x568] sm:$0xff]
    %v264 = vld [vmem:[#allocation2 + $0x570] sm:$0xff]
    %v265 = vld [vmem:[#allocation2 + $0x578] sm:$0xff]
    %v266 = vld [vmem:[#allocation2 + $0x580] sm:$0xff]
    %v267 = vld [vmem:[#allocation2 + $0x588] sm:$0xff]
    %v268 = vld [vmem:[#allocation2 + $0x590] sm:$0xff]
    %v269 = vld [vmem:[#allocation2 + $0x598] sm:$0xff]
    %v270 = vld [vmem:[#allocation2 + $0x5a0] sm:$0xff]
    %v271 = vld [vmem:[#allocation2 + $0x5a8] sm:$0xff]
    %v272 = vld [vmem:[#allocation2 + $0x5b0] sm:$0xff]
    %v273 = vld [vmem:[#allocation2 + $0x5b8] sm:$0xff]
    %v274 = vld [vmem:[#allocation2 + $0x5c0] sm:$0xff]
    %v275 = vld [vmem:[#allocation2 + $0x5c8] sm:$0xff]
    %v276 = vld [vmem:[#allocation2 + $0x5d0] sm:$0xff]
    %v277 = vld [vmem:[#allocation2 + $0x5d8] sm:$0xff]
    %v278 = vld [vmem:[#allocation2 + $0x5e0] sm:$0xff]
    %v279 = vld [vmem:[#allocation2 + $0x5e8] sm:$0xff]
    %v280 = vld [vmem:[#allocation2 + $0x5f0] sm:$0xff]
    %v281 = vld [vmem:[#allocation2 + $0x5f8] sm:$0xff]
    %v282 = vld [vmem:[#allocation2 + $0x600] sm:$0xff]
    %v283 = vld [vmem:[#allocation2 + $0x608] sm:$0xff]
    %v284 = vld [vmem:[#allocation2 + $0x610] sm:$0xff]
    %v285 = vld [vmem:[#allocation2 + $0x618] sm:$0xff]
    %v286 = vld [vmem:[#allocation2 + $0x620] sm:$0xff]
    %v287 = vld [vmem:[#allocation2 + $0x628] sm:$0xff]
    %v288 = vld [vmem:[#allocation2 + $0x630] sm:$0xff]
    %v289 = vld [vmem:[#allocation2 + $0x638] sm:$0xff]
    %v290 = vld [vmem:[#allocation2 + $0x640] sm:$0xff]
    %v291 = vld [vmem:[#allocation2 + $0x648] sm:$0xff]
    %v292 = vld [vmem:[#allocation2 + $0x650] sm:$0xff]
    %v293 = vld [vmem:[#allocation2 + $0x658] sm:$0xff]
    %v294 = vld [vmem:[#allocation2 + $0x660] sm:$0xff]
    %v295 = vld [vmem:[#allocation2 + $0x668] sm:$0xff]
    %v296 = vld [vmem:[#allocation2 + $0x670] sm:$0xff]
    %v297 = vld [vmem:[#allocation2 + $0x678] sm:$0xff]
    %v298 = vld [vmem:[#allocation2 + $0x680] sm:$0xff]
    %v299 = vld [vmem:[#allocation2 + $0x688] sm:$0xff]
    %v300 = vld [vmem:[#allocation2 + $0x690] sm:$0xff]
    %v301 = vld [vmem:[#allocation2 + $0x698] sm:$0xff]
    %v302 = vld [vmem:[#allocation2 + $0x6a0] sm:$0xff]
    %v303 = vld [vmem:[#allocation2 + $0x6a8] sm:$0xff]
    %v304 = vld [vmem:[#allocation2 + $0x6b0] sm:$0xff]
    %v305 = vld [vmem:[#allocation2 + $0x6b8] sm:$0xff]
    %v306 = vld [vmem:[#allocation2 + $0x6c0] sm:$0xff]
    %v307 = vld [vmem:[#allocation2 + $0x6c8] sm:$0xff]
    %v308 = vld [vmem:[#allocation2 + $0x6d0] sm:$0xff]
    %v309 = vld [vmem:[#allocation2 + $0x6d8] sm:$0xff]
    %v310 = vld [vmem:[#allocation2 + $0x6e0] sm:$0xff]
    %v311 = vld [vmem:[#allocation2 + $0x6e8] sm:$0xff]
    %v312 = vld [vmem:[#allocation2 + $0x6f0] sm:$0xff]
    %v313 = vld [vmem:[#allocation2 + $0x6f8] sm:$0xff]
    %v314 = vld [vmem:[#allocation2 + $0x700] sm:$0xff]
    %v315 = vld [vmem:[#allocation2 + $0x708] sm:$0xff]
    %v316 = vld [vmem:[#allocation2 + $0x710] sm:$0xff]
    %v317 = vld [vmem:[#allocation2 + $0x718] sm:$0xff]
    %v318 = vld [vmem:[#allocation2 + $0x720] sm:$0xff]
    %v319 = vld [vmem:[#allocation2 + $0x728] sm:$0xff]
    %v320 = vld [vmem:[#allocation2 + $0x730] sm:$0xff]
    %v321 = vld [vmem:[#allocation2 + $0x738] sm:$0xff]
    %v322 = vld [vmem:[#allocation2 + $0x740] sm:$0xff]
    %v323 = vld [vmem:[#allocation2 + $0x748] sm:$0xff]
    %v324 = vld [vmem:[#allocation2 + $0x750] sm:$0xff]
    %v325 = vld [vmem:[#allocation2 + $0x758] sm:$0xff]
    %v326 = vld [vmem:[#allocation2 + $0x760] sm:$0xff]
    %v327 = vld [vmem:[#allocation2 + $0x768] sm:$0xff]
    %v328 = vld [vmem:[#allocation2 + $0x770] sm:$0xff]
    %v329 = vld [vmem:[#allocation2 + $0x778] sm:$0xff]
    %v330 = vld [vmem:[#allocation2 + $0x780] sm:$0xff]
    %v331 = vld [vmem:[#allocation2 + $0x788] sm:$0xff]
    %v332 = vld [vmem:[#allocation2 + $0x790] sm:$0xff]
    %v333 = vld [vmem:[#allocation2 + $0x798] sm:$0xff]
    %v334 = vld [vmem:[#allocation2 + $0x7a0] sm:$0xff]
    %v335 = vld [vmem:[#allocation2 + $0x7a8] sm:$0xff]
    %v336 = vld [vmem:[#allocation2 + $0x7b0] sm:$0xff]
    %v337 = vld [vmem:[#allocation2 + $0x7b8] sm:$0xff]
    %v338 = vld [vmem:[#allocation2 + $0x7c0] sm:$0xff]
    %v339 = vld [vmem:[#allocation2 + $0x7c8] sm:$0xff]
    %v340 = vld [vmem:[#allocation2 + $0x7d0] sm:$0xff]
    %v341 = vld [vmem:[#allocation2 + $0x7d8] sm:$0xff]
    %v342 = vld [vmem:[#allocation2 + $0x7e0] sm:$0xff]
    %v343 = vld [vmem:[#allocation2 + $0x7e8] sm:$0xff]
    %v344 = vld [vmem:[#allocation2 + $0x7f0] sm:$0xff]
    %v345 = vld [vmem:[#allocation2 + $0x7f8] sm:$0xff]
    %v346 = vld [vmem:[#allocation2 + $0x800] sm:$0xff]
    %v347 = vld [vmem:[#allocation2 + $0x808] sm:$0xff]
    %v348 = vld [vmem:[#allocation2 + $0x810] sm:$0xff]
    %v349 = vld [vmem:[#allocation2 + $0x818] sm:$0xff]
    %v350 = vld [vmem:[#allocation2 + $0x820] sm:$0xff]
    %v351 = vld [vmem:[#allocation2 + $0x828] sm:$0xff]
    %v352 = vld [vmem:[#allocation2 + $0x830] sm:$0xff]
    %v353 = vld [vmem:[#allocation2 + $0x838] sm:$0xff]
    %v354 = vld [vmem:[#allocation2 + $0x840] sm:$0xff]
    %v355 = vld [vmem:[#allocation2 + $0x848] sm:$0xff]
    %v356 = vld [vmem:[#allocation2 + $0x850] sm:$0xff]
    %v357 = vld [vmem:[#allocation2 + $0x858] sm:$0xff]
    %v358 = vld [vmem:[#allocation2 + $0x860] sm:$0xff]
    %v359 = vld [vmem:[#allocation2 + $0x868] sm:$0xff]
    %v360 = vld [vmem:[#allocation2 + $0x870] sm:$0xff]
    %v361 = vld [vmem:[#allocation2 + $0x878] sm:$0xff]
    %v362 = vld [vmem:[#allocation2 + $0x880] sm:$0xff]
    %v363 = vld [vmem:[#allocation2 + $0x888] sm:$0xff]
    %v364 = vld [vmem:[#allocation2 + $0x890] sm:$0xff]
    %v365 = vld [vmem:[#allocation2 + $0x898] sm:$0xff]
    %v366 = vld [vmem:[#allocation2 + $0x8a0] sm:$0xff]
    %v367 = vld [vmem:[#allocation2 + $0x8a8] sm:$0xff]
    %v368 = vld [vmem:[#allocation2 + $0x8b0] sm:$0xff]
    %v369 = vld [vmem:[#allocation2 + $0x8b8] sm:$0xff]
    %v370 = vld [vmem:[#allocation2 + $0x8c0] sm:$0xff]
    %v371 = vld [vmem:[#allocation2 + $0x8c8] sm:$0xff]
    %v372 = vld [vmem:[#allocation2 + $0x8d0] sm:$0xff]
    %v373 = vld [vmem:[#allocation2 + $0x8d8] sm:$0xff]
    %v374 = vld [vmem:[#allocation2 + $0x8e0] sm:$0xff]
    %v375 = vld [vmem:[#allocation2 + $0x8e8] sm:$0xff]
    %v376 = vld [vmem:[#allocation2 + $0x8f0] sm:$0xff]
    %v377 = vld [vmem:[#allocation2 + $0x8f8] sm:$0xff]
    %v378 = vld [vmem:[#allocation2 + $0x900] sm:$0xff]
    %v379 = vld [vmem:[#allocation2 + $0x908] sm:$0xff]
    %v380 = vld [vmem:[#allocation2 + $0x910] sm:$0xff]
    %v381 = vld [vmem:[#allocation2 + $0x918] sm:$0xff]
    %v382 = vld [vmem:[#allocation2 + $0x920] sm:$0xff]
    %v383 = vld [vmem:[#allocation2 + $0x928] sm:$0xff]
    %v384 = vld [vmem:[#allocation2 + $0x930] sm:$0xff]
    %v385 = vld [vmem:[#allocation2 + $0x938] sm:$0xff]
    %v386 = vld [vmem:[#allocation2 + $0x940] sm:$0xff]
    %v387 = vld [vmem:[#allocation2 + $0x948] sm:$0xff]
    %v388 = vld [vmem:[#allocation2 + $0x950] sm:$0xff]
    %v389 = vld [vmem:[#allocation2 + $0x958] sm:$0xff]
    %v390 = vld [vmem:[#allocation2 + $0x960] sm:$0xff]
    %v391 = vld [vmem:[#allocation2 + $0x968] sm:$0xff]
    %v392 = vld [vmem:[#allocation2 + $0x970] sm:$0xff]
    %v393 = vld [vmem:[#allocation2 + $0x978] sm:$0xff]
    %v394 = vld [vmem:[#allocation2 + $0x980] sm:$0xff]
    %v395 = vld [vmem:[#allocation2 + $0x988] sm:$0xff]
    %v396 = vld [vmem:[#allocation2 + $0x990] sm:$0xff]
    %v397 = vld [vmem:[#allocation2 + $0x998] sm:$0xff]
    %v398 = vld [vmem:[#allocation2 + $0x9a0] sm:$0xff]
    %v399 = vld [vmem:[#allocation2 + $0x9a8] sm:$0xff]
    %v400 = vld [vmem:[#allocation2 + $0x9b0] sm:$0xff]
    %v401 = vld [vmem:[#allocation2 + $0x9b8] sm:$0xff]
    %v402 = vld [vmem:[#allocation2 + $0x9c0] sm:$0xff]
    %v403 = vld [vmem:[#allocation2 + $0x9c8] sm:$0xff]
    %v404 = vld [vmem:[#allocation2 + $0x9d0] sm:$0xff]
    %v405 = vld [vmem:[#allocation2 + $0x9d8] sm:$0xff]
    %v406 = vld [vmem:[#allocation2 + $0x9e0] sm:$0xff]
    %v407 = vld [vmem:[#allocation2 + $0x9e8] sm:$0xff]
    %v408 = vld [vmem:[#allocation2 + $0x9f0] sm:$0xff]
    %v409 = vld [vmem:[#allocation2 + $0x9f8] sm:$0xff]
    %v410 = vld [vmem:[#allocation2 + $0xa00] sm:$0xff]
    %v411 = vld [vmem:[#allocation2 + $0xa08] sm:$0xff]
    %v412 = vld [vmem:[#allocation2 + $0xa10] sm:$0xff]
    %v413 = vld [vmem:[#allocation2 + $0xa18] sm:$0xff]
    %v414 = vld [vmem:[#allocation2 + $0xa20] sm:$0xff]
    %v415 = vld [vmem:[#allocation2 + $0xa28] sm:$0xff]
    %v416 = vld [vmem:[#allocation2 + $0xa30] sm:$0xff]
    %v417 = vld [vmem:[#allocation2 + $0xa38] sm:$0xff]
    %v418 = vld [vmem:[#allocation2 + $0xa40] sm:$0xff]
    %v419 = vld [vmem:[#allocation2 + $0xa48] sm:$0xff]
    %v420 = vld [vmem:[#allocation2 + $0xa50] sm:$0xff]
    %v421 = vld [vmem:[#allocation2 + $0xa58] sm:$0xff]
    %v422 = vld [vmem:[#allocation2 + $0xa60] sm:$0xff]
    %v423 = vld [vmem:[#allocation2 + $0xa68] sm:$0xff]
    %v424 = vld [vmem:[#allocation2 + $0xa70] sm:$0xff]
    %v425 = vld [vmem:[#allocation2 + $0xa78] sm:$0xff]
    %v426 = vld [vmem:[#allocation2 + $0xa80] sm:$0xff]
    %v427 = vld [vmem:[#allocation2 + $0xa88] sm:$0xff]
    %v428 = vld [vmem:[#allocation2 + $0xa90] sm:$0xff]
    %v429 = vld [vmem:[#allocation2 + $0xa98] sm:$0xff]
    %v430 = vld [vmem:[#allocation2 + $0xaa0] sm:$0xff]
    %v431 = vld [vmem:[#allocation2 + $0xaa8] sm:$0xff]
    %v432 = vld [vmem:[#allocation2 + $0xab0] sm:$0xff]
    %v433 = vld [vmem:[#allocation2 + $0xab8] sm:$0xff]
    %v434 = vld [vmem:[#allocation2 + $0xac0] sm:$0xff]
    %v435 = vld [vmem:[#allocation2 + $0xac8] sm:$0xff]
    %v436 = vld [vmem:[#allocation2 + $0xad0] sm:$0xff]
    %v437 = vld [vmem:[#allocation2 + $0xad8] sm:$0xff]
    %v438 = vld [vmem:[#allocation2 + $0xae0] sm:$0xff]
    %v439 = vld [vmem:[#allocation2 + $0xae8] sm:$0xff]
    %v440 = vld [vmem:[#allocation2 + $0xaf0] sm:$0xff]
    %v441 = vld [vmem:[#allocation2 + $0xaf8] sm:$0xff]
    %v442 = vld [vmem:[#allocation2 + $0xb00] sm:$0xff]
    %v443 = vld [vmem:[#allocation2 + $0xb08] sm:$0xff]
    %v444 = vld [vmem:[#allocation2 + $0xb10] sm:$0xff]
    %v445 = vld [vmem:[#allocation2 + $0xb18] sm:$0xff]
    %v446 = vld [vmem:[#allocation2 + $0xb20] sm:$0xff]
    %v447 = vld [vmem:[#allocation2 + $0xb28] sm:$0xff]
    %v448 = vld [vmem:[#allocation2 + $0xb30] sm:$0xff]
    %v449 = vld [vmem:[#allocation2 + $0xb38] sm:$0xff]
    %v450 = vld [vmem:[#allocation2 + $0xb40] sm:$0xff]
    %v451 = vld [vmem:[#allocation2 + $0xb48] sm:$0xff]
    %v452 = vld [vmem:[#allocation2 + $0xb50] sm:$0xff]
    %v453 = vld [vmem:[#allocation2 + $0xb58] sm:$0xff]
    %v454 = vld [vmem:[#allocation2 + $0xb60] sm:$0xff]
    %v455 = vld [vmem:[#allocation2 + $0xb68] sm:$0xff]
    %v456 = vld [vmem:[#allocation2 + $0xb70] sm:$0xff]
    %v457 = vld [vmem:[#allocation2 + $0xb78] sm:$0xff]
    %v458 = vld [vmem:[#allocation2 + $0xb80] sm:$0xff]
    %v459 = vld [vmem:[#allocation2 + $0xb88] sm:$0xff]
    %v460 = vld [vmem:[#allocation2 + $0xb90] sm:$0xff]
    %v461 = vld [vmem:[#allocation2 + $0xb98] sm:$0xff]
    %v462 = vld [vmem:[#allocation2 + $0xba0] sm:$0xff]
    %v463 = vld [vmem:[#allocation2 + $0xba8] sm:$0xff]
    %v464 = vld [vmem:[#allocation2 + $0xbb0] sm:$0xff]
    %v465 = vld [vmem:[#allocation2 + $0xbb8] sm:$0xff]
    %v466 = vld [vmem:[#allocation2 + $0xbc0] sm:$0xff]
    %v467 = vld [vmem:[#allocation2 + $0xbc8] sm:$0xff]
    %v468 = vld [vmem:[#allocation2 + $0xbd0] sm:$0xff]
    %v469 = vld [vmem:[#allocation2 + $0xbd8] sm:$0xff]
    %v470 = vld [vmem:[#allocation2 + $0xbe0] sm:$0xff]
    %v471 = vld [vmem:[#allocation2 + $0xbe8] sm:$0xff]
    %v472 = vld [vmem:[#allocation2 + $0xbf0] sm:$0xff]
    %v473 = vld [vmem:[#allocation2 + $0xbf8] sm:$0xff]
    %v474 = vld [vmem:[#allocation2 + $0xc00] sm:$0xff]
    %v475 = vld [vmem:[#allocation2 + $0xc08] sm:$0xff]
    %v476 = vld [vmem:[#allocation2 + $0xc10] sm:$0xff]
    %v477 = vld [vmem:[#allocation2 + $0xc18] sm:$0xff]
    %v478 = vld [vmem:[#allocation2 + $0xc20] sm:$0xff]
    %v479 = vld [vmem:[#allocation2 + $0xc28] sm:$0xff]
    %v480 = vld [vmem:[#allocation2 + $0xc30] sm:$0xff]
    %v481 = vld [vmem:[#allocation2 + $0xc38] sm:$0xff]
    %v482 = vld [vmem:[#allocation2 + $0xc40] sm:$0xff]
    %v483 = vld [vmem:[#allocation2 + $0xc48] sm:$0xff]
    %v484 = vld [vmem:[#allocation2 + $0xc50] sm:$0xff]
    %v485 = vld [vmem:[#allocation2 + $0xc58] sm:$0xff]
    %v486 = vld [vmem:[#allocation2 + $0xc60] sm:$0xff]
    %v487 = vld [vmem:[#allocation2 + $0xc68] sm:$0xff]
    %v488 = vld [vmem:[#allocation2 + $0xc70] sm:$0xff]
    %v489 = vld [vmem:[#allocation2 + $0xc78] sm:$0xff]
    %v490 = vld [vmem:[#allocation2 + $0xc80] sm:$0xff]
    %v491 = vld [vmem:[#allocation2 + $0xc88] sm:$0xff]
    %v492 = vld [vmem:[#allocation2 + $0xc90] sm:$0xff]
    %v493 = vld [vmem:[#allocation2 + $0xc98] sm:$0xff]
    %v494 = vld [vmem:[#allocation2 + $0xca0] sm:$0xff]
    %v495 = vld [vmem:[#allocation2 + $0xca8] sm:$0xff]
    %v496 = vld [vmem:[#allocation2 + $0xcb0] sm:$0xff]
    %v497 = vld [vmem:[#allocation2 + $0xcb8] sm:$0xff]
    %v498 = vld [vmem:[#allocation2 + $0xcc0] sm:$0xff]
    %v499 = vld [vmem:[#allocation2 + $0xcc8] sm:$0xff]
    %v500 = vld [vmem:[#allocation2 + $0xcd0] sm:$0xff]
    %v501 = vld [vmem:[#allocation2 + $0xcd8] sm:$0xff]
    %v502 = vld [vmem:[#allocation2 + $0xce0] sm:$0xff]
    %v503 = vld [vmem:[#allocation2 + $0xce8] sm:$0xff]
    %v504 = vld [vmem:[#allocation2 + $0xcf0] sm:$0xff]
    %v505 = vld [vmem:[#allocation2 + $0xcf8] sm:$0xff]
    %v506 = vld [vmem:[#allocation2 + $0xd00] sm:$0xff]
    %v507 = vld [vmem:[#allocation2 + $0xd08] sm:$0xff]
    %v508 = vld [vmem:[#allocation2 + $0xd10] sm:$0xff]
    %v509 = vld [vmem:[#allocation2 + $0xd18] sm:$0xff]
    %v510 = vld [vmem:[#allocation2 + $0xd20] sm:$0xff]
    %v511 = vld [vmem:[#allocation2 + $0xd28] sm:$0xff]
    %v512 = vld [vmem:[#allocation2 + $0xd30] sm:$0xff]
    %v513 = vld [vmem:[#allocation2 + $0xd38] sm:$0xff]
    %v514 = vld [vmem:[#allocation2 + $0xd40] sm:$0xff]
    %v515 = vld [vmem:[#allocation2 + $0xd48] sm:$0xff]
    %v516 = vld [vmem:[#allocation2 + $0xd50] sm:$0xff]
    %v517 = vld [vmem:[#allocation2 + $0xd58] sm:$0xff]
    %v518 = vld [vmem:[#allocation2 + $0xd60] sm:$0xff]
    %v519 = vld [vmem:[#allocation2 + $0xd68] sm:$0xff]
    %v520 = vld [vmem:[#allocation2 + $0xd70] sm:$0xff]
    %v521 = vld [vmem:[#allocation2 + $0xd78] sm:$0xff]
    %v522 = vld [vmem:[#allocation2 + $0xd80] sm:$0xff]
    %v523 = vld [vmem:[#allocation2 + $0xd88] sm:$0xff]
    %v524 = vld [vmem:[#allocation2 + $0xd90] sm:$0xff]
    %v525 = vld [vmem:[#allocation2 + $0xd98] sm:$0xff]
    %v526 = vld [vmem:[#allocation2 + $0xda0] sm:$0xff]
    %v527 = vld [vmem:[#allocation2 + $0xda8] sm:$0xff]
    %v528 = vld [vmem:[#allocation2 + $0xdb0] sm:$0xff]
    %v529 = vld [vmem:[#allocation2 + $0xdb8] sm:$0xff]
    %v530 = vld [vmem:[#allocation2 + $0xdc0] sm:$0xff]
    %v531 = vld [vmem:[#allocation2 + $0xdc8] sm:$0xff]
    %v532 = vld [vmem:[#allocation2 + $0xdd0] sm:$0xff]
    %v533 = vld [vmem:[#allocation2 + $0xdd8] sm:$0xff]
    %v534 = vld [vmem:[#allocation2 + $0xde0] sm:$0xff]
    %v535 = vld [vmem:[#allocation2 + $0xde8] sm:$0xff]
    %v536 = vld [vmem:[#allocation2 + $0xdf0] sm:$0xff]
    %v537 = vld [vmem:[#allocation2 + $0xdf8] sm:$0xff]
    %v538 = vld [vmem:[#allocation2 + $0xe00] sm:$0xff]
    %v539 = vld [vmem:[#allocation2 + $0xe08] sm:$0xff]
    %v540 = vld [vmem:[#allocation2 + $0xe10] sm:$0xff]
    %v541 = vld [vmem:[#allocation2 + $0xe18] sm:$0xff]
    %v542 = vld [vmem:[#allocation2 + $0xe20] sm:$0xff]
    %v543 = vld [vmem:[#allocation2 + $0xe28] sm:$0xff]
    %v544 = vld [vmem:[#allocation2 + $0xe30] sm:$0xff]
    %v545 = vld [vmem:[#allocation2 + $0xe38] sm:$0xff]
    %v546 = vld [vmem:[#allocation2 + $0xe40] sm:$0xff]
    %v547 = vld [vmem:[#allocation2 + $0xe48] sm:$0xff]
    %v548 = vld [vmem:[#allocation2 + $0xe50] sm:$0xff]
    %v549 = vld [vmem:[#allocation2 + $0xe58] sm:$0xff]
    %v550 = vld [vmem:[#allocation2 + $0xe60] sm:$0xff]
    %v551 = vld [vmem:[#allocation2 + $0xe68] sm:$0xff]
    %v552 = vld [vmem:[#allocation2 + $0xe70] sm:$0xff]
    %v553 = vld [vmem:[#allocation2 + $0xe78] sm:$0xff]
    %v554 = vld [vmem:[#allocation2 + $0xe80] sm:$0xff]
    %v555 = vld [vmem:[#allocation2 + $0xe88] sm:$0xff]
    %v556 = vld [vmem:[#allocation2 + $0xe90] sm:$0xff]
    %v557 = vld [vmem:[#allocation2 + $0xe98] sm:$0xff]
    %v558 = vld [vmem:[#allocation2 + $0xea0] sm:$0xff]
    %v559 = vld [vmem:[#allocation2 + $0xea8] sm:$0xff]
    %v560 = vld [vmem:[#allocation2 + $0xeb0] sm:$0xff]
    %v561 = vld [vmem:[#allocation2 + $0xeb8] sm:$0xff]
    %v562 = vld [vmem:[#allocation2 + $0xec0] sm:$0xff]
    %v563 = vld [vmem:[#allocation2 + $0xec8] sm:$0xff]
    %v564 = vld [vmem:[#allocation2 + $0xed0] sm:$0xff]
    %v565 = vld [vmem:[#allocation2 + $0xed8] sm:$0xff]
    %v566 = vld [vmem:[#allocation2 + $0xee0] sm:$0xff]
    %v567 = vld [vmem:[#allocation2 + $0xee8] sm:$0xff]
    %v568 = vld [vmem:[#allocation2 + $0xef0] sm:$0xff]
    %v569 = vld [vmem:[#allocation2 + $0xef8] sm:$0xff]
    %v570 = vld [vmem:[#allocation2 + $0xf00] sm:$0xff]
    %v571 = vld [vmem:[#allocation2 + $0xf08] sm:$0xff]
    %v572 = vld [vmem:[#allocation2 + $0xf10] sm:$0xff]
    %v573 = vld [vmem:[#allocation2 + $0xf18] sm:$0xff]
    %v574 = vld [vmem:[#allocation2 + $0xf20] sm:$0xff]
    %v575 = vld [vmem:[#allocation2 + $0xf28] sm:$0xff]
    %v576 = vld [vmem:[#allocation2 + $0xf30] sm:$0xff]
    %v577 = vld [vmem:[#allocation2 + $0xf38] sm:$0xff]
    %v578 = vld [vmem:[#allocation2 + $0xf40] sm:$0xff]
    %v579 = vld [vmem:[#allocation2 + $0xf48] sm:$0xff]
    %v580 = vld [vmem:[#allocation2 + $0xf50] sm:$0xff]
    %v581 = vld [vmem:[#allocation2 + $0xf58] sm:$0xff]
    %v582 = vld [vmem:[#allocation2 + $0xf60] sm:$0xff]
    %v583 = vld [vmem:[#allocation2 + $0xf68] sm:$0xff]
    %v584 = vld [vmem:[#allocation2 + $0xf70] sm:$0xff]
    %v585 = vld [vmem:[#allocation2 + $0xf78] sm:$0xff]
    %v586 = vld [vmem:[#allocation2 + $0xf80] sm:$0xff]
    %v587 = vld [vmem:[#allocation2 + $0xf88] sm:$0xff]
    %v588 = vld [vmem:[#allocation2 + $0xf90] sm:$0xff]
    %v589 = vld [vmem:[#allocation2 + $0xf98] sm:$0xff]
    %v590 = vld [vmem:[#allocation2 + $0xfa0] sm:$0xff]
    %v591 = vld [vmem:[#allocation2 + $0xfa8] sm:$0xff]
    %v592 = vld [vmem:[#allocation2 + $0xfb0] sm:$0xff]
    %v593 = vld [vmem:[#allocation2 + $0xfb8] sm:$0xff]
    %v594 = vld [vmem:[#allocation2 + $0xfc0] sm:$0xff]
    %v595 = vld [vmem:[#allocation2 + $0xfc8] sm:$0xff]
    %v596 = vld [vmem:[#allocation2 + $0xfd0] sm:$0xff]
    %v597 = vld [vmem:[#allocation2 + $0xfd8] sm:$0xff]
    %v598 = vld [vmem:[#allocation2 + $0xfe0] sm:$0xff]
    %v599 = vld [vmem:[#allocation2 + $0xfe8] sm:$0xff]
    %v600 = vld [vmem:[#allocation2 + $0xff0] sm:$0xff]
    %v601 = vld [vmem:[#allocation2 + $0xff8] sm:$0xff]
    %v602 = vld [vmem:[#allocation4] sm:$0xf]
    %v604 = vlaneseq
    %v605 = vshrl.u32 %v604, 7
    %v606 = vsub.s32 0, %v605
    %v607 = vrot.slane %v602, %v606
    %v608 = vlaneseq
    %v609 = vshrl.u32 %v608, 7
    %v610 = vsub.s32 1, %v609
    %v611 = vrot.slane %v602, %v610
    %v612 = vlaneseq
    %v613 = vshrl.u32 %v612, 7
    %v614 = vsub.s32 2, %v613
    %v615 = vrot.slane %v602, %v614
    %v616 = vlaneseq
    %v617 = vshrl.u32 %v616, 7
    %v618 = vsub.s32 3, %v617
    %v619 = vrot.slane %v602, %v618
    %v626 = vcombine.high %v88, %v88
    %v628 = vunpack.c.l.s4 1983009808
    %v629 = vunpack.c.0.s8 %v628
    %v630 = vlaneseq
    %v631 = vshrl.u32 %v630, 7
    %v632 = vsub.s32 %v629, %v631
    %v633 = vrot.slane %v88, %v632
    %v635 = vunpack.c.l.s4 1983009808
    %v636 = vunpack.c.0.s8 %v635
    %v637 = vlaneseq
    %v638 = vshrl.u32 %v637, 7
    %v639 = vsub.s32 %v636, %v638
    %v640 = vrot.slane %v626, %v639
    %v641 = vcombine.high %v633, %v633
    %v642 = vcombine.high %v640, %v640
    %v643 = vcombine.high %v89, %v89
    %v645 = vunpack.c.l.s4 1983009808
    %v646 = vunpack.c.0.s8 %v645
    %v647 = vlaneseq
    %v648 = vshrl.u32 %v647, 7
    %v649 = vsub.s32 %v646, %v648
    %v650 = vrot.slane %v89, %v649
    %v652 = vunpack.c.l.s4 1983009808
    %v653 = vunpack.c.0.s8 %v652
    %v654 = vlaneseq
    %v655 = vshrl.u32 %v654, 7
    %v656 = vsub.s32 %v653, %v655
    %v657 = vrot.slane %v643, %v656
    %v658 = vcombine.high %v650, %v650
    %v659 = vcombine.high %v657, %v657
    %668 = vmatprep.subr.mxu0 %v151
    %669 = vmatpush1.msra.mxu0 %v150
    %670 = vmatprep.subr.mxu0 %v147
    %671 = vmatpush1.msra.mxu0 %v146
    %672 = vmatprep.subr.mxu0 %v143
    %673 = vmatpush1.msra.mxu0 %v142
    %674 = vmatprep.subr.mxu0 %v139
    %675 = vmatpush1.msra.mxu0 %v138
    %676 = vmatprep.subr.mxu0 %v135
    %677 = vmatpush1.msra.mxu0 %v134
    %678 = vmatprep.subr.mxu0 %v131
    %679 = vmatpush1.msra.mxu0 %v130
    %680 = vmatprep.subr.mxu0 %v127
    %681 = vmatpush1.msra.mxu0 %v126
    %682 = vmatprep.subr.mxu0 %v123
    %683 = vmatpush1.msra.mxu0 %v122
    %684 = vmatprep.subr.mxu0 %v119
    %685 = vmatpush1.msra.mxu0 %v118
    %686 = vmatprep.subr.mxu0 %v115
    %687 = vmatpush1.msra.mxu0 %v114
    %688 = vmatprep.subr.mxu0 %v111
    %689 = vmatpush1.msra.mxu0 %v110
    %690 = vmatprep.subr.mxu0 %v107
    %691 = vmatpush1.msra.mxu0 %v106
    %692 = vmatprep.subr.mxu0 %v103
    %693 = vmatpush1.msra.mxu0 %v102
    %694 = vmatprep.subr.mxu0 %v99
    %695 = vmatpush1.msra.mxu0 %v98
    %696 = vmatprep.subr.mxu0 %v95
    %697 = vmatpush1.msra.mxu0 %v94
    %698 = vmatprep.subr.mxu0 %v91
    %699 = vmatpush1.msra.mxu0 %v90
    %700 = vmatprep.subr.mxu0 %v215
    %701 = vmatpush2.msra.mxu0 %v214
    %702 = vmatprep.subr.mxu0 %v211
    %703 = vmatpush2.msra.mxu0 %v210
    %704 = vmatprep.subr.mxu0 %v207
    %705 = vmatpush2.msra.mxu0 %v206
    %706 = vmatprep.subr.mxu0 %v203
    %707 = vmatpush2.msra.mxu0 %v202
    %708 = vmatprep.subr.mxu0 %v199
    %709 = vmatpush2.msra.mxu0 %v198
    %710 = vmatprep.subr.mxu0 %v195
    %711 = vmatpush2.msra.mxu0 %v194
    %712 = vmatprep.subr.mxu0 %v191
    %713 = vmatpush2.msra.mxu0 %v190
    %714 = vmatprep.subr.mxu0 %v187
    %715 = vmatpush2.msra.mxu0 %v186
    %716 = vmatprep.subr.mxu0 %v183
    %717 = vmatpush2.msra.mxu0 %v182
    %718 = vmatprep.subr.mxu0 %v179
    %719 = vmatpush2.msra.mxu0 %v178
    %720 = vmatprep.subr.mxu0 %v175
    %721 = vmatpush2.msra.mxu0 %v174
    %722 = vmatprep.subr.mxu0 %v171
    %723 = vmatpush2.msra.mxu0 %v170
    %724 = vmatprep.subr.mxu0 %v167
    %725 = vmatpush2.msra.mxu0 %v166
    %726 = vmatprep.subr.mxu0 %v163
    %727 = vmatpush2.msra.mxu0 %v162
    %728 = vmatprep.subr.mxu0 %v159
    %729 = vmatpush2.msra.mxu0 %v158
    %730 = vmatprep.subr.mxu0 %v155
    %731 = vmatpush2.msra.mxu0 %v154
    %732 = vmatprep.mubr.f32.mxu0 %v641
    %733 = vmatmul.mubr.f32.gmra.mxu0 %v633
    %v734 = vpop.f32.mrf.mxu0
    %v735 = vadd.f32 %v607, %v734
    %v736 = vpop.f32.mrf.mxu0
    %v737 = vadd.f32 %v611, %v736
    %738 = vdwg.mxu0
    %739 = vmatprep.subr.mxu0 %v279
    %740 = vmatpush1.msra.mxu0 %v278
    %741 = vmatprep.subr.mxu0 %v275
    %742 = vmatpush1.msra.mxu0 %v274
    %743 = vmatprep.subr.mxu0 %v271
    %744 = vmatpush1.msra.mxu0 %v270
    %745 = vmatprep.subr.mxu0 %v267
    %746 = vmatpush1.msra.mxu0 %v266
    %747 = vmatprep.subr.mxu0 %v263
    %748 = vmatpush1.msra.mxu0 %v262
    %749 = vmatprep.subr.mxu0 %v259
    %750 = vmatpush1.msra.mxu0 %v258
    %751 = vmatprep.subr.mxu0 %v255
    %752 = vmatpush1.msra.mxu0 %v254
    %753 = vmatprep.subr.mxu0 %v251
    %754 = vmatpush1.msra.mxu0 %v250
    %755 = vmatprep.subr.mxu0 %v247
    %756 = vmatpush1.msra.mxu0 %v246
    %757 = vmatprep.subr.mxu0 %v243
    %758 = vmatpush1.msra.mxu0 %v242
    %759 = vmatprep.subr.mxu0 %v239
    %760 = vmatpush1.msra.mxu0 %v238
    %761 = vmatprep.subr.mxu0 %v235
    %762 = vmatpush1.msra.mxu0 %v234
    %763 = vmatprep.subr.mxu0 %v231
    %764 = vmatpush1.msra.mxu0 %v230
    %765 = vmatprep.subr.mxu0 %v227
    %766 = vmatpush1.msra.mxu0 %v226
    %767 = vmatprep.subr.mxu0 %v223
    %768 = vmatpush1.msra.mxu0 %v222
    %769 = vmatprep.subr.mxu0 %v219
    %770 = vmatpush1.msra.mxu0 %v218
    %771 = vmatprep.subr.mxu0 %v343
    %772 = vmatpush2.msra.mxu0 %v342
    %773 = vmatprep.subr.mxu0 %v339
    %774 = vmatpush2.msra.mxu0 %v338
    %775 = vmatprep.subr.mxu0 %v335
    %776 = vmatpush2.msra.mxu0 %v334
    %777 = vmatprep.subr.mxu0 %v331
    %778 = vmatpush2.msra.mxu0 %v330
    %779 = vmatprep.subr.mxu0 %v327
    %780 = vmatpush2.msra.mxu0 %v326
    %781 = vmatprep.subr.mxu0 %v323
    %782 = vmatpush2.msra.mxu0 %v322
    %783 = vmatprep.subr.mxu0 %v319
    %784 = vmatpush2.msra.mxu0 %v318
    %785 = vmatprep.subr.mxu0 %v315
    %786 = vmatpush2.msra.mxu0 %v314
    %787 = vmatprep.subr.mxu0 %v311
    %788 = vmatpush2.msra.mxu0 %v310
    %789 = vmatprep.subr.mxu0 %v307
    %790 = vmatpush2.msra.mxu0 %v306
    %791 = vmatprep.subr.mxu0 %v303
    %792 = vmatpush2.msra.mxu0 %v302
    %793 = vmatprep.subr.mxu0 %v299
    %794 = vmatpush2.msra.mxu0 %v298
    %795 = vmatprep.subr.mxu0 %v295
    %796 = vmatpush2.msra.mxu0 %v294
    %797 = vmatprep.subr.mxu0 %v291
    %798 = vmatpush2.msra.mxu0 %v290
    %799 = vmatprep.subr.mxu0 %v287
    %800 = vmatpush2.msra.mxu0 %v286
    %801 = vmatprep.subr.mxu0 %v283
    %802 = vmatpush2.msra.mxu0 %v282
    %803 = vmatprep.mubr.f32.mxu0 %v642
    %804 = vmatmul.mubr.f32.gmra.mxu0 %v640
    %v805 = vpop.f32.mrf.mxu0
    %v806 = vadd.f32 %v735, %v805
    %v807 = vpop.f32.mrf.mxu0
    %v808 = vadd.f32 %v737, %v807
    %809 = vdwg.mxu0
    %810 = vmatprep.subr.mxu0 %v407
    %811 = vmatpush1.msra.mxu0 %v406
    %812 = vmatprep.subr.mxu0 %v403
    %813 = vmatpush1.msra.mxu0 %v402
    %814 = vmatprep.subr.mxu0 %v399
    %815 = vmatpush1.msra.mxu0 %v398
    %816 = vmatprep.subr.mxu0 %v395
    %817 = vmatpush1.msra.mxu0 %v394
    %818 = vmatprep.subr.mxu0 %v391
    %819 = vmatpush1.msra.mxu0 %v390
    %820 = vmatprep.subr.mxu0 %v387
    %821 = vmatpush1.msra.mxu0 %v386
    %822 = vmatprep.subr.mxu0 %v383
    %823 = vmatpush1.msra.mxu0 %v382
    %824 = vmatprep.subr.mxu0 %v379
    %825 = vmatpush1.msra.mxu0 %v378
    %826 = vmatprep.subr.mxu0 %v375
    %827 = vmatpush1.msra.mxu0 %v374
    %828 = vmatprep.subr.mxu0 %v371
    %829 = vmatpush1.msra.mxu0 %v370
    %830 = vmatprep.subr.mxu0 %v367
    %831 = vmatpush1.msra.mxu0 %v366
    %832 = vmatprep.subr.mxu0 %v363
    %833 = vmatpush1.msra.mxu0 %v362
    %834 = vmatprep.subr.mxu0 %v359
    %835 = vmatpush1.msra.mxu0 %v358
    %836 = vmatprep.subr.mxu0 %v355
    %837 = vmatpush1.msra.mxu0 %v354
    %838 = vmatprep.subr.mxu0 %v351
    %839 = vmatpush1.msra.mxu0 %v350
    %840 = vmatprep.subr.mxu0 %v347
    %841 = vmatpush1.msra.mxu0 %v346
    %842 = vmatprep.subr.mxu0 %v471
    %843 = vmatpush2.msra.mxu0 %v470
    %844 = vmatprep.subr.mxu0 %v467
    %845 = vmatpush2.msra.mxu0 %v466
    %846 = vmatprep.subr.mxu0 %v463
    %847 = vmatpush2.msra.mxu0 %v462
    %848 = vmatprep.subr.mxu0 %v459
    %849 = vmatpush2.msra.mxu0 %v458
    %850 = vmatprep.subr.mxu0 %v455
    %851 = vmatpush2.msra.mxu0 %v454
    %852 = vmatprep.subr.mxu0 %v451
    %853 = vmatpush2.msra.mxu0 %v450
    %854 = vmatprep.subr.mxu0 %v447
    %855 = vmatpush2.msra.mxu0 %v446
    %856 = vmatprep.subr.mxu0 %v443
    %857 = vmatpush2.msra.mxu0 %v442
    %858 = vmatprep.subr.mxu0 %v439
    %859 = vmatpush2.msra.mxu0 %v438
    %860 = vmatprep.subr.mxu0 %v435
    %861 = vmatpush2.msra.mxu0 %v434
    %862 = vmatprep.subr.mxu0 %v431
    %863 = vmatpush2.msra.mxu0 %v430
    %864 = vmatprep.subr.mxu0 %v427
    %865 = vmatpush2.msra.mxu0 %v426
    %866 = vmatprep.subr.mxu0 %v423
    %867 = vmatpush2.msra.mxu0 %v422
    %868 = vmatprep.subr.mxu0 %v419
    %869 = vmatpush2.msra.mxu0 %v418
    %870 = vmatprep.subr.mxu0 %v415
    %871 = vmatpush2.msra.mxu0 %v414
    %872 = vmatprep.subr.mxu0 %v411
    %873 = vmatpush2.msra.mxu0 %v410
    %874 = vmatprep.mubr.f32.mxu0 %v658
    %875 = vmatmul.mubr.f32.gmra.mxu0 %v650
    %v876 = vpop.f32.mrf.mxu0
    %v877 = vadd.f32 %v806, %v876
    %v878 = vpop.f32.mrf.mxu0
    %v879 = vadd.f32 %v808, %v878
    %880 = vdwg.mxu0
    %881 = vmatprep.subr.mxu0 %v535
    %882 = vmatpush1.msra.mxu0 %v534
    %883 = vmatprep.subr.mxu0 %v531
    %884 = vmatpush1.msra.mxu0 %v530
    %885 = vmatprep.subr.mxu0 %v527
    %886 = vmatpush1.msra.mxu0 %v526
    %887 = vmatprep.subr.mxu0 %v523
    %888 = vmatpush1.msra.mxu0 %v522
    %889 = vmatprep.subr.mxu0 %v519
    %890 = vmatpush1.msra.mxu0 %v518
    %891 = vmatprep.subr.mxu0 %v515
    %892 = vmatpush1.msra.mxu0 %v514
    %893 = vmatprep.subr.mxu0 %v511
    %894 = vmatpush1.msra.mxu0 %v510
    %895 = vmatprep.subr.mxu0 %v507
    %896 = vmatpush1.msra.mxu0 %v506
    %897 = vmatprep.subr.mxu0 %v503
    %898 = vmatpush1.msra.mxu0 %v502
    %899 = vmatprep.subr.mxu0 %v499
    %900 = vmatpush1.msra.mxu0 %v498
    %901 = vmatprep.subr.mxu0 %v495
    %902 = vmatpush1.msra.mxu0 %v494
    %903 = vmatprep.subr.mxu0 %v491
    %904 = vmatpush1.msra.mxu0 %v490
    %905 = vmatprep.subr.mxu0 %v487
    %906 = vmatpush1.msra.mxu0 %v486
    %907 = vmatprep.subr.mxu0 %v483
    %908 = vmatpush1.msra.mxu0 %v482
    %909 = vmatprep.subr.mxu0 %v479
    %910 = vmatpush1.msra.mxu0 %v478
    %911 = vmatprep.subr.mxu0 %v475
    %912 = vmatpush1.msra.mxu0 %v474
    %913 = vmatprep.subr.mxu0 %v599
    %914 = vmatpush2.msra.mxu0 %v598
    %915 = vmatprep.subr.mxu0 %v595
    %916 = vmatpush2.msra.mxu0 %v594
    %917 = vmatprep.subr.mxu0 %v591
    %918 = vmatpush2.msra.mxu0 %v590
    %919 = vmatprep.subr.mxu0 %v587
    %920 = vmatpush2.msra.mxu0 %v586
    %921 = vmatprep.subr.mxu0 %v583
    %922 = vmatpush2.msra.mxu0 %v582
    %923 = vmatprep.subr.mxu0 %v579
    %924 = vmatpush2.msra.mxu0 %v578
    %925 = vmatprep.subr.mxu0 %v575
    %926 = vmatpush2.msra.mxu0 %v574
    %927 = vmatprep.subr.mxu0 %v571
    %928 = vmatpush2.msra.mxu0 %v570
    %929 = vmatprep.subr.mxu0 %v567
    %930 = vmatpush2.msra.mxu0 %v566
    %931 = vmatprep.subr.mxu0 %v563
    %932 = vmatpush2.msra.mxu0 %v562
    %933 = vmatprep.subr.mxu0 %v559
    %934 = vmatpush2.msra.mxu0 %v558
    %935 = vmatprep.subr.mxu0 %v555
    %936 = vmatpush2.msra.mxu0 %v554
    %937 = vmatprep.subr.mxu0 %v551
    %938 = vmatpush2.msra.mxu0 %v550
    %939 = vmatprep.subr.mxu0 %v547
    %940 = vmatpush2.msra.mxu0 %v546
    %941 = vmatprep.subr.mxu0 %v543
    %942 = vmatpush2.msra.mxu0 %v542
    %943 = vmatprep.subr.mxu0 %v539
    %944 = vmatpush2.msra.mxu0 %v538
    %945 = vmatprep.mubr.f32.mxu0 %v659
    %946 = vmatmul.mubr.f32.gmra.mxu0 %v657
    %v947 = vpop.f32.mrf.mxu0
    %v948 = vadd.f32 %v877, %v947
    %v949 = vpop.f32.mrf.mxu0
    %v950 = vadd.f32 %v879, %v949
    %951 = vdwg.mxu0
    %952 = vmatprep.subr.mxu0 %v153
    %953 = vmatpush1.msra.mxu0 %v152
    %954 = vmatprep.subr.mxu0 %v149
    %955 = vmatpush1.msra.mxu0 %v148
    %956 = vmatprep.subr.mxu0 %v145
    %957 = vmatpush1.msra.mxu0 %v144
    %958 = vmatprep.subr.mxu0 %v141
    %959 = vmatpush1.msra.mxu0 %v140
    %960 = vmatprep.subr.mxu0 %v137
    %961 = vmatpush1.msra.mxu0 %v136
    %962 = vmatprep.subr.mxu0 %v133
    %963 = vmatpush1.msra.mxu0 %v132
    %964 = vmatprep.subr.mxu0 %v129
    %965 = vmatpush1.msra.mxu0 %v128
    %966 = vmatprep.subr.mxu0 %v125
    %967 = vmatpush1.msra.mxu0 %v124
    %968 = vmatprep.subr.mxu0 %v121
    %969 = vmatpush1.msra.mxu0 %v120
    %970 = vmatprep.subr.mxu0 %v117
    %971 = vmatpush1.msra.mxu0 %v116
    %972 = vmatprep.subr.mxu0 %v113
    %973 = vmatpush1.msra.mxu0 %v112
    %974 = vmatprep.subr.mxu0 %v109
    %975 = vmatpush1.msra.mxu0 %v108
    %976 = vmatprep.subr.mxu0 %v105
    %977 = vmatpush1.msra.mxu0 %v104
    %978 = vmatprep.subr.mxu0 %v101
    %979 = vmatpush1.msra.mxu0 %v100
    %980 = vmatprep.subr.mxu0 %v97
    %981 = vmatpush1.msra.mxu0 %v96
    %982 = vmatprep.subr.mxu0 %v93
    %983 = vmatpush1.msra.mxu0 %v92
    %984 = vmatprep.subr.mxu0 %v217
    %985 = vmatpush2.msra.mxu0 %v216
    %986 = vmatprep.subr.mxu0 %v213
    %987 = vmatpush2.msra.mxu0 %v212
    %988 = vmatprep.subr.mxu0 %v209
    %989 = vmatpush2.msra.mxu0 %v208
    %990 = vmatprep.subr.mxu0 %v205
    %991 = vmatpush2.msra.mxu0 %v204
    %992 = vmatprep.subr.mxu0 %v201
    %993 = vmatpush2.msra.mxu0 %v200
    %994 = vmatprep.subr.mxu0 %v197
    %995 = vmatpush2.msra.mxu0 %v196
    %996 = vmatprep.subr.mxu0 %v193
    %997 = vmatpush2.msra.mxu0 %v192
    %998 = vmatprep.subr.mxu0 %v189
    %999 = vmatpush2.msra.mxu0 %v188
    %1000 = vmatprep.subr.mxu0 %v185
    %1001 = vmatpush2.msra.mxu0 %v184
    %1002 = vmatprep.subr.mxu0 %v181
    %1003 = vmatpush2.msra.mxu0 %v180
    %1004 = vmatprep.subr.mxu0 %v177
    %1005 = vmatpush2.msra.mxu0 %v176
    %1006 = vmatprep.subr.mxu0 %v173
    %1007 = vmatpush2.msra.mxu0 %v172
    %1008 = vmatprep.subr.mxu0 %v169
    %1009 = vmatpush2.msra.mxu0 %v168
    %1010 = vmatprep.subr.mxu0 %v165
    %1011 = vmatpush2.msra.mxu0 %v164
    %1012 = vmatprep.subr.mxu0 %v161
    %1013 = vmatpush2.msra.mxu0 %v160
    %1014 = vmatprep.subr.mxu0 %v157
    %1015 = vmatpush2.msra.mxu0 %v156
    %1016 = vmatprep.mubr.f32.mxu0 %v641
    %1017 = vmatmul.mubr.f32.gmra.mxu0 %v633
    %v1018 = vpop.f32.mrf.mxu0
    %v1019 = vadd.f32 %v615, %v1018
    %v1020 = vpop.f32.mrf.mxu0
    %v1021 = vadd.f32 %v619, %v1020
    %1022 = vdwg.mxu0
    %1023 = vmatprep.subr.mxu0 %v281
    %1024 = vmatpush1.msra.mxu0 %v280
    %1025 = vmatprep.subr.mxu0 %v277
    %1026 = vmatpush1.msra.mxu0 %v276
    %1027 = vmatprep.subr.mxu0 %v273
    %1028 = vmatpush1.msra.mxu0 %v272
    %1029 = vmatprep.subr.mxu0 %v269
    %1030 = vmatpush1.msra.mxu0 %v268
    %1031 = vmatprep.subr.mxu0 %v265
    %1032 = vmatpush1.msra.mxu0 %v264
    %1033 = vmatprep.subr.mxu0 %v261
    %1034 = vmatpush1.msra.mxu0 %v260
    %1035 = vmatprep.subr.mxu0 %v257
    %1036 = vmatpush1.msra.mxu0 %v256
    %1037 = vmatprep.subr.mxu0 %v253
    %1038 = vmatpush1.msra.mxu0 %v252
    %1039 = vmatprep.subr.mxu0 %v249
    %1040 = vmatpush1.msra.mxu0 %v248
    %1041 = vmatprep.subr.mxu0 %v245
    %1042 = vmatpush1.msra.mxu0 %v244
    %1043 = vmatprep.subr.mxu0 %v241
    %1044 = vmatpush1.msra.mxu0 %v240
    %1045 = vmatprep.subr.mxu0 %v237
    %1046 = vmatpush1.msra.mxu0 %v236
    %1047 = vmatprep.subr.mxu0 %v233
    %1048 = vmatpush1.msra.mxu0 %v232
    %1049 = vmatprep.subr.mxu0 %v229
    %1050 = vmatpush1.msra.mxu0 %v228
    %1051 = vmatprep.subr.mxu0 %v225
    %1052 = vmatpush1.msra.mxu0 %v224
    %1053 = vmatprep.subr.mxu0 %v221
    %1054 = vmatpush1.msra.mxu0 %v220
    %1055 = vmatprep.subr.mxu0 %v345
    %1056 = vmatpush2.msra.mxu0 %v344
    %1057 = vmatprep.subr.mxu0 %v341
    %1058 = vmatpush2.msra.mxu0 %v340
    %1059 = vmatprep.subr.mxu0 %v337
    %1060 = vmatpush2.msra.mxu0 %v336
    %1061 = vmatprep.subr.mxu0 %v333
    %1062 = vmatpush2.msra.mxu0 %v332
    %1063 = vmatprep.subr.mxu0 %v329
    %1064 = vmatpush2.msra.mxu0 %v328
    %1065 = vmatprep.subr.mxu0 %v325
    %1066 = vmatpush2.msra.mxu0 %v324
    %1067 = vmatprep.subr.mxu0 %v321
    %1068 = vmatpush2.msra.mxu0 %v320
    %1069 = vmatprep.subr.mxu0 %v317
    %1070 = vmatpush2.msra.mxu0 %v316
    %1071 = vmatprep.subr.mxu0 %v313
    %1072 = vmatpush2.msra.mxu0 %v312
    %1073 = vmatprep.subr.mxu0 %v309
    %1074 = vmatpush2.msra.mxu0 %v308
    %1075 = vmatprep.subr.mxu0 %v305
    %1076 = vmatpush2.msra.mxu0 %v304
    %1077 = vmatprep.subr.mxu0 %v301
    %1078 = vmatpush2.msra.mxu0 %v300
    %1079 = vmatprep.subr.mxu0 %v297
    %1080 = vmatpush2.msra.mxu0 %v296
    %1081 = vmatprep.subr.mxu0 %v293
    %1082 = vmatpush2.msra.mxu0 %v292
    %1083 = vmatprep.subr.mxu0 %v289
    %1084 = vmatpush2.msra.mxu0 %v288
    %1085 = vmatprep.subr.mxu0 %v285
    %1086 = vmatpush2.msra.mxu0 %v284
    %1087 = vmatprep.mubr.f32.mxu0 %v642
    %1088 = vmatmul.mubr.f32.gmra.mxu0 %v640
    %v1089 = vpop.f32.mrf.mxu0
    %v1090 = vadd.f32 %v1019, %v1089
    %v1091 = vpop.f32.mrf.mxu0
    %v1092 = vadd.f32 %v1021, %v1091
    %1093 = vdwg.mxu0
    %1094 = vmatprep.subr.mxu0 %v409
    %1095 = vmatpush1.msra.mxu0 %v408
    %1096 = vmatprep.subr.mxu0 %v405
    %1097 = vmatpush1.msra.mxu0 %v404
    %1098 = vmatprep.subr.mxu0 %v401
    %1099 = vmatpush1.msra.mxu0 %v400
    %1100 = vmatprep.subr.mxu0 %v397
    %1101 = vmatpush1.msra.mxu0 %v396
    %1102 = vmatprep.subr.mxu0 %v393
    %1103 = vmatpush1.msra.mxu0 %v392
    %1104 = vmatprep.subr.mxu0 %v389
    %1105 = vmatpush1.msra.mxu0 %v388
    %1106 = vmatprep.subr.mxu0 %v385
    %1107 = vmatpush1.msra.mxu0 %v384
    %1108 = vmatprep.subr.mxu0 %v381
    %1109 = vmatpush1.msra.mxu0 %v380
    %1110 = vmatprep.subr.mxu0 %v377
    %1111 = vmatpush1.msra.mxu0 %v376
    %1112 = vmatprep.subr.mxu0 %v373
    %1113 = vmatpush1.msra.mxu0 %v372
    %1114 = vmatprep.subr.mxu0 %v369
    %1115 = vmatpush1.msra.mxu0 %v368
    %1116 = vmatprep.subr.mxu0 %v365
    %1117 = vmatpush1.msra.mxu0 %v364
    %1118 = vmatprep.subr.mxu0 %v361
    %1119 = vmatpush1.msra.mxu0 %v360
    %1120 = vmatprep.subr.mxu0 %v357
    %1121 = vmatpush1.msra.mxu0 %v356
    %1122 = vmatprep.subr.mxu0 %v353
    %1123 = vmatpush1.msra.mxu0 %v352
    %1124 = vmatprep.subr.mxu0 %v349
    %1125 = vmatpush1.msra.mxu0 %v348
    %1126 = vmatprep.subr.mxu0 %v473
    %1127 = vmatpush2.msra.mxu0 %v472
    %1128 = vmatprep.subr.mxu0 %v469
    %1129 = vmatpush2.msra.mxu0 %v468
    %1130 = vmatprep.subr.mxu0 %v465
    %1131 = vmatpush2.msra.mxu0 %v464
    %1132 = vmatprep.subr.mxu0 %v461
    %1133 = vmatpush2.msra.mxu0 %v460
    %1134 = vmatprep.subr.mxu0 %v457
    %1135 = vmatpush2.msra.mxu0 %v456
    %1136 = vmatprep.subr.mxu0 %v453
    %1137 = vmatpush2.msra.mxu0 %v452
    %1138 = vmatprep.subr.mxu0 %v449
    %1139 = vmatpush2.msra.mxu0 %v448
    %1140 = vmatprep.subr.mxu0 %v445
    %1141 = vmatpush2.msra.mxu0 %v444
    %1142 = vmatprep.subr.mxu0 %v441
    %1143 = vmatpush2.msra.mxu0 %v440
    %1144 = vmatprep.subr.mxu0 %v437
    %1145 = vmatpush2.msra.mxu0 %v436
    %1146 = vmatprep.subr.mxu0 %v433
    %1147 = vmatpush2.msra.mxu0 %v432
    %1148 = vmatprep.subr.mxu0 %v429
    %1149 = vmatpush2.msra.mxu0 %v428
    %1150 = vmatprep.subr.mxu0 %v425
    %1151 = vmatpush2.msra.mxu0 %v424
    %1152 = vmatprep.subr.mxu0 %v421
    %1153 = vmatpush2.msra.mxu0 %v420
    %1154 = vmatprep.subr.mxu0 %v417
    %1155 = vmatpush2.msra.mxu0 %v416
    %1156 = vmatprep.subr.mxu0 %v413
    %1157 = vmatpush2.msra.mxu0 %v412
    %1158 = vmatprep.mubr.f32.mxu0 %v658
    %1159 = vmatmul.mubr.f32.gmra.mxu0 %v650
    %v1160 = vpop.f32.mrf.mxu0
    %v1161 = vadd.f32 %v1090, %v1160
    %v1162 = vpop.f32.mrf.mxu0
    %v1163 = vadd.f32 %v1092, %v1162
    %1164 = vdwg.mxu0
    %1165 = vmatprep.subr.mxu0 %v537
    %1166 = vmatpush1.msra.mxu0 %v536
    %1167 = vmatprep.subr.mxu0 %v533
    %1168 = vmatpush1.msra.mxu0 %v532
    %1169 = vmatprep.subr.mxu0 %v529
    %1170 = vmatpush1.msra.mxu0 %v528
    %1171 = vmatprep.subr.mxu0 %v525
    %1172 = vmatpush1.msra.mxu0 %v524
    %1173 = vmatprep.subr.mxu0 %v521
    %1174 = vmatpush1.msra.mxu0 %v520
    %1175 = vmatprep.subr.mxu0 %v517
    %1176 = vmatpush1.msra.mxu0 %v516
    %1177 = vmatprep.subr.mxu0 %v513
    %1178 = vmatpush1.msra.mxu0 %v512
    %1179 = vmatprep.subr.mxu0 %v509
    %1180 = vmatpush1.msra.mxu0 %v508
    %1181 = vmatprep.subr.mxu0 %v505
    %1182 = vmatpush1.msra.mxu0 %v504
    %1183 = vmatprep.subr.mxu0 %v501
    %1184 = vmatpush1.msra.mxu0 %v500
    %1185 = vmatprep.subr.mxu0 %v497
    %1186 = vmatpush1.msra.mxu0 %v496
    %1187 = vmatprep.subr.mxu0 %v493
    %1188 = vmatpush1.msra.mxu0 %v492
    %1189 = vmatprep.subr.mxu0 %v489
    %1190 = vmatpush1.msra.mxu0 %v488
    %1191 = vmatprep.subr.mxu0 %v485
    %1192 = vmatpush1.msra.mxu0 %v484
    %1193 = vmatprep.subr.mxu0 %v481
    %1194 = vmatpush1.msra.mxu0 %v480
    %1195 = vmatprep.subr.mxu0 %v477
    %1196 = vmatpush1.msra.mxu0 %v476
    %1197 = vmatprep.subr.mxu0 %v601
    %1198 = vmatpush2.msra.mxu0 %v600
    %1199 = vmatprep.subr.mxu0 %v597
    %1200 = vmatpush2.msra.mxu0 %v596
    %1201 = vmatprep.subr.mxu0 %v593
    %1202 = vmatpush2.msra.mxu0 %v592
    %1203 = vmatprep.subr.mxu0 %v589
    %1204 = vmatpush2.msra.mxu0 %v588
    %1205 = vmatprep.subr.mxu0 %v585
    %1206 = vmatpush2.msra.mxu0 %v584
    %1207 = vmatprep.subr.mxu0 %v581
    %1208 = vmatpush2.msra.mxu0 %v580
    %1209 = vmatprep.subr.mxu0 %v577
    %1210 = vmatpush2.msra.mxu0 %v576
    %1211 = vmatprep.subr.mxu0 %v573
    %1212 = vmatpush2.msra.mxu0 %v572
    %1213 = vmatprep.subr.mxu0 %v569
    %1214 = vmatpush2.msra.mxu0 %v568
    %1215 = vmatprep.subr.mxu0 %v565
    %1216 = vmatpush2.msra.mxu0 %v564
    %1217 = vmatprep.subr.mxu0 %v561
    %1218 = vmatpush2.msra.mxu0 %v560
    %1219 = vmatprep.subr.mxu0 %v557
    %1220 = vmatpush2.msra.mxu0 %v556
    %1221 = vmatprep.subr.mxu0 %v553
    %1222 = vmatpush2.msra.mxu0 %v552
    %1223 = vmatprep.subr.mxu0 %v549
    %1224 = vmatpush2.msra.mxu0 %v548
    %1225 = vmatprep.subr.mxu0 %v545
    %1226 = vmatpush2.msra.mxu0 %v544
    %1227 = vmatprep.subr.mxu0 %v541
    %1228 = vmatpush2.msra.mxu0 %v540
    %1229 = vmatprep.mubr.f32.mxu0 %v659
    %1230 = vmatmul.mubr.f32.gmra.mxu0 %v657
    %v1231 = vpop.f32.mrf.mxu0
    %v1232 = vadd.f32 %v1161, %v1231
    %v1233 = vpop.f32.mrf.mxu0
    %v1234 = vadd.f32 %v1163, %v1233
    %1235 = vdwg.mxu0
    %v1236 = vmax.f32 %v948, 0.0
    %v1237 = vmax.f32 %v950, 0.0
    %v1238 = vmax.f32 %v1232, 0.0
    %v1239 = vmax.f32 %v1234, 0.0
    %v1240 = vld [vmem:[#allocation6] sm:$0xff]
    %v1241 = vld [vmem:[#allocation6 + $0x8] sm:$0xff]
    %v1242 = vld [vmem:[#allocation6 + $0x10] sm:$0xff]
    %v1243 = vld [vmem:[#allocation6 + $0x18] sm:$0xff]
    %v1244 = vld [vmem:[#allocation6 + $0x20] sm:$0xff]
    %v1245 = vld [vmem:[#allocation6 + $0x28] sm:$0xff]
    %v1246 = vld [vmem:[#allocation6 + $0x30] sm:$0xff]
    %v1247 = vld [vmem:[#allocation6 + $0x38] sm:$0xff]
    %v1248 = vld [vmem:[#allocation6 + $0x40] sm:$0xff]
    %v1249 = vld [vmem:[#allocation6 + $0x48] sm:$0xff]
    %v1250 = vld [vmem:[#allocation6 + $0x50] sm:$0xff]
    %v1251 = vld [vmem:[#allocation6 + $0x58] sm:$0xff]
    %v1252 = vld [vmem:[#allocation6 + $0x60] sm:$0xff]
    %v1253 = vld [vmem:[#allocation6 + $0x68] sm:$0xff]
    %v1254 = vld [vmem:[#allocation6 + $0x70] sm:$0xff]
    %v1255 = vld [vmem:[#allocation6 + $0x78] sm:$0xff]
    %v1256 = vld [vmem:[#allocation6 + $0x80] sm:$0xff]
    %v1257 = vld [vmem:[#allocation6 + $0x88] sm:$0xff]
    %v1258 = vld [vmem:[#allocation6 + $0x90] sm:$0xff]
    %v1259 = vld [vmem:[#allocation6 + $0x98] sm:$0xff]
    %v1260 = vld [vmem:[#allocation6 + $0xa0] sm:$0xff]
    %v1261 = vld [vmem:[#allocation6 + $0xa8] sm:$0xff]
    %v1262 = vld [vmem:[#allocation6 + $0xb0] sm:$0xff]
    %v1263 = vld [vmem:[#allocation6 + $0xb8] sm:$0xff]
    %v1264 = vld [vmem:[#allocation6 + $0xc0] sm:$0xff]
    %v1265 = vld [vmem:[#allocation6 + $0xc8] sm:$0xff]
    %v1266 = vld [vmem:[#allocation6 + $0xd0] sm:$0xff]
    %v1267 = vld [vmem:[#allocation6 + $0xd8] sm:$0xff]
    %v1268 = vld [vmem:[#allocation6 + $0xe0] sm:$0xff]
    %v1269 = vld [vmem:[#allocation6 + $0xe8] sm:$0xff]
    %v1270 = vld [vmem:[#allocation6 + $0xf0] sm:$0xff]
    %v1271 = vld [vmem:[#allocation6 + $0xf8] sm:$0xff]
    %v1272 = vld [vmem:[#allocation6 + $0x100] sm:$0xff]
    %v1273 = vld [vmem:[#allocation6 + $0x108] sm:$0xff]
    %v1274 = vld [vmem:[#allocation6 + $0x110] sm:$0xff]
    %v1275 = vld [vmem:[#allocation6 + $0x118] sm:$0xff]
    %v1276 = vld [vmem:[#allocation6 + $0x120] sm:$0xff]
    %v1277 = vld [vmem:[#allocation6 + $0x128] sm:$0xff]
    %v1278 = vld [vmem:[#allocation6 + $0x130] sm:$0xff]
    %v1279 = vld [vmem:[#allocation6 + $0x138] sm:$0xff]
    %v1280 = vld [vmem:[#allocation6 + $0x140] sm:$0xff]
    %v1281 = vld [vmem:[#allocation6 + $0x148] sm:$0xff]
    %v1282 = vld [vmem:[#allocation6 + $0x150] sm:$0xff]
    %v1283 = vld [vmem:[#allocation6 + $0x158] sm:$0xff]
    %v1284 = vld [vmem:[#allocation6 + $0x160] sm:$0xff]
    %v1285 = vld [vmem:[#allocation6 + $0x168] sm:$0xff]
    %v1286 = vld [vmem:[#allocation6 + $0x170] sm:$0xff]
    %v1287 = vld [vmem:[#allocation6 + $0x178] sm:$0xff]
    %v1288 = vld [vmem:[#allocation6 + $0x180] sm:$0xff]
    %v1289 = vld [vmem:[#allocation6 + $0x188] sm:$0xff]
    %v1290 = vld [vmem:[#allocation6 + $0x190] sm:$0xff]
    %v1291 = vld [vmem:[#allocation6 + $0x198] sm:$0xff]
    %v1292 = vld [vmem:[#allocation6 + $0x1a0] sm:$0xff]
    %v1293 = vld [vmem:[#allocation6 + $0x1a8] sm:$0xff]
    %v1294 = vld [vmem:[#allocation6 + $0x1b0] sm:$0xff]
    %v1295 = vld [vmem:[#allocation6 + $0x1b8] sm:$0xff]
    %v1296 = vld [vmem:[#allocation6 + $0x1c0] sm:$0xff]
    %v1297 = vld [vmem:[#allocation6 + $0x1c8] sm:$0xff]
    %v1298 = vld [vmem:[#allocation6 + $0x1d0] sm:$0xff]
    %v1299 = vld [vmem:[#allocation6 + $0x1d8] sm:$0xff]
    %v1300 = vld [vmem:[#allocation6 + $0x1e0] sm:$0xff]
    %v1301 = vld [vmem:[#allocation6 + $0x1e8] sm:$0xff]
    %v1302 = vld [vmem:[#allocation6 + $0x1f0] sm:$0xff]
    %v1303 = vld [vmem:[#allocation6 + $0x1f8] sm:$0xff]
    %v1304 = vld [vmem:[#allocation6 + $0x200] sm:$0xff]
    %v1305 = vld [vmem:[#allocation6 + $0x208] sm:$0xff]
    %v1306 = vld [vmem:[#allocation6 + $0x210] sm:$0xff]
    %v1307 = vld [vmem:[#allocation6 + $0x218] sm:$0xff]
    %v1308 = vld [vmem:[#allocation6 + $0x220] sm:$0xff]
    %v1309 = vld [vmem:[#allocation6 + $0x228] sm:$0xff]
    %v1310 = vld [vmem:[#allocation6 + $0x230] sm:$0xff]
    %v1311 = vld [vmem:[#allocation6 + $0x238] sm:$0xff]
    %v1312 = vld [vmem:[#allocation6 + $0x240] sm:$0xff]
    %v1313 = vld [vmem:[#allocation6 + $0x248] sm:$0xff]
    %v1314 = vld [vmem:[#allocation6 + $0x250] sm:$0xff]
    %v1315 = vld [vmem:[#allocation6 + $0x258] sm:$0xff]
    %v1316 = vld [vmem:[#allocation6 + $0x260] sm:$0xff]
    %v1317 = vld [vmem:[#allocation6 + $0x268] sm:$0xff]
    %v1318 = vld [vmem:[#allocation6 + $0x270] sm:$0xff]
    %v1319 = vld [vmem:[#allocation6 + $0x278] sm:$0xff]
    %v1320 = vld [vmem:[#allocation6 + $0x280] sm:$0xff]
    %v1321 = vld [vmem:[#allocation6 + $0x288] sm:$0xff]
    %v1322 = vld [vmem:[#allocation6 + $0x290] sm:$0xff]
    %v1323 = vld [vmem:[#allocation6 + $0x298] sm:$0xff]
    %v1324 = vld [vmem:[#allocation6 + $0x2a0] sm:$0xff]
    %v1325 = vld [vmem:[#allocation6 + $0x2a8] sm:$0xff]
    %v1326 = vld [vmem:[#allocation6 + $0x2b0] sm:$0xff]
    %v1327 = vld [vmem:[#allocation6 + $0x2b8] sm:$0xff]
    %v1328 = vld [vmem:[#allocation6 + $0x2c0] sm:$0xff]
    %v1329 = vld [vmem:[#allocation6 + $0x2c8] sm:$0xff]
    %v1330 = vld [vmem:[#allocation6 + $0x2d0] sm:$0xff]
    %v1331 = vld [vmem:[#allocation6 + $0x2d8] sm:$0xff]
    %v1332 = vld [vmem:[#allocation6 + $0x2e0] sm:$0xff]
    %v1333 = vld [vmem:[#allocation6 + $0x2e8] sm:$0xff]
    %v1334 = vld [vmem:[#allocation6 + $0x2f0] sm:$0xff]
    %v1335 = vld [vmem:[#allocation6 + $0x2f8] sm:$0xff]
    %v1336 = vld [vmem:[#allocation6 + $0x300] sm:$0xff]
    %v1337 = vld [vmem:[#allocation6 + $0x308] sm:$0xff]
    %v1338 = vld [vmem:[#allocation6 + $0x310] sm:$0xff]
    %v1339 = vld [vmem:[#allocation6 + $0x318] sm:$0xff]
    %v1340 = vld [vmem:[#allocation6 + $0x320] sm:$0xff]
    %v1341 = vld [vmem:[#allocation6 + $0x328] sm:$0xff]
    %v1342 = vld [vmem:[#allocation6 + $0x330] sm:$0xff]
    %v1343 = vld [vmem:[#allocation6 + $0x338] sm:$0xff]
    %v1344 = vld [vmem:[#allocation6 + $0x340] sm:$0xff]
    %v1345 = vld [vmem:[#allocation6 + $0x348] sm:$0xff]
    %v1346 = vld [vmem:[#allocation6 + $0x350] sm:$0xff]
    %v1347 = vld [vmem:[#allocation6 + $0x358] sm:$0xff]
    %v1348 = vld [vmem:[#allocation6 + $0x360] sm:$0xff]
    %v1349 = vld [vmem:[#allocation6 + $0x368] sm:$0xff]
    %v1350 = vld [vmem:[#allocation6 + $0x370] sm:$0xff]
    %v1351 = vld [vmem:[#allocation6 + $0x378] sm:$0xff]
    %v1352 = vld [vmem:[#allocation6 + $0x380] sm:$0xff]
    %v1353 = vld [vmem:[#allocation6 + $0x388] sm:$0xff]
    %v1354 = vld [vmem:[#allocation6 + $0x390] sm:$0xff]
    %v1355 = vld [vmem:[#allocation6 + $0x398] sm:$0xff]
    %v1356 = vld [vmem:[#allocation6 + $0x3a0] sm:$0xff]
    %v1357 = vld [vmem:[#allocation6 + $0x3a8] sm:$0xff]
    %v1358 = vld [vmem:[#allocation6 + $0x3b0] sm:$0xff]
    %v1359 = vld [vmem:[#allocation6 + $0x3b8] sm:$0xff]
    %v1360 = vld [vmem:[#allocation6 + $0x3c0] sm:$0xff]
    %v1361 = vld [vmem:[#allocation6 + $0x3c8] sm:$0xff]
    %v1362 = vld [vmem:[#allocation6 + $0x3d0] sm:$0xff]
    %v1363 = vld [vmem:[#allocation6 + $0x3d8] sm:$0xff]
    %v1364 = vld [vmem:[#allocation6 + $0x3e0] sm:$0xff]
    %v1365 = vld [vmem:[#allocation6 + $0x3e8] sm:$0xff]
    %v1366 = vld [vmem:[#allocation6 + $0x3f0] sm:$0xff]
    %v1367 = vld [vmem:[#allocation6 + $0x3f8] sm:$0xff]
    %v1368 = vld [vmem:[#allocation7] sm:$0x3]
    %v1370 = vlaneseq
    %v1371 = vshrl.u32 %v1370, 7
    %v1372 = vsub.s32 0, %v1371
    %v1373 = vrot.slane %v1368, %v1372
    %v1374 = vlaneseq
    %v1375 = vshrl.u32 %v1374, 7
    %v1376 = vsub.s32 1, %v1375
    %v1377 = vrot.slane %v1368, %v1376
    %1380 = vmatprep.subr.mxu0 %v1271
    %1381 = vmatpush1.msra.mxu0 %v1270
    %1382 = vmatprep.subr.mxu0 %v1269
    %1383 = vmatpush1.msra.mxu0 %v1268
    %1384 = vmatprep.subr.mxu0 %v1267
    %1385 = vmatpush1.msra.mxu0 %v1266
    %1386 = vmatprep.subr.mxu0 %v1265
    %1387 = vmatpush1.msra.mxu0 %v1264
    %1388 = vmatprep.subr.mxu0 %v1263
    %1389 = vmatpush1.msra.mxu0 %v1262
    %1390 = vmatprep.subr.mxu0 %v1261
    %1391 = vmatpush1.msra.mxu0 %v1260
    %1392 = vmatprep.subr.mxu0 %v1259
    %1393 = vmatpush1.msra.mxu0 %v1258
    %1394 = vmatprep.subr.mxu0 %v1257
    %1395 = vmatpush1.msra.mxu0 %v1256
    %1396 = vmatprep.subr.mxu0 %v1255
    %1397 = vmatpush1.msra.mxu0 %v1254
    %1398 = vmatprep.subr.mxu0 %v1253
    %1399 = vmatpush1.msra.mxu0 %v1252
    %1400 = vmatprep.subr.mxu0 %v1251
    %1401 = vmatpush1.msra.mxu0 %v1250
    %1402 = vmatprep.subr.mxu0 %v1249
    %1403 = vmatpush1.msra.mxu0 %v1248
    %1404 = vmatprep.subr.mxu0 %v1247
    %1405 = vmatpush1.msra.mxu0 %v1246
    %1406 = vmatprep.subr.mxu0 %v1245
    %1407 = vmatpush1.msra.mxu0 %v1244
    %1408 = vmatprep.subr.mxu0 %v1243
    %1409 = vmatpush1.msra.mxu0 %v1242
    %1410 = vmatprep.subr.mxu0 %v1241
    %1411 = vmatpush1.msra.mxu0 %v1240
    %1412 = vmatprep.subr.mxu0 %v1303
    %1413 = vmatpush2.msra.mxu0 %v1302
    %1414 = vmatprep.subr.mxu0 %v1301
    %1415 = vmatpush2.msra.mxu0 %v1300
    %1416 = vmatprep.subr.mxu0 %v1299
    %1417 = vmatpush2.msra.mxu0 %v1298
    %1418 = vmatprep.subr.mxu0 %v1297
    %1419 = vmatpush2.msra.mxu0 %v1296
    %1420 = vmatprep.subr.mxu0 %v1295
    %1421 = vmatpush2.msra.mxu0 %v1294
    %1422 = vmatprep.subr.mxu0 %v1293
    %1423 = vmatpush2.msra.mxu0 %v1292
    %1424 = vmatprep.subr.mxu0 %v1291
    %1425 = vmatpush2.msra.mxu0 %v1290
    %1426 = vmatprep.subr.mxu0 %v1289
    %1427 = vmatpush2.msra.mxu0 %v1288
    %1428 = vmatprep.subr.mxu0 %v1287
    %1429 = vmatpush2.msra.mxu0 %v1286
    %1430 = vmatprep.subr.mxu0 %v1285
    %1431 = vmatpush2.msra.mxu0 %v1284
    %1432 = vmatprep.subr.mxu0 %v1283
    %1433 = vmatpush2.msra.mxu0 %v1282
    %1434 = vmatprep.subr.mxu0 %v1281
    %1435 = vmatpush2.msra.mxu0 %v1280
    %1436 = vmatprep.subr.mxu0 %v1279
    %1437 = vmatpush2.msra.mxu0 %v1278
    %1438 = vmatprep.subr.mxu0 %v1277
    %1439 = vmatpush2.msra.mxu0 %v1276
    %1440 = vmatprep.subr.mxu0 %v1275
    %1441 = vmatpush2.msra.mxu0 %v1274
    %1442 = vmatprep.subr.mxu0 %v1273
    %1443 = vmatpush2.msra.mxu0 %v1272
    %1444 = vmatprep.mubr.f32.mxu0 %v1237
    %1445 = vmatmul.mubr.f32.gmra.mxu0 %v1236
    %v1446 = vpop.f32.mrf.mxu0
    %v1447 = vadd.f32 %v1373, %v1446
    %v1448 = vpop.f32.mrf.mxu0
    %v1449 = vadd.f32 %v1377, %v1448
    %1450 = vdwg.mxu0
    %1451 = vmatprep.subr.mxu0 %v1335
    %1452 = vmatpush1.msra.mxu0 %v1334
    %1453 = vmatprep.subr.mxu0 %v1333
    %1454 = vmatpush1.msra.mxu0 %v1332
    %1455 = vmatprep.subr.mxu0 %v1331
    %1456 = vmatpush1.msra.mxu0 %v1330
    %1457 = vmatprep.subr.mxu0 %v1329
    %1458 = vmatpush1.msra.mxu0 %v1328
    %1459 = vmatprep.subr.mxu0 %v1327
    %1460 = vmatpush1.msra.mxu0 %v1326
    %1461 = vmatprep.subr.mxu0 %v1325
    %1462 = vmatpush1.msra.mxu0 %v1324
    %1463 = vmatprep.subr.mxu0 %v1323
    %1464 = vmatpush1.msra.mxu0 %v1322
    %1465 = vmatprep.subr.mxu0 %v1321
    %1466 = vmatpush1.msra.mxu0 %v1320
    %1467 = vmatprep.subr.mxu0 %v1319
    %1468 = vmatpush1.msra.mxu0 %v1318
    %1469 = vmatprep.subr.mxu0 %v1317
    %1470 = vmatpush1.msra.mxu0 %v1316
    %1471 = vmatprep.subr.mxu0 %v1315
    %1472 = vmatpush1.msra.mxu0 %v1314
    %1473 = vmatprep.subr.mxu0 %v1313
    %1474 = vmatpush1.msra.mxu0 %v1312
    %1475 = vmatprep.subr.mxu0 %v1311
    %1476 = vmatpush1.msra.mxu0 %v1310
    %1477 = vmatprep.subr.mxu0 %v1309
    %1478 = vmatpush1.msra.mxu0 %v1308
    %1479 = vmatprep.subr.mxu0 %v1307
    %1480 = vmatpush1.msra.mxu0 %v1306
    %1481 = vmatprep.subr.mxu0 %v1305
    %1482 = vmatpush1.msra.mxu0 %v1304
    %1483 = vmatprep.subr.mxu0 %v1367
    %1484 = vmatpush2.msra.mxu0 %v1366
    %1485 = vmatprep.subr.mxu0 %v1365
    %1486 = vmatpush2.msra.mxu0 %v1364
    %1487 = vmatprep.subr.mxu0 %v1363
    %1488 = vmatpush2.msra.mxu0 %v1362
    %1489 = vmatprep.subr.mxu0 %v1361
    %1490 = vmatpush2.msra.mxu0 %v1360
    %1491 = vmatprep.subr.mxu0 %v1359
    %1492 = vmatpush2.msra.mxu0 %v1358
    %1493 = vmatprep.subr.mxu0 %v1357
    %1494 = vmatpush2.msra.mxu0 %v1356
    %1495 = vmatprep.subr.mxu0 %v1355
    %1496 = vmatpush2.msra.mxu0 %v1354
    %1497 = vmatprep.subr.mxu0 %v1353
    %1498 = vmatpush2.msra.mxu0 %v1352
    %1499 = vmatprep.subr.mxu0 %v1351
    %1500 = vmatpush2.msra.mxu0 %v1350
    %1501 = vmatprep.subr.mxu0 %v1349
    %1502 = vmatpush2.msra.mxu0 %v1348
    %1503 = vmatprep.subr.mxu0 %v1347
    %1504 = vmatpush2.msra.mxu0 %v1346
    %1505 = vmatprep.subr.mxu0 %v1345
    %1506 = vmatpush2.msra.mxu0 %v1344
    %1507 = vmatprep.subr.mxu0 %v1343
    %1508 = vmatpush2.msra.mxu0 %v1342
    %1509 = vmatprep.subr.mxu0 %v1341
    %1510 = vmatpush2.msra.mxu0 %v1340
    %1511 = vmatprep.subr.mxu0 %v1339
    %1512 = vmatpush2.msra.mxu0 %v1338
    %1513 = vmatprep.subr.mxu0 %v1337
    %1514 = vmatpush2.msra.mxu0 %v1336
    %1515 = vmatprep.mubr.f32.mxu0 %v1239
    %1516 = vmatmul.mubr.f32.gmra.mxu0 %v1238
    %v1517 = vpop.f32.mrf.mxu0
    %v1518 = vadd.f32 %v1447, %v1517
    %v1519 = vpop.f32.mrf.mxu0
    %v1520 = vadd.f32 %v1449, %v1519
    %1521 = vdwg.mxu0
    %v1522 = vmax.f32 %v1518, 0.0
    %v1523 = vmax.f32 %v1520, 0.0
    %v1524 = vld [vmem:[%s5] sm:$0xff]
    %v1525 = vld [vmem:[%s5 + $0x8] sm:$0xff]
    %v1526 = vld [vmem:[%s5 + $0x10] sm:$0xff]
    %v1527 = vld [vmem:[%s5 + $0x18] sm:$0xff]
    %v1528 = vld [vmem:[%s5 + $0x20] sm:$0xff]
    %v1529 = vld [vmem:[%s5 + $0x28] sm:$0xff]
    %v1530 = vld [vmem:[%s5 + $0x30] sm:$0xff]
    %v1531 = vld [vmem:[%s5 + $0x38] sm:$0xff]
    %v1532 = vld [vmem:[%s5 + $0x40] sm:$0xff]
    %v1533 = vld [vmem:[%s5 + $0x48] sm:$0xff]
    %v1534 = vld [vmem:[%s5 + $0x50] sm:$0xff]
    %v1535 = vld [vmem:[%s5 + $0x58] sm:$0xff]
    %v1536 = vld [vmem:[%s5 + $0x60] sm:$0xff]
    %v1537 = vld [vmem:[%s5 + $0x68] sm:$0xff]
    %v1538 = vld [vmem:[%s5 + $0x70] sm:$0xff]
    %v1539 = vld [vmem:[%s5 + $0x78] sm:$0xff]
    %v1540 = vld [vmem:[%s5 + $0x80] sm:$0xff]
    %v1541 = vld [vmem:[%s5 + $0x88] sm:$0xff]
    %v1542 = vld [vmem:[%s5 + $0x90] sm:$0xff]
    %v1543 = vld [vmem:[%s5 + $0x98] sm:$0xff]
    %v1544 = vld [vmem:[%s5 + $0xa0] sm:$0xff]
    %v1545 = vld [vmem:[%s5 + $0xa8] sm:$0xff]
    %v1546 = vld [vmem:[%s5 + $0xb0] sm:$0xff]
    %v1547 = vld [vmem:[%s5 + $0xb8] sm:$0xff]
    %v1548 = vld [vmem:[%s5 + $0xc0] sm:$0xff]
    %v1549 = vld [vmem:[%s5 + $0xc8] sm:$0xff]
    %v1550 = vld [vmem:[%s5 + $0xd0] sm:$0xff]
    %v1551 = vld [vmem:[%s5 + $0xd8] sm:$0xff]
    %v1552 = vld [vmem:[%s5 + $0xe0] sm:$0xff]
    %v1553 = vld [vmem:[%s5 + $0xe8] sm:$0xff]
    %v1554 = vld [vmem:[%s5 + $0xf0] sm:$0xff]
    %v1555 = vld [vmem:[%s5 + $0xf8] sm:$0xff]
    %v1556 = vld [vmem:[#allocation9] sm:$0x1]
    %v1558 = vlaneseq
    %v1559 = vshrl.u32 %v1558, 7
    %v1560 = vsub.s32 0, %v1559
    %v1561 = vrot.slane %v1556, %v1560
    %1563 = vmatprep.subr.mxu0 0.0
    %1564 = vmatpush1.msra.mxu0 %v1539
    %1565 = vmatprep.subr.mxu0 0.0
    %1566 = vmatpush1.msra.mxu0 %v1538
    %1567 = vmatprep.subr.mxu0 0.0
    %1568 = vmatpush1.msra.mxu0 %v1537
    %1569 = vmatprep.subr.mxu0 0.0
    %1570 = vmatpush1.msra.mxu0 %v1536
    %1571 = vmatprep.subr.mxu0 0.0
    %1572 = vmatpush1.msra.mxu0 %v1535
    %1573 = vmatprep.subr.mxu0 0.0
    %1574 = vmatpush1.msra.mxu0 %v1534
    %1575 = vmatprep.subr.mxu0 0.0
    %1576 = vmatpush1.msra.mxu0 %v1533
    %1577 = vmatprep.subr.mxu0 0.0
    %1578 = vmatpush1.msra.mxu0 %v1532
    %1579 = vmatprep.subr.mxu0 0.0
    %1580 = vmatpush1.msra.mxu0 %v1531
    %1581 = vmatprep.subr.mxu0 0.0
    %1582 = vmatpush1.msra.mxu0 %v1530
    %1583 = vmatprep.subr.mxu0 0.0
    %1584 = vmatpush1.msra.mxu0 %v1529
    %1585 = vmatprep.subr.mxu0 0.0
    %1586 = vmatpush1.msra.mxu0 %v1528
    %1587 = vmatprep.subr.mxu0 0.0
    %1588 = vmatpush1.msra.mxu0 %v1527
    %1589 = vmatprep.subr.mxu0 0.0
    %1590 = vmatpush1.msra.mxu0 %v1526
    %1591 = vmatprep.subr.mxu0 0.0
    %1592 = vmatpush1.msra.mxu0 %v1525
    %1593 = vmatprep.subr.mxu0 0.0
    %1594 = vmatpush1.msra.mxu0 %v1524
    %1595 = vmatprep.subr.mxu0 0.0
    %1596 = vmatpush2.msra.mxu0 %v1555
    %1597 = vmatprep.subr.mxu0 0.0
    %1598 = vmatpush2.msra.mxu0 %v1554
    %1599 = vmatprep.subr.mxu0 0.0
    %1600 = vmatpush2.msra.mxu0 %v1553
    %1601 = vmatprep.subr.mxu0 0.0
    %1602 = vmatpush2.msra.mxu0 %v1552
    %1603 = vmatprep.subr.mxu0 0.0
    %1604 = vmatpush2.msra.mxu0 %v1551
    %1605 = vmatprep.subr.mxu0 0.0
    %1606 = vmatpush2.msra.mxu0 %v1550
    %1607 = vmatprep.subr.mxu0 0.0
    %1608 = vmatpush2.msra.mxu0 %v1549
    %1609 = vmatprep.subr.mxu0 0.0
    %1610 = vmatpush2.msra.mxu0 %v1548
    %1611 = vmatprep.subr.mxu0 0.0
    %1612 = vmatpush2.msra.mxu0 %v1547
    %1613 = vmatprep.subr.mxu0 0.0
    %1614 = vmatpush2.msra.mxu0 %v1546
    %1615 = vmatprep.subr.mxu0 0.0
    %1616 = vmatpush2.msra.mxu0 %v1545
    %1617 = vmatprep.subr.mxu0 0.0
    %1618 = vmatpush2.msra.mxu0 %v1544
    %1619 = vmatprep.subr.mxu0 0.0
    %1620 = vmatpush2.msra.mxu0 %v1543
    %1621 = vmatprep.subr.mxu0 0.0
    %1622 = vmatpush2.msra.mxu0 %v1542
    %1623 = vmatprep.subr.mxu0 0.0
    %1624 = vmatpush2.msra.mxu0 %v1541
    %1625 = vmatprep.subr.mxu0 0.0
    %1626 = vmatpush2.msra.mxu0 %v1540
    %1627 = vmatprep.mubr.f32.mxu0 %v1523
    %1628 = vmatmul.mubr.f32.gmra.mxu0 %v1522
    %v1629 = vpop.f32.mrf.mxu0
    %v1630 = vadd.f32 %v1561, %v1629
    %v1631 = vpop.f32.mrf.mxu0
    %1632 = vdwg.mxu0
    %vm1633 = vcmask 66560
    %1634 = vst.msk [vmem:[%s7] sm:$0x3] %vm1633, %v1630
    // Predicated region
    $region50: #{pointnet_densecls_forward.5} parent=1 // pred_check
      _
    $region51: #{pointnet_densecls_forward.5} parent=1 // pred_check_branch
      %1636 = sbr.rel (0) target = $region53
    $region52: #{pointnet_densecls_forward.5} parent=1 // pred_region
      _
    $region53: #{pointnet_densecls_forward.5} parent=1 // pred_fallthru
      _
    // Predicated region
    $region54: #{pointnet_densecls_forward.5} parent=1 // pred_check
      _
    $region55: #{pointnet_densecls_forward.5} parent=1 // pred_check_branch
      %1638 = sbr.rel (0) target = $region57
    $region56: #{pointnet_densecls_forward.5} parent=1 // pred_region
      _
    $region57: #{pointnet_densecls_forward.5} parent=1 // pred_fallthru
      _
    %1639 = vsyncpa [#allocation3], 1
    %1640 = vsyncpa [#allocation5], 1
    %1641 = vsyncpa [#allocation8], 1

// kernel: pointnet_densecls_forward.7
$region0: #{pointnet_densecls_forward.7}
  #allocation0 [shape = 'u32[]', space=smem, size = 0x4, offset = 0x4, fixed_abs, tag = 'smem constant byte address 0x4 - core index']
  #allocation1 [shape = 'u32[144,128]{1,0:T(1,128)}', space=vmem, size = 0x12000, scoped, tag = 'internal scratch']
  %s0 = inlined_call_operand.vmem [shape: bf16[2,64,64], index: 0, kind: input, shape index: {}]
  %s1 = inlined_call_operand.vmem [shape: f32[2,1,512], index: 1, kind: input, shape index: {}]
  %s2 = inlined_call_operand.vmem [shape: bf16[64,512], index: 2, kind: input, shape index: {}]
  %s3 = inlined_call_operand.vmem [shape: f32[1,512], index: 3, kind: input, shape index: {}]
  %s4 = inlined_call_operand.vmem [shape: bf16[512,256], index: 4, kind: input, shape index: {}]
  %s5 = inlined_call_operand.vmem [shape: f32[1,256], index: 5, kind: input, shape index: {}]
  %s6 = inlined_call_operand.vmem [shape: bf16[256,128], index: 6, kind: input, shape index: {}]
  %s7 = inlined_call_operand.vmem [shape: f32[1,128], index: 7, kind: input, shape index: {}]
  %s8 = inlined_call_operand.vmem [shape: bf16[128,2], index: 8, kind: input, shape index: {}]
  %s9 = inlined_call_operand.vmem [shape: f32[1,2], index: 9, kind: input, shape index: {}]
  %s10 = inlined_call_operand.vmem [shape: f32[2,64,2], index: 10, kind: output, shape index: {}]
  %s11 = sld [smem:[#allocation0]]
  $region73: #{pointnet_densecls_forward.7} parent=0
    _
  %s13 = ssub.s32 1, %s11
  %s14 = scalar_select 0, %s13, %s11
  loop: start=0, step=1, limit=4
  $region2: #{pointnet_densecls_forward.7} parent=0 // loop_pre_header
    _
  $region3: #{pointnet_densecls_forward.7} parent=0 // loop_header
    %s16 = sphi 0, %s20
    %p17 = scmp.ge.s32.totalorder %s16, 4
    %s23 = sphi 0, %s35
    %s24 = sphi 0, %s31
    %s25 = sphi 0, %s23
    %s26 = sphi 0, %s24
    %s27 = sphi 0, %s25
    %s28 = sphi 0, %s26
    %s40 = sphi 0, %s42
    %s43 = sphi 0, %s40
    %s44 = sphi 0, %s43
    %s60 = sphi 0, %s44
    %s66 = sphi 0, %s68
    %s69 = sphi 0, %s66
    %s70 = sphi 0, %s69
    %s86 = sphi 0, %s70
    %s90 = sphi 0, %s90
    %s92 = sphi 0, %s90
    %s93 = sphi 0, %s92
    %s107 = sphi 0, %s93
    %s111 = sphi 0, %s111
    %s113 = sphi 0, %s111
    %s114 = sphi 0, %s113
    %s128 = sphi 0, %s114
    %s132 = sphi 0, %s132
    %s134 = sphi 0, %s132
    %s135 = sphi 0, %s134
    %s149 = sphi 0, %s135
    %s153 = sphi 0, %s153
    %s155 = sphi 0, %s153
    %s156 = sphi 0, %s155
    %s170 = sphi 0, %s156
    %s174 = sphi 0, %s174
    %s176 = sphi 0, %s174
    %s177 = sphi 0, %s176
    %s191 = sphi 0, %s177
    %s195 = sphi 0, %s195
    %s197 = sphi 0, %s195
    %s198 = sphi 0, %s197
    %s212 = sphi 0, %s198
    %s216 = sphi 0, %s216
    %s218 = sphi 0, %s216
    %s219 = sphi 0, %s218
    %s233 = sphi 0, %s219
    %s237 = sphi 0, %s237
    %s239 = sphi 0, %s237
    %s240 = sphi 0, %s239
    %s254 = sphi 0, %s240
    %s262 = sphi 0, %s264
    %s265 = sphi 0, %s262
    %s266 = sphi 0, %s265
    %s282 = sphi 0, %s266
  $region4: #{pointnet_densecls_forward.7} parent=0 // loop_header_branch
    %19 = sbr.rel (%p17) target = $region8
  $region5: #{pointnet_densecls_forward.7} parent=0 // loop_body
    %s21 = ssub.s32 %s16, 1
    %s22 = ssub.s32 %s16, 2
    %s29 = sadd.s32 1, %s24
    %p30 = scmp.ge.s32.totalorder %s29, 1
    %s31 = scalar_select %p30, 0, %s29
    %s32 = sadd.s32 1, %s23
    %s33 = scalar_select %p30, %s32, %s23
    %p34 = scmp.ge.s32.totalorder %s33, 2
    %s35 = scalar_select %p34, 0, %s33
    %s36 = ssub.s32 %s23, %s35
    %s37 = ssub.s32 %s24, %s31
    %s38 = sor.u32 %s36, %s37
    %p39 = scmp.eq.s32.totalorder %s38, 0
    %s41 = sadd.s32 %s40, 1
    %s42 = scalar_select %p39, %s40, %s41
    %p45 = pneg %p39
    %p46 = scmp.eq.s32.totalorder %s16, 1
    %p47 = por %p45, %p46
    %p48 = scmp.ne.s32.totalorder %s40, %s43
    %p49 = scmp.eq.s32.totalorder %s16, 0
    %p50 = por %p48, %p49
    %p51 = scmp.ne.s32.totalorder %s40, %s43
    %p52 = scmp.eq.s32.totalorder %s21, 1
    %p53 = por %p51, %p52
    %p54 = scmp.ne.s32.totalorder %s43, %s44
    %p55 = scmp.eq.s32.totalorder %s21, 0
    %p56 = por %p54, %p55
    %p57 = scmp.ne.s32.totalorder %s43, %s44
    %p58 = scmp.eq.s32.totalorder %s22, 1
    %p59 = por %p57, %p58
    %p61 = scmp.ne.s32.totalorder %s44, %s60
    %p62 = scmp.eq.s32.totalorder %s22, 0
    %p63 = por %p61, %p62
    %s64 = ssub.s32 %s23, %s35
    %p65 = scmp.eq.s32.totalorder %s64, 0
    %s67 = sadd.s32 %s66, 1
    %s68 = scalar_select %p65, %s66, %s67
    %p71 = pneg %p65
    %p72 = scmp.eq.s32.totalorder %s16, 1
    %p73 = por %p71, %p72
    %p74 = scmp.ne.s32.totalorder %s66, %s69
    %p75 = scmp.eq.s32.totalorder %s16, 0
    %p76 = por %p74, %p75
    %p77 = scmp.ne.s32.totalorder %s66, %s69
    %p78 = scmp.eq.s32.totalorder %s21, 1
    %p79 = por %p77, %p78
    %p80 = scmp.ne.s32.totalorder %s69, %s70
    %p81 = scmp.eq.s32.totalorder %s21, 0
    %p82 = por %p80, %p81
    %p83 = scmp.ne.s32.totalorder %s69, %s70
    %p84 = scmp.eq.s32.totalorder %s22, 1
    %p85 = por %p83, %p84
    %p87 = scmp.ne.s32.totalorder %s70, %s86
    %p88 = scmp.eq.s32.totalorder %s22, 0
    %p89 = por %p87, %p88
    %s91 = sadd.s32 %s90, 1
    %p94 = scmp.eq.s32.totalorder %s16, 1
    %p95 = scmp.ne.s32.totalorder %s90, %s92
    %p96 = scmp.eq.s32.totalorder %s16, 0
    %p97 = por %p95, %p96
    %p98 = scmp.ne.s32.totalorder %s90, %s92
    %p99 = scmp.eq.s32.totalorder %s21, 1
    %p100 = por %p98, %p99
    %p101 = scmp.ne.s32.totalorder %s92, %s93
    %p102 = scmp.eq.s32.totalorder %s21, 0
    %p103 = por %p101, %p102
    %p104 = scmp.ne.s32.totalorder %s92, %s93
    %p105 = scmp.eq.s32.totalorder %s22, 1
    %p106 = por %p104, %p105
    %p108 = scmp.ne.s32.totalorder %s93, %s107
    %p109 = scmp.eq.s32.totalorder %s22, 0
    %p110 = por %p108, %p109
    %s112 = sadd.s32 %s111, 1
    %p115 = scmp.eq.s32.totalorder %s16, 1
    %p116 = scmp.ne.s32.totalorder %s111, %s113
    %p117 = scmp.eq.s32.totalorder %s16, 0
    %p118 = por %p116, %p117
    %p119 = scmp.ne.s32.totalorder %s111, %s113
    %p120 = scmp.eq.s32.totalorder %s21, 1
    %p121 = por %p119, %p120
    %p122 = scmp.ne.s32.totalorder %s113, %s114
    %p123 = scmp.eq.s32.totalorder %s21, 0
    %p124 = por %p122, %p123
    %p125 = scmp.ne.s32.totalorder %s113, %s114
    %p126 = scmp.eq.s32.totalorder %s22, 1
    %p127 = por %p125, %p126
    %p129 = scmp.ne.s32.totalorder %s114, %s128
    %p130 = scmp.eq.s32.totalorder %s22, 0
    %p131 = por %p129, %p130
    %s133 = sadd.s32 %s132, 1
    %p136 = scmp.eq.s32.totalorder %s16, 1
    %p137 = scmp.ne.s32.totalorder %s132, %s134
    %p138 = scmp.eq.s32.totalorder %s16, 0
    %p139 = por %p137, %p138
    %p140 = scmp.ne.s32.totalorder %s132, %s134
    %p141 = scmp.eq.s32.totalorder %s21, 1
    %p142 = por %p140, %p141
    %p143 = scmp.ne.s32.totalorder %s134, %s135
    %p144 = scmp.eq.s32.totalorder %s21, 0
    %p145 = por %p143, %p144
    %p146 = scmp.ne.s32.totalorder %s134, %s135
    %p147 = scmp.eq.s32.totalorder %s22, 1
    %p148 = por %p146, %p147
    %p150 = scmp.ne.s32.totalorder %s135, %s149
    %p151 = scmp.eq.s32.totalorder %s22, 0
    %p152 = por %p150, %p151
    %s154 = sadd.s32 %s153, 1
    %p157 = scmp.eq.s32.totalorder %s16, 1
    %p158 = scmp.ne.s32.totalorder %s153, %s155
    %p159 = scmp.eq.s32.totalorder %s16, 0
    %p160 = por %p158, %p159
    %p161 = scmp.ne.s32.totalorder %s153, %s155
    %p162 = scmp.eq.s32.totalorder %s21, 1
    %p163 = por %p161, %p162
    %p164 = scmp.ne.s32.totalorder %s155, %s156
    %p165 = scmp.eq.s32.totalorder %s21, 0
    %p166 = por %p164, %p165
    %p167 = scmp.ne.s32.totalorder %s155, %s156
    %p168 = scmp.eq.s32.totalorder %s22, 1
    %p169 = por %p167, %p168
    %p171 = scmp.ne.s32.totalorder %s156, %s170
    %p172 = scmp.eq.s32.totalorder %s22, 0
    %p173 = por %p171, %p172
    %s175 = sadd.s32 %s174, 1
    %p178 = scmp.eq.s32.totalorder %s16, 1
    %p179 = scmp.ne.s32.totalorder %s174, %s176
    %p180 = scmp.eq.s32.totalorder %s16, 0
    %p181 = por %p179, %p180
    %p182 = scmp.ne.s32.totalorder %s174, %s176
    %p183 = scmp.eq.s32.totalorder %s21, 1
    %p184 = por %p182, %p183
    %p185 = scmp.ne.s32.totalorder %s176, %s177
    %p186 = scmp.eq.s32.totalorder %s21, 0
    %p187 = por %p185, %p186
    %p188 = scmp.ne.s32.totalorder %s176, %s177
    %p189 = scmp.eq.s32.totalorder %s22, 1
    %p190 = por %p188, %p189
    %p192 = scmp.ne.s32.totalorder %s177, %s191
    %p193 = scmp.eq.s32.totalorder %s22, 0
    %p194 = por %p192, %p193
    %s196 = sadd.s32 %s195, 1
    %p199 = scmp.eq.s32.totalorder %s16, 1
    %p200 = scmp.ne.s32.totalorder %s195, %s197
    %p201 = scmp.eq.s32.totalorder %s16, 0
    %p202 = por %p200, %p201
    %p203 = scmp.ne.s32.totalorder %s195, %s197
    %p204 = scmp.eq.s32.totalorder %s21, 1
    %p205 = por %p203, %p204
    %p206 = scmp.ne.s32.totalorder %s197, %s198
    %p207 = scmp.eq.s32.totalorder %s21, 0
    %p208 = por %p206, %p207
    %p209 = scmp.ne.s32.totalorder %s197, %s198
    %p210 = scmp.eq.s32.totalorder %s22, 1
    %p211 = por %p209, %p210
    %p213 = scmp.ne.s32.totalorder %s198, %s212
    %p214 = scmp.eq.s32.totalorder %s22, 0
    %p215 = por %p213, %p214
    %s217 = sadd.s32 %s216, 1
    %p220 = scmp.eq.s32.totalorder %s16, 1
    %p221 = scmp.ne.s32.totalorder %s216, %s218
    %p222 = scmp.eq.s32.totalorder %s16, 0
    %p223 = por %p221, %p222
    %p224 = scmp.ne.s32.totalorder %s216, %s218
    %p225 = scmp.eq.s32.totalorder %s21, 1
    %p226 = por %p224, %p225
    %p227 = scmp.ne.s32.totalorder %s218, %s219
    %p228 = scmp.eq.s32.totalorder %s21, 0
    %p229 = por %p227, %p228
    %p230 = scmp.ne.s32.totalorder %s218, %s219
    %p231 = scmp.eq.s32.totalorder %s22, 1
    %p232 = por %p230, %p231
    %p234 = scmp.ne.s32.totalorder %s219, %s233
    %p235 = scmp.eq.s32.totalorder %s22, 0
    %p236 = por %p234, %p235
    %s238 = sadd.s32 %s237, 1
    %p241 = scmp.eq.s32.totalorder %s16, 1
    %p242 = scmp.ne.s32.totalorder %s237, %s239
    %p243 = scmp.eq.s32.totalorder %s16, 0
    %p244 = por %p242, %p243
    %p245 = scmp.ne.s32.totalorder %s237, %s239
    %p246 = scmp.eq.s32.totalorder %s21, 1
    %p247 = por %p245, %p246
    %p248 = scmp.ne.s32.totalorder %s239, %s240
    %p249 = scmp.eq.s32.totalorder %s21, 0
    %p250 = por %p248, %p249
    %p251 = scmp.ne.s32.totalorder %s239, %s240
    %p252 = scmp.eq.s32.totalorder %s22, 1
    %p253 = por %p251, %p252
    %p255 = scmp.ne.s32.totalorder %s240, %s254
    %p256 = scmp.eq.s32.totalorder %s22, 0
    %p257 = por %p255, %p256
    %s258 = ssub.s32 %s23, %s35
    %s259 = ssub.s32 %s24, %s31
    %s260 = sor.u32 %s258, %s259
    %p261 = scmp.eq.s32.totalorder %s260, 0
    %s263 = sadd.s32 %s262, 1
    %s264 = scalar_select %p261, %s262, %s263
    %p267 = pneg %p261
    %p268 = scmp.eq.s32.totalorder %s16, 1
    %p269 = por %p267, %p268
    %p270 = scmp.ne.s32.totalorder %s262, %s265
    %p271 = scmp.eq.s32.totalorder %s16, 0
    %p272 = por %p270, %p271
    %p273 = scmp.ne.s32.totalorder %s262, %s265
    %p274 = scmp.eq.s32.totalorder %s21, 1
    %p275 = por %p273, %p274
    %p276 = scmp.ne.s32.totalorder %s265, %s266
    %p277 = scmp.eq.s32.totalorder %s21, 0
    %p278 = por %p276, %p277
    %p279 = scmp.ne.s32.totalorder %s265, %s266
    %p280 = scmp.eq.s32.totalorder %s22, 1
    %p281 = por %p279, %p280
    %p283 = scmp.ne.s32.totalorder %s266, %s282
    %p284 = scmp.eq.s32.totalorder %s22, 0
    %p285 = por %p283, %p284
    %p286 = scmp.le.s32.totalorder 1, %s16
    %p287 = scmp.lt.s32.totalorder %s16, 3
    %p288 = pnand %p286, %p287
    %p289 = pneg %p288
    // Predicated region
    $region9: #{pointnet_densecls_forward.7} parent=5 // pred_check
      _
    $region10: #{pointnet_densecls_forward.7} parent=5 // pred_check_branch
      %291 = sbr.rel (%p288) target = $region12
    $region11: #{pointnet_densecls_forward.7} parent=5 // pred_region
      %s292 = ssub.s32 %s16, 1
      // Predicated region
      $region13: #{pointnet_densecls_forward.7} parent=11 // pred_check
        %p293 = pneg %p103
      $region14: #{pointnet_densecls_forward.7} parent=11 // pred_check_branch
        %295 = sbr.rel (%p293) target = $region16
      $region15: #{pointnet_densecls_forward.7} parent=11 // pred_region
        _
      $region16: #{pointnet_densecls_forward.7} parent=11 // pred_fallthru
        _
      // Predicated region
      $region17: #{pointnet_densecls_forward.7} parent=11 // pred_check
        %p296 = pneg %p124
      $region18: #{pointnet_densecls_forward.7} parent=11 // pred_check_branch
        %298 = sbr.rel (%p296) target = $region20
      $region19: #{pointnet_densecls_forward.7} parent=11 // pred_region
        _
      $region20: #{pointnet_densecls_forward.7} parent=11 // pred_fallthru
        _
      // Predicated region
      $region21: #{pointnet_densecls_forward.7} parent=11 // pred_check
        %p299 = pneg %p145
      $region22: #{pointnet_densecls_forward.7} parent=11 // pred_check_branch
        %301 = sbr.rel (%p299) target = $region24
      $region23: #{pointnet_densecls_forward.7} parent=11 // pred_region
        _
      $region24: #{pointnet_densecls_forward.7} parent=11 // pred_fallthru
        _
      // Predicated region
      $region25: #{pointnet_densecls_forward.7} parent=11 // pred_check
        %p302 = pneg %p166
      $region26: #{pointnet_densecls_forward.7} parent=11 // pred_check_branch
        %304 = sbr.rel (%p302) target = $region28
      $region27: #{pointnet_densecls_forward.7} parent=11 // pred_region
        _
      $region28: #{pointnet_densecls_forward.7} parent=11 // pred_fallthru
        _
      // Predicated region
      $region29: #{pointnet_densecls_forward.7} parent=11 // pred_check
        %p305 = pneg %p187
      $region30: #{pointnet_densecls_forward.7} parent=11 // pred_check_branch
        %307 = sbr.rel (%p305) target = $region32
      $region31: #{pointnet_densecls_forward.7} parent=11 // pred_region
        _
      $region32: #{pointnet_densecls_forward.7} parent=11 // pred_fallthru
        _
      // Predicated region
      $region33: #{pointnet_densecls_forward.7} parent=11 // pred_check
        %p308 = pneg %p208
      $region34: #{pointnet_densecls_forward.7} parent=11 // pred_check_branch
        %310 = sbr.rel (%p308) target = $region36
      $region35: #{pointnet_densecls_forward.7} parent=11 // pred_region
        _
      $region36: #{pointnet_densecls_forward.7} parent=11 // pred_fallthru
        _
      // Predicated region
      $region37: #{pointnet_densecls_forward.7} parent=11 // pred_check
        %p311 = pneg %p229
      $region38: #{pointnet_densecls_forward.7} parent=11 // pred_check_branch
        %313 = sbr.rel (%p311) target = $region40
      $region39: #{pointnet_densecls_forward.7} parent=11 // pred_region
        _
      $region40: #{pointnet_densecls_forward.7} parent=11 // pred_fallthru
        _
      // Predicated region
      $region41: #{pointnet_densecls_forward.7} parent=11 // pred_check
        %p314 = pneg %p250
      $region42: #{pointnet_densecls_forward.7} parent=11 // pred_check_branch
        %316 = sbr.rel (%p314) target = $region44
      $region43: #{pointnet_densecls_forward.7} parent=11 // pred_region
        _
      $region44: #{pointnet_densecls_forward.7} parent=11 // pred_fallthru
        _
    $region12: #{pointnet_densecls_forward.7} parent=5 // pred_fallthru
      _
    %p317 = scmp.lt.s32.totalorder %s16, 2
    // Predicated region
    $region45: #{pointnet_densecls_forward.7} parent=5 // pred_check
      %p318 = pneg %p317
    $region46: #{pointnet_densecls_forward.7} parent=5 // pred_check_branch
      %320 = sbr.rel (%p318) target = $region48
    $region47: #{pointnet_densecls_forward.7} parent=5 // pred_region
      // Predicated region
      $region49: #{pointnet_densecls_forward.7} parent=47 // pred_check
        %p321 = pneg %p50
      $region50: #{pointnet_densecls_forward.7} parent=47 // pred_check_branch
        %323 = sbr.rel (%p321) target = $region52
      $region51: #{pointnet_densecls_forward.7} parent=47 // pred_region
        %s324 = smul.u32 8, %s24
        %p325 = scmp.lt.s32.totalorder %s23, 1
        %s326 = scalar_select %p325, %s23, 1
        %p327 = scmp.lt.s32.totalorder %s324, 7
        %s328 = scalar_select %p327, %s324, 7
        %s329 = smul.addr %s326, 8
        %s330 = sadd.s32 %s328, %s329
        %s331 = smul.addr %s330, 4
        %s332 = scalar_lea.vmem %s0, %s331
        %s333 = smul.u32 8, %s24
      $region52: #{pointnet_densecls_forward.7} parent=47 // pred_fallthru
        _
      // Predicated region
      $region53: #{pointnet_densecls_forward.7} parent=47 // pred_check
        %p334 = pneg %p76
      $region54: #{pointnet_densecls_forward.7} parent=47 // pred_check_branch
        %336 = sbr.rel (%p334) target = $region56
      $region55: #{pointnet_densecls_forward.7} parent=47 // pred_region
        %p337 = scmp.lt.s32.totalorder %s23, 1
        %s338 = scalar_select %p337, %s23, 1
        %s339 = smul.addr %s338, 4
        %s340 = scalar_lea.vmem %s1, %s339
      $region56: #{pointnet_densecls_forward.7} parent=47 // pred_fallthru
        _
    $region48: #{pointnet_densecls_forward.7} parent=5 // pred_fallthru
      _
    %p341 = scmp.le.s32.totalorder 1, %s16
    %p342 = scmp.lt.s32.totalorder %s16, 3
    %p343 = pnand %p341, %p342
    %p344 = pneg %p343
    // Predicated region
    $region57: #{pointnet_densecls_forward.7} parent=5 // pred_check
      _
    $region58: #{pointnet_densecls_forward.7} parent=5 // pred_check_branch
      %346 = sbr.rel (%p343) target = $region60
    $region59: #{pointnet_densecls_forward.7} parent=5 // pred_region
      %s347 = ssub.s32 %s16, 1
      %s348 = smul.u32 8, %s26
      %p349 = scmp.lt.s32.totalorder %s25, 1
      %s350 = scalar_select %p349, %s25, 1
      %p351 = scmp.lt.s32.totalorder %s348, 7
      %s352 = scalar_select %p351, %s348, 7
      %s353 = smul.addr %s350, 8
      %s354 = sadd.s32 %s352, %s353
      %s355 = smul.addr %s354, 4
      %s356 = scalar_lea.vmem %s0, %s355
      %p357 = pneg %p56
      %p358 = pneg %p53
      %p359 = scmp.lt.s32.totalorder %s25, 1
      %s360 = scalar_select %p359, %s25, 1
      %s361 = smul.addr %s360, 4
      %s362 = scalar_lea.vmem %s1, %s361
      %p363 = pneg %p82
      %p364 = pneg %p79
      %p365 = pneg %p103
      %p366 = pneg %p100
      %p367 = pneg %p124
      %p368 = pneg %p121
      %p369 = pneg %p145
      %p370 = pneg %p142
      %p371 = pneg %p166
      %p372 = pneg %p163
      %p373 = pneg %p187
      %p374 = pneg %p184
      %p375 = pneg %p208
      %p376 = pneg %p205
      %p377 = pneg %p229
      %p378 = pneg %p226
      %p379 = pneg %p250
      %p380 = pneg %p247
      %p381 = pneg %p278
      %p382 = pneg %p275
      %s383 = smul.u32 8, %s26
      %p384 = scmp.lt.s32.totalorder %s25, 1
      %s385 = scalar_select %p384, %s25, 1
      %p386 = scmp.lt.s32.totalorder %s383, 7
      %s387 = scalar_select %p386, %s383, 7
      %s388 = smul.addr %s385, 8
      %s389 = sadd.s32 %s387, %s388
      %s390 = smul.addr %s389, 8
      %s391 = scalar_lea.vmem %s10, %s390
      %s392 = smul.u32 8, %s26
      %p393 = scmp.lt.s32.totalorder %s25, 1
      %s394 = scalar_select %p393, %s25, 1
      %p395 = scmp.lt.s32.totalorder %s392, 7
      %s396 = scalar_select %p395, %s392, 7
      %s397 = smul.addr %s394, 8
      %s398 = sadd.s32 %s396, %s397
      %s399 = smul.addr %s398, 4
      %s400 = scalar_lea.vmem %s0, %s399
      %s401 = smul.u32 8, %s26
      %p402 = scmp.lt.s32.totalorder %s25, 1
      %s403 = scalar_select %p402, %s25, 1
      %s404 = smul.addr %s403, 4
      %s405 = scalar_lea.vmem %s1, %s404
      %s406 = smul.u32 8, %s26
      %p407 = scmp.lt.s32.totalorder %s25, 1
      %s408 = scalar_select %p407, %s25, 1
      %p409 = scmp.lt.s32.totalorder %s406, 7
      %s410 = scalar_select %p409, %s406, 7
      %s411 = smul.addr %s408, 8
      %s412 = sadd.s32 %s410, %s411
      %s413 = smul.addr %s412, 8
      %s414 = scalar_lea.vmem %s10, %s413
      %s415 = smul.u32 8, %s26
      %v417 = vld [vmem:[%s400] sm:$0xf]
      %v418 = vld [vmem:[%s400 + $0x4] sm:$0xf]
      %v419 = vld [vmem:[%s400 + $0x8] sm:$0xf]
      %v420 = vld [vmem:[%s400 + $0xc] sm:$0xf]
      %v421 = vld [vmem:[%s400 + $0x10] sm:$0xf]
      %v422 = vld [vmem:[%s400 + $0x14] sm:$0xf]
      %v423 = vld [vmem:[%s400 + $0x18] sm:$0xf]
      %v424 = vld [vmem:[%s400 + $0x1c] sm:$0xf]
      %v425 = vld [vmem:[%s2] sm:$0xff]
      %v426 = vld [vmem:[%s2 + $0x8] sm:$0xff]
      %v427 = vld [vmem:[%s2 + $0x10] sm:$0xff]
      %v428 = vld [vmem:[%s2 + $0x18] sm:$0xff]
      %v429 = vld [vmem:[%s2 + $0x20] sm:$0xff]
      %v430 = vld [vmem:[%s2 + $0x28] sm:$0xff]
      %v431 = vld [vmem:[%s2 + $0x30] sm:$0xff]
      %v432 = vld [vmem:[%s2 + $0x38] sm:$0xff]
      %v433 = vld [vmem:[%s2 + $0x40] sm:$0xff]
      %v434 = vld [vmem:[%s2 + $0x48] sm:$0xff]
      %v435 = vld [vmem:[%s2 + $0x50] sm:$0xff]
      %v436 = vld [vmem:[%s2 + $0x58] sm:$0xff]
      %v437 = vld [vmem:[%s2 + $0x60] sm:$0xff]
      %v438 = vld [vmem:[%s2 + $0x68] sm:$0xff]
      %v439 = vld [vmem:[%s2 + $0x70] sm:$0xff]
      %v440 = vld [vmem:[%s2 + $0x78] sm:$0xff]
      %v441 = vld [vmem:[%s3] sm:$0xf]
      %v443 = vlaneseq
      %v444 = vshrl.u32 %v443, 7
      %v445 = vsub.s32 0, %v444
      %v446 = vrot.slane %v441, %v445
      %v447 = vlaneseq
      %v448 = vshrl.u32 %v447, 7
      %v449 = vsub.s32 1, %v448
      %v450 = vrot.slane %v441, %v449
      %v451 = vlaneseq
      %v452 = vshrl.u32 %v451, 7
      %v453 = vsub.s32 2, %v452
      %v454 = vrot.slane %v441, %v453
      %v455 = vlaneseq
      %v456 = vshrl.u32 %v455, 7
      %v457 = vsub.s32 3, %v456
      %v458 = vrot.slane %v441, %v457
      %v471 = vunpack.c.l.b16 %v417
      %v472 = vunpack.c.l.b16 %v418
      %v473 = vunpack.c.l.b16 %v419
      %v474 = vunpack.c.l.b16 %v420
      %v475 = vunpack.c.l.b16 %v421
      %v476 = vunpack.c.l.b16 %v422
      %v477 = vunpack.c.l.b16 %v423
      %v478 = vunpack.c.l.b16 %v424
      %v479 = vpack.c.b16 %v472, %v471
      %v480 = vpack.c.b16 %v474, %v473
      %v481 = vpack.c.b16 %v476, %v475
      %v482 = vpack.c.b16 %v478, %v477
      %v499 = vunpack.c.l.b16 %v425
      %v500 = vunpack.c.h.b16 %v425
      %v501 = vunpack.c.l.b16 %v426
      %v502 = vunpack.c.h.b16 %v426
      %v503 = vunpack.c.l.b16 %v427
      %v504 = vunpack.c.h.b16 %v427
      %v505 = vunpack.c.l.b16 %v428
      %v506 = vunpack.c.h.b16 %v428
      %v507 = vunpack.c.l.b16 %v429
      %v508 = vunpack.c.h.b16 %v429
      %v509 = vunpack.c.l.b16 %v430
      %v510 = vunpack.c.h.b16 %v430
      %v511 = vunpack.c.l.b16 %v431
      %v512 = vunpack.c.h.b16 %v431
      %v513 = vunpack.c.l.b16 %v432
      %v514 = vunpack.c.h.b16 %v432
      %v515 = vunpack.c.l.b16 %v433
      %v516 = vunpack.c.h.b16 %v433
      %v517 = vunpack.c.l.b16 %v434
      %v518 = vunpack.c.h.b16 %v434
      %v519 = vunpack.c.l.b16 %v435
      %v520 = vunpack.c.h.b16 %v435
      %v521 = vunpack.c.l.b16 %v436
      %v522 = vunpack.c.h.b16 %v436
      %v523 = vunpack.c.l.b16 %v437
      %v524 = vunpack.c.h.b16 %v437
      %v525 = vunpack.c.l.b16 %v438
      %v526 = vunpack.c.h.b16 %v438
      %v527 = vunpack.c.l.b16 %v439
      %v528 = vunpack.c.h.b16 %v439
      %v529 = vunpack.c.l.b16 %v440
      %v530 = vunpack.c.h.b16 %v440
      %v531 = vpack.c.b16 %v503, %v499
      %v532 = vpack.c.b16 %v504, %v500
      %v533 = vpack.c.b16 %v505, %v501
      %v534 = vpack.c.b16 %v506, %v502
      %v535 = vpack.c.b16 %v511, %v507
      %v536 = vpack.c.b16 %v512, %v508
      %v537 = vpack.c.b16 %v513, %v509
      %v538 = vpack.c.b16 %v514, %v510
      %v539 = vpack.c.b16 %v519, %v515
      %v540 = vpack.c.b16 %v520, %v516
      %v541 = vpack.c.b16 %v521, %v517
      %v542 = vpack.c.b16 %v522, %v518
      %v543 = vpack.c.b16 %v527, %v523
      %v544 = vpack.c.b16 %v528, %v524
      %v545 = vpack.c.b16 %v529, %v525
      %v546 = vpack.c.b16 %v530, %v526
      %vm563 = vcmask 523264
      %v565 = vsel %vm563, %v479, 0
      %v568 = vsel %vm563, %v480, 0
      %v571 = vsel %vm563, %v481, 0
      %v574 = vsel %vm563, %v482, 0
      %576 = vmatprep.subr.bf16.mxu0 0
      %577 = vmatpush1.bf16.msra.mxu0 0
      %578 = vmatprep.subr.bf16.mxu0 0
      %579 = vmatpush1.bf16.msra.mxu0 0
      %580 = vmatprep.subr.bf16.mxu0 0
      %581 = vmatpush1.bf16.msra.mxu0 0
      %582 = vmatprep.subr.bf16.mxu0 0
      %583 = vmatpush1.bf16.msra.mxu0 0
      %584 = vmatprep.subr.bf16.mxu0 %v544
      %585 = vmatpush1.bf16.msra.mxu0 %v543
      %586 = vmatprep.subr.bf16.mxu0 %v540
      %587 = vmatpush1.bf16.msra.mxu0 %v539
      %588 = vmatprep.subr.bf16.mxu0 %v536
      %589 = vmatpush1.bf16.msra.mxu0 %v535
      %590 = vmatprep.subr.bf16.mxu0 %v532
      %591 = vmatpush1.bf16.msra.mxu0 %v531
      %592 = vmatprep.subr.bf16.mxu0 0
      %593 = vmatpush2.bf16.msra.mxu0 0
      %594 = vmatprep.subr.bf16.mxu0 0
      %595 = vmatpush2.bf16.msra.mxu0 0
      %596 = vmatprep.subr.bf16.mxu0 0
      %597 = vmatpush2.bf16.msra.mxu0 0
      %598 = vmatprep.subr.bf16.mxu0 0
      %599 = vmatpush2.bf16.msra.mxu0 0
      %600 = vmatprep.subr.bf16.mxu0 0
      %601 = vmatpush2.bf16.msra.mxu0 0
      %602 = vmatprep.subr.bf16.mxu0 0
      %603 = vmatpush2.bf16.msra.mxu0 0
      %604 = vmatprep.subr.bf16.mxu0 0
      %605 = vmatpush2.bf16.msra.mxu0 0
      %606 = vmatprep.subr.bf16.mxu0 0
      %607 = vmatpush2.bf16.msra.mxu0 0
      %608 = vmatprep.mubr.bf16.mxu0 0
      %609 = vmatmul.mubr.bf16.gmra.mxu0 %v565
      %v610 = vpop.f32.mrf.mxu0
      %v611 = vadd.f32 %v446, %v610
      %v612 = vpop.f32.mrf.mxu0
      %v613 = vadd.f32 %v450, %v612
      %v614 = vpop.f32.mrf.mxu0
      %v615 = vadd.f32 %v446, %v614
      %v616 = vpop.f32.mrf.mxu0
      %v617 = vadd.f32 %v450, %v616
      %618 = vmatprep.mubr.bf16.mxu0 0
      %619 = vmatmul.mubr.bf16.gmra.mxu0 %v568
      %v620 = vpop.f32.mrf.mxu0
      %v621 = vadd.f32 %v446, %v620
      %v622 = vpop.f32.mrf.mxu0
      %v623 = vadd.f32 %v450, %v622
      %v624 = vpop.f32.mrf.mxu0
      %v625 = vadd.f32 %v446, %v624
      %v626 = vpop.f32.mrf.mxu0
      %v627 = vadd.f32 %v450, %v626
      %628 = vmatprep.mubr.bf16.mxu0 0
      %629 = vmatmul.mubr.bf16.gmra.mxu0 %v571
      %v630 = vpop.f32.mrf.mxu0
      %v631 = vadd.f32 %v446, %v630
      %v632 = vpop.f32.mrf.mxu0
      %v633 = vadd.f32 %v450, %v632
      %v634 = vpop.f32.mrf.mxu0
      %v635 = vadd.f32 %v446, %v634
      %v636 = vpop.f32.mrf.mxu0
      %v637 = vadd.f32 %v450, %v636
      %638 = vmatprep.mubr.bf16.mxu0 0
      %639 = vmatmul.mubr.bf16.gmra.mxu0 %v574
      %v640 = vpop.f32.mrf.mxu0
      %v641 = vadd.f32 %v446, %v640
      %v642 = vpop.f32.mrf.mxu0
      %v643 = vadd.f32 %v450, %v642
      %v644 = vpop.f32.mrf.mxu0
      %v645 = vadd.f32 %v446, %v644
      %v646 = vpop.f32.mrf.mxu0
      %v647 = vadd.f32 %v450, %v646
      %648 = vdwg.mxu0
      %649 = vmatprep.subr.bf16.mxu0 0
      %650 = vmatpush1.bf16.msra.mxu0 0
      %651 = vmatprep.subr.bf16.mxu0 0
      %652 = vmatpush1.bf16.msra.mxu0 0
      %653 = vmatprep.subr.bf16.mxu0 0
      %654 = vmatpush1.bf16.msra.mxu0 0
      %655 = vmatprep.subr.bf16.mxu0 0
      %656 = vmatpush1.bf16.msra.mxu0 0
      %657 = vmatprep.subr.bf16.mxu0 %v546
      %658 = vmatpush1.bf16.msra.mxu0 %v545
      %659 = vmatprep.subr.bf16.mxu0 %v542
      %660 = vmatpush1.bf16.msra.mxu0 %v541
      %661 = vmatprep.subr.bf16.mxu0 %v538
      %662 = vmatpush1.bf16.msra.mxu0 %v537
      %663 = vmatprep.subr.bf16.mxu0 %v534
      %664 = vmatpush1.bf16.msra.mxu0 %v533
      %665 = vmatprep.subr.bf16.mxu0 0
      %666 = vmatpush2.bf16.msra.mxu0 0
      %667 = vmatprep.subr.bf16.mxu0 0
      %668 = vmatpush2.bf16.msra.mxu0 0
      %669 = vmatprep.subr.bf16.mxu0 0
      %670 = vmatpush2.bf16.msra.mxu0 0
      %671 = vmatprep.subr.bf16.mxu0 0
      %672 = vmatpush2.bf16.msra.mxu0 0
      %673 = vmatprep.subr.bf16.mxu0 0
      %674 = vmatpush2.bf16.msra.mxu0 0
      %675 = vmatprep.subr.bf16.mxu0 0
      %676 = vmatpush2.bf16.msra.mxu0 0
      %677 = vmatprep.subr.bf16.mxu0 0
      %678 = vmatpush2.bf16.msra.mxu0 0
      %679 = vmatprep.subr.bf16.mxu0 0
      %680 = vmatpush2.bf16.msra.mxu0 0
      %681 = vmatprep.mubr.bf16.mxu0 0
      %682 = vmatmul.mubr.bf16.gmra.mxu0 %v565
      %v683 = vpop.f32.mrf.mxu0
      %v684 = vadd.f32 %v454, %v683
      %v685 = vpop.f32.mrf.mxu0
      %v686 = vadd.f32 %v458, %v685
      %v687 = vpop.f32.mrf.mxu0
      %v688 = vadd.f32 %v454, %v687
      %v689 = vpop.f32.mrf.mxu0
      %v690 = vadd.f32 %v458, %v689
      %691 = vmatprep.mubr.bf16.mxu0 0
      %692 = vmatmul.mubr.bf16.gmra.mxu0 %v568
      %v693 = vpop.f32.mrf.mxu0
      %v694 = vadd.f32 %v454, %v693
      %v695 = vpop.f32.mrf.mxu0
      %v696 = vadd.f32 %v458, %v695
      %v697 = vpop.f32.mrf.mxu0
      %v698 = vadd.f32 %v454, %v697
      %v699 = vpop.f32.mrf.mxu0
      %v700 = vadd.f32 %v458, %v699
      %701 = vmatprep.mubr.bf16.mxu0 0
      %702 = vmatmul.mubr.bf16.gmra.mxu0 %v571
      %v703 = vpop.f32.mrf.mxu0
      %v704 = vadd.f32 %v454, %v703
      %v705 = vpop.f32.mrf.mxu0
      %v706 = vadd.f32 %v458, %v705
      %v707 = vpop.f32.mrf.mxu0
      %v708 = vadd.f32 %v454, %v707
      %v709 = vpop.f32.mrf.mxu0
      %v710 = vadd.f32 %v458, %v709
      %711 = vmatprep.mubr.bf16.mxu0 0
      %712 = vmatmul.mubr.bf16.gmra.mxu0 %v574
      %v713 = vpop.f32.mrf.mxu0
      %v714 = vadd.f32 %v454, %v713
      %v715 = vpop.f32.mrf.mxu0
      %v716 = vadd.f32 %v458, %v715
      %v717 = vpop.f32.mrf.mxu0
      %v718 = vadd.f32 %v454, %v717
      %v719 = vpop.f32.mrf.mxu0
      %v720 = vadd.f32 %v458, %v719
      %721 = vdwg.mxu0
      %v722 = vld [vmem:[%s405] sm:$0xf]
      %v724 = vlaneseq
      %v725 = vshrl.u32 %v724, 7
      %v726 = vsub.s32 0, %v725
      %v727 = vrot.slane %v722, %v726
      %v728 = vlaneseq
      %v729 = vshrl.u32 %v728, 7
      %v730 = vsub.s32 1, %v729
      %v731 = vrot.slane %v722, %v730
      %v732 = vlaneseq
      %v733 = vshrl.u32 %v732, 7
      %v734 = vsub.s32 2, %v733
      %v735 = vrot.slane %v722, %v734
      %v736 = vlaneseq
      %v737 = vshrl.u32 %v736, 7
      %v738 = vsub.s32 3, %v737
      %v739 = vrot.slane %v722, %v738
      %v744 = vadd.f32 %v611, %v727
      %v745 = vadd.f32 %v613, %v731
      %v746 = vadd.f32 %v684, %v735
      %v747 = vadd.f32 %v686, %v739
      %v748 = vadd.f32 %v615, %v727
      %v749 = vadd.f32 %v617, %v731
      %v750 = vadd.f32 %v688, %v735
      %v751 = vadd.f32 %v690, %v739
      %v752 = vadd.f32 %v621, %v727
      %v753 = vadd.f32 %v623, %v731
      %v754 = vadd.f32 %v694, %v735
      %v755 = vadd.f32 %v696, %v739
      %v756 = vadd.f32 %v625, %v727
      %v757 = vadd.f32 %v627, %v731
      %v758 = vadd.f32 %v698, %v735
      %v759 = vadd.f32 %v700, %v739
      %v760 = vadd.f32 %v631, %v727
      %v761 = vadd.f32 %v633, %v731
      %v762 = vadd.f32 %v704, %v735
      %v763 = vadd.f32 %v706, %v739
      %v764 = vadd.f32 %v635, %v727
      %v765 = vadd.f32 %v637, %v731
      %v766 = vadd.f32 %v708, %v735
      %v767 = vadd.f32 %v710, %v739
      %v768 = vadd.f32 %v641, %v727
      %v769 = vadd.f32 %v643, %v731
      %v770 = vadd.f32 %v714, %v735
      %v771 = vadd.f32 %v716, %v739
      %v772 = vadd.f32 %v645, %v727
      %v773 = vadd.f32 %v647, %v731
      %v774 = vadd.f32 %v718, %v735
      %v775 = vadd.f32 %v720, %v739
      %v776 = vmax.f32 %v744, 0.0
      %v777 = vmax.f32 %v745, 0.0
      %v778 = vmax.f32 %v746, 0.0
      %v779 = vmax.f32 %v747, 0.0
      %v780 = vmax.f32 %v748, 0.0
      %v781 = vmax.f32 %v749, 0.0
      %v782 = vmax.f32 %v750, 0.0
      %v783 = vmax.f32 %v751, 0.0
      %v784 = vmax.f32 %v752, 0.0
      %v785 = vmax.f32 %v753, 0.0
      %v786 = vmax.f32 %v754, 0.0
      %v787 = vmax.f32 %v755, 0.0
      %v788 = vmax.f32 %v756, 0.0
      %v789 = vmax.f32 %v757, 0.0
      %v790 = vmax.f32 %v758, 0.0
      %v791 = vmax.f32 %v759, 0.0
      %v792 = vmax.f32 %v760, 0.0
      %v793 = vmax.f32 %v761, 0.0
      %v794 = vmax.f32 %v762, 0.0
      %v795 = vmax.f32 %v763, 0.0
      %v796 = vmax.f32 %v764, 0.0
      %v797 = vmax.f32 %v765, 0.0
      %v798 = vmax.f32 %v766, 0.0
      %v799 = vmax.f32 %v767, 0.0
      %v800 = vmax.f32 %v768, 0.0
      %v801 = vmax.f32 %v769, 0.0
      %v802 = vmax.f32 %v770, 0.0
      %v803 = vmax.f32 %v771, 0.0
      %v804 = vmax.f32 %v772, 0.0
      %v805 = vmax.f32 %v773, 0.0
      %v806 = vmax.f32 %v774, 0.0
      %v807 = vmax.f32 %v775, 0.0
      %v808 = vpack.c.bf16 %v780, %v776
      %v809 = vpack.c.bf16 %v781, %v777
      %v810 = vpack.c.bf16 %v782, %v778
      %v811 = vpack.c.bf16 %v783, %v779
      %v812 = vpack.c.bf16 %v788, %v784
      %v813 = vpack.c.bf16 %v789, %v785
      %v814 = vpack.c.bf16 %v790, %v786
      %v815 = vpack.c.bf16 %v791, %v787
      %v816 = vpack.c.bf16 %v796, %v792
      %v817 = vpack.c.bf16 %v797, %v793
      %v818 = vpack.c.bf16 %v798, %v794
      %v819 = vpack.c.bf16 %v799, %v795
      %v820 = vpack.c.bf16 %v804, %v800
      %v821 = vpack.c.bf16 %v805, %v801
      %v822 = vpack.c.bf16 %v806, %v802
      %v823 = vpack.c.bf16 %v807, %v803
      %v824 = vld [vmem:[%s4] sm:$0xff]
      %v825 = vld [vmem:[%s4 + $0x8] sm:$0xff]
      %v826 = vld [vmem:[%s4 + $0x10] sm:$0xff]
      %v827 = vld [vmem:[%s4 + $0x18] sm:$0xff]
      %v828 = vld [vmem:[%s4 + $0x20] sm:$0xff]
      %v829 = vld [vmem:[%s4 + $0x28] sm:$0xff]
      %v830 = vld [vmem:[%s4 + $0x30] sm:$0xff]
      %v831 = vld [vmem:[%s4 + $0x38] sm:$0xff]
      %v832 = vld [vmem:[%s4 + $0x40] sm:$0xff]
      %v833 = vld [vmem:[%s4 + $0x48] sm:$0xff]
      %v834 = vld [vmem:[%s4 + $0x50] sm:$0xff]
      %v835 = vld [vmem:[%s4 + $0x58] sm:$0xff]
      %v836 = vld [vmem:[%s4 + $0x60] sm:$0xff]
      %v837 = vld [vmem:[%s4 + $0x68] sm:$0xff]
      %v838 = vld [vmem:[%s4 + $0x70] sm:$0xff]
      %v839 = vld [vmem:[%s4 + $0x78] sm:$0xff]
      %v840 = vld [vmem:[%s4 + $0x80] sm:$0xff]
      %v841 = vld [vmem:[%s4 + $0x88] sm:$0xff]
      %v842 = vld [vmem:[%s4 + $0x90] sm:$0xff]
      %v843 = vld [vmem:[%s4 + $0x98] sm:$0xff]
      %v844 = vld [vmem:[%s4 + $0xa0] sm:$0xff]
      %v845 = vld [vmem:[%s4 + $0xa8] sm:$0xff]
      %v846 = vld [vmem:[%s4 + $0xb0] sm:$0xff]
      %v847 = vld [vmem:[%s4 + $0xb8] sm:$0xff]
      %v848 = vld [vmem:[%s4 + $0xc0] sm:$0xff]
      %v849 = vld [vmem:[%s4 + $0xc8] sm:$0xff]
      %v850 = vld [vmem:[%s4 + $0xd0] sm:$0xff]
      %v851 = vld [vmem:[%s4 + $0xd8] sm:$0xff]
      %v852 = vld [vmem:[%s4 + $0xe0] sm:$0xff]
      %v853 = vld [vmem:[%s4 + $0xe8] sm:$0xff]
      %v854 = vld [vmem:[%s4 + $0xf0] sm:$0xff]
      %v855 = vld [vmem:[%s4 + $0xf8] sm:$0xff]
      %v856 = vld [vmem:[%s4 + $0x100] sm:$0xff]
      %v857 = vld [vmem:[%s4 + $0x108] sm:$0xff]
      %v858 = vld [vmem:[%s4 + $0x110] sm:$0xff]
      %v859 = vld [vmem:[%s4 + $0x118] sm:$0xff]
      %v860 = vld [vmem:[%s4 + $0x120] sm:$0xff]
      %v861 = vld [vmem:[%s4 + $0x128] sm:$0xff]
      %v862 = vld [vmem:[%s4 + $0x130] sm:$0xff]
      %v863 = vld [vmem:[%s4 + $0x138] sm:$0xff]
      %v864 = vld [vmem:[%s4 + $0x140] sm:$0xff]
      %v865 = vld [vmem:[%s4 + $0x148] sm:$0xff]
      %v866 = vld [vmem:[%s4 + $0x150] sm:$0xff]
      %v867 = vld [vmem:[%s4 + $0x158] sm:$0xff]
      %v868 = vld [vmem:[%s4 + $0x160] sm:$0xff]
      %v869 = vld [vmem:[%s4 + $0x168] sm:$0xff]
      %v870 = vld [vmem:[%s4 + $0x170] sm:$0xff]
      %v871 = vld [vmem:[%s4 + $0x178] sm:$0xff]
      %v872 = vld [vmem:[%s4 + $0x180] sm:$0xff]
      %v873 = vld [vmem:[%s4 + $0x188] sm:$0xff]
      %v874 = vld [vmem:[%s4 + $0x190] sm:$0xff]
      %v875 = vld [vmem:[%s4 + $0x198] sm:$0xff]
      %v876 = vld [vmem:[%s4 + $0x1a0] sm:$0xff]
      %v877 = vld [vmem:[%s4 + $0x1a8] sm:$0xff]
      %v878 = vld [vmem:[%s4 + $0x1b0] sm:$0xff]
      %v879 = vld [vmem:[%s4 + $0x1b8] sm:$0xff]
      %v880 = vld [vmem:[%s4 + $0x1c0] sm:$0xff]
      %v881 = vld [vmem:[%s4 + $0x1c8] sm:$0xff]
      %v882 = vld [vmem:[%s4 + $0x1d0] sm:$0xff]
      %v883 = vld [vmem:[%s4 + $0x1d8] sm:$0xff]
      %v884 = vld [vmem:[%s4 + $0x1e0] sm:$0xff]
      %v885 = vld [vmem:[%s4 + $0x1e8] sm:$0xff]
      %v886 = vld [vmem:[%s4 + $0x1f0] sm:$0xff]
      %v887 = vld [vmem:[%s4 + $0x1f8] sm:$0xff]
      %v888 = vld [vmem:[%s5] sm:$0x3]
      %v890 = vlaneseq
      %v891 = vshrl.u32 %v890, 7
      %v892 = vsub.s32 0, %v891
      %v893 = vrot.slane %v888, %v892
      %v894 = vlaneseq
      %v895 = vshrl.u32 %v894, 7
      %v896 = vsub.s32 1, %v895
      %v897 = vrot.slane %v888, %v896
      %v964 = vunpack.c.l.b16 %v824
      %v965 = vunpack.c.h.b16 %v824
      %v966 = vunpack.c.l.b16 %v825
      %v967 = vunpack.c.h.b16 %v825
      %v968 = vunpack.c.l.b16 %v826
      %v969 = vunpack.c.h.b16 %v826
      %v970 = vunpack.c.l.b16 %v827
      %v971 = vunpack.c.h.b16 %v827
      %v972 = vunpack.c.l.b16 %v828
      %v973 = vunpack.c.h.b16 %v828
      %v974 = vunpack.c.l.b16 %v829
      %v975 = vunpack.c.h.b16 %v829
      %v976 = vunpack.c.l.b16 %v830
      %v977 = vunpack.c.h.b16 %v830
      %v978 = vunpack.c.l.b16 %v831
      %v979 = vunpack.c.h.b16 %v831
      %v980 = vunpack.c.l.b16 %v832
      %v981 = vunpack.c.h.b16 %v832
      %v982 = vunpack.c.l.b16 %v833
      %v983 = vunpack.c.h.b16 %v833
      %v984 = vunpack.c.l.b16 %v834
      %v985 = vunpack.c.h.b16 %v834
      %v986 = vunpack.c.l.b16 %v835
      %v987 = vunpack.c.h.b16 %v835
      %v988 = vunpack.c.l.b16 %v836
      %v989 = vunpack.c.h.b16 %v836
      %v990 = vunpack.c.l.b16 %v837
      %v991 = vunpack.c.h.b16 %v837
      %v992 = vunpack.c.l.b16 %v838
      %v993 = vunpack.c.h.b16 %v838
      %v994 = vunpack.c.l.b16 %v839
      %v995 = vunpack.c.h.b16 %v839
      %v996 = vunpack.c.l.b16 %v840
      %v997 = vunpack.c.h.b16 %v840
      %v998 = vunpack.c.l.b16 %v841
      %v999 = vunpack.c.h.b16 %v841
      %v1000 = vunpack.c.l.b16 %v842
      %v1001 = vunpack.c.h.b16 %v842
      %v1002 = vunpack.c.l.b16 %v843
      %v1003 = vunpack.c.h.b16 %v843
      %v1004 = vunpack.c.l.b16 %v844
      %v1005 = vunpack.c.h.b16 %v844
      %v1006 = vunpack.c.l.b16 %v845
      %v1007 = vunpack.c.h.b16 %v845
      %v1008 = vunpack.c.l.b16 %v846
      %v1009 = vunpack.c.h.b16 %v846
      %v1010 = vunpack.c.l.b16 %v847
      %v1011 = vunpack.c.h.b16 %v847
      %v1012 = vunpack.c.l.b16 %v848
      %v1013 = vunpack.c.h.b16 %v848
      %v1014 = vunpack.c.l.b16 %v849
      %v1015 = vunpack.c.h.b16 %v849
      %v1016 = vunpack.c.l.b16 %v850
      %v1017 = vunpack.c.h.b16 %v850
      %v1018 = vunpack.c.l.b16 %v851
      %v1019 = vunpack.c.h.b16 %v851
      %v1020 = vunpack.c.l.b16 %v852
      %v1021 = vunpack.c.h.b16 %v852
      %v1022 = vunpack.c.l.b16 %v853
      %v1023 = vunpack.c.h.b16 %v853
      %v1024 = vunpack.c.l.b16 %v854
      %v1025 = vunpack.c.h.b16 %v854
      %v1026 = vunpack.c.l.b16 %v855
      %v1027 = vunpack.c.h.b16 %v855
      %v1028 = vunpack.c.l.b16 %v856
      %v1029 = vunpack.c.h.b16 %v856
      %v1030 = vunpack.c.l.b16 %v857
      %v1031 = vunpack.c.h.b16 %v857
      %v1032 = vunpack.c.l.b16 %v858
      %v1033 = vunpack.c.h.b16 %v858
      %v1034 = vunpack.c.l.b16 %v859
      %v1035 = vunpack.c.h.b16 %v859
      %v1036 = vunpack.c.l.b16 %v860
      %v1037 = vunpack.c.h.b16 %v860
      %v1038 = vunpack.c.l.b16 %v861
      %v1039 = vunpack.c.h.b16 %v861
      %v1040 = vunpack.c.l.b16 %v862
      %v1041 = vunpack.c.h.b16 %v862
      %v1042 = vunpack.c.l.b16 %v863
      %v1043 = vunpack.c.h.b16 %v863
      %v1044 = vunpack.c.l.b16 %v864
      %v1045 = vunpack.c.h.b16 %v864
      %v1046 = vunpack.c.l.b16 %v865
      %v1047 = vunpack.c.h.b16 %v865
      %v1048 = vunpack.c.l.b16 %v866
      %v1049 = vunpack.c.h.b16 %v866
      %v1050 = vunpack.c.l.b16 %v867
      %v1051 = vunpack.c.h.b16 %v867
      %v1052 = vunpack.c.l.b16 %v868
      %v1053 = vunpack.c.h.b16 %v868
      %v1054 = vunpack.c.l.b16 %v869
      %v1055 = vunpack.c.h.b16 %v869
      %v1056 = vunpack.c.l.b16 %v870
      %v1057 = vunpack.c.h.b16 %v870
      %v1058 = vunpack.c.l.b16 %v871
      %v1059 = vunpack.c.h.b16 %v871
      %v1060 = vunpack.c.l.b16 %v872
      %v1061 = vunpack.c.h.b16 %v872
      %v1062 = vunpack.c.l.b16 %v873
      %v1063 = vunpack.c.h.b16 %v873
      %v1064 = vunpack.c.l.b16 %v874
      %v1065 = vunpack.c.h.b16 %v874
      %v1066 = vunpack.c.l.b16 %v875
      %v1067 = vunpack.c.h.b16 %v875
      %v1068 = vunpack.c.l.b16 %v876
      %v1069 = vunpack.c.h.b16 %v876
      %v1070 = vunpack.c.l.b16 %v877
      %v1071 = vunpack.c.h.b16 %v877
      %v1072 = vunpack.c.l.b16 %v878
      %v1073 = vunpack.c.h.b16 %v878
      %v1074 = vunpack.c.l.b16 %v879
      %v1075 = vunpack.c.h.b16 %v879
      %v1076 = vunpack.c.l.b16 %v880
      %v1077 = vunpack.c.h.b16 %v880
      %v1078 = vunpack.c.l.b16 %v881
      %v1079 = vunpack.c.h.b16 %v881
      %v1080 = vunpack.c.l.b16 %v882
      %v1081 = vunpack.c.h.b16 %v882
      %v1082 = vunpack.c.l.b16 %v883
      %v1083 = vunpack.c.h.b16 %v883
      %v1084 = vunpack.c.l.b16 %v884
      %v1085 = vunpack.c.h.b16 %v884
      %v1086 = vunpack.c.l.b16 %v885
      %v1087 = vunpack.c.h.b16 %v885
      %v1088 = vunpack.c.l.b16 %v886
      %v1089 = vunpack.c.h.b16 %v886
      %v1090 = vunpack.c.l.b16 %v887
      %v1091 = vunpack.c.h.b16 %v887
      %v1092 = vpack.c.b16 %v966, %v964
      %v1093 = vpack.c.b16 %v967, %v965
      %v1094 = vpack.c.b16 %v970, %v968
      %v1095 = vpack.c.b16 %v971, %v969
      %v1096 = vpack.c.b16 %v974, %v972
      %v1097 = vpack.c.b16 %v975, %v973
      %v1098 = vpack.c.b16 %v978, %v976
      %v1099 = vpack.c.b16 %v979, %v977
      %v1100 = vpack.c.b16 %v982, %v980
      %v1101 = vpack.c.b16 %v983, %v981
      %v1102 = vpack.c.b16 %v986, %v984
      %v1103 = vpack.c.b16 %v987, %v985
      %v1104 = vpack.c.b16 %v990, %v988
      %v1105 = vpack.c.b16 %v991, %v989
      %v1106 = vpack.c.b16 %v994, %v992
      %v1107 = vpack.c.b16 %v995, %v993
      %v1108 = vpack.c.b16 %v998, %v996
      %v1109 = vpack.c.b16 %v999, %v997
      %v1110 = vpack.c.b16 %v1002, %v1000
      %v1111 = vpack.c.b16 %v1003, %v1001
      %v1112 = vpack.c.b16 %v1006, %v1004
      %v1113 = vpack.c.b16 %v1007, %v1005
      %v1114 = vpack.c.b16 %v1010, %v1008
      %v1115 = vpack.c.b16 %v1011, %v1009
      %v1116 = vpack.c.b16 %v1014, %v1012
      %v1117 = vpack.c.b16 %v1015, %v1013
      %v1118 = vpack.c.b16 %v1018, %v1016
      %v1119 = vpack.c.b16 %v1019, %v1017
      %v1120 = vpack.c.b16 %v1022, %v1020
      %v1121 = vpack.c.b16 %v1023, %v1021
      %v1122 = vpack.c.b16 %v1026, %v1024
      %v1123 = vpack.c.b16 %v1027, %v1025
      %v1124 = vpack.c.b16 %v1030, %v1028
      %v1125 = vpack.c.b16 %v1031, %v1029
      %v1126 = vpack.c.b16 %v1034, %v1032
      %v1127 = vpack.c.b16 %v1035, %v1033
      %v1128 = vpack.c.b16 %v1038, %v1036
      %v1129 = vpack.c.b16 %v1039, %v1037
      %v1130 = vpack.c.b16 %v1042, %v1040
      %v1131 = vpack.c.b16 %v1043, %v1041
      %v1132 = vpack.c.b16 %v1046, %v1044
      %v1133 = vpack.c.b16 %v1047, %v1045
      %v1134 = vpack.c.b16 %v1050, %v1048
      %v1135 = vpack.c.b16 %v1051, %v1049
      %v1136 = vpack.c.b16 %v1054, %v1052
      %v1137 = vpack.c.b16 %v1055, %v1053
      %v1138 = vpack.c.b16 %v1058, %v1056
      %v1139 = vpack.c.b16 %v1059, %v1057
      %v1140 = vpack.c.b16 %v1062, %v1060
      %v1141 = vpack.c.b16 %v1063, %v1061
      %v1142 = vpack.c.b16 %v1066, %v1064
      %v1143 = vpack.c.b16 %v1067, %v1065
      %v1144 = vpack.c.b16 %v1070, %v1068
      %v1145 = vpack.c.b16 %v1071, %v1069
      %v1146 = vpack.c.b16 %v1074, %v1072
      %v1147 = vpack.c.b16 %v1075, %v1073
      %v1148 = vpack.c.b16 %v1078, %v1076
      %v1149 = vpack.c.b16 %v1079, %v1077
      %v1150 = vpack.c.b16 %v1082, %v1080
      %v1151 = vpack.c.b16 %v1083, %v1081
      %v1152 = vpack.c.b16 %v1086, %v1084
      %v1153 = vpack.c.b16 %v1087, %v1085
      %v1154 = vpack.c.b16 %v1090, %v1088
      %v1155 = vpack.c.b16 %v1091, %v1089
      %1220 = vmatprep.subr.bf16.mxu0 %v1107
      %1221 = vmatpush1.bf16.msra.mxu0 %v1106
      %1222 = vmatprep.subr.bf16.mxu0 %v1105
      %1223 = vmatpush1.bf16.msra.mxu0 %v1104
      %1224 = vmatprep.subr.bf16.mxu0 %v1103
      %1225 = vmatpush1.bf16.msra.mxu0 %v1102
      %1226 = vmatprep.subr.bf16.mxu0 %v1101
      %1227 = vmatpush1.bf16.msra.mxu0 %v1100
      %1228 = vmatprep.subr.bf16.mxu0 %v1099
      %1229 = vmatpush1.bf16.msra.mxu0 %v1098
      %1230 = vmatprep.subr.bf16.mxu0 %v1097
      %1231 = vmatpush1.bf16.msra.mxu0 %v1096
      %1232 = vmatprep.subr.bf16.mxu0 %v1095
      %1233 = vmatpush1.bf16.msra.mxu0 %v1094
      %1234 = vmatprep.subr.bf16.mxu0 %v1093
      %1235 = vmatpush1.bf16.msra.mxu0 %v1092
      %1236 = vmatprep.subr.bf16.mxu0 %v1123
      %1237 = vmatpush2.bf16.msra.mxu0 %v1122
      %1238 = vmatprep.subr.bf16.mxu0 %v1121
      %1239 = vmatpush2.bf16.msra.mxu0 %v1120
      %1240 = vmatprep.subr.bf16.mxu0 %v1119
      %1241 = vmatpush2.bf16.msra.mxu0 %v1118
      %1242 = vmatprep.subr.bf16.mxu0 %v1117
      %1243 = vmatpush2.bf16.msra.mxu0 %v1116
      %1244 = vmatprep.subr.bf16.mxu0 %v1115
      %1245 = vmatpush2.bf16.msra.mxu0 %v1114
      %1246 = vmatprep.subr.bf16.mxu0 %v1113
      %1247 = vmatpush2.bf16.msra.mxu0 %v1112
      %1248 = vmatprep.subr.bf16.mxu0 %v1111
      %1249 = vmatpush2.bf16.msra.mxu0 %v1110
      %1250 = vmatprep.subr.bf16.mxu0 %v1109
      %1251 = vmatpush2.bf16.msra.mxu0 %v1108
      %1252 = vmatprep.mubr.bf16.mxu0 %v809
      %1253 = vmatmul.mubr.bf16.gmra.mxu0 %v808
      %v1254 = vpop.f32.mrf.mxu0
      %v1255 = vadd.f32 %v893, %v1254
      %v1256 = vpop.f32.mrf.mxu0
      %v1257 = vadd.f32 %v897, %v1256
      %v1258 = vpop.f32.mrf.mxu0
      %v1259 = vadd.f32 %v893, %v1258
      %v1260 = vpop.f32.mrf.mxu0
      %v1261 = vadd.f32 %v897, %v1260
      %1262 = vmatprep.mubr.bf16.mxu0 %v813
      %1263 = vmatmul.mubr.bf16.gmra.mxu0 %v812
      %v1264 = vpop.f32.mrf.mxu0
      %v1265 = vadd.f32 %v893, %v1264
      %v1266 = vpop.f32.mrf.mxu0
      %v1267 = vadd.f32 %v897, %v1266
      %v1268 = vpop.f32.mrf.mxu0
      %v1269 = vadd.f32 %v893, %v1268
      %v1270 = vpop.f32.mrf.mxu0
      %v1271 = vadd.f32 %v897, %v1270
      %1272 = vmatprep.mubr.bf16.mxu0 %v817
      %1273 = vmatmul.mubr.bf16.gmra.mxu0 %v816
      %v1274 = vpop.f32.mrf.mxu0
      %v1275 = vadd.f32 %v893, %v1274
      %v1276 = vpop.f32.mrf.mxu0
      %v1277 = vadd.f32 %v897, %v1276
      %v1278 = vpop.f32.mrf.mxu0
      %v1279 = vadd.f32 %v893, %v1278
      %v1280 = vpop.f32.mrf.mxu0
      %v1281 = vadd.f32 %v897, %v1280
      %1282 = vmatprep.mubr.bf16.mxu0 %v821
      %1283 = vmatmul.mubr.bf16.gmra.mxu0 %v820
      %v1284 = vpop.f32.mrf.mxu0
      %v1285 = vadd.f32 %v893, %v1284
      %v1286 = vpop.f32.mrf.mxu0
      %v1287 = vadd.f32 %v897, %v1286
      %v1288 = vpop.f32.mrf.mxu0
      %v1289 = vadd.f32 %v893, %v1288
      %v1290 = vpop.f32.mrf.mxu0
      %v1291 = vadd.f32 %v897, %v1290
      %1292 = vdwg.mxu0
      %1293 = vmatprep.subr.bf16.mxu0 %v1139
      %1294 = vmatpush1.bf16.msra.mxu0 %v1138
      %1295 = vmatprep.subr.bf16.mxu0 %v1137
      %1296 = vmatpush1.bf16.msra.mxu0 %v1136
      %1297 = vmatprep.subr.bf16.mxu0 %v1135
      %1298 = vmatpush1.bf16.msra.mxu0 %v1134
      %1299 = vmatprep.subr.bf16.mxu0 %v1133
      %1300 = vmatpush1.bf16.msra.mxu0 %v1132
      %1301 = vmatprep.subr.bf16.mxu0 %v1131
      %1302 = vmatpush1.bf16.msra.mxu0 %v1130
      %1303 = vmatprep.subr.bf16.mxu0 %v1129
      %1304 = vmatpush1.bf16.msra.mxu0 %v1128
      %1305 = vmatprep.subr.bf16.mxu0 %v1127
      %1306 = vmatpush1.bf16.msra.mxu0 %v1126
      %1307 = vmatprep.subr.bf16.mxu0 %v1125
      %1308 = vmatpush1.bf16.msra.mxu0 %v1124
      %1309 = vmatprep.subr.bf16.mxu0 %v1155
      %1310 = vmatpush2.bf16.msra.mxu0 %v1154
      %1311 = vmatprep.subr.bf16.mxu0 %v1153
      %1312 = vmatpush2.bf16.msra.mxu0 %v1152
      %1313 = vmatprep.subr.bf16.mxu0 %v1151
      %1314 = vmatpush2.bf16.msra.mxu0 %v1150
      %1315 = vmatprep.subr.bf16.mxu0 %v1149
      %1316 = vmatpush2.bf16.msra.mxu0 %v1148
      %1317 = vmatprep.subr.bf16.mxu0 %v1147
      %1318 = vmatpush2.bf16.msra.mxu0 %v1146
      %1319 = vmatprep.subr.bf16.mxu0 %v1145
      %1320 = vmatpush2.bf16.msra.mxu0 %v1144
      %1321 = vmatprep.subr.bf16.mxu0 %v1143
      %1322 = vmatpush2.bf16.msra.mxu0 %v1142
      %1323 = vmatprep.subr.bf16.mxu0 %v1141
      %1324 = vmatpush2.bf16.msra.mxu0 %v1140
      %1325 = vmatprep.mubr.bf16.mxu0 %v811
      %1326 = vmatmul.mubr.bf16.gmra.mxu0 %v810
      %v1327 = vpop.f32.mrf.mxu0
      %v1328 = vadd.f32 %v1255, %v1327
      %v1329 = vpop.f32.mrf.mxu0
      %v1330 = vadd.f32 %v1257, %v1329
      %v1331 = vpop.f32.mrf.mxu0
      %v1332 = vadd.f32 %v1259, %v1331
      %v1333 = vpop.f32.mrf.mxu0
      %v1334 = vadd.f32 %v1261, %v1333
      %1335 = vmatprep.mubr.bf16.mxu0 %v815
      %1336 = vmatmul.mubr.bf16.gmra.mxu0 %v814
      %v1337 = vpop.f32.mrf.mxu0
      %v1338 = vadd.f32 %v1265, %v1337
      %v1339 = vpop.f32.mrf.mxu0
      %v1340 = vadd.f32 %v1267, %v1339
      %v1341 = vpop.f32.mrf.mxu0
      %v1342 = vadd.f32 %v1269, %v1341
      %v1343 = vpop.f32.mrf.mxu0
      %v1344 = vadd.f32 %v1271, %v1343
      %1345 = vmatprep.mubr.bf16.mxu0 %v819
      %1346 = vmatmul.mubr.bf16.gmra.mxu0 %v818
      %v1347 = vpop.f32.mrf.mxu0
      %v1348 = vadd.f32 %v1275, %v1347
      %v1349 = vpop.f32.mrf.mxu0
      %v1350 = vadd.f32 %v1277, %v1349
      %v1351 = vpop.f32.mrf.mxu0
      %v1352 = vadd.f32 %v1279, %v1351
      %v1353 = vpop.f32.mrf.mxu0
      %v1354 = vadd.f32 %v1281, %v1353
      %1355 = vmatprep.mubr.bf16.mxu0 %v823
      %1356 = vmatmul.mubr.bf16.gmra.mxu0 %v822
      %v1357 = vpop.f32.mrf.mxu0
      %v1358 = vadd.f32 %v1285, %v1357
      %v1359 = vpop.f32.mrf.mxu0
      %v1360 = vadd.f32 %v1287, %v1359
      %v1361 = vpop.f32.mrf.mxu0
      %v1362 = vadd.f32 %v1289, %v1361
      %v1363 = vpop.f32.mrf.mxu0
      %v1364 = vadd.f32 %v1291, %v1363
      %1365 = vdwg.mxu0
      %v1366 = vmax.f32 %v1328, 0.0
      %v1367 = vmax.f32 %v1330, 0.0
      %v1368 = vmax.f32 %v1332, 0.0
      %v1369 = vmax.f32 %v1334, 0.0
      %v1370 = vmax.f32 %v1338, 0.0
      %v1371 = vmax.f32 %v1340, 0.0
      %v1372 = vmax.f32 %v1342, 0.0
      %v1373 = vmax.f32 %v1344, 0.0
      %v1374 = vmax.f32 %v1348, 0.0
      %v1375 = vmax.f32 %v1350, 0.0
      %v1376 = vmax.f32 %v1352, 0.0
      %v1377 = vmax.f32 %v1354, 0.0
      %v1378 = vmax.f32 %v1358, 0.0
      %v1379 = vmax.f32 %v1360, 0.0
      %v1380 = vmax.f32 %v1362, 0.0
      %v1381 = vmax.f32 %v1364, 0.0
      %v1382 = vpack.c.bf16 %v1368, %v1366
      %v1383 = vpack.c.bf16 %v1369, %v1367
      %v1384 = vpack.c.bf16 %v1372, %v1370
      %v1385 = vpack.c.bf16 %v1373, %v1371
      %v1386 = vpack.c.bf16 %v1376, %v1374
      %v1387 = vpack.c.bf16 %v1377, %v1375
      %v1388 = vpack.c.bf16 %v1380, %v1378
      %v1389 = vpack.c.bf16 %v1381, %v1379
      %v1390 = vld [vmem:[%s6] sm:$0xf]
      %v1391 = vld [vmem:[%s6 + $0x4] sm:$0xf]
      %v1392 = vld [vmem:[%s6 + $0x8] sm:$0xf]
      %v1393 = vld [vmem:[%s6 + $0xc] sm:$0xf]
      %v1394 = vld [vmem:[%s6 + $0x10] sm:$0xf]
      %v1395 = vld [vmem:[%s6 + $0x14] sm:$0xf]
      %v1396 = vld [vmem:[%s6 + $0x18] sm:$0xf]
      %v1397 = vld [vmem:[%s6 + $0x1c] sm:$0xf]
      %v1398 = vld [vmem:[%s6 + $0x20] sm:$0xf]
      %v1399 = vld [vmem:[%s6 + $0x24] sm:$0xf]
      %v1400 = vld [vmem:[%s6 + $0x28] sm:$0xf]
      %v1401 = vld [vmem:[%s6 + $0x2c] sm:$0xf]
      %v1402 = vld [vmem:[%s6 + $0x30] sm:$0xf]
      %v1403 = vld [vmem:[%s6 + $0x34] sm:$0xf]
      %v1404 = vld [vmem:[%s6 + $0x38] sm:$0xf]
      %v1405 = vld [vmem:[%s6 + $0x3c] sm:$0xf]
      %v1406 = vld [vmem:[%s6 + $0x40] sm:$0xf]
      %v1407 = vld [vmem:[%s6 + $0x44] sm:$0xf]
      %v1408 = vld [vmem:[%s6 + $0x48] sm:$0xf]
      %v1409 = vld [vmem:[%s6 + $0x4c] sm:$0xf]
      %v1410 = vld [vmem:[%s6 + $0x50] sm:$0xf]
      %v1411 = vld [vmem:[%s6 + $0x54] sm:$0xf]
      %v1412 = vld [vmem:[%s6 + $0x58] sm:$0xf]
      %v1413 = vld [vmem:[%s6 + $0x5c] sm:$0xf]
      %v1414 = vld [vmem:[%s6 + $0x60] sm:$0xf]
      %v1415 = vld [vmem:[%s6 + $0x64] sm:$0xf]
      %v1416 = vld [vmem:[%s6 + $0x68] sm:$0xf]
      %v1417 = vld [vmem:[%s6 + $0x6c] sm:$0xf]
      %v1418 = vld [vmem:[%s6 + $0x70] sm:$0xf]
      %v1419 = vld [vmem:[%s6 + $0x74] sm:$0xf]
      %v1420 = vld [vmem:[%s6 + $0x78] sm:$0xf]
      %v1421 = vld [vmem:[%s6 + $0x7c] sm:$0xf]
      %v1422 = vld [vmem:[%s7] sm:$0x1]
      %v1424 = vlaneseq
      %v1425 = vshrl.u32 %v1424, 7
      %v1426 = vsub.s32 0, %v1425
      %v1427 = vrot.slane %v1422, %v1426
      %v1461 = vunpack.c.l.b16 %v1390
      %v1462 = vunpack.c.l.b16 %v1391
      %v1463 = vunpack.c.l.b16 %v1392
      %v1464 = vunpack.c.l.b16 %v1393
      %v1465 = vunpack.c.l.b16 %v1394
      %v1466 = vunpack.c.l.b16 %v1395
      %v1467 = vunpack.c.l.b16 %v1396
      %v1468 = vunpack.c.l.b16 %v1397
      %v1469 = vunpack.c.l.b16 %v1398
      %v1470 = vunpack.c.l.b16 %v1399
      %v1471 = vunpack.c.l.b16 %v1400
      %v1472 = vunpack.c.l.b16 %v1401
      %v1473 = vunpack.c.l.b16 %v1402
      %v1474 = vunpack.c.l.b16 %v1403
      %v1475 = vunpack.c.l.b16 %v1404
      %v1476 = vunpack.c.l.b16 %v1405
      %v1477 = vunpack.c.l.b16 %v1406
      %v1478 = vunpack.c.l.b16 %v1407
      %v1479 = vunpack.c.l.b16 %v1408
      %v1480 = vunpack.c.l.b16 %v1409
      %v1481 = vunpack.c.l.b16 %v1410
      %v1482 = vunpack.c.l.b16 %v1411
      %v1483 = vunpack.c.l.b16 %v1412
      %v1484 = vunpack.c.l.b16 %v1413
      %v1485 = vunpack.c.l.b16 %v1414
      %v1486 = vunpack.c.l.b16 %v1415
      %v1487 = vunpack.c.l.b16 %v1416
      %v1488 = vunpack.c.l.b16 %v1417
      %v1489 = vunpack.c.l.b16 %v1418
      %v1490 = vunpack.c.l.b16 %v1419
      %v1491 = vunpack.c.l.b16 %v1420
      %v1492 = vunpack.c.l.b16 %v1421
      %v1493 = vpack.c.b16 %v1462, %v1461
      %v1494 = vpack.c.b16 %v1464, %v1463
      %v1495 = vpack.c.b16 %v1466, %v1465
      %v1496 = vpack.c.b16 %v1468, %v1467
      %v1497 = vpack.c.b16 %v1470, %v1469
      %v1498 = vpack.c.b16 %v1472, %v1471
      %v1499 = vpack.c.b16 %v1474, %v1473
      %v1500 = vpack.c.b16 %v1476, %v1475
      %v1501 = vpack.c.b16 %v1478, %v1477
      %v1502 = vpack.c.b16 %v1480, %v1479
      %v1503 = vpack.c.b16 %v1482, %v1481
      %v1504 = vpack.c.b16 %v1484, %v1483
      %v1505 = vpack.c.b16 %v1486, %v1485
      %v1506 = vpack.c.b16 %v1488, %v1487
      %v1507 = vpack.c.b16 %v1490, %v1489
      %v1508 = vpack.c.b16 %v1492, %v1491
      %1525 = vmatprep.subr.bf16.mxu0 0
      %1526 = vmatpush1.bf16.msra.mxu0 %v1500
      %1527 = vmatprep.subr.bf16.mxu0 0
      %1528 = vmatpush1.bf16.msra.mxu0 %v1499
      %1529 = vmatprep.subr.bf16.mxu0 0
      %1530 = vmatpush1.bf16.msra.mxu0 %v1498
      %1531 = vmatprep.subr.bf16.mxu0 0
      %1532 = vmatpush1.bf16.msra.mxu0 %v1497
      %1533 = vmatprep.subr.bf16.mxu0 0
      %1534 = vmatpush1.bf16.msra.mxu0 %v1496
      %1535 = vmatprep.subr.bf16.mxu0 0
      %1536 = vmatpush1.bf16.msra.mxu0 %v1495
      %1537 = vmatprep.subr.bf16.mxu0 0
      %1538 = vmatpush1.bf16.msra.mxu0 %v1494
      %1539 = vmatprep.subr.bf16.mxu0 0
      %1540 = vmatpush1.bf16.msra.mxu0 %v1493
      %1541 = vmatprep.subr.bf16.mxu0 0
      %1542 = vmatpush2.bf16.msra.mxu0 %v1508
      %1543 = vmatprep.subr.bf16.mxu0 0
      %1544 = vmatpush2.bf16.msra.mxu0 %v1507
      %1545 = vmatprep.subr.bf16.mxu0 0
      %1546 = vmatpush2.bf16.msra.mxu0 %v1506
      %1547 = vmatprep.subr.bf16.mxu0 0
      %1548 = vmatpush2.bf16.msra.mxu0 %v1505
      %1549 = vmatprep.subr.bf16.mxu0 0
      %1550 = vmatpush2.bf16.msra.mxu0 %v1504
      %1551 = vmatprep.subr.bf16.mxu0 0
      %1552 = vmatpush2.bf16.msra.mxu0 %v1503
      %1553 = vmatprep.subr.bf16.mxu0 0
      %1554 = vmatpush2.bf16.msra.mxu0 %v1502
      %1555 = vmatprep.subr.bf16.mxu0 0
      %1556 = vmatpush2.bf16.msra.mxu0 %v1501
      %1557 = vmatprep.mubr.bf16.mxu0 %v1383
      %1558 = vmatmul.mubr.bf16.gmra.mxu0 %v1382
      %v1559 = vpop.f32.mrf.mxu0
      %v1560 = vadd.f32 %v1427, %v1559
      %v1561 = vpop.f32.mrf.mxu0
      %v1562 = vpop.f32.mrf.mxu0
      %v1563 = vadd.f32 %v1427, %v1562
      %v1564 = vpop.f32.mrf.mxu0
      %1565 = vmatprep.mubr.bf16.mxu0 %v1385
      %1566 = vmatmul.mubr.bf16.gmra.mxu0 %v1384
      %v1567 = vpop.f32.mrf.mxu0
      %v1568 = vadd.f32 %v1427, %v1567
      %v1569 = vpop.f32.mrf.mxu0
      %v1570 = vpop.f32.mrf.mxu0
      %v1571 = vadd.f32 %v1427, %v1570
      %v1572 = vpop.f32.mrf.mxu0
      %1573 = vmatprep.mubr.bf16.mxu0 %v1387
      %1574 = vmatmul.mubr.bf16.gmra.mxu0 %v1386
      %v1575 = vpop.f32.mrf.mxu0
      %v1576 = vadd.f32 %v1427, %v1575
      %v1577 = vpop.f32.mrf.mxu0
      %v1578 = vpop.f32.mrf.mxu0
      %v1579 = vadd.f32 %v1427, %v1578
      %v1580 = vpop.f32.mrf.mxu0
      %1581 = vmatprep.mubr.bf16.mxu0 %v1389
      %1582 = vmatmul.mubr.bf16.gmra.mxu0 %v1388
      %v1583 = vpop.f32.mrf.mxu0
      %v1584 = vadd.f32 %v1427, %v1583
      %v1585 = vpop.f32.mrf.mxu0
      %v1586 = vpop.f32.mrf.mxu0
      %v1587 = vadd.f32 %v1427, %v1586
      %v1588 = vpop.f32.mrf.mxu0
      %1589 = vdwg.mxu0
      %v1590 = vmax.f32 %v1560, 0.0
      %v1591 = vmax.f32 %v1563, 0.0
      %v1592 = vmax.f32 %v1568, 0.0
      %v1593 = vmax.f32 %v1571, 0.0
      %v1594 = vmax.f32 %v1576, 0.0
      %v1595 = vmax.f32 %v1579, 0.0
      %v1596 = vmax.f32 %v1584, 0.0
      %v1597 = vmax.f32 %v1587, 0.0
      %v1598 = vpack.c.bf16 %v1591, %v1590
      %v1599 = vpack.c.bf16 %v1593, %v1592
      %v1600 = vpack.c.bf16 %v1595, %v1594
      %v1601 = vpack.c.bf16 %v1597, %v1596
      %v1602 = vld [vmem:[%s8] sm:$0xf]
      %v1603 = vld [vmem:[%s8 + $0x4] sm:$0xf]
      %v1604 = vld [vmem:[%s8 + $0x8] sm:$0xf]
      %v1605 = vld [vmem:[%s8 + $0xc] sm:$0xf]
      %v1606 = vld [vmem:[%s8 + $0x10] sm:$0xf]
      %v1607 = vld [vmem:[%s8 + $0x14] sm:$0xf]
      %v1608 = vld [vmem:[%s8 + $0x18] sm:$0xf]
      %v1609 = vld [vmem:[%s8 + $0x1c] sm:$0xf]
      %v1610 = vld [vmem:[%s8 + $0x20] sm:$0xf]
      %v1611 = vld [vmem:[%s8 + $0x24] sm:$0xf]
      %v1612 = vld [vmem:[%s8 + $0x28] sm:$0xf]
      %v1613 = vld [vmem:[%s8 + $0x2c] sm:$0xf]
      %v1614 = vld [vmem:[%s8 + $0x30] sm:$0xf]
      %v1615 = vld [vmem:[%s8 + $0x34] sm:$0xf]
      %v1616 = vld [vmem:[%s8 + $0x38] sm:$0xf]
      %v1617 = vld [vmem:[%s8 + $0x3c] sm:$0xf]
      %v1618 = vld [vmem:[%s9] sm:$0x1]
      %v1620 = vlaneseq
      %v1621 = vshrl.u32 %v1620, 7
      %v1622 = vsub.s32 0, %v1621
      %v1623 = vrot.slane %v1618, %v1622
      %v1641 = vunpack.c.l.b16 %v1602
      %v1642 = vunpack.c.l.b16 %v1603
      %v1643 = vunpack.c.l.b16 %v1604
      %v1644 = vunpack.c.l.b16 %v1605
      %v1645 = vunpack.c.l.b16 %v1606
      %v1646 = vunpack.c.l.b16 %v1607
      %v1647 = vunpack.c.l.b16 %v1608
      %v1648 = vunpack.c.l.b16 %v1609
      %v1649 = vunpack.c.l.b16 %v1610
      %v1650 = vunpack.c.l.b16 %v1611
      %v1651 = vunpack.c.l.b16 %v1612
      %v1652 = vunpack.c.l.b16 %v1613
      %v1653 = vunpack.c.l.b16 %v1614
      %v1654 = vunpack.c.l.b16 %v1615
      %v1655 = vunpack.c.l.b16 %v1616
      %v1656 = vunpack.c.l.b16 %v1617
      %v1657 = vpack.c.b16 %v1642, %v1641
      %v1658 = vpack.c.b16 %v1644, %v1643
      %v1659 = vpack.c.b16 %v1646, %v1645
      %v1660 = vpack.c.b16 %v1648, %v1647
      %v1661 = vpack.c.b16 %v1650, %v1649
      %v1662 = vpack.c.b16 %v1652, %v1651
      %v1663 = vpack.c.b16 %v1654, %v1653
      %v1664 = vpack.c.b16 %v1656, %v1655
      %1673 = vmatprep.subr.bf16.mxu0 0
      %1674 = vmatpush1.bf16.msra.mxu0 %v1664
      %1675 = vmatprep.subr.bf16.mxu0 0
      %1676 = vmatpush1.bf16.msra.mxu0 %v1663
      %1677 = vmatprep.subr.bf16.mxu0 0
      %1678 = vmatpush1.bf16.msra.mxu0 %v1662
      %1679 = vmatprep.subr.bf16.mxu0 0
      %1680 = vmatpush1.bf16.msra.mxu0 %v1661
      %1681 = vmatprep.subr.bf16.mxu0 0
      %1682 = vmatpush1.bf16.msra.mxu0 %v1660
      %1683 = vmatprep.subr.bf16.mxu0 0
      %1684 = vmatpush1.bf16.msra.mxu0 %v1659
      %1685 = vmatprep.subr.bf16.mxu0 0
      %1686 = vmatpush1.bf16.msra.mxu0 %v1658
      %1687 = vmatprep.subr.bf16.mxu0 0
      %1688 = vmatpush1.bf16.msra.mxu0 %v1657
      %1689 = vmatprep.subr.bf16.mxu0 0
      %1690 = vmatpush2.bf16.msra.mxu0 0
      %1691 = vmatprep.subr.bf16.mxu0 0
      %1692 = vmatpush2.bf16.msra.mxu0 0
      %1693 = vmatprep.subr.bf16.mxu0 0
      %1694 = vmatpush2.bf16.msra.mxu0 0
      %1695 = vmatprep.subr.bf16.mxu0 0
      %1696 = vmatpush2.bf16.msra.mxu0 0
      %1697 = vmatprep.subr.bf16.mxu0 0
      %1698 = vmatpush2.bf16.msra.mxu0 0
      %1699 = vmatprep.subr.bf16.mxu0 0
      %1700 = vmatpush2.bf16.msra.mxu0 0
      %1701 = vmatprep.subr.bf16.mxu0 0
      %1702 = vmatpush2.bf16.msra.mxu0 0
      %1703 = vmatprep.subr.bf16.mxu0 0
      %1704 = vmatpush2.bf16.msra.mxu0 0
      %1705 = vmatprep.mubr.bf16.mxu0 0
      %1706 = vmatmul.mubr.bf16.gmra.mxu0 %v1598
      %v1707 = vpop.f32.mrf.mxu0
      %v1708 = vadd.f32 %v1623, %v1707
      %v1709 = vpop.f32.mrf.mxu0
      %v1710 = vpop.f32.mrf.mxu0
      %v1711 = vadd.f32 %v1623, %v1710
      %v1712 = vpop.f32.mrf.mxu0
      %1713 = vmatprep.mubr.bf16.mxu0 0
      %1714 = vmatmul.mubr.bf16.gmra.mxu0 %v1599
      %v1715 = vpop.f32.mrf.mxu0
      %v1716 = vadd.f32 %v1623, %v1715
      %v1717 = vpop.f32.mrf.mxu0
      %v1718 = vpop.f32.mrf.mxu0
      %v1719 = vadd.f32 %v1623, %v1718
      %v1720 = vpop.f32.mrf.mxu0
      %1721 = vmatprep.mubr.bf16.mxu0 0
      %1722 = vmatmul.mubr.bf16.gmra.mxu0 %v1600
      %v1723 = vpop.f32.mrf.mxu0
      %v1724 = vadd.f32 %v1623, %v1723
      %v1725 = vpop.f32.mrf.mxu0
      %v1726 = vpop.f32.mrf.mxu0
      %v1727 = vadd.f32 %v1623, %v1726
      %v1728 = vpop.f32.mrf.mxu0
      %1729 = vmatprep.mubr.bf16.mxu0 0
      %1730 = vmatmul.mubr.bf16.gmra.mxu0 %v1601
      %v1731 = vpop.f32.mrf.mxu0
      %v1732 = vadd.f32 %v1623, %v1731
      %v1733 = vpop.f32.mrf.mxu0
      %v1734 = vpop.f32.mrf.mxu0
      %v1735 = vadd.f32 %v1623, %v1734
      %v1736 = vpop.f32.mrf.mxu0
      %1737 = vdwg.mxu0
      %vm1738 = vcmask 15360
      %v1739 = vsel %vm1738, %v1708, -inf
      %1740 = vmax.xlane.f32.xlu0 %v1739
      %v1741 = vpop.xlane.xlu0 %1740
      %v1742 = vsel %vm1738, %v1711, -inf
      %1743 = vmax.xlane.f32.xlu0 %v1742
      %v1744 = vpop.xlane.xlu0 %1743
      %v1745 = vsel %vm1738, %v1716, -inf
      %1746 = vmax.xlane.f32.xlu0 %v1745
      %v1747 = vpop.xlane.xlu0 %1746
      %v1748 = vsel %vm1738, %v1719, -inf
      %1749 = vmax.xlane.f32.xlu0 %v1748
      %v1750 = vpop.xlane.xlu0 %1749
      %v1751 = vsel %vm1738, %v1724, -inf
      %1752 = vmax.xlane.f32.xlu0 %v1751
      %v1753 = vpop.xlane.xlu0 %1752
      %v1754 = vsel %vm1738, %v1727, -inf
      %1755 = vmax.xlane.f32.xlu0 %v1754
      %v1756 = vpop.xlane.xlu0 %1755
      %v1757 = vsel %vm1738, %v1732, -inf
      %1758 = vmax.xlane.f32.xlu0 %v1757
      %v1759 = vpop.xlane.xlu0 %1758
      %v1760 = vsel %vm1738, %v1735, -inf
      %1761 = vmax.xlane.f32.xlu0 %v1760
      %v1762 = vpop.xlane.xlu0 %1761
      %v1763 = vsub.f32 %v1708, %v1741
      %v1764 = vsub.f32 %v1711, %v1744
      %v1765 = vsub.f32 %v1716, %v1747
      %v1766 = vsub.f32 %v1719, %v1750
      %v1767 = vsub.f32 %v1724, %v1753
      %v1768 = vsub.f32 %v1727, %v1756
      %v1769 = vsub.f32 %v1732, %v1759
      %v1770 = vsub.f32 %v1735, %v1762
      %v1771 = vmul.f32 %v1763, 1.442695
      %v1772 = vpow.pop %v1771
      %v1773 = vmul.f32 %v1764, 1.442695
      %v1774 = vpow.pop %v1773
      %v1775 = vmul.f32 %v1765, 1.442695
      %v1776 = vpow.pop %v1775
      %v1777 = vmul.f32 %v1766, 1.442695
      %v1778 = vpow.pop %v1777
      %v1779 = vmul.f32 %v1767, 1.442695
      %v1780 = vpow.pop %v1779
      %v1781 = vmul.f32 %v1768, 1.442695
      %v1782 = vpow.pop %v1781
      %v1783 = vmul.f32 %v1769, 1.442695
      %v1784 = vpow.pop %v1783
      %v1785 = vmul.f32 %v1770, 1.442695
      %v1786 = vpow.pop %v1785
      %v1787 = vsel %vm1738, %v1772, 0.0
      %1788 = vadd.xlane.f32.xlu0 %v1787
      %v1789 = vpop.xlane.xlu0 %1788
      %v1790 = vsel %vm1738, %v1774, 0.0
      %1791 = vadd.xlane.f32.xlu0 %v1790
      %v1792 = vpop.xlane.xlu0 %1791
      %v1793 = vsel %vm1738, %v1776, 0.0
      %1794 = vadd.xlane.f32.xlu0 %v1793
      %v1795 = vpop.xlane.xlu0 %1794
      %v1796 = vsel %vm1738, %v1778, 0.0
      %1797 = vadd.xlane.f32.xlu0 %v1796
      %v1798 = vpop.xlane.xlu0 %1797
      %v1799 = vsel %vm1738, %v1780, 0.0
      %1800 = vadd.xlane.f32.xlu0 %v1799
      %v1801 = vpop.xlane.xlu0 %1800
      %v1802 = vsel %vm1738, %v1782, 0.0
      %1803 = vadd.xlane.f32.xlu0 %v1802
      %v1804 = vpop.xlane.xlu0 %1803
      %v1805 = vsel %vm1738, %v1784, 0.0
      %1806 = vadd.xlane.f32.xlu0 %v1805
      %v1807 = vpop.xlane.xlu0 %1806
      %v1808 = vsel %vm1738, %v1786, 0.0
      %1809 = vadd.xlane.f32.xlu0 %v1808
      %v1810 = vpop.xlane.xlu0 %1809
      %v1811 = vlog2.pop %v1789
      %v1812 = vmul.f32 %v1811, 0.6931472
      %v1813 = vlog2.pop %v1792
      %v1814 = vmul.f32 %v1813, 0.6931472
      %v1815 = vlog2.pop %v1795
      %v1816 = vmul.f32 %v1815, 0.6931472
      %v1817 = vlog2.pop %v1798
      %v1818 = vmul.f32 %v1817, 0.6931472
      %v1819 = vlog2.pop %v1801
      %v1820 = vmul.f32 %v1819, 0.6931472
      %v1821 = vlog2.pop %v1804
      %v1822 = vmul.f32 %v1821, 0.6931472
      %v1823 = vlog2.pop %v1807
      %v1824 = vmul.f32 %v1823, 0.6931472
      %v1825 = vlog2.pop %v1810
      %v1826 = vmul.f32 %v1825, 0.6931472
      %v1827 = vadd.f32 %v1741, %v1812
      %v1828 = vadd.f32 %v1744, %v1814
      %v1829 = vadd.f32 %v1747, %v1816
      %v1830 = vadd.f32 %v1750, %v1818
      %v1831 = vadd.f32 %v1753, %v1820
      %v1832 = vadd.f32 %v1756, %v1822
      %v1833 = vadd.f32 %v1759, %v1824
      %v1834 = vadd.f32 %v1762, %v1826
      %v1835 = vsub.f32 %v1708, %v1827
      %v1836 = vsub.f32 %v1711, %v1828
      %v1837 = vsub.f32 %v1716, %v1829
      %v1838 = vsub.f32 %v1719, %v1830
      %v1839 = vsub.f32 %v1724, %v1831
      %v1840 = vsub.f32 %v1727, %v1832
      %v1841 = vsub.f32 %v1732, %v1833
      %v1842 = vsub.f32 %v1735, %v1834
      %1843 = vst.msk [vmem:[%s414] sm:$0xff] %vm1738, %v1835
      %1844 = vst.msk [vmem:[%s414 + $0x8] sm:$0xff] %vm1738, %v1836
      %1845 = vst.msk [vmem:[%s414 + $0x10] sm:$0xff] %vm1738, %v1837
      %1846 = vst.msk [vmem:[%s414 + $0x18] sm:$0xff] %vm1738, %v1838
      %1847 = vst.msk [vmem:[%s414 + $0x20] sm:$0xff] %vm1738, %v1839
      %1848 = vst.msk [vmem:[%s414 + $0x28] sm:$0xff] %vm1738, %v1840
      %1849 = vst.msk [vmem:[%s414 + $0x30] sm:$0xff] %vm1738, %v1841
      %1850 = vst.msk [vmem:[%s414 + $0x38] sm:$0xff] %vm1738, %v1842
      %s1851 = smul.u32 8, %s26
      %p1852 = scmp.lt.s32.totalorder %s25, 1
      %s1853 = scalar_select %p1852, %s25, 1
      %p1854 = scmp.lt.s32.totalorder %s1851, 7
      %s1855 = scalar_select %p1854, %s1851, 7
      %s1856 = smul.addr %s1853, 8
      %s1857 = sadd.s32 %s1855, %s1856
      %s1858 = smul.addr %s1857, 8
      %s1859 = scalar_lea.vmem %s10, %s1858
      // Predicated region
      $region61: #{pointnet_densecls_forward.7} parent=59 // pred_check
        %p1860 = pneg %p275
      $region62: #{pointnet_densecls_forward.7} parent=59 // pred_check_branch
        %1862 = sbr.rel (%p1860) target = $region64
      $region63: #{pointnet_densecls_forward.7} parent=59 // pred_region
        %s1863 = smul.u32 8, %s26
      $region64: #{pointnet_densecls_forward.7} parent=59 // pred_fallthru
        _
    $region60: #{pointnet_densecls_forward.7} parent=5 // pred_fallthru
      _
    %p1864 = scmp.le.s32.totalorder 2, %s16
    // Predicated region
    $region65: #{pointnet_densecls_forward.7} parent=5 // pred_check
      %p1865 = pneg %p1864
    $region66: #{pointnet_densecls_forward.7} parent=5 // pred_check_branch
      %1867 = sbr.rel (%p1865) target = $region68
    $region67: #{pointnet_densecls_forward.7} parent=5 // pred_region
      %s1868 = ssub.s32 %s16, 2
      // Predicated region
      $region69: #{pointnet_densecls_forward.7} parent=67 // pred_check
        %p1869 = pneg %p281
      $region70: #{pointnet_densecls_forward.7} parent=67 // pred_check_branch
        %1871 = sbr.rel (%p1869) target = $region72
      $region71: #{pointnet_densecls_forward.7} parent=67 // pred_region
        %s1872 = smul.u32 8, %s28
        %p1873 = scmp.lt.s32.totalorder %s27, 1
        %s1874 = scalar_select %p1873, %s27, 1
        %p1875 = scmp.lt.s32.totalorder %s1872, 7
        %s1876 = scalar_select %p1875, %s1872, 7
        %s1877 = smul.addr %s1874, 8
        %s1878 = sadd.s32 %s1876, %s1877
        %s1879 = smul.addr %s1878, 8
        %s1880 = scalar_lea.vmem %s10, %s1879
      $region72: #{pointnet_densecls_forward.7} parent=67 // pred_fallthru
        _
    $region68: #{pointnet_densecls_forward.7} parent=5 // pred_fallthru
      _
  $region6: #{pointnet_densecls_forward.7} parent=0 // loop_footer
    %s20 = sadd.s32 1, %s16
  $region7: #{pointnet_densecls_forward.7} parent=0 // loop_footer_branch
    %15 = sbr.rel target = $region3
  $region8: #{pointnet_densecls_forward.7} parent=0 // loop_exit
    _

</llo_original>
